<compile_context>
chip_gen: v6e
topology: v6e:2x2x1
jax: 0.10.0
libtpu: 0.0.40
codegen_flags: <defaults>
</compile_context>

<pallas_src>
import jax
import jax.numpy as jnp
import numpy as np
from jax.experimental import pallas as pl
from jax.experimental.pallas import tpu as pltpu


# ---------------------------------------------------------------------------
# Pallas kernel
# ---------------------------------------------------------------------------
def _lstm_divider_kernel(
    emb_ref,      # (T*B, W)   bf16   time-major embedded input, flattened
    mask_ref,     # (T, B, 1)  f32    1.0 where t < length[b]
    wih_ref,      # (W, 8H)    bf16   [W_ih_fwd | W_ih_bwd]
    whh_hbm_ref,  # (2H, 8H)   bf16   block-diag W_hh, left in HBM (pl.ANY)
    b_ref,        # (1, 8H)    f32    [b_fwd | b_bwd]   (b_ih + b_hh)
    w0_ref,       # (1, 2H)    f32    final linear weight [w_fwd | w_bwd]
    b0_ref,       # (1, 1)     f32    final linear bias
    out_ref,      # (T, B, 1)  f32    sigmoid probabilities (time-major)
    xproj_ref,    # scratch (T, B, 8H) f32  hoisted input projection (+bias)
    whh_ref,      # scratch (2H, 8H)   bf16 VMEM copy of W_hh
    lf_ref,       # scratch (T, B, 1)  f32  forward-direction logits
    lb_ref,       # scratch (T, B, 1)  f32  backward-direction logits
    dma_sem,      # scratch DMA semaphore
):
    T, B, H8 = xproj_ref.shape
    H = H8 // 8
    H4 = 4 * H

    # ---- start the recurrent-weight DMA; it overlaps the projection matmul
    # ---- and the peeled step 0 below, and is only waited on before step 1.
    whh_copy = pltpu.make_async_copy(whh_hbm_ref, whh_ref, dma_sem)
    whh_copy.start()

    # ---- hoisted input projection: one big MXU matmul over all timesteps ----
    xp = (
        jnp.dot(emb_ref[...], wih_ref[...], preferred_element_type=jnp.float32)
        + b_ref[...]
    )                                                   # (T*B, 8H) f32
    xproj_ref[...] = xp.reshape(T, B, H8)               # layout-preserving split

    w0_f = w0_ref[:, :H]                                # (1, H)
    w0_b = w0_ref[:, H:]                                # (1, H)

    def gate_math(g, c_prev):
        # PyTorch gate order i, f, g, o ; all elementwise math in f32.
        i = jax.nn.sigmoid(g[:, 0 * H:1 * H])
        f = jax.nn.sigmoid(g[:, 1 * H:2 * H])
        gg = jnp.tanh(g[:, 2 * H:3 * H])
        o = jax.nn.sigmoid(g[:, 3 * H:4 * H])
        c_new = f * c_prev + i * gg
        h_new = o * jnp.tanh(c_new)
        return h_new, c_new

    def emit_logits(s, t_b, h_f, h_b):
        # l0(relu(.)) folded into the loop: lane-reduce on otherwise idle slots.
        lf_ref[s] = jnp.sum(jnp.maximum(h_f, 0.0) * w0_f, axis=-1, keepdims=True)
        lb_ref[t_b] = jnp.sum(jnp.maximum(h_b, 0.0) * w0_b, axis=-1, keepdims=True)

    # ---- peeled step 0: h == 0 -> h @ W_hh == 0, skip the dot entirely -----
    c0 = jnp.zeros((B, H), jnp.float32)
    xp0 = xproj_ref[0]                                  # (B, 8H)
    xpL = xproj_ref[T - 1]                              # (B, 8H)
    h_f, c_f = gate_math(xp0[:, :H4], c0)
    h_b, c_b = gate_math(xpL[:, H4:], c0)
    m_b = mask_ref[T - 1]                               # (B, 1)
    h_b = h_b * m_b                                     # hold bwd state at zero
    c_b = c_b * m_b                                     # while t >= length[b]
    emit_logits(0, T - 1, h_f, h_b)

    # W_hh is needed from step 1 onward.
    whh_copy.wait()

    # ---- fused fwd/bwd recurrence, fully unrolled with static indices ------
    # fwd step at t = s, bwd step at t = T-1-s; one K=2H=256 dot per step.
    for s in range(1, T):
        t_b = T - 1 - s
        h_cat = jnp.concatenate([h_f, h_b], axis=-1)    # (B, 2H)
        gh = jnp.dot(h_cat.astype(jnp.bfloat16), whh_ref[...],
                     preferred_element_type=jnp.float32)            # (B, 8H)

        xp_f = xproj_ref[s]                             # (B, 8H), static index
        xp_b = xproj_ref[t_b]
        g_f = gh[:, :H4] + xp_f[:, :H4]
        g_b = gh[:, H4:] + xp_b[:, H4:]

        h_f, c_f = gate_math(g_f, c_f)
        h_b, c_b = gate_math(g_b, c_b)

        m_b = mask_ref[t_b]                             # (B, 1) precomputed
        h_b = h_b * m_b
        c_b = c_b * m_b

        emit_logits(s, t_b, h_f, h_b)

    # ---- epilogue: combine logits; fwd padding masked once, off the chain --
    logit = lf_ref[...] * mask_ref[...] + lb_ref[...] + b0_ref[0, 0]  # (T,B,1)
    out_ref[...] = jax.nn.sigmoid(logit)


# ---------------------------------------------------------------------------
# Wrapper
# ---------------------------------------------------------------------------
def lstm_divider_forward(idseq, length_list, params):
    """idseq: (B, T) int32, length_list: (B,) int32 -> (B, T) f32 probabilities."""
    B, T = idseq.shape
    W = params["emb"].shape[1]
    H = params["whh_f"].shape[0]

    # --- JAX glue: embedding gather, time-major layout, weight packing ---
    emb_t = jnp.transpose(params["emb"][idseq], (1, 0, 2))          # (T, B, W)
    emb_flat = emb_t.reshape(T * B, W).astype(jnp.bfloat16)         # (T*B, W)
    mask_tb1 = (
        jnp.arange(T, dtype=jnp.int32)[:, None]
        < length_list.astype(jnp.int32)[None, :]
    ).astype(jnp.float32)[:, :, None]                               # (T, B, 1)

    wih_cat = jnp.concatenate([params["wih_f"], params["wih_b"]],
                              axis=1).astype(jnp.bfloat16)          # (W, 8H)
    whh_bd = jnp.zeros((2 * H, 8 * H), jnp.float32)
    whh_bd = whh_bd.at[:H, :4 * H].set(params["whh_f"])
    whh_bd = whh_bd.at[H:, 4 * H:].set(params["whh_b"])
    whh_bd = whh_bd.astype(jnp.bfloat16)                            # (2H, 8H)
    b_cat = jnp.concatenate([params["b_f"], params["b_b"]], axis=1)  # (1, 8H)

    vmem = pl.BlockSpec(memory_space=pltpu.MemorySpace.VMEM)
    hbm = pl.BlockSpec(memory_space=pl.ANY)   # W_hh stays in HBM; DMA'd manually
    kernel = pl.pallas_call(
        _lstm_divider_kernel,
        out_shape=jax.ShapeDtypeStruct((T, B, 1), jnp.float32),
        in_specs=[vmem, vmem, vmem, hbm, vmem, vmem, vmem],
        out_specs=vmem,
        scratch_shapes=[
            pltpu.VMEM((T, B, 8 * H), jnp.float32),     # hoisted input projection
            pltpu.VMEM((2 * H, 8 * H), jnp.bfloat16),   # W_hh VMEM copy
            pltpu.VMEM((T, B, 1), jnp.float32),         # forward logits
            pltpu.VMEM((T, B, 1), jnp.float32),         # backward logits
            pltpu.SemaphoreType.DMA(()),                # W_hh copy semaphore
        ],
    )
    out_tb1 = kernel(emb_flat, mask_tb1, wih_cat, whh_bd, b_cat,
                     params["w0"], params["b0"])
    return out_tb1[:, :, 0].T                           # (B, T)


# ---------------------------------------------------------------------------
# Deterministic parameter init (mirrors nn.Embedding / nn.LSTM / nn.Linear)
# ---------------------------------------------------------------------------
def init_params(key, voc_size, w_dims, h_dims):
    ks = jax.random.split(key, 12)
    k_lstm = 1.0 / np.sqrt(h_dims)
    k_lin = 1.0 / np.sqrt(2 * h_dims)

    def uni(k, shape, bound):
        return jax.random.uniform(k, shape, jnp.float32, -bound, bound)

    emb = jax.random.normal(ks[0], (voc_size, w_dims), jnp.float32)

    w_ih_f = uni(ks[1], (4 * h_dims, w_dims), k_lstm)
    w_hh_f = uni(ks[2], (4 * h_dims, h_dims), k_lstm)
    b_ih_f = uni(ks[3], (4 * h_dims,), k_lstm)
    b_hh_f = uni(ks[4], (4 * h_dims,), k_lstm)

    w_ih_b = uni(ks[5], (4 * h_dims, w_dims), k_lstm)
    w_hh_b = uni(ks[6], (4 * h_dims, h_dims), k_lstm)
    b_ih_b = uni(ks[7], (4 * h_dims,), k_lstm)
    b_hh_b = uni(ks[8], (4 * h_dims,), k_lstm)

    w_l0 = uni(ks[9], (1, 2 * h_dims), k_lin)
    b_l0 = uni(ks[10], (1,), k_lin)

    return {
        "emb": emb,
        "wih_f": w_ih_f.T, "whh_f": w_hh_f.T, "b_f": (b_ih_f + b_hh_f)[None, :],
        "wih_b": w_ih_b.T, "whh_b": w_hh_b.T, "b_b": (b_ih_b + b_hh_b)[None, :],
        "w0": w_l0, "b0": b_l0.reshape(1, 1),
    }


# ---------------------------------------------------------------------------
# Pure-JAX f32 reference (same packed-sequence semantics) for a sanity check
# ---------------------------------------------------------------------------
def reference_forward(idseq, length_list, params):
    B, T = idseq.shape
    H = params["whh_f"].shape[0]
    emb_t = jnp.transpose(params["emb"][idseq], (1, 0, 2)).astype(jnp.float32)
    lens = length_list.astype(jnp.int32).reshape(B, 1)

    def step(x_t, h, c, wih, whh, b):
        g = x_t @ wih + h @ whh + b
        i = jax.nn.sigmoid(g[:, :H]); f = jax.nn.sigmoid(g[:, H:2 * H])
        gg = jnp.tanh(g[:, 2 * H:3 * H]); o = jax.nn.sigmoid(g[:, 3 * H:])
        c = f * c + i * gg
        return o * jnp.tanh(c), c

    h = jnp.zeros((B, H)); c = jnp.zeros((B, H))
    hf = []
    for t in range(T):
        h, c = step(emb_t[t], h, c, params["wih_f"], params["whh_f"], params["b_f"])
        hf.append(jnp.where(lens > t, h, 0.0))
    h = jnp.zeros((B, H)); c = jnp.zeros((B, H))
    hb = [None] * T
    for t in range(T - 1, -1, -1):
        h, c = step(emb_t[t], h, c, params["wih_b"], params["whh_b"], params["b_b"])
        h = jnp.where(lens > t, h, 0.0)
        c = jnp.where(lens > t, c, 0.0)
        hb[t] = h
    hf = jnp.stack(hf); hb = jnp.stack(hb)                     # (T, B, H)
    hidden = jnp.concatenate([hf, hb], axis=-1)                # (T, B, 2H)
    logit = jnp.einsum("tbh,h->tb", jnp.maximum(hidden, 0.0),
                       params["w0"][0]) + params["b0"][0, 0]
    return jax.nn.sigmoid(logit).T                             # (B, T)


if __name__ == "__main__":
    # Small TPU-friendly sizes: batch=8, seq=8, w_dims=128, h_dims=128, voc=50.
    VOC, W, H = 50, 128, 128
    B, T = 8, 8

    key = jax.random.PRNGKey(0)
    k_par, k_ids, k_len = jax.random.split(key, 3)

    params = init_params(k_par, VOC, W, H)
    idseq = jax.random.randint(k_ids, (B, T), 0, VOC, dtype=jnp.int32)
    # lengths in [1, T]; force max(length) == T so pad_packed_sequence width == T
    length_list = jax.random.randint(k_len, (B,), 1, T + 1, dtype=jnp.int32)
    length_list = length_list.at[0].set(T)

    out = jax.block_until_ready(lstm_divider_forward(idseq, length_list, params))
    assert out.shape == (B, T) and out.dtype == jnp.float32

    ref = jax.block_until_ready(reference_forward(idseq, length_list, params))
    # bf16 matmul operands (f32 accumulation) -> slightly looser tolerance than pure f32.
    np.testing.assert_allclose(np.asarray(out), np.asarray(ref), atol=2e-2, rtol=2e-2)

    print("KERNEL_OK")
</pallas_src>

<mosaic_0001>
module attributes {stable_mosaic.version = 11 : i64} {
  func.func @_lstm_divider_kernel(%arg0: memref<64x128xbf16, #tpu.memory_space<vmem>>, %arg1: memref<8x8x1xf32, #tpu.memory_space<vmem>>, %arg2: memref<128x1024xbf16, #tpu.memory_space<vmem>>, %arg3: memref<256x1024xbf16, #tpu.memory_space<any>>, %arg4: memref<1x1024xf32, #tpu.memory_space<vmem>>, %arg5: memref<1x256xf32, #tpu.memory_space<vmem>>, %arg6: memref<1x1xf32, #tpu.memory_space<vmem>>, %arg7: memref<8x8x1xf32, #tpu.memory_space<vmem>>, %arg8: memref<8x8x1024xf32, #tpu.memory_space<vmem>>, %arg9: memref<256x1024xbf16, #tpu.memory_space<vmem>>, %arg10: memref<8x8x1xf32, #tpu.memory_space<vmem>>, %arg11: memref<8x8x1xf32, #tpu.memory_space<vmem>>, %arg12: memref<!tpu.dma_semaphore, #tpu.memory_space<semaphore_mem>>) attributes {dimension_semantics = [], scalar_prefetch = 0 : i64, scratch_operands = 5 : i64, tpu.core_type = #tpu.core_type<tc>} {
    tpu.enqueue_dma source(%arg3 : memref<256x1024xbf16, #tpu.memory_space<any>>) target(%arg9 : memref<256x1024xbf16, #tpu.memory_space<vmem>>) target_semaphore(%arg12 : memref<!tpu.dma_semaphore, #tpu.memory_space<semaphore_mem>>)
    %c0 = arith.constant 0 : index
    %c0_0 = arith.constant 0 : index
    %0 = vector.load %arg0[%c0, %c0_0] : memref<64x128xbf16, #tpu.memory_space<vmem>>, vector<64x128xbf16>
    %c0_1 = arith.constant 0 : index
    %c0_2 = arith.constant 0 : index
    %1 = vector.load %arg2[%c0_1, %c0_2] : memref<128x1024xbf16, #tpu.memory_space<vmem>>, vector<128x1024xbf16>
    %cst = arith.constant dense<0.000000e+00> : vector<64x1024xf32>
    %2 = tpu.matmul %0, %1, %cst {dimension_numbers = #tpu.dot_dimension_numbers<[1], [0], [0], [1], [0, 0, 1, 1], [], []>} : vector<64x128xbf16>, vector<128x1024xbf16>, vector<64x1024xf32> -> vector<64x1024xf32>
    %c0_3 = arith.constant 0 : index
    %c0_4 = arith.constant 0 : index
    %3 = vector.load %arg4[%c0_3, %c0_4] : memref<1x1024xf32, #tpu.memory_space<vmem>>, vector<1x1024xf32>
    %4 = vector.broadcast %3 : vector<1x1024xf32> to vector<64x1024xf32>
    %5 = arith.addf %2, %4 : vector<64x1024xf32>
    %6 = vector.shape_cast %5 : vector<64x1024xf32> to vector<8x8x1024xf32>
    %c0_5 = arith.constant 0 : index
    %c0_6 = arith.constant 0 : index
    %c0_7 = arith.constant 0 : index
    %7 = vector.load %arg8[%c0_5, %c0_6, %c0_7] : memref<8x8x1024xf32, #tpu.memory_space<vmem>>, vector<8x8x1024xf32>
    tpu.vector_store %arg8[%c0_5, %c0_6, %c0_7], %6 {strides = array<i32>} : memref<8x8x1024xf32, #tpu.memory_space<vmem>>, vector<8x8x1024xf32>,
    %c0_8 = arith.constant 0 : index
    %c0_9 = arith.constant 0 : index
    %8 = vector.load %arg5[%c0_8, %c0_9] : memref<1x256xf32, #tpu.memory_space<vmem>>, vector<1x128xf32>
    %c0_10 = arith.constant 0 : index
    %c128 = arith.constant 128 : index
    %9 = vector.load %arg5[%c0_10, %c128] : memref<1x256xf32, #tpu.memory_space<vmem>>, vector<1x128xf32>
    %cst_11 = arith.constant 0.000000e+00 : f32
    %10 = vector.broadcast %cst_11 : f32 to vector<8x128xf32>
    %c0_12 = arith.constant 0 : index
    %c0_13 = arith.constant 0 : index
    %c0_14 = arith.constant 0 : index
    %11 = vector.load %arg8[%c0_12, %c0_13, %c0_14] : memref<8x8x1024xf32, #tpu.memory_space<vmem>>, vector<1x8x1024xf32>
    %12 = vector.shape_cast %11 : vector<1x8x1024xf32> to vector<8x1024xf32>
    %c7 = arith.constant 7 : index
    %c0_15 = arith.constant 0 : index
    %c0_16 = arith.constant 0 : index
    %13 = vector.load %arg8[%c7, %c0_15, %c0_16] : memref<8x8x1024xf32, #tpu.memory_space<vmem>>, vector<1x8x1024xf32>
    %14 = vector.shape_cast %13 : vector<1x8x1024xf32> to vector<8x1024xf32>
    %15 = vector.extract_strided_slice %12 {offsets = [0, 0], sizes = [8, 512], strides = [1, 1]} : vector<8x1024xf32> to vector<8x512xf32>
    %16 = vector.extract_strided_slice %15 {offsets = [0, 0], sizes = [8, 128], strides = [1, 1]} : vector<8x512xf32> to vector<8x128xf32>
    %17 = arith.negf %16 : vector<8x128xf32>
    %18 = math.exp %17 : vector<8x128xf32>
    %cst_17 = arith.constant 1.000000e+00 : f32
    %19 = vector.broadcast %cst_17 : f32 to vector<8x128xf32>
    %20 = arith.addf %19, %18 : vector<8x128xf32>
    %21 = arith.divf %19, %20 : vector<8x128xf32>
    %22 = vector.extract_strided_slice %15 {offsets = [0, 128], sizes = [8, 128], strides = [1, 1]} : vector<8x512xf32> to vector<8x128xf32>
    %23 = arith.negf %22 : vector<8x128xf32>
    %24 = math.exp %23 : vector<8x128xf32>
    %cst_18 = arith.constant 1.000000e+00 : f32
    %25 = vector.broadcast %cst_18 : f32 to vector<8x128xf32>
    %26 = arith.addf %25, %24 : vector<8x128xf32>
    %27 = arith.divf %25, %26 : vector<8x128xf32>
    %28 = vector.extract_strided_slice %15 {offsets = [0, 256], sizes = [8, 128], strides = [1, 1]} : vector<8x512xf32> to vector<8x128xf32>
    %29 = math.tanh %28 : vector<8x128xf32>
    %30 = vector.extract_strided_slice %15 {offsets = [0, 384], sizes = [8, 128], strides = [1, 1]} : vector<8x512xf32> to vector<8x128xf32>
    %31 = arith.negf %30 : vector<8x128xf32>
    %32 = math.exp %31 : vector<8x128xf32>
    %cst_19 = arith.constant 1.000000e+00 : f32
    %33 = vector.broadcast %cst_19 : f32 to vector<8x128xf32>
    %34 = arith.addf %33, %32 : vector<8x128xf32>
    %35 = arith.divf %33, %34 : vector<8x128xf32>
    %36 = arith.mulf %27, %10 : vector<8x128xf32>
    %37 = arith.mulf %21, %29 : vector<8x128xf32>
    %38 = arith.addf %36, %37 : vector<8x128xf32>
    %39 = math.tanh %38 : vector<8x128xf32>
    %40 = arith.mulf %35, %39 : vector<8x128xf32>
    %41 = vector.extract_strided_slice %14 {offsets = [0, 512], sizes = [8, 512], strides = [1, 1]} : vector<8x1024xf32> to vector<8x512xf32>
    %42 = vector.extract_strided_slice %41 {offsets = [0, 0], sizes = [8, 128], strides = [1, 1]} : vector<8x512xf32> to vector<8x128xf32>
    %43 = arith.negf %42 : vector<8x128xf32>
    %44 = math.exp %43 : vector<8x128xf32>
    %cst_20 = arith.constant 1.000000e+00 : f32
    %45 = vector.broadcast %cst_20 : f32 to vector<8x128xf32>
    %46 = arith.addf %45, %44 : vector<8x128xf32>
    %47 = arith.divf %45, %46 : vector<8x128xf32>
    %48 = vector.extract_strided_slice %41 {offsets = [0, 128], sizes = [8, 128], strides = [1, 1]} : vector<8x512xf32> to vector<8x128xf32>
    %49 = arith.negf %48 : vector<8x128xf32>
    %50 = math.exp %49 : vector<8x128xf32>
    %cst_21 = arith.constant 1.000000e+00 : f32
    %51 = vector.broadcast %cst_21 : f32 to vector<8x128xf32>
    %52 = arith.addf %51, %50 : vector<8x128xf32>
    %53 = arith.divf %51, %52 : vector<8x128xf32>
    %54 = vector.extract_strided_slice %41 {offsets = [0, 256], sizes = [8, 128], strides = [1, 1]} : vector<8x512xf32> to vector<8x128xf32>
    %55 = math.tanh %54 : vector<8x128xf32>
    %56 = vector.extract_strided_slice %41 {offsets = [0, 384], sizes = [8, 128], strides = [1, 1]} : vector<8x512xf32> to vector<8x128xf32>
    %57 = arith.negf %56 : vector<8x128xf32>
    %58 = math.exp %57 : vector<8x128xf32>
    %cst_22 = arith.constant 1.000000e+00 : f32
    %59 = vector.broadcast %cst_22 : f32 to vector<8x128xf32>
    %60 = arith.addf %59, %58 : vector<8x128xf32>
    %61 = arith.divf %59, %60 : vector<8x128xf32>
    %62 = arith.mulf %53, %10 : vector<8x128xf32>
    %63 = arith.mulf %47, %55 : vector<8x128xf32>
    %64 = arith.addf %62, %63 : vector<8x128xf32>
    %65 = math.tanh %64 : vector<8x128xf32>
    %66 = arith.mulf %61, %65 : vector<8x128xf32>
    %c7_23 = arith.constant 7 : index
    %c0_24 = arith.constant 0 : index
    %c0_25 = arith.constant 0 : index
    %67 = vector.load %arg1[%c7_23, %c0_24, %c0_25] : memref<8x8x1xf32, #tpu.memory_space<vmem>>, vector<1x8x1xf32>
    %68 = vector.shape_cast %67 : vector<1x8x1xf32> to vector<8x1xf32>
    %69 = vector.broadcast %68 : vector<8x1xf32> to vector<8x128xf32>
    %70 = arith.mulf %66, %69 : vector<8x128xf32>
    %71 = vector.broadcast %68 : vector<8x1xf32> to vector<8x128xf32>
    %72 = arith.mulf %64, %71 : vector<8x128xf32>
    %cst_26 = arith.constant 0.000000e+00 : f32
    %73 = vector.broadcast %cst_26 : f32 to vector<8x128xf32>
    %74 = arith.maximumf %40, %73 : vector<8x128xf32>
    %75 = vector.broadcast %8 : vector<1x128xf32> to vector<8x128xf32>
    %76 = arith.mulf %74, %75 : vector<8x128xf32>
    %cst_27 = arith.constant dense<0.000000e+00> : vector<8xf32>
    %77 = vector.multi_reduction <add>, %76, %cst_27 [1] : vector<8x128xf32> to vector<8xf32>
    %78 = vector.shape_cast %77 : vector<8xf32> to vector<8x1xf32>
    %c0_28 = arith.constant 0 : index
    %c0_29 = arith.constant 0 : index
    %c0_30 = arith.constant 0 : index
    %79 = vector.load %arg10[%c0_28, %c0_29, %c0_30] : memref<8x8x1xf32, #tpu.memory_space<vmem>>, vector<1x8x1xf32>
    %80 = vector.shape_cast %79 : vector<1x8x1xf32> to vector<8x1xf32>
    %81 = vector.shape_cast %78 : vector<8x1xf32> to vector<1x8x1xf32>
    tpu.vector_store %arg10[%c0_28, %c0_29, %c0_30], %81 {strides = array<i32>} : memref<8x8x1xf32, #tpu.memory_space<vmem>>, vector<1x8x1xf32>,
    %cst_31 = arith.constant 0.000000e+00 : f32
    %82 = vector.broadcast %cst_31 : f32 to vector<8x128xf32>
    %83 = arith.maximumf %70, %82 : vector<8x128xf32>
    %84 = vector.broadcast %9 : vector<1x128xf32> to vector<8x128xf32>
    %85 = arith.mulf %83, %84 : vector<8x128xf32>
    %cst_32 = arith.constant dense<0.000000e+00> : vector<8xf32>
    %86 = vector.multi_reduction <add>, %85, %cst_32 [1] : vector<8x128xf32> to vector<8xf32>
    %87 = vector.shape_cast %86 : vector<8xf32> to vector<8x1xf32>
    %c7_33 = arith.constant 7 : index
    %c0_34 = arith.constant 0 : index
    %c0_35 = arith.constant 0 : index
    %88 = vector.load %arg11[%c7_33, %c0_34, %c0_35] : memref<8x8x1xf32, #tpu.memory_space<vmem>>, vector<1x8x1xf32>
    %89 = vector.shape_cast %88 : vector<1x8x1xf32> to vector<8x1xf32>
    %90 = vector.shape_cast %87 : vector<8x1xf32> to vector<1x8x1xf32>
    tpu.vector_store %arg11[%c7_33, %c0_34, %c0_35], %90 {strides = array<i32>} : memref<8x8x1xf32, #tpu.memory_space<vmem>>, vector<1x8x1xf32>,
    tpu.wait_dma2 semaphore(%arg12 : memref<!tpu.dma_semaphore, #tpu.memory_space<semaphore_mem>>) src(%arg3 : memref<256x1024xbf16, #tpu.memory_space<any>>) dst(%arg9 : memref<256x1024xbf16, #tpu.memory_space<vmem>>)
    %91 = tpu.concatenate %40, %70 in 1 : vector<8x128xf32>, vector<8x128xf32> -> vector<8x256xf32>
    %92 = arith.truncf %91 : vector<8x256xf32> to vector<8x256xbf16>
    %c0_36 = arith.constant 0 : index
    %c0_37 = arith.constant 0 : index
    %93 = vector.load %arg9[%c0_36, %c0_37] : memref<256x1024xbf16, #tpu.memory_space<vmem>>, vector<256x1024xbf16>
    %cst_38 = arith.constant dense<0.000000e+00> : vector<8x1024xf32>
    %94 = tpu.matmul %92, %93, %cst_38 {dimension_numbers = #tpu.dot_dimension_numbers<[1], [0], [0], [1], [0, 0, 1, 1], [], []>} : vector<8x256xbf16>, vector<256x1024xbf16>, vector<8x1024xf32> -> vector<8x1024xf32>
    %c1 = arith.constant 1 : index
    %c0_39 = arith.constant 0 : index
    %c0_40 = arith.constant 0 : index
    %95 = vector.load %arg8[%c1, %c0_39, %c0_40] : memref<8x8x1024xf32, #tpu.memory_space<vmem>>, vector<1x8x1024xf32>
    %96 = vector.shape_cast %95 : vector<1x8x1024xf32> to vector<8x1024xf32>
    %c6 = arith.constant 6 : index
    %c0_41 = arith.constant 0 : index
    %c0_42 = arith.constant 0 : index
    %97 = vector.load %arg8[%c6, %c0_41, %c0_42] : memref<8x8x1024xf32, #tpu.memory_space<vmem>>, vector<1x8x1024xf32>
    %98 = vector.shape_cast %97 : vector<1x8x1024xf32> to vector<8x1024xf32>
    %99 = vector.extract_strided_slice %94 {offsets = [0, 0], sizes = [8, 512], strides = [1, 1]} : vector<8x1024xf32> to vector<8x512xf32>
    %100 = vector.extract_strided_slice %96 {offsets = [0, 0], sizes = [8, 512], strides = [1, 1]} : vector<8x1024xf32> to vector<8x512xf32>
    %101 = arith.addf %99, %100 : vector<8x512xf32>
    %102 = vector.extract_strided_slice %94 {offsets = [0, 512], sizes = [8, 512], strides = [1, 1]} : vector<8x1024xf32> to vector<8x512xf32>
    %103 = vector.extract_strided_slice %98 {offsets = [0, 512], sizes = [8, 512], strides = [1, 1]} : vector<8x1024xf32> to vector<8x512xf32>
    %104 = arith.addf %102, %103 : vector<8x512xf32>
    %105 = vector.extract_strided_slice %101 {offsets = [0, 0], sizes = [8, 128], strides = [1, 1]} : vector<8x512xf32> to vector<8x128xf32>
    %106 = arith.negf %105 : vector<8x128xf32>
    %107 = math.exp %106 : vector<8x128xf32>
    %cst_43 = arith.constant 1.000000e+00 : f32
    %108 = vector.broadcast %cst_43 : f32 to vector<8x128xf32>
    %109 = arith.addf %108, %107 : vector<8x128xf32>
    %110 = arith.divf %108, %109 : vector<8x128xf32>
    %111 = vector.extract_strided_slice %101 {offsets = [0, 128], sizes = [8, 128], strides = [1, 1]} : vector<8x512xf32> to vector<8x128xf32>
    %112 = arith.negf %111 : vector<8x128xf32>
    %113 = math.exp %112 : vector<8x128xf32>
    %cst_44 = arith.constant 1.000000e+00 : f32
    %114 = vector.broadcast %cst_44 : f32 to vector<8x128xf32>
    %115 = arith.addf %114, %113 : vector<8x128xf32>
    %116 = arith.divf %114, %115 : vector<8x128xf32>
    %117 = vector.extract_strided_slice %101 {offsets = [0, 256], sizes = [8, 128], strides = [1, 1]} : vector<8x512xf32> to vector<8x128xf32>
    %118 = math.tanh %117 : vector<8x128xf32>
    %119 = vector.extract_strided_slice %101 {offsets = [0, 384], sizes = [8, 128], strides = [1, 1]} : vector<8x512xf32> to vector<8x128xf32>
    %120 = arith.negf %119 : vector<8x128xf32>
    %121 = math.exp %120 : vector<8x128xf32>
    %cst_45 = arith.constant 1.000000e+00 : f32
    %122 = vector.broadcast %cst_45 : f32 to vector<8x128xf32>
    %123 = arith.addf %122, %121 : vector<8x128xf32>
    %124 = arith.divf %122, %123 : vector<8x128xf32>
    %125 = arith.mulf %116, %38 : vector<8x128xf32>
    %126 = arith.mulf %110, %118 : vector<8x128xf32>
    %127 = arith.addf %125, %126 : vector<8x128xf32>
    %128 = math.tanh %127 : vector<8x128xf32>
    %129 = arith.mulf %124, %128 : vector<8x128xf32>
    %130 = vector.extract_strided_slice %104 {offsets = [0, 0], sizes = [8, 128], strides = [1, 1]} : vector<8x512xf32> to vector<8x128xf32>
    %131 = arith.negf %130 : vector<8x128xf32>
    %132 = math.exp %131 : vector<8x128xf32>
    %cst_46 = arith.constant 1.000000e+00 : f32
    %133 = vector.broadcast %cst_46 : f32 to vector<8x128xf32>
    %134 = arith.addf %133, %132 : vector<8x128xf32>
    %135 = arith.divf %133, %134 : vector<8x128xf32>
    %136 = vector.extract_strided_slice %104 {offsets = [0, 128], sizes = [8, 128], strides = [1, 1]} : vector<8x512xf32> to vector<8x128xf32>
    %137 = arith.negf %136 : vector<8x128xf32>
    %138 = math.exp %137 : vector<8x128xf32>
    %cst_47 = arith.constant 1.000000e+00 : f32
    %139 = vector.broadcast %cst_47 : f32 to vector<8x128xf32>
    %140 = arith.addf %139, %138 : vector<8x128xf32>
    %141 = arith.divf %139, %140 : vector<8x128xf32>
    %142 = vector.extract_strided_slice %104 {offsets = [0, 256], sizes = [8, 128], strides = [1, 1]} : vector<8x512xf32> to vector<8x128xf32>
    %143 = math.tanh %142 : vector<8x128xf32>
    %144 = vector.extract_strided_slice %104 {offsets = [0, 384], sizes = [8, 128], strides = [1, 1]} : vector<8x512xf32> to vector<8x128xf32>
    %145 = arith.negf %144 : vector<8x128xf32>
    %146 = math.exp %145 : vector<8x128xf32>
    %cst_48 = arith.constant 1.000000e+00 : f32
    %147 = vector.broadcast %cst_48 : f32 to vector<8x128xf32>
    %148 = arith.addf %147, %146 : vector<8x128xf32>
    %149 = arith.divf %147, %148 : vector<8x128xf32>
    %150 = arith.mulf %141, %72 : vector<8x128xf32>
    %151 = arith.mulf %135, %143 : vector<8x128xf32>
    %152 = arith.addf %150, %151 : vector<8x128xf32>
    %153 = math.tanh %152 : vector<8x128xf32>
    %154 = arith.mulf %149, %153 : vector<8x128xf32>
    %c6_49 = arith.constant 6 : index
    %c0_50 = arith.constant 0 : index
    %c0_51 = arith.constant 0 : index
    %155 = vector.load %arg1[%c6_49, %c0_50, %c0_51] : memref<8x8x1xf32, #tpu.memory_space<vmem>>, vector<1x8x1xf32>
    %156 = vector.shape_cast %155 : vector<1x8x1xf32> to vector<8x1xf32>
    %157 = vector.broadcast %156 : vector<8x1xf32> to vector<8x128xf32>
    %158 = arith.mulf %154, %157 : vector<8x128xf32>
    %159 = vector.broadcast %156 : vector<8x1xf32> to vector<8x128xf32>
    %160 = arith.mulf %152, %159 : vector<8x128xf32>
    %cst_52 = arith.constant 0.000000e+00 : f32
    %161 = vector.broadcast %cst_52 : f32 to vector<8x128xf32>
    %162 = arith.maximumf %129, %161 : vector<8x128xf32>
    %163 = vector.broadcast %8 : vector<1x128xf32> to vector<8x128xf32>
    %164 = arith.mulf %162, %163 : vector<8x128xf32>
    %cst_53 = arith.constant dense<0.000000e+00> : vector<8xf32>
    %165 = vector.multi_reduction <add>, %164, %cst_53 [1] : vector<8x128xf32> to vector<8xf32>
    %166 = vector.shape_cast %165 : vector<8xf32> to vector<8x1xf32>
    %c1_54 = arith.constant 1 : index
    %c0_55 = arith.constant 0 : index
    %c0_56 = arith.constant 0 : index
    %167 = vector.load %arg10[%c1_54, %c0_55, %c0_56] : memref<8x8x1xf32, #tpu.memory_space<vmem>>, vector<1x8x1xf32>
    %168 = vector.shape_cast %167 : vector<1x8x1xf32> to vector<8x1xf32>
    %169 = vector.shape_cast %166 : vector<8x1xf32> to vector<1x8x1xf32>
    tpu.vector_store %arg10[%c1_54, %c0_55, %c0_56], %169 {strides = array<i32>} : memref<8x8x1xf32, #tpu.memory_space<vmem>>, vector<1x8x1xf32>,
    %cst_57 = arith.constant 0.000000e+00 : f32
    %170 = vector.broadcast %cst_57 : f32 to vector<8x128xf32>
    %171 = arith.maximumf %158, %170 : vector<8x128xf32>
    %172 = vector.broadcast %9 : vector<1x128xf32> to vector<8x128xf32>
    %173 = arith.mulf %171, %172 : vector<8x128xf32>
    %cst_58 = arith.constant dense<0.000000e+00> : vector<8xf32>
    %174 = vector.multi_reduction <add>, %173, %cst_58 [1] : vector<8x128xf32> to vector<8xf32>
    %175 = vector.shape_cast %174 : vector<8xf32> to vector<8x1xf32>
    %c6_59 = arith.constant 6 : index
    %c0_60 = arith.constant 0 : index
    %c0_61 = arith.constant 0 : index
    %176 = vector.load %arg11[%c6_59, %c0_60, %c0_61] : memref<8x8x1xf32, #tpu.memory_space<vmem>>, vector<1x8x1xf32>
    %177 = vector.shape_cast %176 : vector<1x8x1xf32> to vector<8x1xf32>
    %178 = vector.shape_cast %175 : vector<8x1xf32> to vector<1x8x1xf32>
    tpu.vector_store %arg11[%c6_59, %c0_60, %c0_61], %178 {strides = array<i32>} : memref<8x8x1xf32, #tpu.memory_space<vmem>>, vector<1x8x1xf32>,
    %179 = tpu.concatenate %129, %158 in 1 : vector<8x128xf32>, vector<8x128xf32> -> vector<8x256xf32>
    %180 = arith.truncf %179 : vector<8x256xf32> to vector<8x256xbf16>
    %c0_62 = arith.constant 0 : index
    %c0_63 = arith.constant 0 : index
    %181 = vector.load %arg9[%c0_62, %c0_63] : memref<256x1024xbf16, #tpu.memory_space<vmem>>, vector<256x1024xbf16>
    %cst_64 = arith.constant dense<0.000000e+00> : vector<8x1024xf32>
    %182 = tpu.matmul %180, %181, %cst_64 {dimension_numbers = #tpu.dot_dimension_numbers<[1], [0], [0], [1], [0, 0, 1, 1], [], []>} : vector<8x256xbf16>, vector<256x1024xbf16>, vector<8x1024xf32> -> vector<8x1024xf32>
    %c2 = arith.constant 2 : index
    %c0_65 = arith.constant 0 : index
    %c0_66 = arith.constant 0 : index
    %183 = vector.load %arg8[%c2, %c0_65, %c0_66] : memref<8x8x1024xf32, #tpu.memory_space<vmem>>, vector<1x8x1024xf32>
    %184 = vector.shape_cast %183 : vector<1x8x1024xf32> to vector<8x1024xf32>
    %c5 = arith.constant 5 : index
    %c0_67 = arith.constant 0 : index
    %c0_68 = arith.constant 0 : index
    %185 = vector.load %arg8[%c5, %c0_67, %c0_68] : memref<8x8x1024xf32, #tpu.memory_space<vmem>>, vector<1x8x1024xf32>
    %186 = vector.shape_cast %185 : vector<1x8x1024xf32> to vector<8x1024xf32>
    %187 = vector.extract_strided_slice %182 {offsets = [0, 0], sizes = [8, 512], strides = [1, 1]} : vector<8x1024xf32> to vector<8x512xf32>
    %188 = vector.extract_strided_slice %184 {offsets = [0, 0], sizes = [8, 512], strides = [1, 1]} : vector<8x1024xf32> to vector<8x512xf32>
    %189 = arith.addf %187, %188 : vector<8x512xf32>
    %190 = vector.extract_strided_slice %182 {offsets = [0, 512], sizes = [8, 512], strides = [1, 1]} : vector<8x1024xf32> to vector<8x512xf32>
    %191 = vector.extract_strided_slice %186 {offsets = [0, 512], sizes = [8, 512], strides = [1, 1]} : vector<8x1024xf32> to vector<8x512xf32>
    %192 = arith.addf %190, %191 : vector<8x512xf32>
    %193 = vector.extract_strided_slice %189 {offsets = [0, 0], sizes = [8, 128], strides = [1, 1]} : vector<8x512xf32> to vector<8x128xf32>
    %194 = arith.negf %193 : vector<8x128xf32>
    %195 = math.exp %194 : vector<8x128xf32>
    %cst_69 = arith.constant 1.000000e+00 : f32
    %196 = vector.broadcast %cst_69 : f32 to vector<8x128xf32>
    %197 = arith.addf %196, %195 : vector<8x128xf32>
    %198 = arith.divf %196, %197 : vector<8x128xf32>
    %199 = vector.extract_strided_slice %189 {offsets = [0, 128], sizes = [8, 128], strides = [1, 1]} : vector<8x512xf32> to vector<8x128xf32>
    %200 = arith.negf %199 : vector<8x128xf32>
    %201 = math.exp %200 : vector<8x128xf32>
    %cst_70 = arith.constant 1.000000e+00 : f32
    %202 = vector.broadcast %cst_70 : f32 to vector<8x128xf32>
    %203 = arith.addf %202, %201 : vector<8x128xf32>
    %204 = arith.divf %202, %203 : vector<8x128xf32>
    %205 = vector.extract_strided_slice %189 {offsets = [0, 256], sizes = [8, 128], strides = [1, 1]} : vector<8x512xf32> to vector<8x128xf32>
    %206 = math.tanh %205 : vector<8x128xf32>
    %207 = vector.extract_strided_slice %189 {offsets = [0, 384], sizes = [8, 128], strides = [1, 1]} : vector<8x512xf32> to vector<8x128xf32>
    %208 = arith.negf %207 : vector<8x128xf32>
    %209 = math.exp %208 : vector<8x128xf32>
    %cst_71 = arith.constant 1.000000e+00 : f32
    %210 = vector.broadcast %cst_71 : f32 to vector<8x128xf32>
    %211 = arith.addf %210, %209 : vector<8x128xf32>
    %212 = arith.divf %210, %211 : vector<8x128xf32>
    %213 = arith.mulf %204, %127 : vector<8x128xf32>
    %214 = arith.mulf %198, %206 : vector<8x128xf32>
    %215 = arith.addf %213, %214 : vector<8x128xf32>
    %216 = math.tanh %215 : vector<8x128xf32>
    %217 = arith.mulf %212, %216 : vector<8x128xf32>
    %218 = vector.extract_strided_slice %192 {offsets = [0, 0], sizes = [8, 128], strides = [1, 1]} : vector<8x512xf32> to vector<8x128xf32>
    %219 = arith.negf %218 : vector<8x128xf32>
    %220 = math.exp %219 : vector<8x128xf32>
    %cst_72 = arith.constant 1.000000e+00 : f32
    %221 = vector.broadcast %cst_72 : f32 to vector<8x128xf32>
    %222 = arith.addf %221, %220 : vector<8x128xf32>
    %223 = arith.divf %221, %222 : vector<8x128xf32>
    %224 = vector.extract_strided_slice %192 {offsets = [0, 128], sizes = [8, 128], strides = [1, 1]} : vector<8x512xf32> to vector<8x128xf32>
    %225 = arith.negf %224 : vector<8x128xf32>
    %226 = math.exp %225 : vector<8x128xf32>
    %cst_73 = arith.constant 1.000000e+00 : f32
    %227 = vector.broadcast %cst_73 : f32 to vector<8x128xf32>
    %228 = arith.addf %227, %226 : vector<8x128xf32>
    %229 = arith.divf %227, %228 : vector<8x128xf32>
    %230 = vector.extract_strided_slice %192 {offsets = [0, 256], sizes = [8, 128], strides = [1, 1]} : vector<8x512xf32> to vector<8x128xf32>
    %231 = math.tanh %230 : vector<8x128xf32>
    %232 = vector.extract_strided_slice %192 {offsets = [0, 384], sizes = [8, 128], strides = [1, 1]} : vector<8x512xf32> to vector<8x128xf32>
    %233 = arith.negf %232 : vector<8x128xf32>
    %234 = math.exp %233 : vector<8x128xf32>
    %cst_74 = arith.constant 1.000000e+00 : f32
    %235 = vector.broadcast %cst_74 : f32 to vector<8x128xf32>
    %236 = arith.addf %235, %234 : vector<8x128xf32>
    %237 = arith.divf %235, %236 : vector<8x128xf32>
    %238 = arith.mulf %229, %160 : vector<8x128xf32>
    %239 = arith.mulf %223, %231 : vector<8x128xf32>
    %240 = arith.addf %238, %239 : vector<8x128xf32>
    %241 = math.tanh %240 : vector<8x128xf32>
    %242 = arith.mulf %237, %241 : vector<8x128xf32>
    %c5_75 = arith.constant 5 : index
    %c0_76 = arith.constant 0 : index
    %c0_77 = arith.constant 0 : index
    %243 = vector.load %arg1[%c5_75, %c0_76, %c0_77] : memref<8x8x1xf32, #tpu.memory_space<vmem>>, vector<1x8x1xf32>
    %244 = vector.shape_cast %243 : vector<1x8x1xf32> to vector<8x1xf32>
    %245 = vector.broadcast %244 : vector<8x1xf32> to vector<8x128xf32>
    %246 = arith.mulf %242, %245 : vector<8x128xf32>
    %247 = vector.broadcast %244 : vector<8x1xf32> to vector<8x128xf32>
    %248 = arith.mulf %240, %247 : vector<8x128xf32>
    %cst_78 = arith.constant 0.000000e+00 : f32
    %249 = vector.broadcast %cst_78 : f32 to vector<8x128xf32>
    %250 = arith.maximumf %217, %249 : vector<8x128xf32>
    %251 = vector.broadcast %8 : vector<1x128xf32> to vector<8x128xf32>
    %252 = arith.mulf %250, %251 : vector<8x128xf32>
    %cst_79 = arith.constant dense<0.000000e+00> : vector<8xf32>
    %253 = vector.multi_reduction <add>, %252, %cst_79 [1] : vector<8x128xf32> to vector<8xf32>
    %254 = vector.shape_cast %253 : vector<8xf32> to vector<8x1xf32>
    %c2_80 = arith.constant 2 : index
    %c0_81 = arith.constant 0 : index
    %c0_82 = arith.constant 0 : index
    %255 = vector.load %arg10[%c2_80, %c0_81, %c0_82] : memref<8x8x1xf32, #tpu.memory_space<vmem>>, vector<1x8x1xf32>
    %256 = vector.shape_cast %255 : vector<1x8x1xf32> to vector<8x1xf32>
    %257 = vector.shape_cast %254 : vector<8x1xf32> to vector<1x8x1xf32>
    tpu.vector_store %arg10[%c2_80, %c0_81, %c0_82], %257 {strides = array<i32>} : memref<8x8x1xf32, #tpu.memory_space<vmem>>, vector<1x8x1xf32>,
    %cst_83 = arith.constant 0.000000e+00 : f32
    %258 = vector.broadcast %cst_83 : f32 to vector<8x128xf32>
    %259 = arith.maximumf %246, %258 : vector<8x128xf32>
    %260 = vector.broadcast %9 : vector<1x128xf32> to vector<8x128xf32>
    %261 = arith.mulf %259, %260 : vector<8x128xf32>
    %cst_84 = arith.constant dense<0.000000e+00> : vector<8xf32>
    %262 = vector.multi_reduction <add>, %261, %cst_84 [1] : vector<8x128xf32> to vector<8xf32>
    %263 = vector.shape_cast %262 : vector<8xf32> to vector<8x1xf32>
    %c5_85 = arith.constant 5 : index
    %c0_86 = arith.constant 0 : index
    %c0_87 = arith.constant 0 : index
    %264 = vector.load %arg11[%c5_85, %c0_86, %c0_87] : memref<8x8x1xf32, #tpu.memory_space<vmem>>, vector<1x8x1xf32>
    %265 = vector.shape_cast %264 : vector<1x8x1xf32> to vector<8x1xf32>
    %266 = vector.shape_cast %263 : vector<8x1xf32> to vector<1x8x1xf32>
    tpu.vector_store %arg11[%c5_85, %c0_86, %c0_87], %266 {strides = array<i32>} : memref<8x8x1xf32, #tpu.memory_space<vmem>>, vector<1x8x1xf32>,
    %267 = tpu.concatenate %217, %246 in 1 : vector<8x128xf32>, vector<8x128xf32> -> vector<8x256xf32>
    %268 = arith.truncf %267 : vector<8x256xf32> to vector<8x256xbf16>
    %c0_88 = arith.constant 0 : index
    %c0_89 = arith.constant 0 : index
    %269 = vector.load %arg9[%c0_88, %c0_89] : memref<256x1024xbf16, #tpu.memory_space<vmem>>, vector<256x1024xbf16>
    %cst_90 = arith.constant dense<0.000000e+00> : vector<8x1024xf32>
    %270 = tpu.matmul %268, %269, %cst_90 {dimension_numbers = #tpu.dot_dimension_numbers<[1], [0], [0], [1], [0, 0, 1, 1], [], []>} : vector<8x256xbf16>, vector<256x1024xbf16>, vector<8x1024xf32> -> vector<8x1024xf32>
    %c3 = arith.constant 3 : index
    %c0_91 = arith.constant 0 : index
    %c0_92 = arith.constant 0 : index
    %271 = vector.load %arg8[%c3, %c0_91, %c0_92] : memref<8x8x1024xf32, #tpu.memory_space<vmem>>, vector<1x8x1024xf32>
    %272 = vector.shape_cast %271 : vector<1x8x1024xf32> to vector<8x1024xf32>
    %c4 = arith.constant 4 : index
    %c0_93 = arith.constant 0 : index
    %c0_94 = arith.constant 0 : index
    %273 = vector.load %arg8[%c4, %c0_93, %c0_94] : memref<8x8x1024xf32, #tpu.memory_space<vmem>>, vector<1x8x1024xf32>
    %274 = vector.shape_cast %273 : vector<1x8x1024xf32> to vector<8x1024xf32>
    %275 = vector.extract_strided_slice %270 {offsets = [0, 0], sizes = [8, 512], strides = [1, 1]} : vector<8x1024xf32> to vector<8x512xf32>
    %276 = vector.extract_strided_slice %272 {offsets = [0, 0], sizes = [8, 512], strides = [1, 1]} : vector<8x1024xf32> to vector<8x512xf32>
    %277 = arith.addf %275, %276 : vector<8x512xf32>
    %278 = vector.extract_strided_slice %270 {offsets = [0, 512], sizes = [8, 512], strides = [1, 1]} : vector<8x1024xf32> to vector<8x512xf32>
    %279 = vector.extract_strided_slice %274 {offsets = [0, 512], sizes = [8, 512], strides = [1, 1]} : vector<8x1024xf32> to vector<8x512xf32>
    %280 = arith.addf %278, %279 : vector<8x512xf32>
    %281 = vector.extract_strided_slice %277 {offsets = [0, 0], sizes = [8, 128], strides = [1, 1]} : vector<8x512xf32> to vector<8x128xf32>
    %282 = arith.negf %281 : vector<8x128xf32>
    %283 = math.exp %282 : vector<8x128xf32>
    %cst_95 = arith.constant 1.000000e+00 : f32
    %284 = vector.broadcast %cst_95 : f32 to vector<8x128xf32>
    %285 = arith.addf %284, %283 : vector<8x128xf32>
    %286 = arith.divf %284, %285 : vector<8x128xf32>
    %287 = vector.extract_strided_slice %277 {offsets = [0, 128], sizes = [8, 128], strides = [1, 1]} : vector<8x512xf32> to vector<8x128xf32>
    %288 = arith.negf %287 : vector<8x128xf32>
    %289 = math.exp %288 : vector<8x128xf32>
    %cst_96 = arith.constant 1.000000e+00 : f32
    %290 = vector.broadcast %cst_96 : f32 to vector<8x128xf32>
    %291 = arith.addf %290, %289 : vector<8x128xf32>
    %292 = arith.divf %290, %291 : vector<8x128xf32>
    %293 = vector.extract_strided_slice %277 {offsets = [0, 256], sizes = [8, 128], strides = [1, 1]} : vector<8x512xf32> to vector<8x128xf32>
    %294 = math.tanh %293 : vector<8x128xf32>
    %295 = vector.extract_strided_slice %277 {offsets = [0, 384], sizes = [8, 128], strides = [1, 1]} : vector<8x512xf32> to vector<8x128xf32>
    %296 = arith.negf %295 : vector<8x128xf32>
    %297 = math.exp %296 : vector<8x128xf32>
    %cst_97 = arith.constant 1.000000e+00 : f32
    %298 = vector.broadcast %cst_97 : f32 to vector<8x128xf32>
    %299 = arith.addf %298, %297 : vector<8x128xf32>
    %300 = arith.divf %298, %299 : vector<8x128xf32>
    %301 = arith.mulf %292, %215 : vector<8x128xf32>
    %302 = arith.mulf %286, %294 : vector<8x128xf32>
    %303 = arith.addf %301, %302 : vector<8x128xf32>
    %304 = math.tanh %303 : vector<8x128xf32>
    %305 = arith.mulf %300, %304 : vector<8x128xf32>
    %306 = vector.extract_strided_slice %280 {offsets = [0, 0], sizes = [8, 128], strides = [1, 1]} : vector<8x512xf32> to vector<8x128xf32>
    %307 = arith.negf %306 : vector<8x128xf32>
    %308 = math.exp %307 : vector<8x128xf32>
    %cst_98 = arith.constant 1.000000e+00 : f32
    %309 = vector.broadcast %cst_98 : f32 to vector<8x128xf32>
    %310 = arith.addf %309, %308 : vector<8x128xf32>
    %311 = arith.divf %309, %310 : vector<8x128xf32>
    %312 = vector.extract_strided_slice %280 {offsets = [0, 128], sizes = [8, 128], strides = [1, 1]} : vector<8x512xf32> to vector<8x128xf32>
    %313 = arith.negf %312 : vector<8x128xf32>
    %314 = math.exp %313 : vector<8x128xf32>
    %cst_99 = arith.constant 1.000000e+00 : f32
    %315 = vector.broadcast %cst_99 : f32 to vector<8x128xf32>
    %316 = arith.addf %315, %314 : vector<8x128xf32>
    %317 = arith.divf %315, %316 : vector<8x128xf32>
    %318 = vector.extract_strided_slice %280 {offsets = [0, 256], sizes = [8, 128], strides = [1, 1]} : vector<8x512xf32> to vector<8x128xf32>
    %319 = math.tanh %318 : vector<8x128xf32>
    %320 = vector.extract_strided_slice %280 {offsets = [0, 384], sizes = [8, 128], strides = [1, 1]} : vector<8x512xf32> to vector<8x128xf32>
    %321 = arith.negf %320 : vector<8x128xf32>
    %322 = math.exp %321 : vector<8x128xf32>
    %cst_100 = arith.constant 1.000000e+00 : f32
    %323 = vector.broadcast %cst_100 : f32 to vector<8x128xf32>
    %324 = arith.addf %323, %322 : vector<8x128xf32>
    %325 = arith.divf %323, %324 : vector<8x128xf32>
    %326 = arith.mulf %317, %248 : vector<8x128xf32>
    %327 = arith.mulf %311, %319 : vector<8x128xf32>
    %328 = arith.addf %326, %327 : vector<8x128xf32>
    %329 = math.tanh %328 : vector<8x128xf32>
    %330 = arith.mulf %325, %329 : vector<8x128xf32>
    %c4_101 = arith.constant 4 : index
    %c0_102 = arith.constant 0 : index
    %c0_103 = arith.constant 0 : index
    %331 = vector.load %arg1[%c4_101, %c0_102, %c0_103] : memref<8x8x1xf32, #tpu.memory_space<vmem>>, vector<1x8x1xf32>
    %332 = vector.shape_cast %331 : vector<1x8x1xf32> to vector<8x1xf32>
    %333 = vector.broadcast %332 : vector<8x1xf32> to vector<8x128xf32>
    %334 = arith.mulf %330, %333 : vector<8x128xf32>
    %335 = vector.broadcast %332 : vector<8x1xf32> to vector<8x128xf32>
    %336 = arith.mulf %328, %335 : vector<8x128xf32>
    %cst_104 = arith.constant 0.000000e+00 : f32
    %337 = vector.broadcast %cst_104 : f32 to vector<8x128xf32>
    %338 = arith.maximumf %305, %337 : vector<8x128xf32>
    %339 = vector.broadcast %8 : vector<1x128xf32> to vector<8x128xf32>
    %340 = arith.mulf %338, %339 : vector<8x128xf32>
    %cst_105 = arith.constant dense<0.000000e+00> : vector<8xf32>
    %341 = vector.multi_reduction <add>, %340, %cst_105 [1] : vector<8x128xf32> to vector<8xf32>
    %342 = vector.shape_cast %341 : vector<8xf32> to vector<8x1xf32>
    %c3_106 = arith.constant 3 : index
    %c0_107 = arith.constant 0 : index
    %c0_108 = arith.constant 0 : index
    %343 = vector.load %arg10[%c3_106, %c0_107, %c0_108] : memref<8x8x1xf32, #tpu.memory_space<vmem>>, vector<1x8x1xf32>
    %344 = vector.shape_cast %343 : vector<1x8x1xf32> to vector<8x1xf32>
    %345 = vector.shape_cast %342 : vector<8x1xf32> to vector<1x8x1xf32>
    tpu.vector_store %arg10[%c3_106, %c0_107, %c0_108], %345 {strides = array<i32>} : memref<8x8x1xf32, #tpu.memory_space<vmem>>, vector<1x8x1xf32>,
    %cst_109 = arith.constant 0.000000e+00 : f32
    %346 = vector.broadcast %cst_109 : f32 to vector<8x128xf32>
    %347 = arith.maximumf %334, %346 : vector<8x128xf32>
    %348 = vector.broadcast %9 : vector<1x128xf32> to vector<8x128xf32>
    %349 = arith.mulf %347, %348 : vector<8x128xf32>
    %cst_110 = arith.constant dense<0.000000e+00> : vector<8xf32>
    %350 = vector.multi_reduction <add>, %349, %cst_110 [1] : vector<8x128xf32> to vector<8xf32>
    %351 = vector.shape_cast %350 : vector<8xf32> to vector<8x1xf32>
    %c4_111 = arith.constant 4 : index
    %c0_112 = arith.constant 0 : index
    %c0_113 = arith.constant 0 : index
    %352 = vector.load %arg11[%c4_111, %c0_112, %c0_113] : memref<8x8x1xf32, #tpu.memory_space<vmem>>, vector<1x8x1xf32>
    %353 = vector.shape_cast %352 : vector<1x8x1xf32> to vector<8x1xf32>
    %354 = vector.shape_cast %351 : vector<8x1xf32> to vector<1x8x1xf32>
    tpu.vector_store %arg11[%c4_111, %c0_112, %c0_113], %354 {strides = array<i32>} : memref<8x8x1xf32, #tpu.memory_space<vmem>>, vector<1x8x1xf32>,
    %355 = tpu.concatenate %305, %334 in 1 : vector<8x128xf32>, vector<8x128xf32> -> vector<8x256xf32>
    %356 = arith.truncf %355 : vector<8x256xf32> to vector<8x256xbf16>
    %c0_114 = arith.constant 0 : index
    %c0_115 = arith.constant 0 : index
    %357 = vector.load %arg9[%c0_114, %c0_115] : memref<256x1024xbf16, #tpu.memory_space<vmem>>, vector<256x1024xbf16>
    %cst_116 = arith.constant dense<0.000000e+00> : vector<8x1024xf32>
    %358 = tpu.matmul %356, %357, %cst_116 {dimension_numbers = #tpu.dot_dimension_numbers<[1], [0], [0], [1], [0, 0, 1, 1], [], []>} : vector<8x256xbf16>, vector<256x1024xbf16>, vector<8x1024xf32> -> vector<8x1024xf32>
    %c4_117 = arith.constant 4 : index
    %c0_118 = arith.constant 0 : index
    %c0_119 = arith.constant 0 : index
    %359 = vector.load %arg8[%c4_117, %c0_118, %c0_119] : memref<8x8x1024xf32, #tpu.memory_space<vmem>>, vector<1x8x1024xf32>
    %360 = vector.shape_cast %359 : vector<1x8x1024xf32> to vector<8x1024xf32>
    %c3_120 = arith.constant 3 : index
    %c0_121 = arith.constant 0 : index
    %c0_122 = arith.constant 0 : index
    %361 = vector.load %arg8[%c3_120, %c0_121, %c0_122] : memref<8x8x1024xf32, #tpu.memory_space<vmem>>, vector<1x8x1024xf32>
    %362 = vector.shape_cast %361 : vector<1x8x1024xf32> to vector<8x1024xf32>
    %363 = vector.extract_strided_slice %358 {offsets = [0, 0], sizes = [8, 512], strides = [1, 1]} : vector<8x1024xf32> to vector<8x512xf32>
    %364 = vector.extract_strided_slice %360 {offsets = [0, 0], sizes = [8, 512], strides = [1, 1]} : vector<8x1024xf32> to vector<8x512xf32>
    %365 = arith.addf %363, %364 : vector<8x512xf32>
    %366 = vector.extract_strided_slice %358 {offsets = [0, 512], sizes = [8, 512], strides = [1, 1]} : vector<8x1024xf32> to vector<8x512xf32>
    %367 = vector.extract_strided_slice %362 {offsets = [0, 512], sizes = [8, 512], strides = [1, 1]} : vector<8x1024xf32> to vector<8x512xf32>
    %368 = arith.addf %366, %367 : vector<8x512xf32>
    %369 = vector.extract_strided_slice %365 {offsets = [0, 0], sizes = [8, 128], strides = [1, 1]} : vector<8x512xf32> to vector<8x128xf32>
    %370 = arith.negf %369 : vector<8x128xf32>
    %371 = math.exp %370 : vector<8x128xf32>
    %cst_123 = arith.constant 1.000000e+00 : f32
    %372 = vector.broadcast %cst_123 : f32 to vector<8x128xf32>
    %373 = arith.addf %372, %371 : vector<8x128xf32>
    %374 = arith.divf %372, %373 : vector<8x128xf32>
    %375 = vector.extract_strided_slice %365 {offsets = [0, 128], sizes = [8, 128], strides = [1, 1]} : vector<8x512xf32> to vector<8x128xf32>
    %376 = arith.negf %375 : vector<8x128xf32>
    %377 = math.exp %376 : vector<8x128xf32>
    %cst_124 = arith.constant 1.000000e+00 : f32
    %378 = vector.broadcast %cst_124 : f32 to vector<8x128xf32>
    %379 = arith.addf %378, %377 : vector<8x128xf32>
    %380 = arith.divf %378, %379 : vector<8x128xf32>
    %381 = vector.extract_strided_slice %365 {offsets = [0, 256], sizes = [8, 128], strides = [1, 1]} : vector<8x512xf32> to vector<8x128xf32>
    %382 = math.tanh %381 : vector<8x128xf32>
    %383 = vector.extract_strided_slice %365 {offsets = [0, 384], sizes = [8, 128], strides = [1, 1]} : vector<8x512xf32> to vector<8x128xf32>
    %384 = arith.negf %383 : vector<8x128xf32>
    %385 = math.exp %384 : vector<8x128xf32>
    %cst_125 = arith.constant 1.000000e+00 : f32
    %386 = vector.broadcast %cst_125 : f32 to vector<8x128xf32>
    %387 = arith.addf %386, %385 : vector<8x128xf32>
    %388 = arith.divf %386, %387 : vector<8x128xf32>
    %389 = arith.mulf %380, %303 : vector<8x128xf32>
    %390 = arith.mulf %374, %382 : vector<8x128xf32>
    %391 = arith.addf %389, %390 : vector<8x128xf32>
    %392 = math.tanh %391 : vector<8x128xf32>
    %393 = arith.mulf %388, %392 : vector<8x128xf32>
    %394 = vector.extract_strided_slice %368 {offsets = [0, 0], sizes = [8, 128], strides = [1, 1]} : vector<8x512xf32> to vector<8x128xf32>
    %395 = arith.negf %394 : vector<8x128xf32>
    %396 = math.exp %395 : vector<8x128xf32>
    %cst_126 = arith.constant 1.000000e+00 : f32
    %397 = vector.broadcast %cst_126 : f32 to vector<8x128xf32>
    %398 = arith.addf %397, %396 : vector<8x128xf32>
    %399 = arith.divf %397, %398 : vector<8x128xf32>
    %400 = vector.extract_strided_slice %368 {offsets = [0, 128], sizes = [8, 128], strides = [1, 1]} : vector<8x512xf32> to vector<8x128xf32>
    %401 = arith.negf %400 : vector<8x128xf32>
    %402 = math.exp %401 : vector<8x128xf32>
    %cst_127 = arith.constant 1.000000e+00 : f32
    %403 = vector.broadcast %cst_127 : f32 to vector<8x128xf32>
    %404 = arith.addf %403, %402 : vector<8x128xf32>
    %405 = arith.divf %403, %404 : vector<8x128xf32>
    %406 = vector.extract_strided_slice %368 {offsets = [0, 256], sizes = [8, 128], strides = [1, 1]} : vector<8x512xf32> to vector<8x128xf32>
    %407 = math.tanh %406 : vector<8x128xf32>
    %408 = vector.extract_strided_slice %368 {offsets = [0, 384], sizes = [8, 128], strides = [1, 1]} : vector<8x512xf32> to vector<8x128xf32>
    %409 = arith.negf %408 : vector<8x128xf32>
    %410 = math.exp %409 : vector<8x128xf32>
    %cst_128 = arith.constant 1.000000e+00 : f32
    %411 = vector.broadcast %cst_128 : f32 to vector<8x128xf32>
    %412 = arith.addf %411, %410 : vector<8x128xf32>
    %413 = arith.divf %411, %412 : vector<8x128xf32>
    %414 = arith.mulf %405, %336 : vector<8x128xf32>
    %415 = arith.mulf %399, %407 : vector<8x128xf32>
    %416 = arith.addf %414, %415 : vector<8x128xf32>
    %417 = math.tanh %416 : vector<8x128xf32>
    %418 = arith.mulf %413, %417 : vector<8x128xf32>
    %c3_129 = arith.constant 3 : index
    %c0_130 = arith.constant 0 : index
    %c0_131 = arith.constant 0 : index
    %419 = vector.load %arg1[%c3_129, %c0_130, %c0_131] : memref<8x8x1xf32, #tpu.memory_space<vmem>>, vector<1x8x1xf32>
    %420 = vector.shape_cast %419 : vector<1x8x1xf32> to vector<8x1xf32>
    %421 = vector.broadcast %420 : vector<8x1xf32> to vector<8x128xf32>
    %422 = arith.mulf %418, %421 : vector<8x128xf32>
    %423 = vector.broadcast %420 : vector<8x1xf32> to vector<8x128xf32>
    %424 = arith.mulf %416, %423 : vector<8x128xf32>
    %cst_132 = arith.constant 0.000000e+00 : f32
    %425 = vector.broadcast %cst_132 : f32 to vector<8x128xf32>
    %426 = arith.maximumf %393, %425 : vector<8x128xf32>
    %427 = vector.broadcast %8 : vector<1x128xf32> to vector<8x128xf32>
    %428 = arith.mulf %426, %427 : vector<8x128xf32>
    %cst_133 = arith.constant dense<0.000000e+00> : vector<8xf32>
    %429 = vector.multi_reduction <add>, %428, %cst_133 [1] : vector<8x128xf32> to vector<8xf32>
    %430 = vector.shape_cast %429 : vector<8xf32> to vector<8x1xf32>
    %c4_134 = arith.constant 4 : index
    %c0_135 = arith.constant 0 : index
    %c0_136 = arith.constant 0 : index
    %431 = vector.load %arg10[%c4_134, %c0_135, %c0_136] : memref<8x8x1xf32, #tpu.memory_space<vmem>>, vector<1x8x1xf32>
    %432 = vector.shape_cast %431 : vector<1x8x1xf32> to vector<8x1xf32>
    %433 = vector.shape_cast %430 : vector<8x1xf32> to vector<1x8x1xf32>
    tpu.vector_store %arg10[%c4_134, %c0_135, %c0_136], %433 {strides = array<i32>} : memref<8x8x1xf32, #tpu.memory_space<vmem>>, vector<1x8x1xf32>,
    %cst_137 = arith.constant 0.000000e+00 : f32
    %434 = vector.broadcast %cst_137 : f32 to vector<8x128xf32>
    %435 = arith.maximumf %422, %434 : vector<8x128xf32>
    %436 = vector.broadcast %9 : vector<1x128xf32> to vector<8x128xf32>
    %437 = arith.mulf %435, %436 : vector<8x128xf32>
    %cst_138 = arith.constant dense<0.000000e+00> : vector<8xf32>
    %438 = vector.multi_reduction <add>, %437, %cst_138 [1] : vector<8x128xf32> to vector<8xf32>
    %439 = vector.shape_cast %438 : vector<8xf32> to vector<8x1xf32>
    %c3_139 = arith.constant 3 : index
    %c0_140 = arith.constant 0 : index
    %c0_141 = arith.constant 0 : index
    %440 = vector.load %arg11[%c3_139, %c0_140, %c0_141] : memref<8x8x1xf32, #tpu.memory_space<vmem>>, vector<1x8x1xf32>
    %441 = vector.shape_cast %440 : vector<1x8x1xf32> to vector<8x1xf32>
    %442 = vector.shape_cast %439 : vector<8x1xf32> to vector<1x8x1xf32>
    tpu.vector_store %arg11[%c3_139, %c0_140, %c0_141], %442 {strides = array<i32>} : memref<8x8x1xf32, #tpu.memory_space<vmem>>, vector<1x8x1xf32>,
    %443 = tpu.concatenate %393, %422 in 1 : vector<8x128xf32>, vector<8x128xf32> -> vector<8x256xf32>
    %444 = arith.truncf %443 : vector<8x256xf32> to vector<8x256xbf16>
    %c0_142 = arith.constant 0 : index
    %c0_143 = arith.constant 0 : index
    %445 = vector.load %arg9[%c0_142, %c0_143] : memref<256x1024xbf16, #tpu.memory_space<vmem>>, vector<256x1024xbf16>
    %cst_144 = arith.constant dense<0.000000e+00> : vector<8x1024xf32>
    %446 = tpu.matmul %444, %445, %cst_144 {dimension_numbers = #tpu.dot_dimension_numbers<[1], [0], [0], [1], [0, 0, 1, 1], [], []>} : vector<8x256xbf16>, vector<256x1024xbf16>, vector<8x1024xf32> -> vector<8x1024xf32>
    %c5_145 = arith.constant 5 : index
    %c0_146 = arith.constant 0 : index
    %c0_147 = arith.constant 0 : index
    %447 = vector.load %arg8[%c5_145, %c0_146, %c0_147] : memref<8x8x1024xf32, #tpu.memory_space<vmem>>, vector<1x8x1024xf32>
    %448 = vector.shape_cast %447 : vector<1x8x1024xf32> to vector<8x1024xf32>
    %c2_148 = arith.constant 2 : index
    %c0_149 = arith.constant 0 : index
    %c0_150 = arith.constant 0 : index
    %449 = vector.load %arg8[%c2_148, %c0_149, %c0_150] : memref<8x8x1024xf32, #tpu.memory_space<vmem>>, vector<1x8x1024xf32>
    %450 = vector.shape_cast %449 : vector<1x8x1024xf32> to vector<8x1024xf32>
    %451 = vector.extract_strided_slice %446 {offsets = [0, 0], sizes = [8, 512], strides = [1, 1]} : vector<8x1024xf32> to vector<8x512xf32>
    %452 = vector.extract_strided_slice %448 {offsets = [0, 0], sizes = [8, 512], strides = [1, 1]} : vector<8x1024xf32> to vector<8x512xf32>
    %453 = arith.addf %451, %452 : vector<8x512xf32>
    %454 = vector.extract_strided_slice %446 {offsets = [0, 512], sizes = [8, 512], strides = [1, 1]} : vector<8x1024xf32> to vector<8x512xf32>
    %455 = vector.extract_strided_slice %450 {offsets = [0, 512], sizes = [8, 512], strides = [1, 1]} : vector<8x1024xf32> to vector<8x512xf32>
    %456 = arith.addf %454, %455 : vector<8x512xf32>
    %457 = vector.extract_strided_slice %453 {offsets = [0, 0], sizes = [8, 128], strides = [1, 1]} : vector<8x512xf32> to vector<8x128xf32>
    %458 = arith.negf %457 : vector<8x128xf32>
    %459 = math.exp %458 : vector<8x128xf32>
    %cst_151 = arith.constant 1.000000e+00 : f32
    %460 = vector.broadcast %cst_151 : f32 to vector<8x128xf32>
    %461 = arith.addf %460, %459 : vector<8x128xf32>
    %462 = arith.divf %460, %461 : vector<8x128xf32>
    %463 = vector.extract_strided_slice %453 {offsets = [0, 128], sizes = [8, 128], strides = [1, 1]} : vector<8x512xf32> to vector<8x128xf32>
    %464 = arith.negf %463 : vector<8x128xf32>
    %465 = math.exp %464 : vector<8x128xf32>
    %cst_152 = arith.constant 1.000000e+00 : f32
    %466 = vector.broadcast %cst_152 : f32 to vector<8x128xf32>
    %467 = arith.addf %466, %465 : vector<8x128xf32>
    %468 = arith.divf %466, %467 : vector<8x128xf32>
    %469 = vector.extract_strided_slice %453 {offsets = [0, 256], sizes = [8, 128], strides = [1, 1]} : vector<8x512xf32> to vector<8x128xf32>
    %470 = math.tanh %469 : vector<8x128xf32>
    %471 = vector.extract_strided_slice %453 {offsets = [0, 384], sizes = [8, 128], strides = [1, 1]} : vector<8x512xf32> to vector<8x128xf32>
    %472 = arith.negf %471 : vector<8x128xf32>
    %473 = math.exp %472 : vector<8x128xf32>
    %cst_153 = arith.constant 1.000000e+00 : f32
    %474 = vector.broadcast %cst_153 : f32 to vector<8x128xf32>
    %475 = arith.addf %474, %473 : vector<8x128xf32>
    %476 = arith.divf %474, %475 : vector<8x128xf32>
    %477 = arith.mulf %468, %391 : vector<8x128xf32>
    %478 = arith.mulf %462, %470 : vector<8x128xf32>
    %479 = arith.addf %477, %478 : vector<8x128xf32>
    %480 = math.tanh %479 : vector<8x128xf32>
    %481 = arith.mulf %476, %480 : vector<8x128xf32>
    %482 = vector.extract_strided_slice %456 {offsets = [0, 0], sizes = [8, 128], strides = [1, 1]} : vector<8x512xf32> to vector<8x128xf32>
    %483 = arith.negf %482 : vector<8x128xf32>
    %484 = math.exp %483 : vector<8x128xf32>
    %cst_154 = arith.constant 1.000000e+00 : f32
    %485 = vector.broadcast %cst_154 : f32 to vector<8x128xf32>
    %486 = arith.addf %485, %484 : vector<8x128xf32>
    %487 = arith.divf %485, %486 : vector<8x128xf32>
    %488 = vector.extract_strided_slice %456 {offsets = [0, 128], sizes = [8, 128], strides = [1, 1]} : vector<8x512xf32> to vector<8x128xf32>
    %489 = arith.negf %488 : vector<8x128xf32>
    %490 = math.exp %489 : vector<8x128xf32>
    %cst_155 = arith.constant 1.000000e+00 : f32
    %491 = vector.broadcast %cst_155 : f32 to vector<8x128xf32>
    %492 = arith.addf %491, %490 : vector<8x128xf32>
    %493 = arith.divf %491, %492 : vector<8x128xf32>
    %494 = vector.extract_strided_slice %456 {offsets = [0, 256], sizes = [8, 128], strides = [1, 1]} : vector<8x512xf32> to vector<8x128xf32>
    %495 = math.tanh %494 : vector<8x128xf32>
    %496 = vector.extract_strided_slice %456 {offsets = [0, 384], sizes = [8, 128], strides = [1, 1]} : vector<8x512xf32> to vector<8x128xf32>
    %497 = arith.negf %496 : vector<8x128xf32>
    %498 = math.exp %497 : vector<8x128xf32>
    %cst_156 = arith.constant 1.000000e+00 : f32
    %499 = vector.broadcast %cst_156 : f32 to vector<8x128xf32>
    %500 = arith.addf %499, %498 : vector<8x128xf32>
    %501 = arith.divf %499, %500 : vector<8x128xf32>
    %502 = arith.mulf %493, %424 : vector<8x128xf32>
    %503 = arith.mulf %487, %495 : vector<8x128xf32>
    %504 = arith.addf %502, %503 : vector<8x128xf32>
    %505 = math.tanh %504 : vector<8x128xf32>
    %506 = arith.mulf %501, %505 : vector<8x128xf32>
    %c2_157 = arith.constant 2 : index
    %c0_158 = arith.constant 0 : index
    %c0_159 = arith.constant 0 : index
    %507 = vector.load %arg1[%c2_157, %c0_158, %c0_159] : memref<8x8x1xf32, #tpu.memory_space<vmem>>, vector<1x8x1xf32>
    %508 = vector.shape_cast %507 : vector<1x8x1xf32> to vector<8x1xf32>
    %509 = vector.broadcast %508 : vector<8x1xf32> to vector<8x128xf32>
    %510 = arith.mulf %506, %509 : vector<8x128xf32>
    %511 = vector.broadcast %508 : vector<8x1xf32> to vector<8x128xf32>
    %512 = arith.mulf %504, %511 : vector<8x128xf32>
    %cst_160 = arith.constant 0.000000e+00 : f32
    %513 = vector.broadcast %cst_160 : f32 to vector<8x128xf32>
    %514 = arith.maximumf %481, %513 : vector<8x128xf32>
    %515 = vector.broadcast %8 : vector<1x128xf32> to vector<8x128xf32>
    %516 = arith.mulf %514, %515 : vector<8x128xf32>
    %cst_161 = arith.constant dense<0.000000e+00> : vector<8xf32>
    %517 = vector.multi_reduction <add>, %516, %cst_161 [1] : vector<8x128xf32> to vector<8xf32>
    %518 = vector.shape_cast %517 : vector<8xf32> to vector<8x1xf32>
    %c5_162 = arith.constant 5 : index
    %c0_163 = arith.constant 0 : index
    %c0_164 = arith.constant 0 : index
    %519 = vector.load %arg10[%c5_162, %c0_163, %c0_164] : memref<8x8x1xf32, #tpu.memory_space<vmem>>, vector<1x8x1xf32>
    %520 = vector.shape_cast %519 : vector<1x8x1xf32> to vector<8x1xf32>
    %521 = vector.shape_cast %518 : vector<8x1xf32> to vector<1x8x1xf32>
    tpu.vector_store %arg10[%c5_162, %c0_163, %c0_164], %521 {strides = array<i32>} : memref<8x8x1xf32, #tpu.memory_space<vmem>>, vector<1x8x1xf32>,
    %cst_165 = arith.constant 0.000000e+00 : f32
    %522 = vector.broadcast %cst_165 : f32 to vector<8x128xf32>
    %523 = arith.maximumf %510, %522 : vector<8x128xf32>
    %524 = vector.broadcast %9 : vector<1x128xf32> to vector<8x128xf32>
    %525 = arith.mulf %523, %524 : vector<8x128xf32>
    %cst_166 = arith.constant dense<0.000000e+00> : vector<8xf32>
    %526 = vector.multi_reduction <add>, %525, %cst_166 [1] : vector<8x128xf32> to vector<8xf32>
    %527 = vector.shape_cast %526 : vector<8xf32> to vector<8x1xf32>
    %c2_167 = arith.constant 2 : index
    %c0_168 = arith.constant 0 : index
    %c0_169 = arith.constant 0 : index
    %528 = vector.load %arg11[%c2_167, %c0_168, %c0_169] : memref<8x8x1xf32, #tpu.memory_space<vmem>>, vector<1x8x1xf32>
    %529 = vector.shape_cast %528 : vector<1x8x1xf32> to vector<8x1xf32>
    %530 = vector.shape_cast %527 : vector<8x1xf32> to vector<1x8x1xf32>
    tpu.vector_store %arg11[%c2_167, %c0_168, %c0_169], %530 {strides = array<i32>} : memref<8x8x1xf32, #tpu.memory_space<vmem>>, vector<1x8x1xf32>,
    %531 = tpu.concatenate %481, %510 in 1 : vector<8x128xf32>, vector<8x128xf32> -> vector<8x256xf32>
    %532 = arith.truncf %531 : vector<8x256xf32> to vector<8x256xbf16>
    %c0_170 = arith.constant 0 : index
    %c0_171 = arith.constant 0 : index
    %533 = vector.load %arg9[%c0_170, %c0_171] : memref<256x1024xbf16, #tpu.memory_space<vmem>>, vector<256x1024xbf16>
    %cst_172 = arith.constant dense<0.000000e+00> : vector<8x1024xf32>
    %534 = tpu.matmul %532, %533, %cst_172 {dimension_numbers = #tpu.dot_dimension_numbers<[1], [0], [0], [1], [0, 0, 1, 1], [], []>} : vector<8x256xbf16>, vector<256x1024xbf16>, vector<8x1024xf32> -> vector<8x1024xf32>
    %c6_173 = arith.constant 6 : index
    %c0_174 = arith.constant 0 : index
    %c0_175 = arith.constant 0 : index
    %535 = vector.load %arg8[%c6_173, %c0_174, %c0_175] : memref<8x8x1024xf32, #tpu.memory_space<vmem>>, vector<1x8x1024xf32>
    %536 = vector.shape_cast %535 : vector<1x8x1024xf32> to vector<8x1024xf32>
    %c1_176 = arith.constant 1 : index
    %c0_177 = arith.constant 0 : index
    %c0_178 = arith.constant 0 : index
    %537 = vector.load %arg8[%c1_176, %c0_177, %c0_178] : memref<8x8x1024xf32, #tpu.memory_space<vmem>>, vector<1x8x1024xf32>
    %538 = vector.shape_cast %537 : vector<1x8x1024xf32> to vector<8x1024xf32>
    %539 = vector.extract_strided_slice %534 {offsets = [0, 0], sizes = [8, 512], strides = [1, 1]} : vector<8x1024xf32> to vector<8x512xf32>
    %540 = vector.extract_strided_slice %536 {offsets = [0, 0], sizes = [8, 512], strides = [1, 1]} : vector<8x1024xf32> to vector<8x512xf32>
    %541 = arith.addf %539, %540 : vector<8x512xf32>
    %542 = vector.extract_strided_slice %534 {offsets = [0, 512], sizes = [8, 512], strides = [1, 1]} : vector<8x1024xf32> to vector<8x512xf32>
    %543 = vector.extract_strided_slice %538 {offsets = [0, 512], sizes = [8, 512], strides = [1, 1]} : vector<8x1024xf32> to vector<8x512xf32>
    %544 = arith.addf %542, %543 : vector<8x512xf32>
    %545 = vector.extract_strided_slice %541 {offsets = [0, 0], sizes = [8, 128], strides = [1, 1]} : vector<8x512xf32> to vector<8x128xf32>
    %546 = arith.negf %545 : vector<8x128xf32>
    %547 = math.exp %546 : vector<8x128xf32>
    %cst_179 = arith.constant 1.000000e+00 : f32
    %548 = vector.broadcast %cst_179 : f32 to vector<8x128xf32>
    %549 = arith.addf %548, %547 : vector<8x128xf32>
    %550 = arith.divf %548, %549 : vector<8x128xf32>
    %551 = vector.extract_strided_slice %541 {offsets = [0, 128], sizes = [8, 128], strides = [1, 1]} : vector<8x512xf32> to vector<8x128xf32>
    %552 = arith.negf %551 : vector<8x128xf32>
    %553 = math.exp %552 : vector<8x128xf32>
    %cst_180 = arith.constant 1.000000e+00 : f32
    %554 = vector.broadcast %cst_180 : f32 to vector<8x128xf32>
    %555 = arith.addf %554, %553 : vector<8x128xf32>
    %556 = arith.divf %554, %555 : vector<8x128xf32>
    %557 = vector.extract_strided_slice %541 {offsets = [0, 256], sizes = [8, 128], strides = [1, 1]} : vector<8x512xf32> to vector<8x128xf32>
    %558 = math.tanh %557 : vector<8x128xf32>
    %559 = vector.extract_strided_slice %541 {offsets = [0, 384], sizes = [8, 128], strides = [1, 1]} : vector<8x512xf32> to vector<8x128xf32>
    %560 = arith.negf %559 : vector<8x128xf32>
    %561 = math.exp %560 : vector<8x128xf32>
    %cst_181 = arith.constant 1.000000e+00 : f32
    %562 = vector.broadcast %cst_181 : f32 to vector<8x128xf32>
    %563 = arith.addf %562, %561 : vector<8x128xf32>
    %564 = arith.divf %562, %563 : vector<8x128xf32>
    %565 = arith.mulf %556, %479 : vector<8x128xf32>
    %566 = arith.mulf %550, %558 : vector<8x128xf32>
    %567 = arith.addf %565, %566 : vector<8x128xf32>
    %568 = math.tanh %567 : vector<8x128xf32>
    %569 = arith.mulf %564, %568 : vector<8x128xf32>
    %570 = vector.extract_strided_slice %544 {offsets = [0, 0], sizes = [8, 128], strides = [1, 1]} : vector<8x512xf32> to vector<8x128xf32>
    %571 = arith.negf %570 : vector<8x128xf32>
    %572 = math.exp %571 : vector<8x128xf32>
    %cst_182 = arith.constant 1.000000e+00 : f32
    %573 = vector.broadcast %cst_182 : f32 to vector<8x128xf32>
    %574 = arith.addf %573, %572 : vector<8x128xf32>
    %575 = arith.divf %573, %574 : vector<8x128xf32>
    %576 = vector.extract_strided_slice %544 {offsets = [0, 128], sizes = [8, 128], strides = [1, 1]} : vector<8x512xf32> to vector<8x128xf32>
    %577 = arith.negf %576 : vector<8x128xf32>
    %578 = math.exp %577 : vector<8x128xf32>
    %cst_183 = arith.constant 1.000000e+00 : f32
    %579 = vector.broadcast %cst_183 : f32 to vector<8x128xf32>
    %580 = arith.addf %579, %578 : vector<8x128xf32>
    %581 = arith.divf %579, %580 : vector<8x128xf32>
    %582 = vector.extract_strided_slice %544 {offsets = [0, 256], sizes = [8, 128], strides = [1, 1]} : vector<8x512xf32> to vector<8x128xf32>
    %583 = math.tanh %582 : vector<8x128xf32>
    %584 = vector.extract_strided_slice %544 {offsets = [0, 384], sizes = [8, 128], strides = [1, 1]} : vector<8x512xf32> to vector<8x128xf32>
    %585 = arith.negf %584 : vector<8x128xf32>
    %586 = math.exp %585 : vector<8x128xf32>
    %cst_184 = arith.constant 1.000000e+00 : f32
    %587 = vector.broadcast %cst_184 : f32 to vector<8x128xf32>
    %588 = arith.addf %587, %586 : vector<8x128xf32>
    %589 = arith.divf %587, %588 : vector<8x128xf32>
    %590 = arith.mulf %581, %512 : vector<8x128xf32>
    %591 = arith.mulf %575, %583 : vector<8x128xf32>
    %592 = arith.addf %590, %591 : vector<8x128xf32>
    %593 = math.tanh %592 : vector<8x128xf32>
    %594 = arith.mulf %589, %593 : vector<8x128xf32>
    %c1_185 = arith.constant 1 : index
    %c0_186 = arith.constant 0 : index
    %c0_187 = arith.constant 0 : index
    %595 = vector.load %arg1[%c1_185, %c0_186, %c0_187] : memref<8x8x1xf32, #tpu.memory_space<vmem>>, vector<1x8x1xf32>
    %596 = vector.shape_cast %595 : vector<1x8x1xf32> to vector<8x1xf32>
    %597 = vector.broadcast %596 : vector<8x1xf32> to vector<8x128xf32>
    %598 = arith.mulf %594, %597 : vector<8x128xf32>
    %599 = vector.broadcast %596 : vector<8x1xf32> to vector<8x128xf32>
    %600 = arith.mulf %592, %599 : vector<8x128xf32>
    %cst_188 = arith.constant 0.000000e+00 : f32
    %601 = vector.broadcast %cst_188 : f32 to vector<8x128xf32>
    %602 = arith.maximumf %569, %601 : vector<8x128xf32>
    %603 = vector.broadcast %8 : vector<1x128xf32> to vector<8x128xf32>
    %604 = arith.mulf %602, %603 : vector<8x128xf32>
    %cst_189 = arith.constant dense<0.000000e+00> : vector<8xf32>
    %605 = vector.multi_reduction <add>, %604, %cst_189 [1] : vector<8x128xf32> to vector<8xf32>
    %606 = vector.shape_cast %605 : vector<8xf32> to vector<8x1xf32>
    %c6_190 = arith.constant 6 : index
    %c0_191 = arith.constant 0 : index
    %c0_192 = arith.constant 0 : index
    %607 = vector.load %arg10[%c6_190, %c0_191, %c0_192] : memref<8x8x1xf32, #tpu.memory_space<vmem>>, vector<1x8x1xf32>
    %608 = vector.shape_cast %607 : vector<1x8x1xf32> to vector<8x1xf32>
    %609 = vector.shape_cast %606 : vector<8x1xf32> to vector<1x8x1xf32>
    tpu.vector_store %arg10[%c6_190, %c0_191, %c0_192], %609 {strides = array<i32>} : memref<8x8x1xf32, #tpu.memory_space<vmem>>, vector<1x8x1xf32>,
    %cst_193 = arith.constant 0.000000e+00 : f32
    %610 = vector.broadcast %cst_193 : f32 to vector<8x128xf32>
    %611 = arith.maximumf %598, %610 : vector<8x128xf32>
    %612 = vector.broadcast %9 : vector<1x128xf32> to vector<8x128xf32>
    %613 = arith.mulf %611, %612 : vector<8x128xf32>
    %cst_194 = arith.constant dense<0.000000e+00> : vector<8xf32>
    %614 = vector.multi_reduction <add>, %613, %cst_194 [1] : vector<8x128xf32> to vector<8xf32>
    %615 = vector.shape_cast %614 : vector<8xf32> to vector<8x1xf32>
    %c1_195 = arith.constant 1 : index
    %c0_196 = arith.constant 0 : index
    %c0_197 = arith.constant 0 : index
    %616 = vector.load %arg11[%c1_195, %c0_196, %c0_197] : memref<8x8x1xf32, #tpu.memory_space<vmem>>, vector<1x8x1xf32>
    %617 = vector.shape_cast %616 : vector<1x8x1xf32> to vector<8x1xf32>
    %618 = vector.shape_cast %615 : vector<8x1xf32> to vector<1x8x1xf32>
    tpu.vector_store %arg11[%c1_195, %c0_196, %c0_197], %618 {strides = array<i32>} : memref<8x8x1xf32, #tpu.memory_space<vmem>>, vector<1x8x1xf32>,
    %619 = tpu.concatenate %569, %598 in 1 : vector<8x128xf32>, vector<8x128xf32> -> vector<8x256xf32>
    %620 = arith.truncf %619 : vector<8x256xf32> to vector<8x256xbf16>
    %c0_198 = arith.constant 0 : index
    %c0_199 = arith.constant 0 : index
    %621 = vector.load %arg9[%c0_198, %c0_199] : memref<256x1024xbf16, #tpu.memory_space<vmem>>, vector<256x1024xbf16>
    %cst_200 = arith.constant dense<0.000000e+00> : vector<8x1024xf32>
    %622 = tpu.matmul %620, %621, %cst_200 {dimension_numbers = #tpu.dot_dimension_numbers<[1], [0], [0], [1], [0, 0, 1, 1], [], []>} : vector<8x256xbf16>, vector<256x1024xbf16>, vector<8x1024xf32> -> vector<8x1024xf32>
    %c7_201 = arith.constant 7 : index
    %c0_202 = arith.constant 0 : index
    %c0_203 = arith.constant 0 : index
    %623 = vector.load %arg8[%c7_201, %c0_202, %c0_203] : memref<8x8x1024xf32, #tpu.memory_space<vmem>>, vector<1x8x1024xf32>
    %624 = vector.shape_cast %623 : vector<1x8x1024xf32> to vector<8x1024xf32>
    %c0_204 = arith.constant 0 : index
    %c0_205 = arith.constant 0 : index
    %c0_206 = arith.constant 0 : index
    %625 = vector.load %arg8[%c0_204, %c0_205, %c0_206] : memref<8x8x1024xf32, #tpu.memory_space<vmem>>, vector<1x8x1024xf32>
    %626 = vector.shape_cast %625 : vector<1x8x1024xf32> to vector<8x1024xf32>
    %627 = vector.extract_strided_slice %622 {offsets = [0, 0], sizes = [8, 512], strides = [1, 1]} : vector<8x1024xf32> to vector<8x512xf32>
    %628 = vector.extract_strided_slice %624 {offsets = [0, 0], sizes = [8, 512], strides = [1, 1]} : vector<8x1024xf32> to vector<8x512xf32>
    %629 = arith.addf %627, %628 : vector<8x512xf32>
    %630 = vector.extract_strided_slice %622 {offsets = [0, 512], sizes = [8, 512], strides = [1, 1]} : vector<8x1024xf32> to vector<8x512xf32>
    %631 = vector.extract_strided_slice %626 {offsets = [0, 512], sizes = [8, 512], strides = [1, 1]} : vector<8x1024xf32> to vector<8x512xf32>
    %632 = arith.addf %630, %631 : vector<8x512xf32>
    %633 = vector.extract_strided_slice %629 {offsets = [0, 0], sizes = [8, 128], strides = [1, 1]} : vector<8x512xf32> to vector<8x128xf32>
    %634 = arith.negf %633 : vector<8x128xf32>
    %635 = math.exp %634 : vector<8x128xf32>
    %cst_207 = arith.constant 1.000000e+00 : f32
    %636 = vector.broadcast %cst_207 : f32 to vector<8x128xf32>
    %637 = arith.addf %636, %635 : vector<8x128xf32>
    %638 = arith.divf %636, %637 : vector<8x128xf32>
    %639 = vector.extract_strided_slice %629 {offsets = [0, 128], sizes = [8, 128], strides = [1, 1]} : vector<8x512xf32> to vector<8x128xf32>
    %640 = arith.negf %639 : vector<8x128xf32>
    %641 = math.exp %640 : vector<8x128xf32>
    %cst_208 = arith.constant 1.000000e+00 : f32
    %642 = vector.broadcast %cst_208 : f32 to vector<8x128xf32>
    %643 = arith.addf %642, %641 : vector<8x128xf32>
    %644 = arith.divf %642, %643 : vector<8x128xf32>
    %645 = vector.extract_strided_slice %629 {offsets = [0, 256], sizes = [8, 128], strides = [1, 1]} : vector<8x512xf32> to vector<8x128xf32>
    %646 = math.tanh %645 : vector<8x128xf32>
    %647 = vector.extract_strided_slice %629 {offsets = [0, 384], sizes = [8, 128], strides = [1, 1]} : vector<8x512xf32> to vector<8x128xf32>
    %648 = arith.negf %647 : vector<8x128xf32>
    %649 = math.exp %648 : vector<8x128xf32>
    %cst_209 = arith.constant 1.000000e+00 : f32
    %650 = vector.broadcast %cst_209 : f32 to vector<8x128xf32>
    %651 = arith.addf %650, %649 : vector<8x128xf32>
    %652 = arith.divf %650, %651 : vector<8x128xf32>
    %653 = arith.mulf %644, %567 : vector<8x128xf32>
    %654 = arith.mulf %638, %646 : vector<8x128xf32>
    %655 = arith.addf %653, %654 : vector<8x128xf32>
    %656 = math.tanh %655 : vector<8x128xf32>
    %657 = arith.mulf %652, %656 : vector<8x128xf32>
    %658 = vector.extract_strided_slice %632 {offsets = [0, 0], sizes = [8, 128], strides = [1, 1]} : vector<8x512xf32> to vector<8x128xf32>
    %659 = arith.negf %658 : vector<8x128xf32>
    %660 = math.exp %659 : vector<8x128xf32>
    %cst_210 = arith.constant 1.000000e+00 : f32
    %661 = vector.broadcast %cst_210 : f32 to vector<8x128xf32>
    %662 = arith.addf %661, %660 : vector<8x128xf32>
    %663 = arith.divf %661, %662 : vector<8x128xf32>
    %664 = vector.extract_strided_slice %632 {offsets = [0, 128], sizes = [8, 128], strides = [1, 1]} : vector<8x512xf32> to vector<8x128xf32>
    %665 = arith.negf %664 : vector<8x128xf32>
    %666 = math.exp %665 : vector<8x128xf32>
    %cst_211 = arith.constant 1.000000e+00 : f32
    %667 = vector.broadcast %cst_211 : f32 to vector<8x128xf32>
    %668 = arith.addf %667, %666 : vector<8x128xf32>
    %669 = arith.divf %667, %668 : vector<8x128xf32>
    %670 = vector.extract_strided_slice %632 {offsets = [0, 256], sizes = [8, 128], strides = [1, 1]} : vector<8x512xf32> to vector<8x128xf32>
    %671 = math.tanh %670 : vector<8x128xf32>
    %672 = vector.extract_strided_slice %632 {offsets = [0, 384], sizes = [8, 128], strides = [1, 1]} : vector<8x512xf32> to vector<8x128xf32>
    %673 = arith.negf %672 : vector<8x128xf32>
    %674 = math.exp %673 : vector<8x128xf32>
    %cst_212 = arith.constant 1.000000e+00 : f32
    %675 = vector.broadcast %cst_212 : f32 to vector<8x128xf32>
    %676 = arith.addf %675, %674 : vector<8x128xf32>
    %677 = arith.divf %675, %676 : vector<8x128xf32>
    %678 = arith.mulf %669, %600 : vector<8x128xf32>
    %679 = arith.mulf %663, %671 : vector<8x128xf32>
    %680 = arith.addf %678, %679 : vector<8x128xf32>
    %681 = math.tanh %680 : vector<8x128xf32>
    %682 = arith.mulf %677, %681 : vector<8x128xf32>
    %c0_213 = arith.constant 0 : index
    %c0_214 = arith.constant 0 : index
    %c0_215 = arith.constant 0 : index
    %683 = vector.load %arg1[%c0_213, %c0_214, %c0_215] : memref<8x8x1xf32, #tpu.memory_space<vmem>>, vector<1x8x1xf32>
    %684 = vector.shape_cast %683 : vector<1x8x1xf32> to vector<8x1xf32>
    %685 = vector.broadcast %684 : vector<8x1xf32> to vector<8x128xf32>
    %686 = arith.mulf %682, %685 : vector<8x128xf32>
    %cst_216 = arith.constant 0.000000e+00 : f32
    %687 = vector.broadcast %cst_216 : f32 to vector<8x128xf32>
    %688 = arith.maximumf %657, %687 : vector<8x128xf32>
    %689 = vector.broadcast %8 : vector<1x128xf32> to vector<8x128xf32>
    %690 = arith.mulf %688, %689 : vector<8x128xf32>
    %cst_217 = arith.constant dense<0.000000e+00> : vector<8xf32>
    %691 = vector.multi_reduction <add>, %690, %cst_217 [1] : vector<8x128xf32> to vector<8xf32>
    %692 = vector.shape_cast %691 : vector<8xf32> to vector<8x1xf32>
    %c7_218 = arith.constant 7 : index
    %c0_219 = arith.constant 0 : index
    %c0_220 = arith.constant 0 : index
    %693 = vector.load %arg10[%c7_218, %c0_219, %c0_220] : memref<8x8x1xf32, #tpu.memory_space<vmem>>, vector<1x8x1xf32>
    %694 = vector.shape_cast %693 : vector<1x8x1xf32> to vector<8x1xf32>
    %695 = vector.shape_cast %692 : vector<8x1xf32> to vector<1x8x1xf32>
    tpu.vector_store %arg10[%c7_218, %c0_219, %c0_220], %695 {strides = array<i32>} : memref<8x8x1xf32, #tpu.memory_space<vmem>>, vector<1x8x1xf32>,
    %cst_221 = arith.constant 0.000000e+00 : f32
    %696 = vector.broadcast %cst_221 : f32 to vector<8x128xf32>
    %697 = arith.maximumf %686, %696 : vector<8x128xf32>
    %698 = vector.broadcast %9 : vector<1x128xf32> to vector<8x128xf32>
    %699 = arith.mulf %697, %698 : vector<8x128xf32>
    %cst_222 = arith.constant dense<0.000000e+00> : vector<8xf32>
    %700 = vector.multi_reduction <add>, %699, %cst_222 [1] : vector<8x128xf32> to vector<8xf32>
    %701 = vector.shape_cast %700 : vector<8xf32> to vector<8x1xf32>
    %c0_223 = arith.constant 0 : index
    %c0_224 = arith.constant 0 : index
    %c0_225 = arith.constant 0 : index
    %702 = vector.load %arg11[%c0_223, %c0_224, %c0_225] : memref<8x8x1xf32, #tpu.memory_space<vmem>>, vector<1x8x1xf32>
    %703 = vector.shape_cast %702 : vector<1x8x1xf32> to vector<8x1xf32>
    %704 = vector.shape_cast %701 : vector<8x1xf32> to vector<1x8x1xf32>
    tpu.vector_store %arg11[%c0_223, %c0_224, %c0_225], %704 {strides = array<i32>} : memref<8x8x1xf32, #tpu.memory_space<vmem>>, vector<1x8x1xf32>,
    %c0_226 = arith.constant 0 : index
    %c0_227 = arith.constant 0 : index
    %c0_228 = arith.constant 0 : index
    %705 = vector.load %arg10[%c0_226, %c0_227, %c0_228] : memref<8x8x1xf32, #tpu.memory_space<vmem>>, vector<8x8x1xf32>
    %c0_229 = arith.constant 0 : index
    %c0_230 = arith.constant 0 : index
    %c0_231 = arith.constant 0 : index
    %706 = vector.load %arg1[%c0_229, %c0_230, %c0_231] : memref<8x8x1xf32, #tpu.memory_space<vmem>>, vector<8x8x1xf32>
    %707 = arith.mulf %705, %706 : vector<8x8x1xf32>
    %c0_232 = arith.constant 0 : index
    %c0_233 = arith.constant 0 : index
    %c0_234 = arith.constant 0 : index
    %708 = vector.load %arg11[%c0_232, %c0_233, %c0_234] : memref<8x8x1xf32, #tpu.memory_space<vmem>>, vector<8x8x1xf32>
    %709 = arith.addf %707, %708 : vector<8x8x1xf32>
    %c0_235 = arith.constant 0 : index
    %c0_236 = arith.constant 0 : index
    %710 = vector.load %arg6[%c0_235, %c0_236] : memref<1x1xf32, #tpu.memory_space<vmem>>, vector<1x1xf32>
    %711 = vector.extract %710[0, 0] : f32 from vector<1x1xf32>
    %712 = vector.broadcast %711 : f32 to vector<8x8x1xf32>
    %713 = arith.addf %709, %712 : vector<8x8x1xf32>
    %714 = arith.negf %713 : vector<8x8x1xf32>
    %715 = math.exp %714 : vector<8x8x1xf32>
    %cst_237 = arith.constant 1.000000e+00 : f32
    %716 = vector.broadcast %cst_237 : f32 to vector<8x8x1xf32>
    %717 = arith.addf %716, %715 : vector<8x8x1xf32>
    %718 = arith.divf %716, %717 : vector<8x8x1xf32>
    %c0_238 = arith.constant 0 : index
    %c0_239 = arith.constant 0 : index
    %c0_240 = arith.constant 0 : index
    %719 = vector.load %arg7[%c0_238, %c0_239, %c0_240] : memref<8x8x1xf32, #tpu.memory_space<vmem>>, vector<8x8x1xf32>
    tpu.vector_store %arg7[%c0_238, %c0_239, %c0_240], %718 {strides = array<i32>} : memref<8x8x1xf32, #tpu.memory_space<vmem>>, vector<8x8x1xf32>,
    return
  }
}

</mosaic_0001>

<llo_original>
// kernel: tpu_custom_call.1
$region0: #{tpu_custom_call.1}
  #allocation0 [shape = 'u32[]', space=smem, size = 0x4, offset = 0x4, fixed_abs, tag = 'smem constant byte address 0x4 - core index']
  #allocation1 [shape = 'u32[144,128]{1,0:T(1,128)}', space=vmem, size = 0x12000, scoped, tag = 'internal scratch']
  #allocation2 [shape = 'f32[8,8,1024]{2,1,0:T(8,128)}', space=vmem, size = 0x40000, scoped, tag = 'scratch operand']
  #allocation3 [shape = 'bf16[256,1024]{1,0:T(8,128)(2,1)}', space=vmem, size = 0x80000, scoped, tag = 'scratch operand']
  #allocation4 [shape = 'f32[8,8,1]{2,1,0:T(8,128)}', space=vmem, size = 0x8000, scoped, tag = 'scratch operand']
  #allocation5 [shape = 'f32[8,8,1]{2,1,0:T(8,128)}', space=vmem, size = 0x8000, scoped, tag = 'scratch operand']
  #allocation6 [shape = 's32[1]{0}', space=sflag, size = 0x4, scoped, tag = 'scratch operand']
  #allocation7 [shape = 'f32[1,1]{1,0:T(1,128)S(1)}', space=vmem, size = 0x200, scoped, tag = 'scoped memory for tpu_custom_call.1']
  #allocation10 [shape = 's32[]', space=sflag, size = 0x4, offset = 0, fixed_abs, tag = 'sflag constant byte address 0x0 - dummy sync flag']
  #allocation11 [shape = 's32[]', space=sflag, size = 0x4, offset = 0, fixed_abs, tag = 'sflag constant byte address 0x0 - dummy sync flag']
  #allocation12 [shape = 'u32[]', space=smem, size = 0x4, offset = 0x44, fixed_abs, tag = 'smem constant byte address 0x44 - assertion arg 0']
  #allocation13 [shape = 'u32[]', space=smem, size = 0x4, offset = 0x48, fixed_abs, tag = 'smem constant byte address 0x48 - assertion arg 1']
  %s0 = inlined_call_operand.vmem [shape: bf16[64,128], index: 0, kind: input, shape index: {}]
  %s1 = inlined_call_operand.vmem [shape: f32[8,8,1], index: 1, kind: input, shape index: {}]
  %s2 = inlined_call_operand.hbm [shape: bf16[128,1024], index: 2, kind: input, shape index: {}]
  %s3 = inlined_call_operand.hbm [shape: bf16[256,1024], index: 3, kind: input, shape index: {}]
  %s4 = inlined_call_operand.vmem [shape: f32[1,1024], index: 4, kind: input, shape index: {}]
  %s5 = inlined_call_operand.vmem [shape: f32[1,256], index: 5, kind: input, shape index: {}]
  %s6 = inlined_call_operand.<no memory space> [shape: f32[1,1], index: 6, kind: input, shape index: {}]
  %s7 = inlined_call_operand.vmem [shape: f32[8,8,1], index: 7, kind: output, shape index: {}]
  %s8 = sld [smem:[#allocation0]]
  $region42: #{tpu_custom_call.1} parent=0
    _
  %s10 = ssub.s32 1, %s8
  %s11 = scalar_select 0, %s10, %s8
  %v12 = vstv %s6
  %13 = vst [vmem:[#allocation7] sm:$0x1] %v12
  $region1: #{tpu_custom_call.1} parent=0
    #allocation8 [shape = 'u8[262144]{0}', space=vmem, size = 0x40000, scoped, tag = 'input window, operand 2, single buffered']
    #allocation9 [shape = 's32[1]{0}', space=sflag, size = 0x4, scoped, tag = 'scoped memory for tpu_custom_call.1']
    %14 = vsyncpa [#allocation9], 0
    // Predicated region
    $region2: #{tpu_custom_call.1} parent=1 // pred_check
      _
    $region3: #{tpu_custom_call.1} parent=1 // pred_check_branch
      %16 = sbr.rel (0) target = $region5
    $region4: #{tpu_custom_call.1} parent=1 // pred_region
      _
    $region5: #{tpu_custom_call.1} parent=1 // pred_fallthru
      _
    // Predicated region
    $region6: #{tpu_custom_call.1} parent=1 // pred_check
      _
    $region7: #{tpu_custom_call.1} parent=1 // pred_check_branch
      %18 = sbr.rel (0) target = $region9
    $region8: #{tpu_custom_call.1} parent=1 // pred_region
      _
    $region9: #{tpu_custom_call.1} parent=1 // pred_fallthru
      _
    // Predicated region
    $region10: #{tpu_custom_call.1} parent=1 // pred_check
      _
    $region11: #{tpu_custom_call.1} parent=1 // pred_check_branch
      %20 = sbr.rel (0) target = $region13
    $region12: #{tpu_custom_call.1} parent=1 // pred_region
      %s22 = ssub.s32 8192, 8192
      %23 = vsyncadd [#allocation9], %s22
      %s24 = sshll.u32 [#allocation8], 4
      %s25 = int_to_ptr.vmem [resolvable:$true] %s24
      %30 = dma.hbm_to_vmem [thread:$0]  %s2, 8192, %s25, [#allocation9], 512, 512, 32
    $region13: #{tpu_custom_call.1} parent=1 // pred_fallthru
      _
    // Predicated region
    $region14: #{tpu_custom_call.1} parent=1 // pred_check
      _
    $region15: #{tpu_custom_call.1} parent=1 // pred_check_branch
      %32 = sbr.rel (0) target = $region17
    $region16: #{tpu_custom_call.1} parent=1 // pred_region
      _
    $region17: #{tpu_custom_call.1} parent=1 // pred_fallthru
      _
    // Predicated region
    $region18: #{tpu_custom_call.1} parent=1 // pred_check
      _
    $region19: #{tpu_custom_call.1} parent=1 // pred_check_branch
      %34 = sbr.rel (0) target = $region21
    $region20: #{tpu_custom_call.1} parent=1 // pred_region
      _
    $region21: #{tpu_custom_call.1} parent=1 // pred_fallthru
      _
    // Predicated region
    $region22: #{tpu_custom_call.1} parent=1 // pred_check
      _
    $region23: #{tpu_custom_call.1} parent=1 // pred_check_branch
      %36 = sbr.rel (0) target = $region25
    $region24: #{tpu_custom_call.1} parent=1 // pred_region
      _
    $region25: #{tpu_custom_call.1} parent=1 // pred_fallthru
      _
    // Predicated region
    $region26: #{tpu_custom_call.1} parent=1 // pred_check
      _
    $region27: #{tpu_custom_call.1} parent=1 // pred_check_branch
      %38 = sbr.rel (0) target = $region29
    $region28: #{tpu_custom_call.1} parent=1 // pred_region
      %39 = dma.done [#allocation9], 8192
    $region29: #{tpu_custom_call.1} parent=1 // pred_fallthru
      _
    // Predicated region
    $region30: #{tpu_custom_call.1} parent=1 // pred_check
      _
    $region31: #{tpu_custom_call.1} parent=1 // pred_check_branch
      %42 = sbr.rel target = $region33
    $region32: #{tpu_custom_call.1} parent=1 // pred_region
      %43 = sst [smem:[#allocation12]] [#allocation11]
      %44 = sst [smem:[#allocation13]] [#allocation10]
    $region33: #{tpu_custom_call.1} parent=1 // pred_fallthru
      _
    %46 = shalt.err (0)
    %s48 = sshll.u32 [#allocation3], 4
    %s49 = int_to_ptr.vmem [resolvable:$true] %s48
    %51 = dma.hbm_to_vmem [thread:$0]  %s3, 16384, %s49, [#allocation6]
    %v52 = vld [vmem:[%s0] sm:$0xf]
    %v53 = vld [vmem:[%s0 + $0x4] sm:$0xf]
    %v54 = vld [vmem:[%s0 + $0x8] sm:$0xf]
    %v55 = vld [vmem:[%s0 + $0xc] sm:$0xf]
    %v56 = vld [vmem:[%s0 + $0x10] sm:$0xf]
    %v57 = vld [vmem:[%s0 + $0x14] sm:$0xf]
    %v58 = vld [vmem:[%s0 + $0x18] sm:$0xf]
    %v59 = vld [vmem:[%s0 + $0x1c] sm:$0xf]
    %v60 = vld [vmem:[#allocation8] sm:$0xff]
    %v61 = vld [vmem:[#allocation8 + $0x8] sm:$0xff]
    %v62 = vld [vmem:[#allocation8 + $0x10] sm:$0xff]
    %v63 = vld [vmem:[#allocation8 + $0x18] sm:$0xff]
    %v64 = vld [vmem:[#allocation8 + $0x20] sm:$0xff]
    %v65 = vld [vmem:[#allocation8 + $0x28] sm:$0xff]
    %v66 = vld [vmem:[#allocation8 + $0x30] sm:$0xff]
    %v67 = vld [vmem:[#allocation8 + $0x38] sm:$0xff]
    %v68 = vld [vmem:[#allocation8 + $0x40] sm:$0xff]
    %v69 = vld [vmem:[#allocation8 + $0x48] sm:$0xff]
    %v70 = vld [vmem:[#allocation8 + $0x50] sm:$0xff]
    %v71 = vld [vmem:[#allocation8 + $0x58] sm:$0xff]
    %v72 = vld [vmem:[#allocation8 + $0x60] sm:$0xff]
    %v73 = vld [vmem:[#allocation8 + $0x68] sm:$0xff]
    %v74 = vld [vmem:[#allocation8 + $0x70] sm:$0xff]
    %v75 = vld [vmem:[#allocation8 + $0x78] sm:$0xff]
    %v76 = vld [vmem:[#allocation8 + $0x80] sm:$0xff]
    %v77 = vld [vmem:[#allocation8 + $0x88] sm:$0xff]
    %v78 = vld [vmem:[#allocation8 + $0x90] sm:$0xff]
    %v79 = vld [vmem:[#allocation8 + $0x98] sm:$0xff]
    %v80 = vld [vmem:[#allocation8 + $0xa0] sm:$0xff]
    %v81 = vld [vmem:[#allocation8 + $0xa8] sm:$0xff]
    %v82 = vld [vmem:[#allocation8 + $0xb0] sm:$0xff]
    %v83 = vld [vmem:[#allocation8 + $0xb8] sm:$0xff]
    %v84 = vld [vmem:[#allocation8 + $0xc0] sm:$0xff]
    %v85 = vld [vmem:[#allocation8 + $0xc8] sm:$0xff]
    %v86 = vld [vmem:[#allocation8 + $0xd0] sm:$0xff]
    %v87 = vld [vmem:[#allocation8 + $0xd8] sm:$0xff]
    %v88 = vld [vmem:[#allocation8 + $0xe0] sm:$0xff]
    %v89 = vld [vmem:[#allocation8 + $0xe8] sm:$0xff]
    %v90 = vld [vmem:[#allocation8 + $0xf0] sm:$0xff]
    %v91 = vld [vmem:[#allocation8 + $0xf8] sm:$0xff]
    %v92 = vld [vmem:[#allocation8 + $0x100] sm:$0xff]
    %v93 = vld [vmem:[#allocation8 + $0x108] sm:$0xff]
    %v94 = vld [vmem:[#allocation8 + $0x110] sm:$0xff]
    %v95 = vld [vmem:[#allocation8 + $0x118] sm:$0xff]
    %v96 = vld [vmem:[#allocation8 + $0x120] sm:$0xff]
    %v97 = vld [vmem:[#allocation8 + $0x128] sm:$0xff]
    %v98 = vld [vmem:[#allocation8 + $0x130] sm:$0xff]
    %v99 = vld [vmem:[#allocation8 + $0x138] sm:$0xff]
    %v100 = vld [vmem:[#allocation8 + $0x140] sm:$0xff]
    %v101 = vld [vmem:[#allocation8 + $0x148] sm:$0xff]
    %v102 = vld [vmem:[#allocation8 + $0x150] sm:$0xff]
    %v103 = vld [vmem:[#allocation8 + $0x158] sm:$0xff]
    %v104 = vld [vmem:[#allocation8 + $0x160] sm:$0xff]
    %v105 = vld [vmem:[#allocation8 + $0x168] sm:$0xff]
    %v106 = vld [vmem:[#allocation8 + $0x170] sm:$0xff]
    %v107 = vld [vmem:[#allocation8 + $0x178] sm:$0xff]
    %v108 = vld [vmem:[#allocation8 + $0x180] sm:$0xff]
    %v109 = vld [vmem:[#allocation8 + $0x188] sm:$0xff]
    %v110 = vld [vmem:[#allocation8 + $0x190] sm:$0xff]
    %v111 = vld [vmem:[#allocation8 + $0x198] sm:$0xff]
    %v112 = vld [vmem:[#allocation8 + $0x1a0] sm:$0xff]
    %v113 = vld [vmem:[#allocation8 + $0x1a8] sm:$0xff]
    %v114 = vld [vmem:[#allocation8 + $0x1b0] sm:$0xff]
    %v115 = vld [vmem:[#allocation8 + $0x1b8] sm:$0xff]
    %v116 = vld [vmem:[#allocation8 + $0x1c0] sm:$0xff]
    %v117 = vld [vmem:[#allocation8 + $0x1c8] sm:$0xff]
    %v118 = vld [vmem:[#allocation8 + $0x1d0] sm:$0xff]
    %v119 = vld [vmem:[#allocation8 + $0x1d8] sm:$0xff]
    %v120 = vld [vmem:[#allocation8 + $0x1e0] sm:$0xff]
    %v121 = vld [vmem:[#allocation8 + $0x1e8] sm:$0xff]
    %v122 = vld [vmem:[#allocation8 + $0x1f0] sm:$0xff]
    %v123 = vld [vmem:[#allocation8 + $0x1f8] sm:$0xff]
    %v124 = vld [vmem:[%s4] sm:$0xff]
    %v126 = vlaneseq
    %v127 = vshrl.u32 %v126, 7
    %v128 = vsub.s32 0, %v127
    %v129 = vrot.slane %v124, %v128
    %v130 = vlaneseq
    %v131 = vshrl.u32 %v130, 7
    %v132 = vsub.s32 1, %v131
    %v133 = vrot.slane %v124, %v132
    %v134 = vlaneseq
    %v135 = vshrl.u32 %v134, 7
    %v136 = vsub.s32 2, %v135
    %v137 = vrot.slane %v124, %v136
    %v138 = vlaneseq
    %v139 = vshrl.u32 %v138, 7
    %v140 = vsub.s32 3, %v139
    %v141 = vrot.slane %v124, %v140
    %v142 = vlaneseq
    %v143 = vshrl.u32 %v142, 7
    %v144 = vsub.s32 4, %v143
    %v145 = vrot.slane %v124, %v144
    %v146 = vlaneseq
    %v147 = vshrl.u32 %v146, 7
    %v148 = vsub.s32 5, %v147
    %v149 = vrot.slane %v124, %v148
    %v150 = vlaneseq
    %v151 = vshrl.u32 %v150, 7
    %v152 = vsub.s32 6, %v151
    %v153 = vrot.slane %v124, %v152
    %v154 = vlaneseq
    %v155 = vshrl.u32 %v154, 7
    %v156 = vsub.s32 7, %v155
    %v157 = vrot.slane %v124, %v156
    %v174 = vunpack.c.l.b16 %v52
    %v175 = vunpack.c.l.b16 %v53
    %v176 = vunpack.c.l.b16 %v54
    %v177 = vunpack.c.l.b16 %v55
    %v178 = vunpack.c.l.b16 %v56
    %v179 = vunpack.c.l.b16 %v57
    %v180 = vunpack.c.l.b16 %v58
    %v181 = vunpack.c.l.b16 %v59
    %v182 = vpack.c.b16 %v175, %v174
    %v183 = vpack.c.b16 %v177, %v176
    %v184 = vpack.c.b16 %v179, %v178
    %v185 = vpack.c.b16 %v181, %v180
    %v254 = vunpack.c.l.b16 %v60
    %v255 = vunpack.c.h.b16 %v60
    %v256 = vunpack.c.l.b16 %v61
    %v257 = vunpack.c.h.b16 %v61
    %v258 = vunpack.c.l.b16 %v62
    %v259 = vunpack.c.h.b16 %v62
    %v260 = vunpack.c.l.b16 %v63
    %v261 = vunpack.c.h.b16 %v63
    %v262 = vunpack.c.l.b16 %v64
    %v263 = vunpack.c.h.b16 %v64
    %v264 = vunpack.c.l.b16 %v65
    %v265 = vunpack.c.h.b16 %v65
    %v266 = vunpack.c.l.b16 %v66
    %v267 = vunpack.c.h.b16 %v66
    %v268 = vunpack.c.l.b16 %v67
    %v269 = vunpack.c.h.b16 %v67
    %v270 = vunpack.c.l.b16 %v68
    %v271 = vunpack.c.h.b16 %v68
    %v272 = vunpack.c.l.b16 %v69
    %v273 = vunpack.c.h.b16 %v69
    %v274 = vunpack.c.l.b16 %v70
    %v275 = vunpack.c.h.b16 %v70
    %v276 = vunpack.c.l.b16 %v71
    %v277 = vunpack.c.h.b16 %v71
    %v278 = vunpack.c.l.b16 %v72
    %v279 = vunpack.c.h.b16 %v72
    %v280 = vunpack.c.l.b16 %v73
    %v281 = vunpack.c.h.b16 %v73
    %v282 = vunpack.c.l.b16 %v74
    %v283 = vunpack.c.h.b16 %v74
    %v284 = vunpack.c.l.b16 %v75
    %v285 = vunpack.c.h.b16 %v75
    %v286 = vunpack.c.l.b16 %v76
    %v287 = vunpack.c.h.b16 %v76
    %v288 = vunpack.c.l.b16 %v77
    %v289 = vunpack.c.h.b16 %v77
    %v290 = vunpack.c.l.b16 %v78
    %v291 = vunpack.c.h.b16 %v78
    %v292 = vunpack.c.l.b16 %v79
    %v293 = vunpack.c.h.b16 %v79
    %v294 = vunpack.c.l.b16 %v80
    %v295 = vunpack.c.h.b16 %v80
    %v296 = vunpack.c.l.b16 %v81
    %v297 = vunpack.c.h.b16 %v81
    %v298 = vunpack.c.l.b16 %v82
    %v299 = vunpack.c.h.b16 %v82
    %v300 = vunpack.c.l.b16 %v83
    %v301 = vunpack.c.h.b16 %v83
    %v302 = vunpack.c.l.b16 %v84
    %v303 = vunpack.c.h.b16 %v84
    %v304 = vunpack.c.l.b16 %v85
    %v305 = vunpack.c.h.b16 %v85
    %v306 = vunpack.c.l.b16 %v86
    %v307 = vunpack.c.h.b16 %v86
    %v308 = vunpack.c.l.b16 %v87
    %v309 = vunpack.c.h.b16 %v87
    %v310 = vunpack.c.l.b16 %v88
    %v311 = vunpack.c.h.b16 %v88
    %v312 = vunpack.c.l.b16 %v89
    %v313 = vunpack.c.h.b16 %v89
    %v314 = vunpack.c.l.b16 %v90
    %v315 = vunpack.c.h.b16 %v90
    %v316 = vunpack.c.l.b16 %v91
    %v317 = vunpack.c.h.b16 %v91
    %v318 = vunpack.c.l.b16 %v92
    %v319 = vunpack.c.h.b16 %v92
    %v320 = vunpack.c.l.b16 %v93
    %v321 = vunpack.c.h.b16 %v93
    %v322 = vunpack.c.l.b16 %v94
    %v323 = vunpack.c.h.b16 %v94
    %v324 = vunpack.c.l.b16 %v95
    %v325 = vunpack.c.h.b16 %v95
    %v326 = vunpack.c.l.b16 %v96
    %v327 = vunpack.c.h.b16 %v96
    %v328 = vunpack.c.l.b16 %v97
    %v329 = vunpack.c.h.b16 %v97
    %v330 = vunpack.c.l.b16 %v98
    %v331 = vunpack.c.h.b16 %v98
    %v332 = vunpack.c.l.b16 %v99
    %v333 = vunpack.c.h.b16 %v99
    %v334 = vunpack.c.l.b16 %v100
    %v335 = vunpack.c.h.b16 %v100
    %v336 = vunpack.c.l.b16 %v101
    %v337 = vunpack.c.h.b16 %v101
    %v338 = vunpack.c.l.b16 %v102
    %v339 = vunpack.c.h.b16 %v102
    %v340 = vunpack.c.l.b16 %v103
    %v341 = vunpack.c.h.b16 %v103
    %v342 = vunpack.c.l.b16 %v104
    %v343 = vunpack.c.h.b16 %v104
    %v344 = vunpack.c.l.b16 %v105
    %v345 = vunpack.c.h.b16 %v105
    %v346 = vunpack.c.l.b16 %v106
    %v347 = vunpack.c.h.b16 %v106
    %v348 = vunpack.c.l.b16 %v107
    %v349 = vunpack.c.h.b16 %v107
    %v350 = vunpack.c.l.b16 %v108
    %v351 = vunpack.c.h.b16 %v108
    %v352 = vunpack.c.l.b16 %v109
    %v353 = vunpack.c.h.b16 %v109
    %v354 = vunpack.c.l.b16 %v110
    %v355 = vunpack.c.h.b16 %v110
    %v356 = vunpack.c.l.b16 %v111
    %v357 = vunpack.c.h.b16 %v111
    %v358 = vunpack.c.l.b16 %v112
    %v359 = vunpack.c.h.b16 %v112
    %v360 = vunpack.c.l.b16 %v113
    %v361 = vunpack.c.h.b16 %v113
    %v362 = vunpack.c.l.b16 %v114
    %v363 = vunpack.c.h.b16 %v114
    %v364 = vunpack.c.l.b16 %v115
    %v365 = vunpack.c.h.b16 %v115
    %v366 = vunpack.c.l.b16 %v116
    %v367 = vunpack.c.h.b16 %v116
    %v368 = vunpack.c.l.b16 %v117
    %v369 = vunpack.c.h.b16 %v117
    %v370 = vunpack.c.l.b16 %v118
    %v371 = vunpack.c.h.b16 %v118
    %v372 = vunpack.c.l.b16 %v119
    %v373 = vunpack.c.h.b16 %v119
    %v374 = vunpack.c.l.b16 %v120
    %v375 = vunpack.c.h.b16 %v120
    %v376 = vunpack.c.l.b16 %v121
    %v377 = vunpack.c.h.b16 %v121
    %v378 = vunpack.c.l.b16 %v122
    %v379 = vunpack.c.h.b16 %v122
    %v380 = vunpack.c.l.b16 %v123
    %v381 = vunpack.c.h.b16 %v123
    %v382 = vpack.c.b16 %v262, %v254
    %v383 = vpack.c.b16 %v263, %v255
    %v384 = vpack.c.b16 %v264, %v256
    %v385 = vpack.c.b16 %v265, %v257
    %v386 = vpack.c.b16 %v266, %v258
    %v387 = vpack.c.b16 %v267, %v259
    %v388 = vpack.c.b16 %v268, %v260
    %v389 = vpack.c.b16 %v269, %v261
    %v390 = vpack.c.b16 %v278, %v270
    %v391 = vpack.c.b16 %v279, %v271
    %v392 = vpack.c.b16 %v280, %v272
    %v393 = vpack.c.b16 %v281, %v273
    %v394 = vpack.c.b16 %v282, %v274
    %v395 = vpack.c.b16 %v283, %v275
    %v396 = vpack.c.b16 %v284, %v276
    %v397 = vpack.c.b16 %v285, %v277
    %v398 = vpack.c.b16 %v294, %v286
    %v399 = vpack.c.b16 %v295, %v287
    %v400 = vpack.c.b16 %v296, %v288
    %v401 = vpack.c.b16 %v297, %v289
    %v402 = vpack.c.b16 %v298, %v290
    %v403 = vpack.c.b16 %v299, %v291
    %v404 = vpack.c.b16 %v300, %v292
    %v405 = vpack.c.b16 %v301, %v293
    %v406 = vpack.c.b16 %v310, %v302
    %v407 = vpack.c.b16 %v311, %v303
    %v408 = vpack.c.b16 %v312, %v304
    %v409 = vpack.c.b16 %v313, %v305
    %v410 = vpack.c.b16 %v314, %v306
    %v411 = vpack.c.b16 %v315, %v307
    %v412 = vpack.c.b16 %v316, %v308
    %v413 = vpack.c.b16 %v317, %v309
    %v414 = vpack.c.b16 %v326, %v318
    %v415 = vpack.c.b16 %v327, %v319
    %v416 = vpack.c.b16 %v328, %v320
    %v417 = vpack.c.b16 %v329, %v321
    %v418 = vpack.c.b16 %v330, %v322
    %v419 = vpack.c.b16 %v331, %v323
    %v420 = vpack.c.b16 %v332, %v324
    %v421 = vpack.c.b16 %v333, %v325
    %v422 = vpack.c.b16 %v342, %v334
    %v423 = vpack.c.b16 %v343, %v335
    %v424 = vpack.c.b16 %v344, %v336
    %v425 = vpack.c.b16 %v345, %v337
    %v426 = vpack.c.b16 %v346, %v338
    %v427 = vpack.c.b16 %v347, %v339
    %v428 = vpack.c.b16 %v348, %v340
    %v429 = vpack.c.b16 %v349, %v341
    %v430 = vpack.c.b16 %v358, %v350
    %v431 = vpack.c.b16 %v359, %v351
    %v432 = vpack.c.b16 %v360, %v352
    %v433 = vpack.c.b16 %v361, %v353
    %v434 = vpack.c.b16 %v362, %v354
    %v435 = vpack.c.b16 %v363, %v355
    %v436 = vpack.c.b16 %v364, %v356
    %v437 = vpack.c.b16 %v365, %v357
    %v438 = vpack.c.b16 %v374, %v366
    %v439 = vpack.c.b16 %v375, %v367
    %v440 = vpack.c.b16 %v376, %v368
    %v441 = vpack.c.b16 %v377, %v369
    %v442 = vpack.c.b16 %v378, %v370
    %v443 = vpack.c.b16 %v379, %v371
    %v444 = vpack.c.b16 %v380, %v372
    %v445 = vpack.c.b16 %v381, %v373
    %510 = vmatprep.subr.bf16.mxu0 %v439
    %511 = vmatpush1.bf16.msra.mxu0 %v438
    %512 = vmatprep.subr.bf16.mxu0 %v431
    %513 = vmatpush1.bf16.msra.mxu0 %v430
    %514 = vmatprep.subr.bf16.mxu0 %v423
    %515 = vmatpush1.bf16.msra.mxu0 %v422
    %516 = vmatprep.subr.bf16.mxu0 %v415
    %517 = vmatpush1.bf16.msra.mxu0 %v414
    %518 = vmatprep.subr.bf16.mxu0 %v407
    %519 = vmatpush1.bf16.msra.mxu0 %v406
    %520 = vmatprep.subr.bf16.mxu0 %v399
    %521 = vmatpush1.bf16.msra.mxu0 %v398
    %522 = vmatprep.subr.bf16.mxu0 %v391
    %523 = vmatpush1.bf16.msra.mxu0 %v390
    %524 = vmatprep.subr.bf16.mxu0 %v383
    %525 = vmatpush1.bf16.msra.mxu0 %v382
    %526 = vmatprep.subr.bf16.mxu0 0
    %527 = vmatpush2.bf16.msra.mxu0 0
    %528 = vmatprep.subr.bf16.mxu0 0
    %529 = vmatpush2.bf16.msra.mxu0 0
    %530 = vmatprep.subr.bf16.mxu0 0
    %531 = vmatpush2.bf16.msra.mxu0 0
    %532 = vmatprep.subr.bf16.mxu0 0
    %533 = vmatpush2.bf16.msra.mxu0 0
    %534 = vmatprep.subr.bf16.mxu0 0
    %535 = vmatpush2.bf16.msra.mxu0 0
    %536 = vmatprep.subr.bf16.mxu0 0
    %537 = vmatpush2.bf16.msra.mxu0 0
    %538 = vmatprep.subr.bf16.mxu0 0
    %539 = vmatpush2.bf16.msra.mxu0 0
    %540 = vmatprep.subr.bf16.mxu0 0
    %541 = vmatpush2.bf16.msra.mxu0 0
    %542 = vmatprep.mubr.bf16.mxu0 0
    %543 = vmatmul.mubr.bf16.gmra.mxu0 %v182
    %v544 = vpop.f32.mrf.mxu0
    %v545 = vadd.f32 %v129, %v544
    %v546 = vpop.f32.mrf.mxu0
    %v547 = vadd.f32 %v133, %v546
    %v548 = vpop.f32.mrf.mxu0
    %v549 = vadd.f32 %v129, %v548
    %v550 = vpop.f32.mrf.mxu0
    %v551 = vadd.f32 %v133, %v550
    %552 = vmatprep.mubr.bf16.mxu0 0
    %553 = vmatmul.mubr.bf16.gmra.mxu0 %v183
    %v554 = vpop.f32.mrf.mxu0
    %v555 = vadd.f32 %v129, %v554
    %v556 = vpop.f32.mrf.mxu0
    %v557 = vadd.f32 %v133, %v556
    %v558 = vpop.f32.mrf.mxu0
    %v559 = vadd.f32 %v129, %v558
    %v560 = vpop.f32.mrf.mxu0
    %v561 = vadd.f32 %v133, %v560
    %562 = vmatprep.mubr.bf16.mxu0 0
    %563 = vmatmul.mubr.bf16.gmra.mxu0 %v184
    %v564 = vpop.f32.mrf.mxu0
    %v565 = vadd.f32 %v129, %v564
    %v566 = vpop.f32.mrf.mxu0
    %v567 = vadd.f32 %v133, %v566
    %v568 = vpop.f32.mrf.mxu0
    %v569 = vadd.f32 %v129, %v568
    %v570 = vpop.f32.mrf.mxu0
    %v571 = vadd.f32 %v133, %v570
    %572 = vmatprep.mubr.bf16.mxu0 0
    %573 = vmatmul.mubr.bf16.gmra.mxu0 %v185
    %v574 = vpop.f32.mrf.mxu0
    %v575 = vadd.f32 %v129, %v574
    %v576 = vpop.f32.mrf.mxu0
    %v577 = vadd.f32 %v133, %v576
    %v578 = vpop.f32.mrf.mxu0
    %v579 = vadd.f32 %v129, %v578
    %v580 = vpop.f32.mrf.mxu0
    %v581 = vadd.f32 %v133, %v580
    %582 = vdwg.mxu0
    %583 = vmatprep.subr.bf16.mxu0 %v441
    %584 = vmatpush1.bf16.msra.mxu0 %v440
    %585 = vmatprep.subr.bf16.mxu0 %v433
    %586 = vmatpush1.bf16.msra.mxu0 %v432
    %587 = vmatprep.subr.bf16.mxu0 %v425
    %588 = vmatpush1.bf16.msra.mxu0 %v424
    %589 = vmatprep.subr.bf16.mxu0 %v417
    %590 = vmatpush1.bf16.msra.mxu0 %v416
    %591 = vmatprep.subr.bf16.mxu0 %v409
    %592 = vmatpush1.bf16.msra.mxu0 %v408
    %593 = vmatprep.subr.bf16.mxu0 %v401
    %594 = vmatpush1.bf16.msra.mxu0 %v400
    %595 = vmatprep.subr.bf16.mxu0 %v393
    %596 = vmatpush1.bf16.msra.mxu0 %v392
    %597 = vmatprep.subr.bf16.mxu0 %v385
    %598 = vmatpush1.bf16.msra.mxu0 %v384
    %599 = vmatprep.subr.bf16.mxu0 0
    %600 = vmatpush2.bf16.msra.mxu0 0
    %601 = vmatprep.subr.bf16.mxu0 0
    %602 = vmatpush2.bf16.msra.mxu0 0
    %603 = vmatprep.subr.bf16.mxu0 0
    %604 = vmatpush2.bf16.msra.mxu0 0
    %605 = vmatprep.subr.bf16.mxu0 0
    %606 = vmatpush2.bf16.msra.mxu0 0
    %607 = vmatprep.subr.bf16.mxu0 0
    %608 = vmatpush2.bf16.msra.mxu0 0
    %609 = vmatprep.subr.bf16.mxu0 0
    %610 = vmatpush2.bf16.msra.mxu0 0
    %611 = vmatprep.subr.bf16.mxu0 0
    %612 = vmatpush2.bf16.msra.mxu0 0
    %613 = vmatprep.subr.bf16.mxu0 0
    %614 = vmatpush2.bf16.msra.mxu0 0
    %615 = vmatprep.mubr.bf16.mxu0 0
    %616 = vmatmul.mubr.bf16.gmra.mxu0 %v182
    %v617 = vpop.f32.mrf.mxu0
    %v618 = vadd.f32 %v137, %v617
    %v619 = vpop.f32.mrf.mxu0
    %v620 = vadd.f32 %v141, %v619
    %v621 = vpop.f32.mrf.mxu0
    %v622 = vadd.f32 %v137, %v621
    %v623 = vpop.f32.mrf.mxu0
    %v624 = vadd.f32 %v141, %v623
    %625 = vmatprep.mubr.bf16.mxu0 0
    %626 = vmatmul.mubr.bf16.gmra.mxu0 %v183
    %v627 = vpop.f32.mrf.mxu0
    %v628 = vadd.f32 %v137, %v627
    %v629 = vpop.f32.mrf.mxu0
    %v630 = vadd.f32 %v141, %v629
    %v631 = vpop.f32.mrf.mxu0
    %v632 = vadd.f32 %v137, %v631
    %v633 = vpop.f32.mrf.mxu0
    %v634 = vadd.f32 %v141, %v633
    %635 = vmatprep.mubr.bf16.mxu0 0
    %636 = vmatmul.mubr.bf16.gmra.mxu0 %v184
    %v637 = vpop.f32.mrf.mxu0
    %v638 = vadd.f32 %v137, %v637
    %v639 = vpop.f32.mrf.mxu0
    %v640 = vadd.f32 %v141, %v639
    %v641 = vpop.f32.mrf.mxu0
    %v642 = vadd.f32 %v137, %v641
    %v643 = vpop.f32.mrf.mxu0
    %v644 = vadd.f32 %v141, %v643
    %645 = vmatprep.mubr.bf16.mxu0 0
    %646 = vmatmul.mubr.bf16.gmra.mxu0 %v185
    %v647 = vpop.f32.mrf.mxu0
    %v648 = vadd.f32 %v137, %v647
    %v649 = vpop.f32.mrf.mxu0
    %v650 = vadd.f32 %v141, %v649
    %v651 = vpop.f32.mrf.mxu0
    %v652 = vadd.f32 %v137, %v651
    %v653 = vpop.f32.mrf.mxu0
    %v654 = vadd.f32 %v141, %v653
    %655 = vdwg.mxu0
    %656 = vmatprep.subr.bf16.mxu0 %v443
    %657 = vmatpush1.bf16.msra.mxu0 %v442
    %658 = vmatprep.subr.bf16.mxu0 %v435
    %659 = vmatpush1.bf16.msra.mxu0 %v434
    %660 = vmatprep.subr.bf16.mxu0 %v427
    %661 = vmatpush1.bf16.msra.mxu0 %v426
    %662 = vmatprep.subr.bf16.mxu0 %v419
    %663 = vmatpush1.bf16.msra.mxu0 %v418
    %664 = vmatprep.subr.bf16.mxu0 %v411
    %665 = vmatpush1.bf16.msra.mxu0 %v410
    %666 = vmatprep.subr.bf16.mxu0 %v403
    %667 = vmatpush1.bf16.msra.mxu0 %v402
    %668 = vmatprep.subr.bf16.mxu0 %v395
    %669 = vmatpush1.bf16.msra.mxu0 %v394
    %670 = vmatprep.subr.bf16.mxu0 %v387
    %671 = vmatpush1.bf16.msra.mxu0 %v386
    %672 = vmatprep.subr.bf16.mxu0 0
    %673 = vmatpush2.bf16.msra.mxu0 0
    %674 = vmatprep.subr.bf16.mxu0 0
    %675 = vmatpush2.bf16.msra.mxu0 0
    %676 = vmatprep.subr.bf16.mxu0 0
    %677 = vmatpush2.bf16.msra.mxu0 0
    %678 = vmatprep.subr.bf16.mxu0 0
    %679 = vmatpush2.bf16.msra.mxu0 0
    %680 = vmatprep.subr.bf16.mxu0 0
    %681 = vmatpush2.bf16.msra.mxu0 0
    %682 = vmatprep.subr.bf16.mxu0 0
    %683 = vmatpush2.bf16.msra.mxu0 0
    %684 = vmatprep.subr.bf16.mxu0 0
    %685 = vmatpush2.bf16.msra.mxu0 0
    %686 = vmatprep.subr.bf16.mxu0 0
    %687 = vmatpush2.bf16.msra.mxu0 0
    %688 = vmatprep.mubr.bf16.mxu0 0
    %689 = vmatmul.mubr.bf16.gmra.mxu0 %v182
    %v690 = vpop.f32.mrf.mxu0
    %v691 = vadd.f32 %v145, %v690
    %v692 = vpop.f32.mrf.mxu0
    %v693 = vadd.f32 %v149, %v692
    %v694 = vpop.f32.mrf.mxu0
    %v695 = vadd.f32 %v145, %v694
    %v696 = vpop.f32.mrf.mxu0
    %v697 = vadd.f32 %v149, %v696
    %698 = vmatprep.mubr.bf16.mxu0 0
    %699 = vmatmul.mubr.bf16.gmra.mxu0 %v183
    %v700 = vpop.f32.mrf.mxu0
    %v701 = vadd.f32 %v145, %v700
    %v702 = vpop.f32.mrf.mxu0
    %v703 = vadd.f32 %v149, %v702
    %v704 = vpop.f32.mrf.mxu0
    %v705 = vadd.f32 %v145, %v704
    %v706 = vpop.f32.mrf.mxu0
    %v707 = vadd.f32 %v149, %v706
    %708 = vmatprep.mubr.bf16.mxu0 0
    %709 = vmatmul.mubr.bf16.gmra.mxu0 %v184
    %v710 = vpop.f32.mrf.mxu0
    %v711 = vadd.f32 %v145, %v710
    %v712 = vpop.f32.mrf.mxu0
    %v713 = vadd.f32 %v149, %v712
    %v714 = vpop.f32.mrf.mxu0
    %v715 = vadd.f32 %v145, %v714
    %v716 = vpop.f32.mrf.mxu0
    %v717 = vadd.f32 %v149, %v716
    %718 = vmatprep.mubr.bf16.mxu0 0
    %719 = vmatmul.mubr.bf16.gmra.mxu0 %v185
    %v720 = vpop.f32.mrf.mxu0
    %v721 = vadd.f32 %v145, %v720
    %v722 = vpop.f32.mrf.mxu0
    %v723 = vadd.f32 %v149, %v722
    %v724 = vpop.f32.mrf.mxu0
    %v725 = vadd.f32 %v145, %v724
    %v726 = vpop.f32.mrf.mxu0
    %v727 = vadd.f32 %v149, %v726
    %728 = vdwg.mxu0
    %729 = vmatprep.subr.bf16.mxu0 %v445
    %730 = vmatpush1.bf16.msra.mxu0 %v444
    %731 = vmatprep.subr.bf16.mxu0 %v437
    %732 = vmatpush1.bf16.msra.mxu0 %v436
    %733 = vmatprep.subr.bf16.mxu0 %v429
    %734 = vmatpush1.bf16.msra.mxu0 %v428
    %735 = vmatprep.subr.bf16.mxu0 %v421
    %736 = vmatpush1.bf16.msra.mxu0 %v420
    %737 = vmatprep.subr.bf16.mxu0 %v413
    %738 = vmatpush1.bf16.msra.mxu0 %v412
    %739 = vmatprep.subr.bf16.mxu0 %v405
    %740 = vmatpush1.bf16.msra.mxu0 %v404
    %741 = vmatprep.subr.bf16.mxu0 %v397
    %742 = vmatpush1.bf16.msra.mxu0 %v396
    %743 = vmatprep.subr.bf16.mxu0 %v389
    %744 = vmatpush1.bf16.msra.mxu0 %v388
    %745 = vmatprep.subr.bf16.mxu0 0
    %746 = vmatpush2.bf16.msra.mxu0 0
    %747 = vmatprep.subr.bf16.mxu0 0
    %748 = vmatpush2.bf16.msra.mxu0 0
    %749 = vmatprep.subr.bf16.mxu0 0
    %750 = vmatpush2.bf16.msra.mxu0 0
    %751 = vmatprep.subr.bf16.mxu0 0
    %752 = vmatpush2.bf16.msra.mxu0 0
    %753 = vmatprep.subr.bf16.mxu0 0
    %754 = vmatpush2.bf16.msra.mxu0 0
    %755 = vmatprep.subr.bf16.mxu0 0
    %756 = vmatpush2.bf16.msra.mxu0 0
    %757 = vmatprep.subr.bf16.mxu0 0
    %758 = vmatpush2.bf16.msra.mxu0 0
    %759 = vmatprep.subr.bf16.mxu0 0
    %760 = vmatpush2.bf16.msra.mxu0 0
    %761 = vmatprep.mubr.bf16.mxu0 0
    %762 = vmatmul.mubr.bf16.gmra.mxu0 %v182
    %v763 = vpop.f32.mrf.mxu0
    %v764 = vadd.f32 %v153, %v763
    %v765 = vpop.f32.mrf.mxu0
    %v766 = vadd.f32 %v157, %v765
    %v767 = vpop.f32.mrf.mxu0
    %v768 = vadd.f32 %v153, %v767
    %v769 = vpop.f32.mrf.mxu0
    %v770 = vadd.f32 %v157, %v769
    %771 = vmatprep.mubr.bf16.mxu0 0
    %772 = vmatmul.mubr.bf16.gmra.mxu0 %v183
    %v773 = vpop.f32.mrf.mxu0
    %v774 = vadd.f32 %v153, %v773
    %v775 = vpop.f32.mrf.mxu0
    %v776 = vadd.f32 %v157, %v775
    %v777 = vpop.f32.mrf.mxu0
    %v778 = vadd.f32 %v153, %v777
    %v779 = vpop.f32.mrf.mxu0
    %v780 = vadd.f32 %v157, %v779
    %781 = vmatprep.mubr.bf16.mxu0 0
    %782 = vmatmul.mubr.bf16.gmra.mxu0 %v184
    %v783 = vpop.f32.mrf.mxu0
    %v784 = vadd.f32 %v153, %v783
    %v785 = vpop.f32.mrf.mxu0
    %v786 = vadd.f32 %v157, %v785
    %v787 = vpop.f32.mrf.mxu0
    %v788 = vadd.f32 %v153, %v787
    %v789 = vpop.f32.mrf.mxu0
    %v790 = vadd.f32 %v157, %v789
    %791 = vmatprep.mubr.bf16.mxu0 0
    %792 = vmatmul.mubr.bf16.gmra.mxu0 %v185
    %v793 = vpop.f32.mrf.mxu0
    %v794 = vadd.f32 %v153, %v793
    %v795 = vpop.f32.mrf.mxu0
    %v796 = vadd.f32 %v157, %v795
    %v797 = vpop.f32.mrf.mxu0
    %v798 = vadd.f32 %v153, %v797
    %v799 = vpop.f32.mrf.mxu0
    %v800 = vadd.f32 %v157, %v799
    %801 = vdwg.mxu0
    %802 = vst [vmem:[#allocation2] sm:$0xff] %v545
    %803 = vst [vmem:[#allocation2 + $0x8] sm:$0xff] %v547
    %804 = vst [vmem:[#allocation2 + $0x10] sm:$0xff] %v618
    %805 = vst [vmem:[#allocation2 + $0x18] sm:$0xff] %v620
    %806 = vst [vmem:[#allocation2 + $0x20] sm:$0xff] %v691
    %807 = vst [vmem:[#allocation2 + $0x28] sm:$0xff] %v693
    %808 = vst [vmem:[#allocation2 + $0x30] sm:$0xff] %v764
    %809 = vst [vmem:[#allocation2 + $0x38] sm:$0xff] %v766
    %810 = vst [vmem:[#allocation2 + $0x40] sm:$0xff] %v549
    %811 = vst [vmem:[#allocation2 + $0x48] sm:$0xff] %v551
    %812 = vst [vmem:[#allocation2 + $0x50] sm:$0xff] %v622
    %813 = vst [vmem:[#allocation2 + $0x58] sm:$0xff] %v624
    %814 = vst [vmem:[#allocation2 + $0x60] sm:$0xff] %v695
    %815 = vst [vmem:[#allocation2 + $0x68] sm:$0xff] %v697
    %816 = vst [vmem:[#allocation2 + $0x70] sm:$0xff] %v768
    %817 = vst [vmem:[#allocation2 + $0x78] sm:$0xff] %v770
    %818 = vst [vmem:[#allocation2 + $0x80] sm:$0xff] %v555
    %819 = vst [vmem:[#allocation2 + $0x88] sm:$0xff] %v557
    %820 = vst [vmem:[#allocation2 + $0x90] sm:$0xff] %v628
    %821 = vst [vmem:[#allocation2 + $0x98] sm:$0xff] %v630
    %822 = vst [vmem:[#allocation2 + $0xa0] sm:$0xff] %v701
    %823 = vst [vmem:[#allocation2 + $0xa8] sm:$0xff] %v703
    %824 = vst [vmem:[#allocation2 + $0xb0] sm:$0xff] %v774
    %825 = vst [vmem:[#allocation2 + $0xb8] sm:$0xff] %v776
    %826 = vst [vmem:[#allocation2 + $0xc0] sm:$0xff] %v559
    %827 = vst [vmem:[#allocation2 + $0xc8] sm:$0xff] %v561
    %828 = vst [vmem:[#allocation2 + $0xd0] sm:$0xff] %v632
    %829 = vst [vmem:[#allocation2 + $0xd8] sm:$0xff] %v634
    %830 = vst [vmem:[#allocation2 + $0xe0] sm:$0xff] %v705
    %831 = vst [vmem:[#allocation2 + $0xe8] sm:$0xff] %v707
    %832 = vst [vmem:[#allocation2 + $0xf0] sm:$0xff] %v778
    %833 = vst [vmem:[#allocation2 + $0xf8] sm:$0xff] %v780
    %834 = vst [vmem:[#allocation2 + $0x100] sm:$0xff] %v565
    %835 = vst [vmem:[#allocation2 + $0x108] sm:$0xff] %v567
    %836 = vst [vmem:[#allocation2 + $0x110] sm:$0xff] %v638
    %837 = vst [vmem:[#allocation2 + $0x118] sm:$0xff] %v640
    %838 = vst [vmem:[#allocation2 + $0x120] sm:$0xff] %v711
    %839 = vst [vmem:[#allocation2 + $0x128] sm:$0xff] %v713
    %840 = vst [vmem:[#allocation2 + $0x130] sm:$0xff] %v784
    %841 = vst [vmem:[#allocation2 + $0x138] sm:$0xff] %v786
    %842 = vst [vmem:[#allocation2 + $0x140] sm:$0xff] %v569
    %843 = vst [vmem:[#allocation2 + $0x148] sm:$0xff] %v571
    %844 = vst [vmem:[#allocation2 + $0x150] sm:$0xff] %v642
    %845 = vst [vmem:[#allocation2 + $0x158] sm:$0xff] %v644
    %846 = vst [vmem:[#allocation2 + $0x160] sm:$0xff] %v715
    %847 = vst [vmem:[#allocation2 + $0x168] sm:$0xff] %v717
    %848 = vst [vmem:[#allocation2 + $0x170] sm:$0xff] %v788
    %849 = vst [vmem:[#allocation2 + $0x178] sm:$0xff] %v790
    %850 = vst [vmem:[#allocation2 + $0x180] sm:$0xff] %v575
    %851 = vst [vmem:[#allocation2 + $0x188] sm:$0xff] %v577
    %852 = vst [vmem:[#allocation2 + $0x190] sm:$0xff] %v648
    %853 = vst [vmem:[#allocation2 + $0x198] sm:$0xff] %v650
    %854 = vst [vmem:[#allocation2 + $0x1a0] sm:$0xff] %v721
    %855 = vst [vmem:[#allocation2 + $0x1a8] sm:$0xff] %v723
    %856 = vst [vmem:[#allocation2 + $0x1b0] sm:$0xff] %v794
    %857 = vst [vmem:[#allocation2 + $0x1b8] sm:$0xff] %v796
    %858 = vst [vmem:[#allocation2 + $0x1c0] sm:$0xff] %v579
    %859 = vst [vmem:[#allocation2 + $0x1c8] sm:$0xff] %v581
    %860 = vst [vmem:[#allocation2 + $0x1d0] sm:$0xff] %v652
    %861 = vst [vmem:[#allocation2 + $0x1d8] sm:$0xff] %v654
    %862 = vst [vmem:[#allocation2 + $0x1e0] sm:$0xff] %v725
    %863 = vst [vmem:[#allocation2 + $0x1e8] sm:$0xff] %v727
    %864 = vst [vmem:[#allocation2 + $0x1f0] sm:$0xff] %v798
    %865 = vst [vmem:[#allocation2 + $0x1f8] sm:$0xff] %v800
    %v866 = vld [vmem:[%s5] sm:$0x1]
    %v867 = vld [vmem:[%s5 + $0x1] sm:$0x1]
    %v868 = vld [vmem:[#allocation2] sm:$0xff]
    %v869 = vld [vmem:[#allocation2 + $0x8] sm:$0xff]
    %v870 = vld [vmem:[#allocation2 + $0x10] sm:$0xff]
    %v871 = vld [vmem:[#allocation2 + $0x18] sm:$0xff]
    %s872 = scalar_lea.vmem [#allocation2], 448
    %v873 = vld [vmem:[%s872 + $0x20] sm:$0xff]
    %v874 = vld [vmem:[%s872 + $0x28] sm:$0xff]
    %v875 = vld [vmem:[%s872 + $0x30] sm:$0xff]
    %v876 = vld [vmem:[%s872 + $0x38] sm:$0xff]
    %v877 = vxor.u32 %v868, 2147483648
    %v878 = vmul.f32 %v877, 1.442695
    %v879 = vpow.pop %v878
    %v880 = vadd.f32 %v879, 1.0
    %v881 = vrcp.pop %v880
    %v882 = vmul.f32 1.0, %v881
    %v883 = vxor.u32 %v869, 2147483648
    %v884 = vmul.f32 %v883, 1.442695
    %v885 = vpow.pop %v884
    %v886 = vadd.f32 %v885, 1.0
    %v887 = vrcp.pop %v886
    %v888 = vmul.f32 1.0, %v887
    %v889 = vtanh.pop %v870
    %v890 = vxor.u32 %v871, 2147483648
    %v891 = vmul.f32 %v890, 1.442695
    %v892 = vpow.pop %v891
    %v893 = vadd.f32 %v892, 1.0
    %v894 = vrcp.pop %v893
    %v895 = vmul.f32 1.0, %v894
    %v896 = vmul.f32 %v888, 0.0
    %v897 = vmul.f32 %v882, %v889
    %v898 = vadd.f32 %v896, %v897
    %v899 = vtanh.pop %v898
    %v900 = vmul.f32 %v895, %v899
    %v901 = vxor.u32 %v873, 2147483648
    %v902 = vmul.f32 %v901, 1.442695
    %v903 = vpow.pop %v902
    %v904 = vadd.f32 %v903, 1.0
    %v905 = vrcp.pop %v904
    %v906 = vmul.f32 1.0, %v905
    %v907 = vxor.u32 %v874, 2147483648
    %v908 = vmul.f32 %v907, 1.442695
    %v909 = vpow.pop %v908
    %v910 = vadd.f32 %v909, 1.0
    %v911 = vrcp.pop %v910
    %v912 = vmul.f32 1.0, %v911
    %v913 = vtanh.pop %v875
    %v914 = vxor.u32 %v876, 2147483648
    %v915 = vmul.f32 %v914, 1.442695
    %v916 = vpow.pop %v915
    %v917 = vadd.f32 %v916, 1.0
    %v918 = vrcp.pop %v917
    %v919 = vmul.f32 1.0, %v918
    %v920 = vmul.f32 %v912, 0.0
    %v921 = vmul.f32 %v906, %v913
    %v922 = vadd.f32 %v920, %v921
    %v923 = vtanh.pop %v922
    %v924 = vmul.f32 %v919, %v923
    %s925 = scalar_lea.vmem %s1, 56
    %v926 = vld [vmem:[%s925] sm:$0xff]
    %928 = vset.pattern.permute.xlu0 0
    %929 = vperm.xlu0 %928, %v926
    %v930 = vpop.permute.xlu0 %929
    %v932 = vmul.f32 %v924, %v930
    %v933 = vmul.f32 %v922, %v930
    %v934 = vmax.f32 %v900, 0.0
    %v936 = vlaneseq
    %v937 = vshrl.u32 %v936, 7
    %v938 = vsub.s32 0, %v937
    %v939 = vrot.slane %v866, %v938
    %v941 = vmul.f32 %v934, %v939
    %942 = vadd.xlane.f32.xlu0 %v941
    %v943 = vpop.xlane.xlu0 %942
    %vm944 = vcmask 7168
    %945 = vst.msk [vmem:[#allocation4] sm:$0xff] %vm944, %v943
    %v946 = vmax.f32 %v932, 0.0
    %v948 = vlaneseq
    %v949 = vshrl.u32 %v948, 7
    %v950 = vsub.s32 0, %v949
    %v951 = vrot.slane %v867, %v950
    %v953 = vmul.f32 %v946, %v951
    %954 = vadd.xlane.f32.xlu0 %v953
    %v955 = vpop.xlane.xlu0 %954
    %s956 = scalar_lea.vmem [#allocation5], 56
    %957 = vst.msk [vmem:[%s956] sm:$0xff] %vm944, %v955
    %s958 = smul.u32 4, 32
    %s959 = smul.u32 %s958, 8
    %s960 = sshll.u32 %s959, 4
    %961 = dma.done [#allocation6], %s960
    %v962 = vpack.c.bf16 %v900, %v900
    %v963 = vpack.c.bf16 %v932, %v932
    %v964 = vld [vmem:[#allocation3] sm:$0xff]
    %v965 = vld [vmem:[#allocation3 + $0x8] sm:$0xff]
    %v966 = vld [vmem:[#allocation3 + $0x10] sm:$0xff]
    %v967 = vld [vmem:[#allocation3 + $0x18] sm:$0xff]
    %v968 = vld [vmem:[#allocation3 + $0x20] sm:$0xff]
    %v969 = vld [vmem:[#allocation3 + $0x28] sm:$0xff]
    %v970 = vld [vmem:[#allocation3 + $0x30] sm:$0xff]
    %v971 = vld [vmem:[#allocation3 + $0x38] sm:$0xff]
    %v972 = vld [vmem:[#allocation3 + $0x40] sm:$0xff]
    %v973 = vld [vmem:[#allocation3 + $0x48] sm:$0xff]
    %v974 = vld [vmem:[#allocation3 + $0x50] sm:$0xff]
    %v975 = vld [vmem:[#allocation3 + $0x58] sm:$0xff]
    %v976 = vld [vmem:[#allocation3 + $0x60] sm:$0xff]
    %v977 = vld [vmem:[#allocation3 + $0x68] sm:$0xff]
    %v978 = vld [vmem:[#allocation3 + $0x70] sm:$0xff]
    %v979 = vld [vmem:[#allocation3 + $0x78] sm:$0xff]
    %v980 = vld [vmem:[#allocation3 + $0x80] sm:$0xff]
    %v981 = vld [vmem:[#allocation3 + $0x88] sm:$0xff]
    %v982 = vld [vmem:[#allocation3 + $0x90] sm:$0xff]
    %v983 = vld [vmem:[#allocation3 + $0x98] sm:$0xff]
    %v984 = vld [vmem:[#allocation3 + $0xa0] sm:$0xff]
    %v985 = vld [vmem:[#allocation3 + $0xa8] sm:$0xff]
    %v986 = vld [vmem:[#allocation3 + $0xb0] sm:$0xff]
    %v987 = vld [vmem:[#allocation3 + $0xb8] sm:$0xff]
    %v988 = vld [vmem:[#allocation3 + $0xc0] sm:$0xff]
    %v989 = vld [vmem:[#allocation3 + $0xc8] sm:$0xff]
    %v990 = vld [vmem:[#allocation3 + $0xd0] sm:$0xff]
    %v991 = vld [vmem:[#allocation3 + $0xd8] sm:$0xff]
    %v992 = vld [vmem:[#allocation3 + $0xe0] sm:$0xff]
    %v993 = vld [vmem:[#allocation3 + $0xe8] sm:$0xff]
    %v994 = vld [vmem:[#allocation3 + $0xf0] sm:$0xff]
    %v995 = vld [vmem:[#allocation3 + $0xf8] sm:$0xff]
    %v996 = vld [vmem:[#allocation3 + $0x100] sm:$0xff]
    %v997 = vld [vmem:[#allocation3 + $0x108] sm:$0xff]
    %v998 = vld [vmem:[#allocation3 + $0x110] sm:$0xff]
    %v999 = vld [vmem:[#allocation3 + $0x118] sm:$0xff]
    %v1000 = vld [vmem:[#allocation3 + $0x120] sm:$0xff]
    %v1001 = vld [vmem:[#allocation3 + $0x128] sm:$0xff]
    %v1002 = vld [vmem:[#allocation3 + $0x130] sm:$0xff]
    %v1003 = vld [vmem:[#allocation3 + $0x138] sm:$0xff]
    %v1004 = vld [vmem:[#allocation3 + $0x140] sm:$0xff]
    %v1005 = vld [vmem:[#allocation3 + $0x148] sm:$0xff]
    %v1006 = vld [vmem:[#allocation3 + $0x150] sm:$0xff]
    %v1007 = vld [vmem:[#allocation3 + $0x158] sm:$0xff]
    %v1008 = vld [vmem:[#allocation3 + $0x160] sm:$0xff]
    %v1009 = vld [vmem:[#allocation3 + $0x168] sm:$0xff]
    %v1010 = vld [vmem:[#allocation3 + $0x170] sm:$0xff]
    %v1011 = vld [vmem:[#allocation3 + $0x178] sm:$0xff]
    %v1012 = vld [vmem:[#allocation3 + $0x180] sm:$0xff]
    %v1013 = vld [vmem:[#allocation3 + $0x188] sm:$0xff]
    %v1014 = vld [vmem:[#allocation3 + $0x190] sm:$0xff]
    %v1015 = vld [vmem:[#allocation3 + $0x198] sm:$0xff]
    %v1016 = vld [vmem:[#allocation3 + $0x1a0] sm:$0xff]
    %v1017 = vld [vmem:[#allocation3 + $0x1a8] sm:$0xff]
    %v1018 = vld [vmem:[#allocation3 + $0x1b0] sm:$0xff]
    %v1019 = vld [vmem:[#allocation3 + $0x1b8] sm:$0xff]
    %v1020 = vld [vmem:[#allocation3 + $0x1c0] sm:$0xff]
    %v1021 = vld [vmem:[#allocation3 + $0x1c8] sm:$0xff]
    %v1022 = vld [vmem:[#allocation3 + $0x1d0] sm:$0xff]
    %v1023 = vld [vmem:[#allocation3 + $0x1d8] sm:$0xff]
    %v1024 = vld [vmem:[#allocation3 + $0x1e0] sm:$0xff]
    %v1025 = vld [vmem:[#allocation3 + $0x1e8] sm:$0xff]
    %v1026 = vld [vmem:[#allocation3 + $0x1f0] sm:$0xff]
    %v1027 = vld [vmem:[#allocation3 + $0x1f8] sm:$0xff]
    %v1028 = vld [vmem:[#allocation3 + $0x200] sm:$0xff]
    %v1029 = vld [vmem:[#allocation3 + $0x208] sm:$0xff]
    %v1030 = vld [vmem:[#allocation3 + $0x210] sm:$0xff]
    %v1031 = vld [vmem:[#allocation3 + $0x218] sm:$0xff]
    %v1032 = vld [vmem:[#allocation3 + $0x220] sm:$0xff]
    %v1033 = vld [vmem:[#allocation3 + $0x228] sm:$0xff]
    %v1034 = vld [vmem:[#allocation3 + $0x230] sm:$0xff]
    %v1035 = vld [vmem:[#allocation3 + $0x238] sm:$0xff]
    %v1036 = vld [vmem:[#allocation3 + $0x240] sm:$0xff]
    %v1037 = vld [vmem:[#allocation3 + $0x248] sm:$0xff]
    %v1038 = vld [vmem:[#allocation3 + $0x250] sm:$0xff]
    %v1039 = vld [vmem:[#allocation3 + $0x258] sm:$0xff]
    %v1040 = vld [vmem:[#allocation3 + $0x260] sm:$0xff]
    %v1041 = vld [vmem:[#allocation3 + $0x268] sm:$0xff]
    %v1042 = vld [vmem:[#allocation3 + $0x270] sm:$0xff]
    %v1043 = vld [vmem:[#allocation3 + $0x278] sm:$0xff]
    %v1044 = vld [vmem:[#allocation3 + $0x280] sm:$0xff]
    %v1045 = vld [vmem:[#allocation3 + $0x288] sm:$0xff]
    %v1046 = vld [vmem:[#allocation3 + $0x290] sm:$0xff]
    %v1047 = vld [vmem:[#allocation3 + $0x298] sm:$0xff]
    %v1048 = vld [vmem:[#allocation3 + $0x2a0] sm:$0xff]
    %v1049 = vld [vmem:[#allocation3 + $0x2a8] sm:$0xff]
    %v1050 = vld [vmem:[#allocation3 + $0x2b0] sm:$0xff]
    %v1051 = vld [vmem:[#allocation3 + $0x2b8] sm:$0xff]
    %v1052 = vld [vmem:[#allocation3 + $0x2c0] sm:$0xff]
    %v1053 = vld [vmem:[#allocation3 + $0x2c8] sm:$0xff]
    %v1054 = vld [vmem:[#allocation3 + $0x2d0] sm:$0xff]
    %v1055 = vld [vmem:[#allocation3 + $0x2d8] sm:$0xff]
    %v1056 = vld [vmem:[#allocation3 + $0x2e0] sm:$0xff]
    %v1057 = vld [vmem:[#allocation3 + $0x2e8] sm:$0xff]
    %v1058 = vld [vmem:[#allocation3 + $0x2f0] sm:$0xff]
    %v1059 = vld [vmem:[#allocation3 + $0x2f8] sm:$0xff]
    %v1060 = vld [vmem:[#allocation3 + $0x300] sm:$0xff]
    %v1061 = vld [vmem:[#allocation3 + $0x308] sm:$0xff]
    %v1062 = vld [vmem:[#allocation3 + $0x310] sm:$0xff]
    %v1063 = vld [vmem:[#allocation3 + $0x318] sm:$0xff]
    %v1064 = vld [vmem:[#allocation3 + $0x320] sm:$0xff]
    %v1065 = vld [vmem:[#allocation3 + $0x328] sm:$0xff]
    %v1066 = vld [vmem:[#allocation3 + $0x330] sm:$0xff]
    %v1067 = vld [vmem:[#allocation3 + $0x338] sm:$0xff]
    %v1068 = vld [vmem:[#allocation3 + $0x340] sm:$0xff]
    %v1069 = vld [vmem:[#allocation3 + $0x348] sm:$0xff]
    %v1070 = vld [vmem:[#allocation3 + $0x350] sm:$0xff]
    %v1071 = vld [vmem:[#allocation3 + $0x358] sm:$0xff]
    %v1072 = vld [vmem:[#allocation3 + $0x360] sm:$0xff]
    %v1073 = vld [vmem:[#allocation3 + $0x368] sm:$0xff]
    %v1074 = vld [vmem:[#allocation3 + $0x370] sm:$0xff]
    %v1075 = vld [vmem:[#allocation3 + $0x378] sm:$0xff]
    %v1076 = vld [vmem:[#allocation3 + $0x380] sm:$0xff]
    %v1077 = vld [vmem:[#allocation3 + $0x388] sm:$0xff]
    %v1078 = vld [vmem:[#allocation3 + $0x390] sm:$0xff]
    %v1079 = vld [vmem:[#allocation3 + $0x398] sm:$0xff]
    %v1080 = vld [vmem:[#allocation3 + $0x3a0] sm:$0xff]
    %v1081 = vld [vmem:[#allocation3 + $0x3a8] sm:$0xff]
    %v1082 = vld [vmem:[#allocation3 + $0x3b0] sm:$0xff]
    %v1083 = vld [vmem:[#allocation3 + $0x3b8] sm:$0xff]
    %v1084 = vld [vmem:[#allocation3 + $0x3c0] sm:$0xff]
    %v1085 = vld [vmem:[#allocation3 + $0x3c8] sm:$0xff]
    %v1086 = vld [vmem:[#allocation3 + $0x3d0] sm:$0xff]
    %v1087 = vld [vmem:[#allocation3 + $0x3d8] sm:$0xff]
    %v1088 = vld [vmem:[#allocation3 + $0x3e0] sm:$0xff]
    %v1089 = vld [vmem:[#allocation3 + $0x3e8] sm:$0xff]
    %v1090 = vld [vmem:[#allocation3 + $0x3f0] sm:$0xff]
    %v1091 = vld [vmem:[#allocation3 + $0x3f8] sm:$0xff]
    %v1220 = vunpack.c.l.b16 %v964
    %v1221 = vunpack.c.h.b16 %v964
    %v1222 = vunpack.c.l.b16 %v965
    %v1223 = vunpack.c.h.b16 %v965
    %v1224 = vunpack.c.l.b16 %v966
    %v1225 = vunpack.c.h.b16 %v966
    %v1226 = vunpack.c.l.b16 %v967
    %v1227 = vunpack.c.h.b16 %v967
    %v1228 = vunpack.c.l.b16 %v968
    %v1229 = vunpack.c.h.b16 %v968
    %v1230 = vunpack.c.l.b16 %v969
    %v1231 = vunpack.c.h.b16 %v969
    %v1232 = vunpack.c.l.b16 %v970
    %v1233 = vunpack.c.h.b16 %v970
    %v1234 = vunpack.c.l.b16 %v971
    %v1235 = vunpack.c.h.b16 %v971
    %v1236 = vunpack.c.l.b16 %v972
    %v1237 = vunpack.c.h.b16 %v972
    %v1238 = vunpack.c.l.b16 %v973
    %v1239 = vunpack.c.h.b16 %v973
    %v1240 = vunpack.c.l.b16 %v974
    %v1241 = vunpack.c.h.b16 %v974
    %v1242 = vunpack.c.l.b16 %v975
    %v1243 = vunpack.c.h.b16 %v975
    %v1244 = vunpack.c.l.b16 %v976
    %v1245 = vunpack.c.h.b16 %v976
    %v1246 = vunpack.c.l.b16 %v977
    %v1247 = vunpack.c.h.b16 %v977
    %v1248 = vunpack.c.l.b16 %v978
    %v1249 = vunpack.c.h.b16 %v978
    %v1250 = vunpack.c.l.b16 %v979
    %v1251 = vunpack.c.h.b16 %v979
    %v1252 = vunpack.c.l.b16 %v980
    %v1253 = vunpack.c.h.b16 %v980
    %v1254 = vunpack.c.l.b16 %v981
    %v1255 = vunpack.c.h.b16 %v981
    %v1256 = vunpack.c.l.b16 %v982
    %v1257 = vunpack.c.h.b16 %v982
    %v1258 = vunpack.c.l.b16 %v983
    %v1259 = vunpack.c.h.b16 %v983
    %v1260 = vunpack.c.l.b16 %v984
    %v1261 = vunpack.c.h.b16 %v984
    %v1262 = vunpack.c.l.b16 %v985
    %v1263 = vunpack.c.h.b16 %v985
    %v1264 = vunpack.c.l.b16 %v986
    %v1265 = vunpack.c.h.b16 %v986
    %v1266 = vunpack.c.l.b16 %v987
    %v1267 = vunpack.c.h.b16 %v987
    %v1268 = vunpack.c.l.b16 %v988
    %v1269 = vunpack.c.h.b16 %v988
    %v1270 = vunpack.c.l.b16 %v989
    %v1271 = vunpack.c.h.b16 %v989
    %v1272 = vunpack.c.l.b16 %v990
    %v1273 = vunpack.c.h.b16 %v990
    %v1274 = vunpack.c.l.b16 %v991
    %v1275 = vunpack.c.h.b16 %v991
    %v1276 = vunpack.c.l.b16 %v992
    %v1277 = vunpack.c.h.b16 %v992
    %v1278 = vunpack.c.l.b16 %v993
    %v1279 = vunpack.c.h.b16 %v993
    %v1280 = vunpack.c.l.b16 %v994
    %v1281 = vunpack.c.h.b16 %v994
    %v1282 = vunpack.c.l.b16 %v995
    %v1283 = vunpack.c.h.b16 %v995
    %v1284 = vunpack.c.l.b16 %v996
    %v1285 = vunpack.c.h.b16 %v996
    %v1286 = vunpack.c.l.b16 %v997
    %v1287 = vunpack.c.h.b16 %v997
    %v1288 = vunpack.c.l.b16 %v998
    %v1289 = vunpack.c.h.b16 %v998
    %v1290 = vunpack.c.l.b16 %v999
    %v1291 = vunpack.c.h.b16 %v999
    %v1292 = vunpack.c.l.b16 %v1000
    %v1293 = vunpack.c.h.b16 %v1000
    %v1294 = vunpack.c.l.b16 %v1001
    %v1295 = vunpack.c.h.b16 %v1001
    %v1296 = vunpack.c.l.b16 %v1002
    %v1297 = vunpack.c.h.b16 %v1002
    %v1298 = vunpack.c.l.b16 %v1003
    %v1299 = vunpack.c.h.b16 %v1003
    %v1300 = vunpack.c.l.b16 %v1004
    %v1301 = vunpack.c.h.b16 %v1004
    %v1302 = vunpack.c.l.b16 %v1005
    %v1303 = vunpack.c.h.b16 %v1005
    %v1304 = vunpack.c.l.b16 %v1006
    %v1305 = vunpack.c.h.b16 %v1006
    %v1306 = vunpack.c.l.b16 %v1007
    %v1307 = vunpack.c.h.b16 %v1007
    %v1308 = vunpack.c.l.b16 %v1008
    %v1309 = vunpack.c.h.b16 %v1008
    %v1310 = vunpack.c.l.b16 %v1009
    %v1311 = vunpack.c.h.b16 %v1009
    %v1312 = vunpack.c.l.b16 %v1010
    %v1313 = vunpack.c.h.b16 %v1010
    %v1314 = vunpack.c.l.b16 %v1011
    %v1315 = vunpack.c.h.b16 %v1011
    %v1316 = vunpack.c.l.b16 %v1012
    %v1317 = vunpack.c.h.b16 %v1012
    %v1318 = vunpack.c.l.b16 %v1013
    %v1319 = vunpack.c.h.b16 %v1013
    %v1320 = vunpack.c.l.b16 %v1014
    %v1321 = vunpack.c.h.b16 %v1014
    %v1322 = vunpack.c.l.b16 %v1015
    %v1323 = vunpack.c.h.b16 %v1015
    %v1324 = vunpack.c.l.b16 %v1016
    %v1325 = vunpack.c.h.b16 %v1016
    %v1326 = vunpack.c.l.b16 %v1017
    %v1327 = vunpack.c.h.b16 %v1017
    %v1328 = vunpack.c.l.b16 %v1018
    %v1329 = vunpack.c.h.b16 %v1018
    %v1330 = vunpack.c.l.b16 %v1019
    %v1331 = vunpack.c.h.b16 %v1019
    %v1332 = vunpack.c.l.b16 %v1020
    %v1333 = vunpack.c.h.b16 %v1020
    %v1334 = vunpack.c.l.b16 %v1021
    %v1335 = vunpack.c.h.b16 %v1021
    %v1336 = vunpack.c.l.b16 %v1022
    %v1337 = vunpack.c.h.b16 %v1022
    %v1338 = vunpack.c.l.b16 %v1023
    %v1339 = vunpack.c.h.b16 %v1023
    %v1340 = vunpack.c.l.b16 %v1024
    %v1341 = vunpack.c.h.b16 %v1024
    %v1342 = vunpack.c.l.b16 %v1025
    %v1343 = vunpack.c.h.b16 %v1025
    %v1344 = vunpack.c.l.b16 %v1026
    %v1345 = vunpack.c.h.b16 %v1026
    %v1346 = vunpack.c.l.b16 %v1027
    %v1347 = vunpack.c.h.b16 %v1027
    %v1348 = vunpack.c.l.b16 %v1028
    %v1349 = vunpack.c.h.b16 %v1028
    %v1350 = vunpack.c.l.b16 %v1029
    %v1351 = vunpack.c.h.b16 %v1029
    %v1352 = vunpack.c.l.b16 %v1030
    %v1353 = vunpack.c.h.b16 %v1030
    %v1354 = vunpack.c.l.b16 %v1031
    %v1355 = vunpack.c.h.b16 %v1031
    %v1356 = vunpack.c.l.b16 %v1032
    %v1357 = vunpack.c.h.b16 %v1032
    %v1358 = vunpack.c.l.b16 %v1033
    %v1359 = vunpack.c.h.b16 %v1033
    %v1360 = vunpack.c.l.b16 %v1034
    %v1361 = vunpack.c.h.b16 %v1034
    %v1362 = vunpack.c.l.b16 %v1035
    %v1363 = vunpack.c.h.b16 %v1035
    %v1364 = vunpack.c.l.b16 %v1036
    %v1365 = vunpack.c.h.b16 %v1036
    %v1366 = vunpack.c.l.b16 %v1037
    %v1367 = vunpack.c.h.b16 %v1037
    %v1368 = vunpack.c.l.b16 %v1038
    %v1369 = vunpack.c.h.b16 %v1038
    %v1370 = vunpack.c.l.b16 %v1039
    %v1371 = vunpack.c.h.b16 %v1039
    %v1372 = vunpack.c.l.b16 %v1040
    %v1373 = vunpack.c.h.b16 %v1040
    %v1374 = vunpack.c.l.b16 %v1041
    %v1375 = vunpack.c.h.b16 %v1041
    %v1376 = vunpack.c.l.b16 %v1042
    %v1377 = vunpack.c.h.b16 %v1042
    %v1378 = vunpack.c.l.b16 %v1043
    %v1379 = vunpack.c.h.b16 %v1043
    %v1380 = vunpack.c.l.b16 %v1044
    %v1381 = vunpack.c.h.b16 %v1044
    %v1382 = vunpack.c.l.b16 %v1045
    %v1383 = vunpack.c.h.b16 %v1045
    %v1384 = vunpack.c.l.b16 %v1046
    %v1385 = vunpack.c.h.b16 %v1046
    %v1386 = vunpack.c.l.b16 %v1047
    %v1387 = vunpack.c.h.b16 %v1047
    %v1388 = vunpack.c.l.b16 %v1048
    %v1389 = vunpack.c.h.b16 %v1048
    %v1390 = vunpack.c.l.b16 %v1049
    %v1391 = vunpack.c.h.b16 %v1049
    %v1392 = vunpack.c.l.b16 %v1050
    %v1393 = vunpack.c.h.b16 %v1050
    %v1394 = vunpack.c.l.b16 %v1051
    %v1395 = vunpack.c.h.b16 %v1051
    %v1396 = vunpack.c.l.b16 %v1052
    %v1397 = vunpack.c.h.b16 %v1052
    %v1398 = vunpack.c.l.b16 %v1053
    %v1399 = vunpack.c.h.b16 %v1053
    %v1400 = vunpack.c.l.b16 %v1054
    %v1401 = vunpack.c.h.b16 %v1054
    %v1402 = vunpack.c.l.b16 %v1055
    %v1403 = vunpack.c.h.b16 %v1055
    %v1404 = vunpack.c.l.b16 %v1056
    %v1405 = vunpack.c.h.b16 %v1056
    %v1406 = vunpack.c.l.b16 %v1057
    %v1407 = vunpack.c.h.b16 %v1057
    %v1408 = vunpack.c.l.b16 %v1058
    %v1409 = vunpack.c.h.b16 %v1058
    %v1410 = vunpack.c.l.b16 %v1059
    %v1411 = vunpack.c.h.b16 %v1059
    %v1412 = vunpack.c.l.b16 %v1060
    %v1413 = vunpack.c.h.b16 %v1060
    %v1414 = vunpack.c.l.b16 %v1061
    %v1415 = vunpack.c.h.b16 %v1061
    %v1416 = vunpack.c.l.b16 %v1062
    %v1417 = vunpack.c.h.b16 %v1062
    %v1418 = vunpack.c.l.b16 %v1063
    %v1419 = vunpack.c.h.b16 %v1063
    %v1420 = vunpack.c.l.b16 %v1064
    %v1421 = vunpack.c.h.b16 %v1064
    %v1422 = vunpack.c.l.b16 %v1065
    %v1423 = vunpack.c.h.b16 %v1065
    %v1424 = vunpack.c.l.b16 %v1066
    %v1425 = vunpack.c.h.b16 %v1066
    %v1426 = vunpack.c.l.b16 %v1067
    %v1427 = vunpack.c.h.b16 %v1067
    %v1428 = vunpack.c.l.b16 %v1068
    %v1429 = vunpack.c.h.b16 %v1068
    %v1430 = vunpack.c.l.b16 %v1069
    %v1431 = vunpack.c.h.b16 %v1069
    %v1432 = vunpack.c.l.b16 %v1070
    %v1433 = vunpack.c.h.b16 %v1070
    %v1434 = vunpack.c.l.b16 %v1071
    %v1435 = vunpack.c.h.b16 %v1071
    %v1436 = vunpack.c.l.b16 %v1072
    %v1437 = vunpack.c.h.b16 %v1072
    %v1438 = vunpack.c.l.b16 %v1073
    %v1439 = vunpack.c.h.b16 %v1073
    %v1440 = vunpack.c.l.b16 %v1074
    %v1441 = vunpack.c.h.b16 %v1074
    %v1442 = vunpack.c.l.b16 %v1075
    %v1443 = vunpack.c.h.b16 %v1075
    %v1444 = vunpack.c.l.b16 %v1076
    %v1445 = vunpack.c.h.b16 %v1076
    %v1446 = vunpack.c.l.b16 %v1077
    %v1447 = vunpack.c.h.b16 %v1077
    %v1448 = vunpack.c.l.b16 %v1078
    %v1449 = vunpack.c.h.b16 %v1078
    %v1450 = vunpack.c.l.b16 %v1079
    %v1451 = vunpack.c.h.b16 %v1079
    %v1452 = vunpack.c.l.b16 %v1080
    %v1453 = vunpack.c.h.b16 %v1080
    %v1454 = vunpack.c.l.b16 %v1081
    %v1455 = vunpack.c.h.b16 %v1081
    %v1456 = vunpack.c.l.b16 %v1082
    %v1457 = vunpack.c.h.b16 %v1082
    %v1458 = vunpack.c.l.b16 %v1083
    %v1459 = vunpack.c.h.b16 %v1083
    %v1460 = vunpack.c.l.b16 %v1084
    %v1461 = vunpack.c.h.b16 %v1084
    %v1462 = vunpack.c.l.b16 %v1085
    %v1463 = vunpack.c.h.b16 %v1085
    %v1464 = vunpack.c.l.b16 %v1086
    %v1465 = vunpack.c.h.b16 %v1086
    %v1466 = vunpack.c.l.b16 %v1087
    %v1467 = vunpack.c.h.b16 %v1087
    %v1468 = vunpack.c.l.b16 %v1088
    %v1469 = vunpack.c.h.b16 %v1088
    %v1470 = vunpack.c.l.b16 %v1089
    %v1471 = vunpack.c.h.b16 %v1089
    %v1472 = vunpack.c.l.b16 %v1090
    %v1473 = vunpack.c.h.b16 %v1090
    %v1474 = vunpack.c.l.b16 %v1091
    %v1475 = vunpack.c.h.b16 %v1091
    %v1476 = vpack.c.b16 %v1228, %v1220
    %v1477 = vpack.c.b16 %v1229, %v1221
    %v1478 = vpack.c.b16 %v1230, %v1222
    %v1479 = vpack.c.b16 %v1231, %v1223
    %v1480 = vpack.c.b16 %v1232, %v1224
    %v1481 = vpack.c.b16 %v1233, %v1225
    %v1482 = vpack.c.b16 %v1234, %v1226
    %v1483 = vpack.c.b16 %v1235, %v1227
    %v1484 = vpack.c.b16 %v1244, %v1236
    %v1485 = vpack.c.b16 %v1245, %v1237
    %v1486 = vpack.c.b16 %v1246, %v1238
    %v1487 = vpack.c.b16 %v1247, %v1239
    %v1488 = vpack.c.b16 %v1248, %v1240
    %v1489 = vpack.c.b16 %v1249, %v1241
    %v1490 = vpack.c.b16 %v1250, %v1242
    %v1491 = vpack.c.b16 %v1251, %v1243
    %v1492 = vpack.c.b16 %v1260, %v1252
    %v1493 = vpack.c.b16 %v1261, %v1253
    %v1494 = vpack.c.b16 %v1262, %v1254
    %v1495 = vpack.c.b16 %v1263, %v1255
    %v1496 = vpack.c.b16 %v1264, %v1256
    %v1497 = vpack.c.b16 %v1265, %v1257
    %v1498 = vpack.c.b16 %v1266, %v1258
    %v1499 = vpack.c.b16 %v1267, %v1259
    %v1500 = vpack.c.b16 %v1276, %v1268
    %v1501 = vpack.c.b16 %v1277, %v1269
    %v1502 = vpack.c.b16 %v1278, %v1270
    %v1503 = vpack.c.b16 %v1279, %v1271
    %v1504 = vpack.c.b16 %v1280, %v1272
    %v1505 = vpack.c.b16 %v1281, %v1273
    %v1506 = vpack.c.b16 %v1282, %v1274
    %v1507 = vpack.c.b16 %v1283, %v1275
    %v1508 = vpack.c.b16 %v1292, %v1284
    %v1509 = vpack.c.b16 %v1293, %v1285
    %v1510 = vpack.c.b16 %v1294, %v1286
    %v1511 = vpack.c.b16 %v1295, %v1287
    %v1512 = vpack.c.b16 %v1296, %v1288
    %v1513 = vpack.c.b16 %v1297, %v1289
    %v1514 = vpack.c.b16 %v1298, %v1290
    %v1515 = vpack.c.b16 %v1299, %v1291
    %v1516 = vpack.c.b16 %v1308, %v1300
    %v1517 = vpack.c.b16 %v1309, %v1301
    %v1518 = vpack.c.b16 %v1310, %v1302
    %v1519 = vpack.c.b16 %v1311, %v1303
    %v1520 = vpack.c.b16 %v1312, %v1304
    %v1521 = vpack.c.b16 %v1313, %v1305
    %v1522 = vpack.c.b16 %v1314, %v1306
    %v1523 = vpack.c.b16 %v1315, %v1307
    %v1524 = vpack.c.b16 %v1324, %v1316
    %v1525 = vpack.c.b16 %v1325, %v1317
    %v1526 = vpack.c.b16 %v1326, %v1318
    %v1527 = vpack.c.b16 %v1327, %v1319
    %v1528 = vpack.c.b16 %v1328, %v1320
    %v1529 = vpack.c.b16 %v1329, %v1321
    %v1530 = vpack.c.b16 %v1330, %v1322
    %v1531 = vpack.c.b16 %v1331, %v1323
    %v1532 = vpack.c.b16 %v1340, %v1332
    %v1533 = vpack.c.b16 %v1341, %v1333
    %v1534 = vpack.c.b16 %v1342, %v1334
    %v1535 = vpack.c.b16 %v1343, %v1335
    %v1536 = vpack.c.b16 %v1344, %v1336
    %v1537 = vpack.c.b16 %v1345, %v1337
    %v1538 = vpack.c.b16 %v1346, %v1338
    %v1539 = vpack.c.b16 %v1347, %v1339
    %v1540 = vpack.c.b16 %v1356, %v1348
    %v1541 = vpack.c.b16 %v1357, %v1349
    %v1542 = vpack.c.b16 %v1358, %v1350
    %v1543 = vpack.c.b16 %v1359, %v1351
    %v1544 = vpack.c.b16 %v1360, %v1352
    %v1545 = vpack.c.b16 %v1361, %v1353
    %v1546 = vpack.c.b16 %v1362, %v1354
    %v1547 = vpack.c.b16 %v1363, %v1355
    %v1548 = vpack.c.b16 %v1372, %v1364
    %v1549 = vpack.c.b16 %v1373, %v1365
    %v1550 = vpack.c.b16 %v1374, %v1366
    %v1551 = vpack.c.b16 %v1375, %v1367
    %v1552 = vpack.c.b16 %v1376, %v1368
    %v1553 = vpack.c.b16 %v1377, %v1369
    %v1554 = vpack.c.b16 %v1378, %v1370
    %v1555 = vpack.c.b16 %v1379, %v1371
    %v1556 = vpack.c.b16 %v1388, %v1380
    %v1557 = vpack.c.b16 %v1389, %v1381
    %v1558 = vpack.c.b16 %v1390, %v1382
    %v1559 = vpack.c.b16 %v1391, %v1383
    %v1560 = vpack.c.b16 %v1392, %v1384
    %v1561 = vpack.c.b16 %v1393, %v1385
    %v1562 = vpack.c.b16 %v1394, %v1386
    %v1563 = vpack.c.b16 %v1395, %v1387
    %v1564 = vpack.c.b16 %v1404, %v1396
    %v1565 = vpack.c.b16 %v1405, %v1397
    %v1566 = vpack.c.b16 %v1406, %v1398
    %v1567 = vpack.c.b16 %v1407, %v1399
    %v1568 = vpack.c.b16 %v1408, %v1400
    %v1569 = vpack.c.b16 %v1409, %v1401
    %v1570 = vpack.c.b16 %v1410, %v1402
    %v1571 = vpack.c.b16 %v1411, %v1403
    %v1572 = vpack.c.b16 %v1420, %v1412
    %v1573 = vpack.c.b16 %v1421, %v1413
    %v1574 = vpack.c.b16 %v1422, %v1414
    %v1575 = vpack.c.b16 %v1423, %v1415
    %v1576 = vpack.c.b16 %v1424, %v1416
    %v1577 = vpack.c.b16 %v1425, %v1417
    %v1578 = vpack.c.b16 %v1426, %v1418
    %v1579 = vpack.c.b16 %v1427, %v1419
    %v1580 = vpack.c.b16 %v1436, %v1428
    %v1581 = vpack.c.b16 %v1437, %v1429
    %v1582 = vpack.c.b16 %v1438, %v1430
    %v1583 = vpack.c.b16 %v1439, %v1431
    %v1584 = vpack.c.b16 %v1440, %v1432
    %v1585 = vpack.c.b16 %v1441, %v1433
    %v1586 = vpack.c.b16 %v1442, %v1434
    %v1587 = vpack.c.b16 %v1443, %v1435
    %v1588 = vpack.c.b16 %v1452, %v1444
    %v1589 = vpack.c.b16 %v1453, %v1445
    %v1590 = vpack.c.b16 %v1454, %v1446
    %v1591 = vpack.c.b16 %v1455, %v1447
    %v1592 = vpack.c.b16 %v1456, %v1448
    %v1593 = vpack.c.b16 %v1457, %v1449
    %v1594 = vpack.c.b16 %v1458, %v1450
    %v1595 = vpack.c.b16 %v1459, %v1451
    %v1596 = vpack.c.b16 %v1468, %v1460
    %v1597 = vpack.c.b16 %v1469, %v1461
    %v1598 = vpack.c.b16 %v1470, %v1462
    %v1599 = vpack.c.b16 %v1471, %v1463
    %v1600 = vpack.c.b16 %v1472, %v1464
    %v1601 = vpack.c.b16 %v1473, %v1465
    %v1602 = vpack.c.b16 %v1474, %v1466
    %v1603 = vpack.c.b16 %v1475, %v1467
    %1732 = vmatprep.subr.bf16.mxu0 %v1533
    %1733 = vmatpush1.bf16.msra.mxu0 %v1532
    %1734 = vmatprep.subr.bf16.mxu0 %v1525
    %1735 = vmatpush1.bf16.msra.mxu0 %v1524
    %1736 = vmatprep.subr.bf16.mxu0 %v1517
    %1737 = vmatpush1.bf16.msra.mxu0 %v1516
    %1738 = vmatprep.subr.bf16.mxu0 %v1509
    %1739 = vmatpush1.bf16.msra.mxu0 %v1508
    %1740 = vmatprep.subr.bf16.mxu0 %v1501
    %1741 = vmatpush1.bf16.msra.mxu0 %v1500
    %1742 = vmatprep.subr.bf16.mxu0 %v1493
    %1743 = vmatpush1.bf16.msra.mxu0 %v1492
    %1744 = vmatprep.subr.bf16.mxu0 %v1485
    %1745 = vmatpush1.bf16.msra.mxu0 %v1484
    %1746 = vmatprep.subr.bf16.mxu0 %v1477
    %1747 = vmatpush1.bf16.msra.mxu0 %v1476
    %1748 = vmatprep.subr.bf16.mxu0 %v1597
    %1749 = vmatpush2.bf16.msra.mxu0 %v1596
    %1750 = vmatprep.subr.bf16.mxu0 %v1589
    %1751 = vmatpush2.bf16.msra.mxu0 %v1588
    %1752 = vmatprep.subr.bf16.mxu0 %v1581
    %1753 = vmatpush2.bf16.msra.mxu0 %v1580
    %1754 = vmatprep.subr.bf16.mxu0 %v1573
    %1755 = vmatpush2.bf16.msra.mxu0 %v1572
    %1756 = vmatprep.subr.bf16.mxu0 %v1565
    %1757 = vmatpush2.bf16.msra.mxu0 %v1564
    %1758 = vmatprep.subr.bf16.mxu0 %v1557
    %1759 = vmatpush2.bf16.msra.mxu0 %v1556
    %1760 = vmatprep.subr.bf16.mxu0 %v1549
    %1761 = vmatpush2.bf16.msra.mxu0 %v1548
    %1762 = vmatprep.subr.bf16.mxu0 %v1541
    %1763 = vmatpush2.bf16.msra.mxu0 %v1540
    %1764 = vmatprep.mubr.bf16.mxu0 %v963
    %1765 = vmatmul.mubr.bf16.gmra.mxu0 %v962
    %v1766 = vpop.f32.mrf.mxu0
    %v1767 = vadd.f32 0.0, %v1766
    %v1768 = vpop.f32.mrf.mxu0
    %v1769 = vadd.f32 0.0, %v1768
    %v1770 = vpop.f32.mrf.mxu0
    %v1771 = vpop.f32.mrf.mxu0
    %1772 = vdwg.mxu0
    %1773 = vmatprep.subr.bf16.mxu0 %v1535
    %1774 = vmatpush1.bf16.msra.mxu0 %v1534
    %1775 = vmatprep.subr.bf16.mxu0 %v1527
    %1776 = vmatpush1.bf16.msra.mxu0 %v1526
    %1777 = vmatprep.subr.bf16.mxu0 %v1519
    %1778 = vmatpush1.bf16.msra.mxu0 %v1518
    %1779 = vmatprep.subr.bf16.mxu0 %v1511
    %1780 = vmatpush1.bf16.msra.mxu0 %v1510
    %1781 = vmatprep.subr.bf16.mxu0 %v1503
    %1782 = vmatpush1.bf16.msra.mxu0 %v1502
    %1783 = vmatprep.subr.bf16.mxu0 %v1495
    %1784 = vmatpush1.bf16.msra.mxu0 %v1494
    %1785 = vmatprep.subr.bf16.mxu0 %v1487
    %1786 = vmatpush1.bf16.msra.mxu0 %v1486
    %1787 = vmatprep.subr.bf16.mxu0 %v1479
    %1788 = vmatpush1.bf16.msra.mxu0 %v1478
    %1789 = vmatprep.subr.bf16.mxu0 %v1599
    %1790 = vmatpush2.bf16.msra.mxu0 %v1598
    %1791 = vmatprep.subr.bf16.mxu0 %v1591
    %1792 = vmatpush2.bf16.msra.mxu0 %v1590
    %1793 = vmatprep.subr.bf16.mxu0 %v1583
    %1794 = vmatpush2.bf16.msra.mxu0 %v1582
    %1795 = vmatprep.subr.bf16.mxu0 %v1575
    %1796 = vmatpush2.bf16.msra.mxu0 %v1574
    %1797 = vmatprep.subr.bf16.mxu0 %v1567
    %1798 = vmatpush2.bf16.msra.mxu0 %v1566
    %1799 = vmatprep.subr.bf16.mxu0 %v1559
    %1800 = vmatpush2.bf16.msra.mxu0 %v1558
    %1801 = vmatprep.subr.bf16.mxu0 %v1551
    %1802 = vmatpush2.bf16.msra.mxu0 %v1550
    %1803 = vmatprep.subr.bf16.mxu0 %v1543
    %1804 = vmatpush2.bf16.msra.mxu0 %v1542
    %1805 = vmatprep.mubr.bf16.mxu0 %v963
    %1806 = vmatmul.mubr.bf16.gmra.mxu0 %v962
    %v1807 = vpop.f32.mrf.mxu0
    %v1808 = vadd.f32 0.0, %v1807
    %v1809 = vpop.f32.mrf.mxu0
    %v1810 = vadd.f32 0.0, %v1809
    %v1811 = vpop.f32.mrf.mxu0
    %v1812 = vpop.f32.mrf.mxu0
    %1813 = vdwg.mxu0
    %1814 = vmatprep.subr.bf16.mxu0 %v1537
    %1815 = vmatpush1.bf16.msra.mxu0 %v1536
    %1816 = vmatprep.subr.bf16.mxu0 %v1529
    %1817 = vmatpush1.bf16.msra.mxu0 %v1528
    %1818 = vmatprep.subr.bf16.mxu0 %v1521
    %1819 = vmatpush1.bf16.msra.mxu0 %v1520
    %1820 = vmatprep.subr.bf16.mxu0 %v1513
    %1821 = vmatpush1.bf16.msra.mxu0 %v1512
    %1822 = vmatprep.subr.bf16.mxu0 %v1505
    %1823 = vmatpush1.bf16.msra.mxu0 %v1504
    %1824 = vmatprep.subr.bf16.mxu0 %v1497
    %1825 = vmatpush1.bf16.msra.mxu0 %v1496
    %1826 = vmatprep.subr.bf16.mxu0 %v1489
    %1827 = vmatpush1.bf16.msra.mxu0 %v1488
    %1828 = vmatprep.subr.bf16.mxu0 %v1481
    %1829 = vmatpush1.bf16.msra.mxu0 %v1480
    %1830 = vmatprep.subr.bf16.mxu0 %v1601
    %1831 = vmatpush2.bf16.msra.mxu0 %v1600
    %1832 = vmatprep.subr.bf16.mxu0 %v1593
    %1833 = vmatpush2.bf16.msra.mxu0 %v1592
    %1834 = vmatprep.subr.bf16.mxu0 %v1585
    %1835 = vmatpush2.bf16.msra.mxu0 %v1584
    %1836 = vmatprep.subr.bf16.mxu0 %v1577
    %1837 = vmatpush2.bf16.msra.mxu0 %v1576
    %1838 = vmatprep.subr.bf16.mxu0 %v1569
    %1839 = vmatpush2.bf16.msra.mxu0 %v1568
    %1840 = vmatprep.subr.bf16.mxu0 %v1561
    %1841 = vmatpush2.bf16.msra.mxu0 %v1560
    %1842 = vmatprep.subr.bf16.mxu0 %v1553
    %1843 = vmatpush2.bf16.msra.mxu0 %v1552
    %1844 = vmatprep.subr.bf16.mxu0 %v1545
    %1845 = vmatpush2.bf16.msra.mxu0 %v1544
    %1846 = vmatprep.mubr.bf16.mxu0 %v963
    %1847 = vmatmul.mubr.bf16.gmra.mxu0 %v962
    %v1848 = vpop.f32.mrf.mxu0
    %v1849 = vadd.f32 0.0, %v1848
    %v1850 = vpop.f32.mrf.mxu0
    %v1851 = vadd.f32 0.0, %v1850
    %v1852 = vpop.f32.mrf.mxu0
    %v1853 = vpop.f32.mrf.mxu0
    %1854 = vdwg.mxu0
    %1855 = vmatprep.subr.bf16.mxu0 %v1539
    %1856 = vmatpush1.bf16.msra.mxu0 %v1538
    %1857 = vmatprep.subr.bf16.mxu0 %v1531
    %1858 = vmatpush1.bf16.msra.mxu0 %v1530
    %1859 = vmatprep.subr.bf16.mxu0 %v1523
    %1860 = vmatpush1.bf16.msra.mxu0 %v1522
    %1861 = vmatprep.subr.bf16.mxu0 %v1515
    %1862 = vmatpush1.bf16.msra.mxu0 %v1514
    %1863 = vmatprep.subr.bf16.mxu0 %v1507
    %1864 = vmatpush1.bf16.msra.mxu0 %v1506
    %1865 = vmatprep.subr.bf16.mxu0 %v1499
    %1866 = vmatpush1.bf16.msra.mxu0 %v1498
    %1867 = vmatprep.subr.bf16.mxu0 %v1491
    %1868 = vmatpush1.bf16.msra.mxu0 %v1490
    %1869 = vmatprep.subr.bf16.mxu0 %v1483
    %1870 = vmatpush1.bf16.msra.mxu0 %v1482
    %1871 = vmatprep.subr.bf16.mxu0 %v1603
    %1872 = vmatpush2.bf16.msra.mxu0 %v1602
    %1873 = vmatprep.subr.bf16.mxu0 %v1595
    %1874 = vmatpush2.bf16.msra.mxu0 %v1594
    %1875 = vmatprep.subr.bf16.mxu0 %v1587
    %1876 = vmatpush2.bf16.msra.mxu0 %v1586
    %1877 = vmatprep.subr.bf16.mxu0 %v1579
    %1878 = vmatpush2.bf16.msra.mxu0 %v1578
    %1879 = vmatprep.subr.bf16.mxu0 %v1571
    %1880 = vmatpush2.bf16.msra.mxu0 %v1570
    %1881 = vmatprep.subr.bf16.mxu0 %v1563
    %1882 = vmatpush2.bf16.msra.mxu0 %v1562
    %1883 = vmatprep.subr.bf16.mxu0 %v1555
    %1884 = vmatpush2.bf16.msra.mxu0 %v1554
    %1885 = vmatprep.subr.bf16.mxu0 %v1547
    %1886 = vmatpush2.bf16.msra.mxu0 %v1546
    %1887 = vmatprep.mubr.bf16.mxu0 %v963
    %1888 = vmatmul.mubr.bf16.gmra.mxu0 %v962
    %v1889 = vpop.f32.mrf.mxu0
    %v1890 = vadd.f32 0.0, %v1889
    %v1891 = vpop.f32.mrf.mxu0
    %v1892 = vadd.f32 0.0, %v1891
    %v1893 = vpop.f32.mrf.mxu0
    %v1894 = vpop.f32.mrf.mxu0
    %1895 = vdwg.mxu0
    %s1896 = scalar_lea.vmem [#allocation2], 64
    %v1897 = vld [vmem:[%s1896] sm:$0xff]
    %v1898 = vld [vmem:[%s1896 + $0x8] sm:$0xff]
    %v1899 = vld [vmem:[%s1896 + $0x10] sm:$0xff]
    %v1900 = vld [vmem:[%s1896 + $0x18] sm:$0xff]
    %s1901 = scalar_lea.vmem [#allocation2], 384
    %v1902 = vld [vmem:[%s1901 + $0x20] sm:$0xff]
    %v1903 = vld [vmem:[%s1901 + $0x28] sm:$0xff]
    %v1904 = vld [vmem:[%s1901 + $0x30] sm:$0xff]
    %v1905 = vld [vmem:[%s1901 + $0x38] sm:$0xff]
    %v1906 = vadd.f32 %v1767, %v1897
    %v1907 = vadd.f32 %v1769, %v1898
    %v1908 = vadd.f32 %v1808, %v1899
    %v1909 = vadd.f32 %v1810, %v1900
    %v1910 = vadd.f32 %v1849, %v1902
    %v1911 = vadd.f32 %v1851, %v1903
    %v1912 = vadd.f32 %v1890, %v1904
    %v1913 = vadd.f32 %v1892, %v1905
    %v1914 = vxor.u32 %v1906, 2147483648
    %v1915 = vmul.f32 %v1914, 1.442695
    %v1916 = vpow.pop %v1915
    %v1917 = vadd.f32 %v1916, 1.0
    %v1918 = vrcp.pop %v1917
    %v1919 = vmul.f32 1.0, %v1918
    %v1920 = vxor.u32 %v1907, 2147483648
    %v1921 = vmul.f32 %v1920, 1.442695
    %v1922 = vpow.pop %v1921
    %v1923 = vadd.f32 %v1922, 1.0
    %v1924 = vrcp.pop %v1923
    %v1925 = vmul.f32 1.0, %v1924
    %v1926 = vtanh.pop %v1908
    %v1927 = vxor.u32 %v1909, 2147483648
    %v1928 = vmul.f32 %v1927, 1.442695
    %v1929 = vpow.pop %v1928
    %v1930 = vadd.f32 %v1929, 1.0
    %v1931 = vrcp.pop %v1930
    %v1932 = vmul.f32 1.0, %v1931
    %v1933 = vmul.f32 %v1925, %v898
    %v1934 = vmul.f32 %v1919, %v1926
    %v1935 = vadd.f32 %v1933, %v1934
    %v1936 = vtanh.pop %v1935
    %v1937 = vmul.f32 %v1932, %v1936
    %v1938 = vxor.u32 %v1910, 2147483648
    %v1939 = vmul.f32 %v1938, 1.442695
    %v1940 = vpow.pop %v1939
    %v1941 = vadd.f32 %v1940, 1.0
    %v1942 = vrcp.pop %v1941
    %v1943 = vmul.f32 1.0, %v1942
    %v1944 = vxor.u32 %v1911, 2147483648
    %v1945 = vmul.f32 %v1944, 1.442695
    %v1946 = vpow.pop %v1945
    %v1947 = vadd.f32 %v1946, 1.0
    %v1948 = vrcp.pop %v1947
    %v1949 = vmul.f32 1.0, %v1948
    %v1950 = vtanh.pop %v1912
    %v1951 = vxor.u32 %v1913, 2147483648
    %v1952 = vmul.f32 %v1951, 1.442695
    %v1953 = vpow.pop %v1952
    %v1954 = vadd.f32 %v1953, 1.0
    %v1955 = vrcp.pop %v1954
    %v1956 = vmul.f32 1.0, %v1955
    %v1957 = vmul.f32 %v1949, %v933
    %v1958 = vmul.f32 %v1943, %v1950
    %v1959 = vadd.f32 %v1957, %v1958
    %v1960 = vtanh.pop %v1959
    %v1961 = vmul.f32 %v1956, %v1960
    %s1962 = scalar_lea.vmem %s1, 48
    %v1963 = vld [vmem:[%s1962] sm:$0xff]
    %1965 = vset.pattern.permute.xlu0 0
    %1966 = vperm.xlu0 %1965, %v1963
    %v1967 = vpop.permute.xlu0 %1966
    %v1969 = vmul.f32 %v1961, %v1967
    %v1970 = vmul.f32 %v1959, %v1967
    %v1971 = vmax.f32 %v1937, 0.0
    %v1972 = vmul.f32 %v1971, %v939
    %1973 = vadd.xlane.f32.xlu0 %v1972
    %v1974 = vpop.xlane.xlu0 %1973
    %s1975 = scalar_lea.vmem [#allocation4], 8
    %1976 = vst.msk [vmem:[%s1975] sm:$0xff] %vm944, %v1974
    %v1977 = vmax.f32 %v1969, 0.0
    %v1978 = vmul.f32 %v1977, %v951
    %1979 = vadd.xlane.f32.xlu0 %v1978
    %v1980 = vpop.xlane.xlu0 %1979
    %s1981 = scalar_lea.vmem [#allocation5], 48
    %1982 = vst.msk [vmem:[%s1981] sm:$0xff] %vm944, %v1980
    %v1983 = vpack.c.bf16 %v1937, %v1937
    %v1984 = vpack.c.bf16 %v1969, %v1969
    %v1985 = vld [vmem:[#allocation3] sm:$0xff]
    %v1986 = vld [vmem:[#allocation3 + $0x8] sm:$0xff]
    %v1987 = vld [vmem:[#allocation3 + $0x10] sm:$0xff]
    %v1988 = vld [vmem:[#allocation3 + $0x18] sm:$0xff]
    %v1989 = vld [vmem:[#allocation3 + $0x20] sm:$0xff]
    %v1990 = vld [vmem:[#allocation3 + $0x28] sm:$0xff]
    %v1991 = vld [vmem:[#allocation3 + $0x30] sm:$0xff]
    %v1992 = vld [vmem:[#allocation3 + $0x38] sm:$0xff]
    %v1993 = vld [vmem:[#allocation3 + $0x40] sm:$0xff]
    %v1994 = vld [vmem:[#allocation3 + $0x48] sm:$0xff]
    %v1995 = vld [vmem:[#allocation3 + $0x50] sm:$0xff]
    %v1996 = vld [vmem:[#allocation3 + $0x58] sm:$0xff]
    %v1997 = vld [vmem:[#allocation3 + $0x60] sm:$0xff]
    %v1998 = vld [vmem:[#allocation3 + $0x68] sm:$0xff]
    %v1999 = vld [vmem:[#allocation3 + $0x70] sm:$0xff]
    %v2000 = vld [vmem:[#allocation3 + $0x78] sm:$0xff]
    %v2001 = vld [vmem:[#allocation3 + $0x80] sm:$0xff]
    %v2002 = vld [vmem:[#allocation3 + $0x88] sm:$0xff]
    %v2003 = vld [vmem:[#allocation3 + $0x90] sm:$0xff]
    %v2004 = vld [vmem:[#allocation3 + $0x98] sm:$0xff]
    %v2005 = vld [vmem:[#allocation3 + $0xa0] sm:$0xff]
    %v2006 = vld [vmem:[#allocation3 + $0xa8] sm:$0xff]
    %v2007 = vld [vmem:[#allocation3 + $0xb0] sm:$0xff]
    %v2008 = vld [vmem:[#allocation3 + $0xb8] sm:$0xff]
    %v2009 = vld [vmem:[#allocation3 + $0xc0] sm:$0xff]
    %v2010 = vld [vmem:[#allocation3 + $0xc8] sm:$0xff]
    %v2011 = vld [vmem:[#allocation3 + $0xd0] sm:$0xff]
    %v2012 = vld [vmem:[#allocation3 + $0xd8] sm:$0xff]
    %v2013 = vld [vmem:[#allocation3 + $0xe0] sm:$0xff]
    %v2014 = vld [vmem:[#allocation3 + $0xe8] sm:$0xff]
    %v2015 = vld [vmem:[#allocation3 + $0xf0] sm:$0xff]
    %v2016 = vld [vmem:[#allocation3 + $0xf8] sm:$0xff]
    %v2017 = vld [vmem:[#allocation3 + $0x100] sm:$0xff]
    %v2018 = vld [vmem:[#allocation3 + $0x108] sm:$0xff]
    %v2019 = vld [vmem:[#allocation3 + $0x110] sm:$0xff]
    %v2020 = vld [vmem:[#allocation3 + $0x118] sm:$0xff]
    %v2021 = vld [vmem:[#allocation3 + $0x120] sm:$0xff]
    %v2022 = vld [vmem:[#allocation3 + $0x128] sm:$0xff]
    %v2023 = vld [vmem:[#allocation3 + $0x130] sm:$0xff]
    %v2024 = vld [vmem:[#allocation3 + $0x138] sm:$0xff]
    %v2025 = vld [vmem:[#allocation3 + $0x140] sm:$0xff]
    %v2026 = vld [vmem:[#allocation3 + $0x148] sm:$0xff]
    %v2027 = vld [vmem:[#allocation3 + $0x150] sm:$0xff]
    %v2028 = vld [vmem:[#allocation3 + $0x158] sm:$0xff]
    %v2029 = vld [vmem:[#allocation3 + $0x160] sm:$0xff]
    %v2030 = vld [vmem:[#allocation3 + $0x168] sm:$0xff]
    %v2031 = vld [vmem:[#allocation3 + $0x170] sm:$0xff]
    %v2032 = vld [vmem:[#allocation3 + $0x178] sm:$0xff]
    %v2033 = vld [vmem:[#allocation3 + $0x180] sm:$0xff]
    %v2034 = vld [vmem:[#allocation3 + $0x188] sm:$0xff]
    %v2035 = vld [vmem:[#allocation3 + $0x190] sm:$0xff]
    %v2036 = vld [vmem:[#allocation3 + $0x198] sm:$0xff]
    %v2037 = vld [vmem:[#allocation3 + $0x1a0] sm:$0xff]
    %v2038 = vld [vmem:[#allocation3 + $0x1a8] sm:$0xff]
    %v2039 = vld [vmem:[#allocation3 + $0x1b0] sm:$0xff]
    %v2040 = vld [vmem:[#allocation3 + $0x1b8] sm:$0xff]
    %v2041 = vld [vmem:[#allocation3 + $0x1c0] sm:$0xff]
    %v2042 = vld [vmem:[#allocation3 + $0x1c8] sm:$0xff]
    %v2043 = vld [vmem:[#allocation3 + $0x1d0] sm:$0xff]
    %v2044 = vld [vmem:[#allocation3 + $0x1d8] sm:$0xff]
    %v2045 = vld [vmem:[#allocation3 + $0x1e0] sm:$0xff]
    %v2046 = vld [vmem:[#allocation3 + $0x1e8] sm:$0xff]
    %v2047 = vld [vmem:[#allocation3 + $0x1f0] sm:$0xff]
    %v2048 = vld [vmem:[#allocation3 + $0x1f8] sm:$0xff]
    %v2049 = vld [vmem:[#allocation3 + $0x200] sm:$0xff]
    %v2050 = vld [vmem:[#allocation3 + $0x208] sm:$0xff]
    %v2051 = vld [vmem:[#allocation3 + $0x210] sm:$0xff]
    %v2052 = vld [vmem:[#allocation3 + $0x218] sm:$0xff]
    %v2053 = vld [vmem:[#allocation3 + $0x220] sm:$0xff]
    %v2054 = vld [vmem:[#allocation3 + $0x228] sm:$0xff]
    %v2055 = vld [vmem:[#allocation3 + $0x230] sm:$0xff]
    %v2056 = vld [vmem:[#allocation3 + $0x238] sm:$0xff]
    %v2057 = vld [vmem:[#allocation3 + $0x240] sm:$0xff]
    %v2058 = vld [vmem:[#allocation3 + $0x248] sm:$0xff]
    %v2059 = vld [vmem:[#allocation3 + $0x250] sm:$0xff]
    %v2060 = vld [vmem:[#allocation3 + $0x258] sm:$0xff]
    %v2061 = vld [vmem:[#allocation3 + $0x260] sm:$0xff]
    %v2062 = vld [vmem:[#allocation3 + $0x268] sm:$0xff]
    %v2063 = vld [vmem:[#allocation3 + $0x270] sm:$0xff]
    %v2064 = vld [vmem:[#allocation3 + $0x278] sm:$0xff]
    %v2065 = vld [vmem:[#allocation3 + $0x280] sm:$0xff]
    %v2066 = vld [vmem:[#allocation3 + $0x288] sm:$0xff]
    %v2067 = vld [vmem:[#allocation3 + $0x290] sm:$0xff]
    %v2068 = vld [vmem:[#allocation3 + $0x298] sm:$0xff]
    %v2069 = vld [vmem:[#allocation3 + $0x2a0] sm:$0xff]
    %v2070 = vld [vmem:[#allocation3 + $0x2a8] sm:$0xff]
    %v2071 = vld [vmem:[#allocation3 + $0x2b0] sm:$0xff]
    %v2072 = vld [vmem:[#allocation3 + $0x2b8] sm:$0xff]
    %v2073 = vld [vmem:[#allocation3 + $0x2c0] sm:$0xff]
    %v2074 = vld [vmem:[#allocation3 + $0x2c8] sm:$0xff]
    %v2075 = vld [vmem:[#allocation3 + $0x2d0] sm:$0xff]
    %v2076 = vld [vmem:[#allocation3 + $0x2d8] sm:$0xff]
    %v2077 = vld [vmem:[#allocation3 + $0x2e0] sm:$0xff]
    %v2078 = vld [vmem:[#allocation3 + $0x2e8] sm:$0xff]
    %v2079 = vld [vmem:[#allocation3 + $0x2f0] sm:$0xff]
    %v2080 = vld [vmem:[#allocation3 + $0x2f8] sm:$0xff]
    %v2081 = vld [vmem:[#allocation3 + $0x300] sm:$0xff]
    %v2082 = vld [vmem:[#allocation3 + $0x308] sm:$0xff]
    %v2083 = vld [vmem:[#allocation3 + $0x310] sm:$0xff]
    %v2084 = vld [vmem:[#allocation3 + $0x318] sm:$0xff]
    %v2085 = vld [vmem:[#allocation3 + $0x320] sm:$0xff]
    %v2086 = vld [vmem:[#allocation3 + $0x328] sm:$0xff]
    %v2087 = vld [vmem:[#allocation3 + $0x330] sm:$0xff]
    %v2088 = vld [vmem:[#allocation3 + $0x338] sm:$0xff]
    %v2089 = vld [vmem:[#allocation3 + $0x340] sm:$0xff]
    %v2090 = vld [vmem:[#allocation3 + $0x348] sm:$0xff]
    %v2091 = vld [vmem:[#allocation3 + $0x350] sm:$0xff]
    %v2092 = vld [vmem:[#allocation3 + $0x358] sm:$0xff]
    %v2093 = vld [vmem:[#allocation3 + $0x360] sm:$0xff]
    %v2094 = vld [vmem:[#allocation3 + $0x368] sm:$0xff]
    %v2095 = vld [vmem:[#allocation3 + $0x370] sm:$0xff]
    %v2096 = vld [vmem:[#allocation3 + $0x378] sm:$0xff]
    %v2097 = vld [vmem:[#allocation3 + $0x380] sm:$0xff]
    %v2098 = vld [vmem:[#allocation3 + $0x388] sm:$0xff]
    %v2099 = vld [vmem:[#allocation3 + $0x390] sm:$0xff]
    %v2100 = vld [vmem:[#allocation3 + $0x398] sm:$0xff]
    %v2101 = vld [vmem:[#allocation3 + $0x3a0] sm:$0xff]
    %v2102 = vld [vmem:[#allocation3 + $0x3a8] sm:$0xff]
    %v2103 = vld [vmem:[#allocation3 + $0x3b0] sm:$0xff]
    %v2104 = vld [vmem:[#allocation3 + $0x3b8] sm:$0xff]
    %v2105 = vld [vmem:[#allocation3 + $0x3c0] sm:$0xff]
    %v2106 = vld [vmem:[#allocation3 + $0x3c8] sm:$0xff]
    %v2107 = vld [vmem:[#allocation3 + $0x3d0] sm:$0xff]
    %v2108 = vld [vmem:[#allocation3 + $0x3d8] sm:$0xff]
    %v2109 = vld [vmem:[#allocation3 + $0x3e0] sm:$0xff]
    %v2110 = vld [vmem:[#allocation3 + $0x3e8] sm:$0xff]
    %v2111 = vld [vmem:[#allocation3 + $0x3f0] sm:$0xff]
    %v2112 = vld [vmem:[#allocation3 + $0x3f8] sm:$0xff]
    %v2241 = vunpack.c.l.b16 %v1985
    %v2242 = vunpack.c.h.b16 %v1985
    %v2243 = vunpack.c.l.b16 %v1986
    %v2244 = vunpack.c.h.b16 %v1986
    %v2245 = vunpack.c.l.b16 %v1987
    %v2246 = vunpack.c.h.b16 %v1987
    %v2247 = vunpack.c.l.b16 %v1988
    %v2248 = vunpack.c.h.b16 %v1988
    %v2249 = vunpack.c.l.b16 %v1989
    %v2250 = vunpack.c.h.b16 %v1989
    %v2251 = vunpack.c.l.b16 %v1990
    %v2252 = vunpack.c.h.b16 %v1990
    %v2253 = vunpack.c.l.b16 %v1991
    %v2254 = vunpack.c.h.b16 %v1991
    %v2255 = vunpack.c.l.b16 %v1992
    %v2256 = vunpack.c.h.b16 %v1992
    %v2257 = vunpack.c.l.b16 %v1993
    %v2258 = vunpack.c.h.b16 %v1993
    %v2259 = vunpack.c.l.b16 %v1994
    %v2260 = vunpack.c.h.b16 %v1994
    %v2261 = vunpack.c.l.b16 %v1995
    %v2262 = vunpack.c.h.b16 %v1995
    %v2263 = vunpack.c.l.b16 %v1996
    %v2264 = vunpack.c.h.b16 %v1996
    %v2265 = vunpack.c.l.b16 %v1997
    %v2266 = vunpack.c.h.b16 %v1997
    %v2267 = vunpack.c.l.b16 %v1998
    %v2268 = vunpack.c.h.b16 %v1998
    %v2269 = vunpack.c.l.b16 %v1999
    %v2270 = vunpack.c.h.b16 %v1999
    %v2271 = vunpack.c.l.b16 %v2000
    %v2272 = vunpack.c.h.b16 %v2000
    %v2273 = vunpack.c.l.b16 %v2001
    %v2274 = vunpack.c.h.b16 %v2001
    %v2275 = vunpack.c.l.b16 %v2002
    %v2276 = vunpack.c.h.b16 %v2002
    %v2277 = vunpack.c.l.b16 %v2003
    %v2278 = vunpack.c.h.b16 %v2003
    %v2279 = vunpack.c.l.b16 %v2004
    %v2280 = vunpack.c.h.b16 %v2004
    %v2281 = vunpack.c.l.b16 %v2005
    %v2282 = vunpack.c.h.b16 %v2005
    %v2283 = vunpack.c.l.b16 %v2006
    %v2284 = vunpack.c.h.b16 %v2006
    %v2285 = vunpack.c.l.b16 %v2007
    %v2286 = vunpack.c.h.b16 %v2007
    %v2287 = vunpack.c.l.b16 %v2008
    %v2288 = vunpack.c.h.b16 %v2008
    %v2289 = vunpack.c.l.b16 %v2009
    %v2290 = vunpack.c.h.b16 %v2009
    %v2291 = vunpack.c.l.b16 %v2010
    %v2292 = vunpack.c.h.b16 %v2010
    %v2293 = vunpack.c.l.b16 %v2011
    %v2294 = vunpack.c.h.b16 %v2011
    %v2295 = vunpack.c.l.b16 %v2012
    %v2296 = vunpack.c.h.b16 %v2012
    %v2297 = vunpack.c.l.b16 %v2013
    %v2298 = vunpack.c.h.b16 %v2013
    %v2299 = vunpack.c.l.b16 %v2014
    %v2300 = vunpack.c.h.b16 %v2014
    %v2301 = vunpack.c.l.b16 %v2015
    %v2302 = vunpack.c.h.b16 %v2015
    %v2303 = vunpack.c.l.b16 %v2016
    %v2304 = vunpack.c.h.b16 %v2016
    %v2305 = vunpack.c.l.b16 %v2017
    %v2306 = vunpack.c.h.b16 %v2017
    %v2307 = vunpack.c.l.b16 %v2018
    %v2308 = vunpack.c.h.b16 %v2018
    %v2309 = vunpack.c.l.b16 %v2019
    %v2310 = vunpack.c.h.b16 %v2019
    %v2311 = vunpack.c.l.b16 %v2020
    %v2312 = vunpack.c.h.b16 %v2020
    %v2313 = vunpack.c.l.b16 %v2021
    %v2314 = vunpack.c.h.b16 %v2021
    %v2315 = vunpack.c.l.b16 %v2022
    %v2316 = vunpack.c.h.b16 %v2022
    %v2317 = vunpack.c.l.b16 %v2023
    %v2318 = vunpack.c.h.b16 %v2023
    %v2319 = vunpack.c.l.b16 %v2024
    %v2320 = vunpack.c.h.b16 %v2024
    %v2321 = vunpack.c.l.b16 %v2025
    %v2322 = vunpack.c.h.b16 %v2025
    %v2323 = vunpack.c.l.b16 %v2026
    %v2324 = vunpack.c.h.b16 %v2026
    %v2325 = vunpack.c.l.b16 %v2027
    %v2326 = vunpack.c.h.b16 %v2027
    %v2327 = vunpack.c.l.b16 %v2028
    %v2328 = vunpack.c.h.b16 %v2028
    %v2329 = vunpack.c.l.b16 %v2029
    %v2330 = vunpack.c.h.b16 %v2029
    %v2331 = vunpack.c.l.b16 %v2030
    %v2332 = vunpack.c.h.b16 %v2030
    %v2333 = vunpack.c.l.b16 %v2031
    %v2334 = vunpack.c.h.b16 %v2031
    %v2335 = vunpack.c.l.b16 %v2032
    %v2336 = vunpack.c.h.b16 %v2032
    %v2337 = vunpack.c.l.b16 %v2033
    %v2338 = vunpack.c.h.b16 %v2033
    %v2339 = vunpack.c.l.b16 %v2034
    %v2340 = vunpack.c.h.b16 %v2034
    %v2341 = vunpack.c.l.b16 %v2035
    %v2342 = vunpack.c.h.b16 %v2035
    %v2343 = vunpack.c.l.b16 %v2036
    %v2344 = vunpack.c.h.b16 %v2036
    %v2345 = vunpack.c.l.b16 %v2037
    %v2346 = vunpack.c.h.b16 %v2037
    %v2347 = vunpack.c.l.b16 %v2038
    %v2348 = vunpack.c.h.b16 %v2038
    %v2349 = vunpack.c.l.b16 %v2039
    %v2350 = vunpack.c.h.b16 %v2039
    %v2351 = vunpack.c.l.b16 %v2040
    %v2352 = vunpack.c.h.b16 %v2040
    %v2353 = vunpack.c.l.b16 %v2041
    %v2354 = vunpack.c.h.b16 %v2041
    %v2355 = vunpack.c.l.b16 %v2042
    %v2356 = vunpack.c.h.b16 %v2042
    %v2357 = vunpack.c.l.b16 %v2043
    %v2358 = vunpack.c.h.b16 %v2043
    %v2359 = vunpack.c.l.b16 %v2044
    %v2360 = vunpack.c.h.b16 %v2044
    %v2361 = vunpack.c.l.b16 %v2045
    %v2362 = vunpack.c.h.b16 %v2045
    %v2363 = vunpack.c.l.b16 %v2046
    %v2364 = vunpack.c.h.b16 %v2046
    %v2365 = vunpack.c.l.b16 %v2047
    %v2366 = vunpack.c.h.b16 %v2047
    %v2367 = vunpack.c.l.b16 %v2048
    %v2368 = vunpack.c.h.b16 %v2048
    %v2369 = vunpack.c.l.b16 %v2049
    %v2370 = vunpack.c.h.b16 %v2049
    %v2371 = vunpack.c.l.b16 %v2050
    %v2372 = vunpack.c.h.b16 %v2050
    %v2373 = vunpack.c.l.b16 %v2051
    %v2374 = vunpack.c.h.b16 %v2051
    %v2375 = vunpack.c.l.b16 %v2052
    %v2376 = vunpack.c.h.b16 %v2052
    %v2377 = vunpack.c.l.b16 %v2053
    %v2378 = vunpack.c.h.b16 %v2053
    %v2379 = vunpack.c.l.b16 %v2054
    %v2380 = vunpack.c.h.b16 %v2054
    %v2381 = vunpack.c.l.b16 %v2055
    %v2382 = vunpack.c.h.b16 %v2055
    %v2383 = vunpack.c.l.b16 %v2056
    %v2384 = vunpack.c.h.b16 %v2056
    %v2385 = vunpack.c.l.b16 %v2057
    %v2386 = vunpack.c.h.b16 %v2057
    %v2387 = vunpack.c.l.b16 %v2058
    %v2388 = vunpack.c.h.b16 %v2058
    %v2389 = vunpack.c.l.b16 %v2059
    %v2390 = vunpack.c.h.b16 %v2059
    %v2391 = vunpack.c.l.b16 %v2060
    %v2392 = vunpack.c.h.b16 %v2060
    %v2393 = vunpack.c.l.b16 %v2061
    %v2394 = vunpack.c.h.b16 %v2061
    %v2395 = vunpack.c.l.b16 %v2062
    %v2396 = vunpack.c.h.b16 %v2062
    %v2397 = vunpack.c.l.b16 %v2063
    %v2398 = vunpack.c.h.b16 %v2063
    %v2399 = vunpack.c.l.b16 %v2064
    %v2400 = vunpack.c.h.b16 %v2064
    %v2401 = vunpack.c.l.b16 %v2065
    %v2402 = vunpack.c.h.b16 %v2065
    %v2403 = vunpack.c.l.b16 %v2066
    %v2404 = vunpack.c.h.b16 %v2066
    %v2405 = vunpack.c.l.b16 %v2067
    %v2406 = vunpack.c.h.b16 %v2067
    %v2407 = vunpack.c.l.b16 %v2068
    %v2408 = vunpack.c.h.b16 %v2068
    %v2409 = vunpack.c.l.b16 %v2069
    %v2410 = vunpack.c.h.b16 %v2069
    %v2411 = vunpack.c.l.b16 %v2070
    %v2412 = vunpack.c.h.b16 %v2070
    %v2413 = vunpack.c.l.b16 %v2071
    %v2414 = vunpack.c.h.b16 %v2071
    %v2415 = vunpack.c.l.b16 %v2072
    %v2416 = vunpack.c.h.b16 %v2072
    %v2417 = vunpack.c.l.b16 %v2073
    %v2418 = vunpack.c.h.b16 %v2073
    %v2419 = vunpack.c.l.b16 %v2074
    %v2420 = vunpack.c.h.b16 %v2074
    %v2421 = vunpack.c.l.b16 %v2075
    %v2422 = vunpack.c.h.b16 %v2075
    %v2423 = vunpack.c.l.b16 %v2076
    %v2424 = vunpack.c.h.b16 %v2076
    %v2425 = vunpack.c.l.b16 %v2077
    %v2426 = vunpack.c.h.b16 %v2077
    %v2427 = vunpack.c.l.b16 %v2078
    %v2428 = vunpack.c.h.b16 %v2078
    %v2429 = vunpack.c.l.b16 %v2079
    %v2430 = vunpack.c.h.b16 %v2079
    %v2431 = vunpack.c.l.b16 %v2080
    %v2432 = vunpack.c.h.b16 %v2080
    %v2433 = vunpack.c.l.b16 %v2081
    %v2434 = vunpack.c.h.b16 %v2081
    %v2435 = vunpack.c.l.b16 %v2082
    %v2436 = vunpack.c.h.b16 %v2082
    %v2437 = vunpack.c.l.b16 %v2083
    %v2438 = vunpack.c.h.b16 %v2083
    %v2439 = vunpack.c.l.b16 %v2084
    %v2440 = vunpack.c.h.b16 %v2084
    %v2441 = vunpack.c.l.b16 %v2085
    %v2442 = vunpack.c.h.b16 %v2085
    %v2443 = vunpack.c.l.b16 %v2086
    %v2444 = vunpack.c.h.b16 %v2086
    %v2445 = vunpack.c.l.b16 %v2087
    %v2446 = vunpack.c.h.b16 %v2087
    %v2447 = vunpack.c.l.b16 %v2088
    %v2448 = vunpack.c.h.b16 %v2088
    %v2449 = vunpack.c.l.b16 %v2089
    %v2450 = vunpack.c.h.b16 %v2089
    %v2451 = vunpack.c.l.b16 %v2090
    %v2452 = vunpack.c.h.b16 %v2090
    %v2453 = vunpack.c.l.b16 %v2091
    %v2454 = vunpack.c.h.b16 %v2091
    %v2455 = vunpack.c.l.b16 %v2092
    %v2456 = vunpack.c.h.b16 %v2092
    %v2457 = vunpack.c.l.b16 %v2093
    %v2458 = vunpack.c.h.b16 %v2093
    %v2459 = vunpack.c.l.b16 %v2094
    %v2460 = vunpack.c.h.b16 %v2094
    %v2461 = vunpack.c.l.b16 %v2095
    %v2462 = vunpack.c.h.b16 %v2095
    %v2463 = vunpack.c.l.b16 %v2096
    %v2464 = vunpack.c.h.b16 %v2096
    %v2465 = vunpack.c.l.b16 %v2097
    %v2466 = vunpack.c.h.b16 %v2097
    %v2467 = vunpack.c.l.b16 %v2098
    %v2468 = vunpack.c.h.b16 %v2098
    %v2469 = vunpack.c.l.b16 %v2099
    %v2470 = vunpack.c.h.b16 %v2099
    %v2471 = vunpack.c.l.b16 %v2100
    %v2472 = vunpack.c.h.b16 %v2100
    %v2473 = vunpack.c.l.b16 %v2101
    %v2474 = vunpack.c.h.b16 %v2101
    %v2475 = vunpack.c.l.b16 %v2102
    %v2476 = vunpack.c.h.b16 %v2102
    %v2477 = vunpack.c.l.b16 %v2103
    %v2478 = vunpack.c.h.b16 %v2103
    %v2479 = vunpack.c.l.b16 %v2104
    %v2480 = vunpack.c.h.b16 %v2104
    %v2481 = vunpack.c.l.b16 %v2105
    %v2482 = vunpack.c.h.b16 %v2105
    %v2483 = vunpack.c.l.b16 %v2106
    %v2484 = vunpack.c.h.b16 %v2106
    %v2485 = vunpack.c.l.b16 %v2107
    %v2486 = vunpack.c.h.b16 %v2107
    %v2487 = vunpack.c.l.b16 %v2108
    %v2488 = vunpack.c.h.b16 %v2108
    %v2489 = vunpack.c.l.b16 %v2109
    %v2490 = vunpack.c.h.b16 %v2109
    %v2491 = vunpack.c.l.b16 %v2110
    %v2492 = vunpack.c.h.b16 %v2110
    %v2493 = vunpack.c.l.b16 %v2111
    %v2494 = vunpack.c.h.b16 %v2111
    %v2495 = vunpack.c.l.b16 %v2112
    %v2496 = vunpack.c.h.b16 %v2112
    %v2497 = vpack.c.b16 %v2249, %v2241
    %v2498 = vpack.c.b16 %v2250, %v2242
    %v2499 = vpack.c.b16 %v2251, %v2243
    %v2500 = vpack.c.b16 %v2252, %v2244
    %v2501 = vpack.c.b16 %v2253, %v2245
    %v2502 = vpack.c.b16 %v2254, %v2246
    %v2503 = vpack.c.b16 %v2255, %v2247
    %v2504 = vpack.c.b16 %v2256, %v2248
    %v2505 = vpack.c.b16 %v2265, %v2257
    %v2506 = vpack.c.b16 %v2266, %v2258
    %v2507 = vpack.c.b16 %v2267, %v2259
    %v2508 = vpack.c.b16 %v2268, %v2260
    %v2509 = vpack.c.b16 %v2269, %v2261
    %v2510 = vpack.c.b16 %v2270, %v2262
    %v2511 = vpack.c.b16 %v2271, %v2263
    %v2512 = vpack.c.b16 %v2272, %v2264
    %v2513 = vpack.c.b16 %v2281, %v2273
    %v2514 = vpack.c.b16 %v2282, %v2274
    %v2515 = vpack.c.b16 %v2283, %v2275
    %v2516 = vpack.c.b16 %v2284, %v2276
    %v2517 = vpack.c.b16 %v2285, %v2277
    %v2518 = vpack.c.b16 %v2286, %v2278
    %v2519 = vpack.c.b16 %v2287, %v2279
    %v2520 = vpack.c.b16 %v2288, %v2280
    %v2521 = vpack.c.b16 %v2297, %v2289
    %v2522 = vpack.c.b16 %v2298, %v2290
    %v2523 = vpack.c.b16 %v2299, %v2291
    %v2524 = vpack.c.b16 %v2300, %v2292
    %v2525 = vpack.c.b16 %v2301, %v2293
    %v2526 = vpack.c.b16 %v2302, %v2294
    %v2527 = vpack.c.b16 %v2303, %v2295
    %v2528 = vpack.c.b16 %v2304, %v2296
    %v2529 = vpack.c.b16 %v2313, %v2305
    %v2530 = vpack.c.b16 %v2314, %v2306
    %v2531 = vpack.c.b16 %v2315, %v2307
    %v2532 = vpack.c.b16 %v2316, %v2308
    %v2533 = vpack.c.b16 %v2317, %v2309
    %v2534 = vpack.c.b16 %v2318, %v2310
    %v2535 = vpack.c.b16 %v2319, %v2311
    %v2536 = vpack.c.b16 %v2320, %v2312
    %v2537 = vpack.c.b16 %v2329, %v2321
    %v2538 = vpack.c.b16 %v2330, %v2322
    %v2539 = vpack.c.b16 %v2331, %v2323
    %v2540 = vpack.c.b16 %v2332, %v2324
    %v2541 = vpack.c.b16 %v2333, %v2325
    %v2542 = vpack.c.b16 %v2334, %v2326
    %v2543 = vpack.c.b16 %v2335, %v2327
    %v2544 = vpack.c.b16 %v2336, %v2328
    %v2545 = vpack.c.b16 %v2345, %v2337
    %v2546 = vpack.c.b16 %v2346, %v2338
    %v2547 = vpack.c.b16 %v2347, %v2339
    %v2548 = vpack.c.b16 %v2348, %v2340
    %v2549 = vpack.c.b16 %v2349, %v2341
    %v2550 = vpack.c.b16 %v2350, %v2342
    %v2551 = vpack.c.b16 %v2351, %v2343
    %v2552 = vpack.c.b16 %v2352, %v2344
    %v2553 = vpack.c.b16 %v2361, %v2353
    %v2554 = vpack.c.b16 %v2362, %v2354
    %v2555 = vpack.c.b16 %v2363, %v2355
    %v2556 = vpack.c.b16 %v2364, %v2356
    %v2557 = vpack.c.b16 %v2365, %v2357
    %v2558 = vpack.c.b16 %v2366, %v2358
    %v2559 = vpack.c.b16 %v2367, %v2359
    %v2560 = vpack.c.b16 %v2368, %v2360
    %v2561 = vpack.c.b16 %v2377, %v2369
    %v2562 = vpack.c.b16 %v2378, %v2370
    %v2563 = vpack.c.b16 %v2379, %v2371
    %v2564 = vpack.c.b16 %v2380, %v2372
    %v2565 = vpack.c.b16 %v2381, %v2373
    %v2566 = vpack.c.b16 %v2382, %v2374
    %v2567 = vpack.c.b16 %v2383, %v2375
    %v2568 = vpack.c.b16 %v2384, %v2376
    %v2569 = vpack.c.b16 %v2393, %v2385
    %v2570 = vpack.c.b16 %v2394, %v2386
    %v2571 = vpack.c.b16 %v2395, %v2387
    %v2572 = vpack.c.b16 %v2396, %v2388
    %v2573 = vpack.c.b16 %v2397, %v2389
    %v2574 = vpack.c.b16 %v2398, %v2390
    %v2575 = vpack.c.b16 %v2399, %v2391
    %v2576 = vpack.c.b16 %v2400, %v2392
    %v2577 = vpack.c.b16 %v2409, %v2401
    %v2578 = vpack.c.b16 %v2410, %v2402
    %v2579 = vpack.c.b16 %v2411, %v2403
    %v2580 = vpack.c.b16 %v2412, %v2404
    %v2581 = vpack.c.b16 %v2413, %v2405
    %v2582 = vpack.c.b16 %v2414, %v2406
    %v2583 = vpack.c.b16 %v2415, %v2407
    %v2584 = vpack.c.b16 %v2416, %v2408
    %v2585 = vpack.c.b16 %v2425, %v2417
    %v2586 = vpack.c.b16 %v2426, %v2418
    %v2587 = vpack.c.b16 %v2427, %v2419
    %v2588 = vpack.c.b16 %v2428, %v2420
    %v2589 = vpack.c.b16 %v2429, %v2421
    %v2590 = vpack.c.b16 %v2430, %v2422
    %v2591 = vpack.c.b16 %v2431, %v2423
    %v2592 = vpack.c.b16 %v2432, %v2424
    %v2593 = vpack.c.b16 %v2441, %v2433
    %v2594 = vpack.c.b16 %v2442, %v2434
    %v2595 = vpack.c.b16 %v2443, %v2435
    %v2596 = vpack.c.b16 %v2444, %v2436
    %v2597 = vpack.c.b16 %v2445, %v2437
    %v2598 = vpack.c.b16 %v2446, %v2438
    %v2599 = vpack.c.b16 %v2447, %v2439
    %v2600 = vpack.c.b16 %v2448, %v2440
    %v2601 = vpack.c.b16 %v2457, %v2449
    %v2602 = vpack.c.b16 %v2458, %v2450
    %v2603 = vpack.c.b16 %v2459, %v2451
    %v2604 = vpack.c.b16 %v2460, %v2452
    %v2605 = vpack.c.b16 %v2461, %v2453
    %v2606 = vpack.c.b16 %v2462, %v2454
    %v2607 = vpack.c.b16 %v2463, %v2455
    %v2608 = vpack.c.b16 %v2464, %v2456
    %v2609 = vpack.c.b16 %v2473, %v2465
    %v2610 = vpack.c.b16 %v2474, %v2466
    %v2611 = vpack.c.b16 %v2475, %v2467
    %v2612 = vpack.c.b16 %v2476, %v2468
    %v2613 = vpack.c.b16 %v2477, %v2469
    %v2614 = vpack.c.b16 %v2478, %v2470
    %v2615 = vpack.c.b16 %v2479, %v2471
    %v2616 = vpack.c.b16 %v2480, %v2472
    %v2617 = vpack.c.b16 %v2489, %v2481
    %v2618 = vpack.c.b16 %v2490, %v2482
    %v2619 = vpack.c.b16 %v2491, %v2483
    %v2620 = vpack.c.b16 %v2492, %v2484
    %v2621 = vpack.c.b16 %v2493, %v2485
    %v2622 = vpack.c.b16 %v2494, %v2486
    %v2623 = vpack.c.b16 %v2495, %v2487
    %v2624 = vpack.c.b16 %v2496, %v2488
    %2753 = vmatprep.subr.bf16.mxu0 %v2554
    %2754 = vmatpush1.bf16.msra.mxu0 %v2553
    %2755 = vmatprep.subr.bf16.mxu0 %v2546
    %2756 = vmatpush1.bf16.msra.mxu0 %v2545
    %2757 = vmatprep.subr.bf16.mxu0 %v2538
    %2758 = vmatpush1.bf16.msra.mxu0 %v2537
    %2759 = vmatprep.subr.bf16.mxu0 %v2530
    %2760 = vmatpush1.bf16.msra.mxu0 %v2529
    %2761 = vmatprep.subr.bf16.mxu0 %v2522
    %2762 = vmatpush1.bf16.msra.mxu0 %v2521
    %2763 = vmatprep.subr.bf16.mxu0 %v2514
    %2764 = vmatpush1.bf16.msra.mxu0 %v2513
    %2765 = vmatprep.subr.bf16.mxu0 %v2506
    %2766 = vmatpush1.bf16.msra.mxu0 %v2505
    %2767 = vmatprep.subr.bf16.mxu0 %v2498
    %2768 = vmatpush1.bf16.msra.mxu0 %v2497
    %2769 = vmatprep.subr.bf16.mxu0 %v2618
    %2770 = vmatpush2.bf16.msra.mxu0 %v2617
    %2771 = vmatprep.subr.bf16.mxu0 %v2610
    %2772 = vmatpush2.bf16.msra.mxu0 %v2609
    %2773 = vmatprep.subr.bf16.mxu0 %v2602
    %2774 = vmatpush2.bf16.msra.mxu0 %v2601
    %2775 = vmatprep.subr.bf16.mxu0 %v2594
    %2776 = vmatpush2.bf16.msra.mxu0 %v2593
    %2777 = vmatprep.subr.bf16.mxu0 %v2586
    %2778 = vmatpush2.bf16.msra.mxu0 %v2585
    %2779 = vmatprep.subr.bf16.mxu0 %v2578
    %2780 = vmatpush2.bf16.msra.mxu0 %v2577
    %2781 = vmatprep.subr.bf16.mxu0 %v2570
    %2782 = vmatpush2.bf16.msra.mxu0 %v2569
    %2783 = vmatprep.subr.bf16.mxu0 %v2562
    %2784 = vmatpush2.bf16.msra.mxu0 %v2561
    %2785 = vmatprep.mubr.bf16.mxu0 %v1984
    %2786 = vmatmul.mubr.bf16.gmra.mxu0 %v1983
    %v2787 = vpop.f32.mrf.mxu0
    %v2788 = vadd.f32 0.0, %v2787
    %v2789 = vpop.f32.mrf.mxu0
    %v2790 = vadd.f32 0.0, %v2789
    %v2791 = vpop.f32.mrf.mxu0
    %v2792 = vpop.f32.mrf.mxu0
    %2793 = vdwg.mxu0
    %2794 = vmatprep.subr.bf16.mxu0 %v2556
    %2795 = vmatpush1.bf16.msra.mxu0 %v2555
    %2796 = vmatprep.subr.bf16.mxu0 %v2548
    %2797 = vmatpush1.bf16.msra.mxu0 %v2547
    %2798 = vmatprep.subr.bf16.mxu0 %v2540
    %2799 = vmatpush1.bf16.msra.mxu0 %v2539
    %2800 = vmatprep.subr.bf16.mxu0 %v2532
    %2801 = vmatpush1.bf16.msra.mxu0 %v2531
    %2802 = vmatprep.subr.bf16.mxu0 %v2524
    %2803 = vmatpush1.bf16.msra.mxu0 %v2523
    %2804 = vmatprep.subr.bf16.mxu0 %v2516
    %2805 = vmatpush1.bf16.msra.mxu0 %v2515
    %2806 = vmatprep.subr.bf16.mxu0 %v2508
    %2807 = vmatpush1.bf16.msra.mxu0 %v2507
    %2808 = vmatprep.subr.bf16.mxu0 %v2500
    %2809 = vmatpush1.bf16.msra.mxu0 %v2499
    %2810 = vmatprep.subr.bf16.mxu0 %v2620
    %2811 = vmatpush2.bf16.msra.mxu0 %v2619
    %2812 = vmatprep.subr.bf16.mxu0 %v2612
    %2813 = vmatpush2.bf16.msra.mxu0 %v2611
    %2814 = vmatprep.subr.bf16.mxu0 %v2604
    %2815 = vmatpush2.bf16.msra.mxu0 %v2603
    %2816 = vmatprep.subr.bf16.mxu0 %v2596
    %2817 = vmatpush2.bf16.msra.mxu0 %v2595
    %2818 = vmatprep.subr.bf16.mxu0 %v2588
    %2819 = vmatpush2.bf16.msra.mxu0 %v2587
    %2820 = vmatprep.subr.bf16.mxu0 %v2580
    %2821 = vmatpush2.bf16.msra.mxu0 %v2579
    %2822 = vmatprep.subr.bf16.mxu0 %v2572
    %2823 = vmatpush2.bf16.msra.mxu0 %v2571
    %2824 = vmatprep.subr.bf16.mxu0 %v2564
    %2825 = vmatpush2.bf16.msra.mxu0 %v2563
    %2826 = vmatprep.mubr.bf16.mxu0 %v1984
    %2827 = vmatmul.mubr.bf16.gmra.mxu0 %v1983
    %v2828 = vpop.f32.mrf.mxu0
    %v2829 = vadd.f32 0.0, %v2828
    %v2830 = vpop.f32.mrf.mxu0
    %v2831 = vadd.f32 0.0, %v2830
    %v2832 = vpop.f32.mrf.mxu0
    %v2833 = vpop.f32.mrf.mxu0
    %2834 = vdwg.mxu0
    %2835 = vmatprep.subr.bf16.mxu0 %v2558
    %2836 = vmatpush1.bf16.msra.mxu0 %v2557
    %2837 = vmatprep.subr.bf16.mxu0 %v2550
    %2838 = vmatpush1.bf16.msra.mxu0 %v2549
    %2839 = vmatprep.subr.bf16.mxu0 %v2542
    %2840 = vmatpush1.bf16.msra.mxu0 %v2541
    %2841 = vmatprep.subr.bf16.mxu0 %v2534
    %2842 = vmatpush1.bf16.msra.mxu0 %v2533
    %2843 = vmatprep.subr.bf16.mxu0 %v2526
    %2844 = vmatpush1.bf16.msra.mxu0 %v2525
    %2845 = vmatprep.subr.bf16.mxu0 %v2518
    %2846 = vmatpush1.bf16.msra.mxu0 %v2517
    %2847 = vmatprep.subr.bf16.mxu0 %v2510
    %2848 = vmatpush1.bf16.msra.mxu0 %v2509
    %2849 = vmatprep.subr.bf16.mxu0 %v2502
    %2850 = vmatpush1.bf16.msra.mxu0 %v2501
    %2851 = vmatprep.subr.bf16.mxu0 %v2622
    %2852 = vmatpush2.bf16.msra.mxu0 %v2621
    %2853 = vmatprep.subr.bf16.mxu0 %v2614
    %2854 = vmatpush2.bf16.msra.mxu0 %v2613
    %2855 = vmatprep.subr.bf16.mxu0 %v2606
    %2856 = vmatpush2.bf16.msra.mxu0 %v2605
    %2857 = vmatprep.subr.bf16.mxu0 %v2598
    %2858 = vmatpush2.bf16.msra.mxu0 %v2597
    %2859 = vmatprep.subr.bf16.mxu0 %v2590
    %2860 = vmatpush2.bf16.msra.mxu0 %v2589
    %2861 = vmatprep.subr.bf16.mxu0 %v2582
    %2862 = vmatpush2.bf16.msra.mxu0 %v2581
    %2863 = vmatprep.subr.bf16.mxu0 %v2574
    %2864 = vmatpush2.bf16.msra.mxu0 %v2573
    %2865 = vmatprep.subr.bf16.mxu0 %v2566
    %2866 = vmatpush2.bf16.msra.mxu0 %v2565
    %2867 = vmatprep.mubr.bf16.mxu0 %v1984
    %2868 = vmatmul.mubr.bf16.gmra.mxu0 %v1983
    %v2869 = vpop.f32.mrf.mxu0
    %v2870 = vadd.f32 0.0, %v2869
    %v2871 = vpop.f32.mrf.mxu0
    %v2872 = vadd.f32 0.0, %v2871
    %v2873 = vpop.f32.mrf.mxu0
    %v2874 = vpop.f32.mrf.mxu0
    %2875 = vdwg.mxu0
    %2876 = vmatprep.subr.bf16.mxu0 %v2560
    %2877 = vmatpush1.bf16.msra.mxu0 %v2559
    %2878 = vmatprep.subr.bf16.mxu0 %v2552
    %2879 = vmatpush1.bf16.msra.mxu0 %v2551
    %2880 = vmatprep.subr.bf16.mxu0 %v2544
    %2881 = vmatpush1.bf16.msra.mxu0 %v2543
    %2882 = vmatprep.subr.bf16.mxu0 %v2536
    %2883 = vmatpush1.bf16.msra.mxu0 %v2535
    %2884 = vmatprep.subr.bf16.mxu0 %v2528
    %2885 = vmatpush1.bf16.msra.mxu0 %v2527
    %2886 = vmatprep.subr.bf16.mxu0 %v2520
    %2887 = vmatpush1.bf16.msra.mxu0 %v2519
    %2888 = vmatprep.subr.bf16.mxu0 %v2512
    %2889 = vmatpush1.bf16.msra.mxu0 %v2511
    %2890 = vmatprep.subr.bf16.mxu0 %v2504
    %2891 = vmatpush1.bf16.msra.mxu0 %v2503
    %2892 = vmatprep.subr.bf16.mxu0 %v2624
    %2893 = vmatpush2.bf16.msra.mxu0 %v2623
    %2894 = vmatprep.subr.bf16.mxu0 %v2616
    %2895 = vmatpush2.bf16.msra.mxu0 %v2615
    %2896 = vmatprep.subr.bf16.mxu0 %v2608
    %2897 = vmatpush2.bf16.msra.mxu0 %v2607
    %2898 = vmatprep.subr.bf16.mxu0 %v2600
    %2899 = vmatpush2.bf16.msra.mxu0 %v2599
    %2900 = vmatprep.subr.bf16.mxu0 %v2592
    %2901 = vmatpush2.bf16.msra.mxu0 %v2591
    %2902 = vmatprep.subr.bf16.mxu0 %v2584
    %2903 = vmatpush2.bf16.msra.mxu0 %v2583
    %2904 = vmatprep.subr.bf16.mxu0 %v2576
    %2905 = vmatpush2.bf16.msra.mxu0 %v2575
    %2906 = vmatprep.subr.bf16.mxu0 %v2568
    %2907 = vmatpush2.bf16.msra.mxu0 %v2567
    %2908 = vmatprep.mubr.bf16.mxu0 %v1984
    %2909 = vmatmul.mubr.bf16.gmra.mxu0 %v1983
    %v2910 = vpop.f32.mrf.mxu0
    %v2911 = vadd.f32 0.0, %v2910
    %v2912 = vpop.f32.mrf.mxu0
    %v2913 = vadd.f32 0.0, %v2912
    %v2914 = vpop.f32.mrf.mxu0
    %v2915 = vpop.f32.mrf.mxu0
    %2916 = vdwg.mxu0
    %s2917 = scalar_lea.vmem [#allocation2], 128
    %v2918 = vld [vmem:[%s2917] sm:$0xff]
    %v2919 = vld [vmem:[%s2917 + $0x8] sm:$0xff]
    %v2920 = vld [vmem:[%s2917 + $0x10] sm:$0xff]
    %v2921 = vld [vmem:[%s2917 + $0x18] sm:$0xff]
    %s2922 = scalar_lea.vmem [#allocation2], 320
    %v2923 = vld [vmem:[%s2922 + $0x20] sm:$0xff]
    %v2924 = vld [vmem:[%s2922 + $0x28] sm:$0xff]
    %v2925 = vld [vmem:[%s2922 + $0x30] sm:$0xff]
    %v2926 = vld [vmem:[%s2922 + $0x38] sm:$0xff]
    %v2927 = vadd.f32 %v2788, %v2918
    %v2928 = vadd.f32 %v2790, %v2919
    %v2929 = vadd.f32 %v2829, %v2920
    %v2930 = vadd.f32 %v2831, %v2921
    %v2931 = vadd.f32 %v2870, %v2923
    %v2932 = vadd.f32 %v2872, %v2924
    %v2933 = vadd.f32 %v2911, %v2925
    %v2934 = vadd.f32 %v2913, %v2926
    %v2935 = vxor.u32 %v2927, 2147483648
    %v2936 = vmul.f32 %v2935, 1.442695
    %v2937 = vpow.pop %v2936
    %v2938 = vadd.f32 %v2937, 1.0
    %v2939 = vrcp.pop %v2938
    %v2940 = vmul.f32 1.0, %v2939
    %v2941 = vxor.u32 %v2928, 2147483648
    %v2942 = vmul.f32 %v2941, 1.442695
    %v2943 = vpow.pop %v2942
    %v2944 = vadd.f32 %v2943, 1.0
    %v2945 = vrcp.pop %v2944
    %v2946 = vmul.f32 1.0, %v2945
    %v2947 = vtanh.pop %v2929
    %v2948 = vxor.u32 %v2930, 2147483648
    %v2949 = vmul.f32 %v2948, 1.442695
    %v2950 = vpow.pop %v2949
    %v2951 = vadd.f32 %v2950, 1.0
    %v2952 = vrcp.pop %v2951
    %v2953 = vmul.f32 1.0, %v2952
    %v2954 = vmul.f32 %v2946, %v1935
    %v2955 = vmul.f32 %v2940, %v2947
    %v2956 = vadd.f32 %v2954, %v2955
    %v2957 = vtanh.pop %v2956
    %v2958 = vmul.f32 %v2953, %v2957
    %v2959 = vxor.u32 %v2931, 2147483648
    %v2960 = vmul.f32 %v2959, 1.442695
    %v2961 = vpow.pop %v2960
    %v2962 = vadd.f32 %v2961, 1.0
    %v2963 = vrcp.pop %v2962
    %v2964 = vmul.f32 1.0, %v2963
    %v2965 = vxor.u32 %v2932, 2147483648
    %v2966 = vmul.f32 %v2965, 1.442695
    %v2967 = vpow.pop %v2966
    %v2968 = vadd.f32 %v2967, 1.0
    %v2969 = vrcp.pop %v2968
    %v2970 = vmul.f32 1.0, %v2969
    %v2971 = vtanh.pop %v2933
    %v2972 = vxor.u32 %v2934, 2147483648
    %v2973 = vmul.f32 %v2972, 1.442695
    %v2974 = vpow.pop %v2973
    %v2975 = vadd.f32 %v2974, 1.0
    %v2976 = vrcp.pop %v2975
    %v2977 = vmul.f32 1.0, %v2976
    %v2978 = vmul.f32 %v2970, %v1970
    %v2979 = vmul.f32 %v2964, %v2971
    %v2980 = vadd.f32 %v2978, %v2979
    %v2981 = vtanh.pop %v2980
    %v2982 = vmul.f32 %v2977, %v2981
    %s2983 = scalar_lea.vmem %s1, 40
    %v2984 = vld [vmem:[%s2983] sm:$0xff]
    %2986 = vset.pattern.permute.xlu0 0
    %2987 = vperm.xlu0 %2986, %v2984
    %v2988 = vpop.permute.xlu0 %2987
    %v2990 = vmul.f32 %v2982, %v2988
    %v2991 = vmul.f32 %v2980, %v2988
    %v2992 = vmax.f32 %v2958, 0.0
    %v2993 = vmul.f32 %v2992, %v939
    %2994 = vadd.xlane.f32.xlu0 %v2993
    %v2995 = vpop.xlane.xlu0 %2994
    %s2996 = scalar_lea.vmem [#allocation4], 16
    %2997 = vst.msk [vmem:[%s2996] sm:$0xff] %vm944, %v2995
    %v2998 = vmax.f32 %v2990, 0.0
    %v2999 = vmul.f32 %v2998, %v951
    %3000 = vadd.xlane.f32.xlu0 %v2999
    %v3001 = vpop.xlane.xlu0 %3000
    %s3002 = scalar_lea.vmem [#allocation5], 40
    %3003 = vst.msk [vmem:[%s3002] sm:$0xff] %vm944, %v3001
    %v3004 = vpack.c.bf16 %v2958, %v2958
    %v3005 = vpack.c.bf16 %v2990, %v2990
    %v3006 = vld [vmem:[#allocation3] sm:$0xff]
    %v3007 = vld [vmem:[#allocation3 + $0x8] sm:$0xff]
    %v3008 = vld [vmem:[#allocation3 + $0x10] sm:$0xff]
    %v3009 = vld [vmem:[#allocation3 + $0x18] sm:$0xff]
    %v3010 = vld [vmem:[#allocation3 + $0x20] sm:$0xff]
    %v3011 = vld [vmem:[#allocation3 + $0x28] sm:$0xff]
    %v3012 = vld [vmem:[#allocation3 + $0x30] sm:$0xff]
    %v3013 = vld [vmem:[#allocation3 + $0x38] sm:$0xff]
    %v3014 = vld [vmem:[#allocation3 + $0x40] sm:$0xff]
    %v3015 = vld [vmem:[#allocation3 + $0x48] sm:$0xff]
    %v3016 = vld [vmem:[#allocation3 + $0x50] sm:$0xff]
    %v3017 = vld [vmem:[#allocation3 + $0x58] sm:$0xff]
    %v3018 = vld [vmem:[#allocation3 + $0x60] sm:$0xff]
    %v3019 = vld [vmem:[#allocation3 + $0x68] sm:$0xff]
    %v3020 = vld [vmem:[#allocation3 + $0x70] sm:$0xff]
    %v3021 = vld [vmem:[#allocation3 + $0x78] sm:$0xff]
    %v3022 = vld [vmem:[#allocation3 + $0x80] sm:$0xff]
    %v3023 = vld [vmem:[#allocation3 + $0x88] sm:$0xff]
    %v3024 = vld [vmem:[#allocation3 + $0x90] sm:$0xff]
    %v3025 = vld [vmem:[#allocation3 + $0x98] sm:$0xff]
    %v3026 = vld [vmem:[#allocation3 + $0xa0] sm:$0xff]
    %v3027 = vld [vmem:[#allocation3 + $0xa8] sm:$0xff]
    %v3028 = vld [vmem:[#allocation3 + $0xb0] sm:$0xff]
    %v3029 = vld [vmem:[#allocation3 + $0xb8] sm:$0xff]
    %v3030 = vld [vmem:[#allocation3 + $0xc0] sm:$0xff]
    %v3031 = vld [vmem:[#allocation3 + $0xc8] sm:$0xff]
    %v3032 = vld [vmem:[#allocation3 + $0xd0] sm:$0xff]
    %v3033 = vld [vmem:[#allocation3 + $0xd8] sm:$0xff]
    %v3034 = vld [vmem:[#allocation3 + $0xe0] sm:$0xff]
    %v3035 = vld [vmem:[#allocation3 + $0xe8] sm:$0xff]
    %v3036 = vld [vmem:[#allocation3 + $0xf0] sm:$0xff]
    %v3037 = vld [vmem:[#allocation3 + $0xf8] sm:$0xff]
    %v3038 = vld [vmem:[#allocation3 + $0x100] sm:$0xff]
    %v3039 = vld [vmem:[#allocation3 + $0x108] sm:$0xff]
    %v3040 = vld [vmem:[#allocation3 + $0x110] sm:$0xff]
    %v3041 = vld [vmem:[#allocation3 + $0x118] sm:$0xff]
    %v3042 = vld [vmem:[#allocation3 + $0x120] sm:$0xff]
    %v3043 = vld [vmem:[#allocation3 + $0x128] sm:$0xff]
    %v3044 = vld [vmem:[#allocation3 + $0x130] sm:$0xff]
    %v3045 = vld [vmem:[#allocation3 + $0x138] sm:$0xff]
    %v3046 = vld [vmem:[#allocation3 + $0x140] sm:$0xff]
    %v3047 = vld [vmem:[#allocation3 + $0x148] sm:$0xff]
    %v3048 = vld [vmem:[#allocation3 + $0x150] sm:$0xff]
    %v3049 = vld [vmem:[#allocation3 + $0x158] sm:$0xff]
    %v3050 = vld [vmem:[#allocation3 + $0x160] sm:$0xff]
    %v3051 = vld [vmem:[#allocation3 + $0x168] sm:$0xff]
    %v3052 = vld [vmem:[#allocation3 + $0x170] sm:$0xff]
    %v3053 = vld [vmem:[#allocation3 + $0x178] sm:$0xff]
    %v3054 = vld [vmem:[#allocation3 + $0x180] sm:$0xff]
    %v3055 = vld [vmem:[#allocation3 + $0x188] sm:$0xff]
    %v3056 = vld [vmem:[#allocation3 + $0x190] sm:$0xff]
    %v3057 = vld [vmem:[#allocation3 + $0x198] sm:$0xff]
    %v3058 = vld [vmem:[#allocation3 + $0x1a0] sm:$0xff]
    %v3059 = vld [vmem:[#allocation3 + $0x1a8] sm:$0xff]
    %v3060 = vld [vmem:[#allocation3 + $0x1b0] sm:$0xff]
    %v3061 = vld [vmem:[#allocation3 + $0x1b8] sm:$0xff]
    %v3062 = vld [vmem:[#allocation3 + $0x1c0] sm:$0xff]
    %v3063 = vld [vmem:[#allocation3 + $0x1c8] sm:$0xff]
    %v3064 = vld [vmem:[#allocation3 + $0x1d0] sm:$0xff]
    %v3065 = vld [vmem:[#allocation3 + $0x1d8] sm:$0xff]
    %v3066 = vld [vmem:[#allocation3 + $0x1e0] sm:$0xff]
    %v3067 = vld [vmem:[#allocation3 + $0x1e8] sm:$0xff]
    %v3068 = vld [vmem:[#allocation3 + $0x1f0] sm:$0xff]
    %v3069 = vld [vmem:[#allocation3 + $0x1f8] sm:$0xff]
    %v3070 = vld [vmem:[#allocation3 + $0x200] sm:$0xff]
    %v3071 = vld [vmem:[#allocation3 + $0x208] sm:$0xff]
    %v3072 = vld [vmem:[#allocation3 + $0x210] sm:$0xff]
    %v3073 = vld [vmem:[#allocation3 + $0x218] sm:$0xff]
    %v3074 = vld [vmem:[#allocation3 + $0x220] sm:$0xff]
    %v3075 = vld [vmem:[#allocation3 + $0x228] sm:$0xff]
    %v3076 = vld [vmem:[#allocation3 + $0x230] sm:$0xff]
    %v3077 = vld [vmem:[#allocation3 + $0x238] sm:$0xff]
    %v3078 = vld [vmem:[#allocation3 + $0x240] sm:$0xff]
    %v3079 = vld [vmem:[#allocation3 + $0x248] sm:$0xff]
    %v3080 = vld [vmem:[#allocation3 + $0x250] sm:$0xff]
    %v3081 = vld [vmem:[#allocation3 + $0x258] sm:$0xff]
    %v3082 = vld [vmem:[#allocation3 + $0x260] sm:$0xff]
    %v3083 = vld [vmem:[#allocation3 + $0x268] sm:$0xff]
    %v3084 = vld [vmem:[#allocation3 + $0x270] sm:$0xff]
    %v3085 = vld [vmem:[#allocation3 + $0x278] sm:$0xff]
    %v3086 = vld [vmem:[#allocation3 + $0x280] sm:$0xff]
    %v3087 = vld [vmem:[#allocation3 + $0x288] sm:$0xff]
    %v3088 = vld [vmem:[#allocation3 + $0x290] sm:$0xff]
    %v3089 = vld [vmem:[#allocation3 + $0x298] sm:$0xff]
    %v3090 = vld [vmem:[#allocation3 + $0x2a0] sm:$0xff]
    %v3091 = vld [vmem:[#allocation3 + $0x2a8] sm:$0xff]
    %v3092 = vld [vmem:[#allocation3 + $0x2b0] sm:$0xff]
    %v3093 = vld [vmem:[#allocation3 + $0x2b8] sm:$0xff]
    %v3094 = vld [vmem:[#allocation3 + $0x2c0] sm:$0xff]
    %v3095 = vld [vmem:[#allocation3 + $0x2c8] sm:$0xff]
    %v3096 = vld [vmem:[#allocation3 + $0x2d0] sm:$0xff]
    %v3097 = vld [vmem:[#allocation3 + $0x2d8] sm:$0xff]
    %v3098 = vld [vmem:[#allocation3 + $0x2e0] sm:$0xff]
    %v3099 = vld [vmem:[#allocation3 + $0x2e8] sm:$0xff]
    %v3100 = vld [vmem:[#allocation3 + $0x2f0] sm:$0xff]
    %v3101 = vld [vmem:[#allocation3 + $0x2f8] sm:$0xff]
    %v3102 = vld [vmem:[#allocation3 + $0x300] sm:$0xff]
    %v3103 = vld [vmem:[#allocation3 + $0x308] sm:$0xff]
    %v3104 = vld [vmem:[#allocation3 + $0x310] sm:$0xff]
    %v3105 = vld [vmem:[#allocation3 + $0x318] sm:$0xff]
    %v3106 = vld [vmem:[#allocation3 + $0x320] sm:$0xff]
    %v3107 = vld [vmem:[#allocation3 + $0x328] sm:$0xff]
    %v3108 = vld [vmem:[#allocation3 + $0x330] sm:$0xff]
    %v3109 = vld [vmem:[#allocation3 + $0x338] sm:$0xff]
    %v3110 = vld [vmem:[#allocation3 + $0x340] sm:$0xff]
    %v3111 = vld [vmem:[#allocation3 + $0x348] sm:$0xff]
    %v3112 = vld [vmem:[#allocation3 + $0x350] sm:$0xff]
    %v3113 = vld [vmem:[#allocation3 + $0x358] sm:$0xff]
    %v3114 = vld [vmem:[#allocation3 + $0x360] sm:$0xff]
    %v3115 = vld [vmem:[#allocation3 + $0x368] sm:$0xff]
    %v3116 = vld [vmem:[#allocation3 + $0x370] sm:$0xff]
    %v3117 = vld [vmem:[#allocation3 + $0x378] sm:$0xff]
    %v3118 = vld [vmem:[#allocation3 + $0x380] sm:$0xff]
    %v3119 = vld [vmem:[#allocation3 + $0x388] sm:$0xff]
    %v3120 = vld [vmem:[#allocation3 + $0x390] sm:$0xff]
    %v3121 = vld [vmem:[#allocation3 + $0x398] sm:$0xff]
    %v3122 = vld [vmem:[#allocation3 + $0x3a0] sm:$0xff]
    %v3123 = vld [vmem:[#allocation3 + $0x3a8] sm:$0xff]
    %v3124 = vld [vmem:[#allocation3 + $0x3b0] sm:$0xff]
    %v3125 = vld [vmem:[#allocation3 + $0x3b8] sm:$0xff]
    %v3126 = vld [vmem:[#allocation3 + $0x3c0] sm:$0xff]
    %v3127 = vld [vmem:[#allocation3 + $0x3c8] sm:$0xff]
    %v3128 = vld [vmem:[#allocation3 + $0x3d0] sm:$0xff]
    %v3129 = vld [vmem:[#allocation3 + $0x3d8] sm:$0xff]
    %v3130 = vld [vmem:[#allocation3 + $0x3e0] sm:$0xff]
    %v3131 = vld [vmem:[#allocation3 + $0x3e8] sm:$0xff]
    %v3132 = vld [vmem:[#allocation3 + $0x3f0] sm:$0xff]
    %v3133 = vld [vmem:[#allocation3 + $0x3f8] sm:$0xff]
    %v3262 = vunpack.c.l.b16 %v3006
    %v3263 = vunpack.c.h.b16 %v3006
    %v3264 = vunpack.c.l.b16 %v3007
    %v3265 = vunpack.c.h.b16 %v3007
    %v3266 = vunpack.c.l.b16 %v3008
    %v3267 = vunpack.c.h.b16 %v3008
    %v3268 = vunpack.c.l.b16 %v3009
    %v3269 = vunpack.c.h.b16 %v3009
    %v3270 = vunpack.c.l.b16 %v3010
    %v3271 = vunpack.c.h.b16 %v3010
    %v3272 = vunpack.c.l.b16 %v3011
    %v3273 = vunpack.c.h.b16 %v3011
    %v3274 = vunpack.c.l.b16 %v3012
    %v3275 = vunpack.c.h.b16 %v3012
    %v3276 = vunpack.c.l.b16 %v3013
    %v3277 = vunpack.c.h.b16 %v3013
    %v3278 = vunpack.c.l.b16 %v3014
    %v3279 = vunpack.c.h.b16 %v3014
    %v3280 = vunpack.c.l.b16 %v3015
    %v3281 = vunpack.c.h.b16 %v3015
    %v3282 = vunpack.c.l.b16 %v3016
    %v3283 = vunpack.c.h.b16 %v3016
    %v3284 = vunpack.c.l.b16 %v3017
    %v3285 = vunpack.c.h.b16 %v3017
    %v3286 = vunpack.c.l.b16 %v3018
    %v3287 = vunpack.c.h.b16 %v3018
    %v3288 = vunpack.c.l.b16 %v3019
    %v3289 = vunpack.c.h.b16 %v3019
    %v3290 = vunpack.c.l.b16 %v3020
    %v3291 = vunpack.c.h.b16 %v3020
    %v3292 = vunpack.c.l.b16 %v3021
    %v3293 = vunpack.c.h.b16 %v3021
    %v3294 = vunpack.c.l.b16 %v3022
    %v3295 = vunpack.c.h.b16 %v3022
    %v3296 = vunpack.c.l.b16 %v3023
    %v3297 = vunpack.c.h.b16 %v3023
    %v3298 = vunpack.c.l.b16 %v3024
    %v3299 = vunpack.c.h.b16 %v3024
    %v3300 = vunpack.c.l.b16 %v3025
    %v3301 = vunpack.c.h.b16 %v3025
    %v3302 = vunpack.c.l.b16 %v3026
    %v3303 = vunpack.c.h.b16 %v3026
    %v3304 = vunpack.c.l.b16 %v3027
    %v3305 = vunpack.c.h.b16 %v3027
    %v3306 = vunpack.c.l.b16 %v3028
    %v3307 = vunpack.c.h.b16 %v3028
    %v3308 = vunpack.c.l.b16 %v3029
    %v3309 = vunpack.c.h.b16 %v3029
    %v3310 = vunpack.c.l.b16 %v3030
    %v3311 = vunpack.c.h.b16 %v3030
    %v3312 = vunpack.c.l.b16 %v3031
    %v3313 = vunpack.c.h.b16 %v3031
    %v3314 = vunpack.c.l.b16 %v3032
    %v3315 = vunpack.c.h.b16 %v3032
    %v3316 = vunpack.c.l.b16 %v3033
    %v3317 = vunpack.c.h.b16 %v3033
    %v3318 = vunpack.c.l.b16 %v3034
    %v3319 = vunpack.c.h.b16 %v3034
    %v3320 = vunpack.c.l.b16 %v3035
    %v3321 = vunpack.c.h.b16 %v3035
    %v3322 = vunpack.c.l.b16 %v3036
    %v3323 = vunpack.c.h.b16 %v3036
    %v3324 = vunpack.c.l.b16 %v3037
    %v3325 = vunpack.c.h.b16 %v3037
    %v3326 = vunpack.c.l.b16 %v3038
    %v3327 = vunpack.c.h.b16 %v3038
    %v3328 = vunpack.c.l.b16 %v3039
    %v3329 = vunpack.c.h.b16 %v3039
    %v3330 = vunpack.c.l.b16 %v3040
    %v3331 = vunpack.c.h.b16 %v3040
    %v3332 = vunpack.c.l.b16 %v3041
    %v3333 = vunpack.c.h.b16 %v3041
    %v3334 = vunpack.c.l.b16 %v3042
    %v3335 = vunpack.c.h.b16 %v3042
    %v3336 = vunpack.c.l.b16 %v3043
    %v3337 = vunpack.c.h.b16 %v3043
    %v3338 = vunpack.c.l.b16 %v3044
    %v3339 = vunpack.c.h.b16 %v3044
    %v3340 = vunpack.c.l.b16 %v3045
    %v3341 = vunpack.c.h.b16 %v3045
    %v3342 = vunpack.c.l.b16 %v3046
    %v3343 = vunpack.c.h.b16 %v3046
    %v3344 = vunpack.c.l.b16 %v3047
    %v3345 = vunpack.c.h.b16 %v3047
    %v3346 = vunpack.c.l.b16 %v3048
    %v3347 = vunpack.c.h.b16 %v3048
    %v3348 = vunpack.c.l.b16 %v3049
    %v3349 = vunpack.c.h.b16 %v3049
    %v3350 = vunpack.c.l.b16 %v3050
    %v3351 = vunpack.c.h.b16 %v3050
    %v3352 = vunpack.c.l.b16 %v3051
    %v3353 = vunpack.c.h.b16 %v3051
    %v3354 = vunpack.c.l.b16 %v3052
    %v3355 = vunpack.c.h.b16 %v3052
    %v3356 = vunpack.c.l.b16 %v3053
    %v3357 = vunpack.c.h.b16 %v3053
    %v3358 = vunpack.c.l.b16 %v3054
    %v3359 = vunpack.c.h.b16 %v3054
    %v3360 = vunpack.c.l.b16 %v3055
    %v3361 = vunpack.c.h.b16 %v3055
    %v3362 = vunpack.c.l.b16 %v3056
    %v3363 = vunpack.c.h.b16 %v3056
    %v3364 = vunpack.c.l.b16 %v3057
    %v3365 = vunpack.c.h.b16 %v3057
    %v3366 = vunpack.c.l.b16 %v3058
    %v3367 = vunpack.c.h.b16 %v3058
    %v3368 = vunpack.c.l.b16 %v3059
    %v3369 = vunpack.c.h.b16 %v3059
    %v3370 = vunpack.c.l.b16 %v3060
    %v3371 = vunpack.c.h.b16 %v3060
    %v3372 = vunpack.c.l.b16 %v3061
    %v3373 = vunpack.c.h.b16 %v3061
    %v3374 = vunpack.c.l.b16 %v3062
    %v3375 = vunpack.c.h.b16 %v3062
    %v3376 = vunpack.c.l.b16 %v3063
    %v3377 = vunpack.c.h.b16 %v3063
    %v3378 = vunpack.c.l.b16 %v3064
    %v3379 = vunpack.c.h.b16 %v3064
    %v3380 = vunpack.c.l.b16 %v3065
    %v3381 = vunpack.c.h.b16 %v3065
    %v3382 = vunpack.c.l.b16 %v3066
    %v3383 = vunpack.c.h.b16 %v3066
    %v3384 = vunpack.c.l.b16 %v3067
    %v3385 = vunpack.c.h.b16 %v3067
    %v3386 = vunpack.c.l.b16 %v3068
    %v3387 = vunpack.c.h.b16 %v3068
    %v3388 = vunpack.c.l.b16 %v3069
    %v3389 = vunpack.c.h.b16 %v3069
    %v3390 = vunpack.c.l.b16 %v3070
    %v3391 = vunpack.c.h.b16 %v3070
    %v3392 = vunpack.c.l.b16 %v3071
    %v3393 = vunpack.c.h.b16 %v3071
    %v3394 = vunpack.c.l.b16 %v3072
    %v3395 = vunpack.c.h.b16 %v3072
    %v3396 = vunpack.c.l.b16 %v3073
    %v3397 = vunpack.c.h.b16 %v3073
    %v3398 = vunpack.c.l.b16 %v3074
    %v3399 = vunpack.c.h.b16 %v3074
    %v3400 = vunpack.c.l.b16 %v3075
    %v3401 = vunpack.c.h.b16 %v3075
    %v3402 = vunpack.c.l.b16 %v3076
    %v3403 = vunpack.c.h.b16 %v3076
    %v3404 = vunpack.c.l.b16 %v3077
    %v3405 = vunpack.c.h.b16 %v3077
    %v3406 = vunpack.c.l.b16 %v3078
    %v3407 = vunpack.c.h.b16 %v3078
    %v3408 = vunpack.c.l.b16 %v3079
    %v3409 = vunpack.c.h.b16 %v3079
    %v3410 = vunpack.c.l.b16 %v3080
    %v3411 = vunpack.c.h.b16 %v3080
    %v3412 = vunpack.c.l.b16 %v3081
    %v3413 = vunpack.c.h.b16 %v3081
    %v3414 = vunpack.c.l.b16 %v3082
    %v3415 = vunpack.c.h.b16 %v3082
    %v3416 = vunpack.c.l.b16 %v3083
    %v3417 = vunpack.c.h.b16 %v3083
    %v3418 = vunpack.c.l.b16 %v3084
    %v3419 = vunpack.c.h.b16 %v3084
    %v3420 = vunpack.c.l.b16 %v3085
    %v3421 = vunpack.c.h.b16 %v3085
    %v3422 = vunpack.c.l.b16 %v3086
    %v3423 = vunpack.c.h.b16 %v3086
    %v3424 = vunpack.c.l.b16 %v3087
    %v3425 = vunpack.c.h.b16 %v3087
    %v3426 = vunpack.c.l.b16 %v3088
    %v3427 = vunpack.c.h.b16 %v3088
    %v3428 = vunpack.c.l.b16 %v3089
    %v3429 = vunpack.c.h.b16 %v3089
    %v3430 = vunpack.c.l.b16 %v3090
    %v3431 = vunpack.c.h.b16 %v3090
    %v3432 = vunpack.c.l.b16 %v3091
    %v3433 = vunpack.c.h.b16 %v3091
    %v3434 = vunpack.c.l.b16 %v3092
    %v3435 = vunpack.c.h.b16 %v3092
    %v3436 = vunpack.c.l.b16 %v3093
    %v3437 = vunpack.c.h.b16 %v3093
    %v3438 = vunpack.c.l.b16 %v3094
    %v3439 = vunpack.c.h.b16 %v3094
    %v3440 = vunpack.c.l.b16 %v3095
    %v3441 = vunpack.c.h.b16 %v3095
    %v3442 = vunpack.c.l.b16 %v3096
    %v3443 = vunpack.c.h.b16 %v3096
    %v3444 = vunpack.c.l.b16 %v3097
    %v3445 = vunpack.c.h.b16 %v3097
    %v3446 = vunpack.c.l.b16 %v3098
    %v3447 = vunpack.c.h.b16 %v3098
    %v3448 = vunpack.c.l.b16 %v3099
    %v3449 = vunpack.c.h.b16 %v3099
    %v3450 = vunpack.c.l.b16 %v3100
    %v3451 = vunpack.c.h.b16 %v3100
    %v3452 = vunpack.c.l.b16 %v3101
    %v3453 = vunpack.c.h.b16 %v3101
    %v3454 = vunpack.c.l.b16 %v3102
    %v3455 = vunpack.c.h.b16 %v3102
    %v3456 = vunpack.c.l.b16 %v3103
    %v3457 = vunpack.c.h.b16 %v3103
    %v3458 = vunpack.c.l.b16 %v3104
    %v3459 = vunpack.c.h.b16 %v3104
    %v3460 = vunpack.c.l.b16 %v3105
    %v3461 = vunpack.c.h.b16 %v3105
    %v3462 = vunpack.c.l.b16 %v3106
    %v3463 = vunpack.c.h.b16 %v3106
    %v3464 = vunpack.c.l.b16 %v3107
    %v3465 = vunpack.c.h.b16 %v3107
    %v3466 = vunpack.c.l.b16 %v3108
    %v3467 = vunpack.c.h.b16 %v3108
    %v3468 = vunpack.c.l.b16 %v3109
    %v3469 = vunpack.c.h.b16 %v3109
    %v3470 = vunpack.c.l.b16 %v3110
    %v3471 = vunpack.c.h.b16 %v3110
    %v3472 = vunpack.c.l.b16 %v3111
    %v3473 = vunpack.c.h.b16 %v3111
    %v3474 = vunpack.c.l.b16 %v3112
    %v3475 = vunpack.c.h.b16 %v3112
    %v3476 = vunpack.c.l.b16 %v3113
    %v3477 = vunpack.c.h.b16 %v3113
    %v3478 = vunpack.c.l.b16 %v3114
    %v3479 = vunpack.c.h.b16 %v3114
    %v3480 = vunpack.c.l.b16 %v3115
    %v3481 = vunpack.c.h.b16 %v3115
    %v3482 = vunpack.c.l.b16 %v3116
    %v3483 = vunpack.c.h.b16 %v3116
    %v3484 = vunpack.c.l.b16 %v3117
    %v3485 = vunpack.c.h.b16 %v3117
    %v3486 = vunpack.c.l.b16 %v3118
    %v3487 = vunpack.c.h.b16 %v3118
    %v3488 = vunpack.c.l.b16 %v3119
    %v3489 = vunpack.c.h.b16 %v3119
    %v3490 = vunpack.c.l.b16 %v3120
    %v3491 = vunpack.c.h.b16 %v3120
    %v3492 = vunpack.c.l.b16 %v3121
    %v3493 = vunpack.c.h.b16 %v3121
    %v3494 = vunpack.c.l.b16 %v3122
    %v3495 = vunpack.c.h.b16 %v3122
    %v3496 = vunpack.c.l.b16 %v3123
    %v3497 = vunpack.c.h.b16 %v3123
    %v3498 = vunpack.c.l.b16 %v3124
    %v3499 = vunpack.c.h.b16 %v3124
    %v3500 = vunpack.c.l.b16 %v3125
    %v3501 = vunpack.c.h.b16 %v3125
    %v3502 = vunpack.c.l.b16 %v3126
    %v3503 = vunpack.c.h.b16 %v3126
    %v3504 = vunpack.c.l.b16 %v3127
    %v3505 = vunpack.c.h.b16 %v3127
    %v3506 = vunpack.c.l.b16 %v3128
    %v3507 = vunpack.c.h.b16 %v3128
    %v3508 = vunpack.c.l.b16 %v3129
    %v3509 = vunpack.c.h.b16 %v3129
    %v3510 = vunpack.c.l.b16 %v3130
    %v3511 = vunpack.c.h.b16 %v3130
    %v3512 = vunpack.c.l.b16 %v3131
    %v3513 = vunpack.c.h.b16 %v3131
    %v3514 = vunpack.c.l.b16 %v3132
    %v3515 = vunpack.c.h.b16 %v3132
    %v3516 = vunpack.c.l.b16 %v3133
    %v3517 = vunpack.c.h.b16 %v3133
    %v3518 = vpack.c.b16 %v3270, %v3262
    %v3519 = vpack.c.b16 %v3271, %v3263
    %v3520 = vpack.c.b16 %v3272, %v3264
    %v3521 = vpack.c.b16 %v3273, %v3265
    %v3522 = vpack.c.b16 %v3274, %v3266
    %v3523 = vpack.c.b16 %v3275, %v3267
    %v3524 = vpack.c.b16 %v3276, %v3268
    %v3525 = vpack.c.b16 %v3277, %v3269
    %v3526 = vpack.c.b16 %v3286, %v3278
    %v3527 = vpack.c.b16 %v3287, %v3279
    %v3528 = vpack.c.b16 %v3288, %v3280
    %v3529 = vpack.c.b16 %v3289, %v3281
    %v3530 = vpack.c.b16 %v3290, %v3282
    %v3531 = vpack.c.b16 %v3291, %v3283
    %v3532 = vpack.c.b16 %v3292, %v3284
    %v3533 = vpack.c.b16 %v3293, %v3285
    %v3534 = vpack.c.b16 %v3302, %v3294
    %v3535 = vpack.c.b16 %v3303, %v3295
    %v3536 = vpack.c.b16 %v3304, %v3296
    %v3537 = vpack.c.b16 %v3305, %v3297
    %v3538 = vpack.c.b16 %v3306, %v3298
    %v3539 = vpack.c.b16 %v3307, %v3299
    %v3540 = vpack.c.b16 %v3308, %v3300
    %v3541 = vpack.c.b16 %v3309, %v3301
    %v3542 = vpack.c.b16 %v3318, %v3310
    %v3543 = vpack.c.b16 %v3319, %v3311
    %v3544 = vpack.c.b16 %v3320, %v3312
    %v3545 = vpack.c.b16 %v3321, %v3313
    %v3546 = vpack.c.b16 %v3322, %v3314
    %v3547 = vpack.c.b16 %v3323, %v3315
    %v3548 = vpack.c.b16 %v3324, %v3316
    %v3549 = vpack.c.b16 %v3325, %v3317
    %v3550 = vpack.c.b16 %v3334, %v3326
    %v3551 = vpack.c.b16 %v3335, %v3327
    %v3552 = vpack.c.b16 %v3336, %v3328
    %v3553 = vpack.c.b16 %v3337, %v3329
    %v3554 = vpack.c.b16 %v3338, %v3330
    %v3555 = vpack.c.b16 %v3339, %v3331
    %v3556 = vpack.c.b16 %v3340, %v3332
    %v3557 = vpack.c.b16 %v3341, %v3333
    %v3558 = vpack.c.b16 %v3350, %v3342
    %v3559 = vpack.c.b16 %v3351, %v3343
    %v3560 = vpack.c.b16 %v3352, %v3344
    %v3561 = vpack.c.b16 %v3353, %v3345
    %v3562 = vpack.c.b16 %v3354, %v3346
    %v3563 = vpack.c.b16 %v3355, %v3347
    %v3564 = vpack.c.b16 %v3356, %v3348
    %v3565 = vpack.c.b16 %v3357, %v3349
    %v3566 = vpack.c.b16 %v3366, %v3358
    %v3567 = vpack.c.b16 %v3367, %v3359
    %v3568 = vpack.c.b16 %v3368, %v3360
    %v3569 = vpack.c.b16 %v3369, %v3361
    %v3570 = vpack.c.b16 %v3370, %v3362
    %v3571 = vpack.c.b16 %v3371, %v3363
    %v3572 = vpack.c.b16 %v3372, %v3364
    %v3573 = vpack.c.b16 %v3373, %v3365
    %v3574 = vpack.c.b16 %v3382, %v3374
    %v3575 = vpack.c.b16 %v3383, %v3375
    %v3576 = vpack.c.b16 %v3384, %v3376
    %v3577 = vpack.c.b16 %v3385, %v3377
    %v3578 = vpack.c.b16 %v3386, %v3378
    %v3579 = vpack.c.b16 %v3387, %v3379
    %v3580 = vpack.c.b16 %v3388, %v3380
    %v3581 = vpack.c.b16 %v3389, %v3381
    %v3582 = vpack.c.b16 %v3398, %v3390
    %v3583 = vpack.c.b16 %v3399, %v3391
    %v3584 = vpack.c.b16 %v3400, %v3392
    %v3585 = vpack.c.b16 %v3401, %v3393
    %v3586 = vpack.c.b16 %v3402, %v3394
    %v3587 = vpack.c.b16 %v3403, %v3395
    %v3588 = vpack.c.b16 %v3404, %v3396
    %v3589 = vpack.c.b16 %v3405, %v3397
    %v3590 = vpack.c.b16 %v3414, %v3406
    %v3591 = vpack.c.b16 %v3415, %v3407
    %v3592 = vpack.c.b16 %v3416, %v3408
    %v3593 = vpack.c.b16 %v3417, %v3409
    %v3594 = vpack.c.b16 %v3418, %v3410
    %v3595 = vpack.c.b16 %v3419, %v3411
    %v3596 = vpack.c.b16 %v3420, %v3412
    %v3597 = vpack.c.b16 %v3421, %v3413
    %v3598 = vpack.c.b16 %v3430, %v3422
    %v3599 = vpack.c.b16 %v3431, %v3423
    %v3600 = vpack.c.b16 %v3432, %v3424
    %v3601 = vpack.c.b16 %v3433, %v3425
    %v3602 = vpack.c.b16 %v3434, %v3426
    %v3603 = vpack.c.b16 %v3435, %v3427
    %v3604 = vpack.c.b16 %v3436, %v3428
    %v3605 = vpack.c.b16 %v3437, %v3429
    %v3606 = vpack.c.b16 %v3446, %v3438
    %v3607 = vpack.c.b16 %v3447, %v3439
    %v3608 = vpack.c.b16 %v3448, %v3440
    %v3609 = vpack.c.b16 %v3449, %v3441
    %v3610 = vpack.c.b16 %v3450, %v3442
    %v3611 = vpack.c.b16 %v3451, %v3443
    %v3612 = vpack.c.b16 %v3452, %v3444
    %v3613 = vpack.c.b16 %v3453, %v3445
    %v3614 = vpack.c.b16 %v3462, %v3454
    %v3615 = vpack.c.b16 %v3463, %v3455
    %v3616 = vpack.c.b16 %v3464, %v3456
    %v3617 = vpack.c.b16 %v3465, %v3457
    %v3618 = vpack.c.b16 %v3466, %v3458
    %v3619 = vpack.c.b16 %v3467, %v3459
    %v3620 = vpack.c.b16 %v3468, %v3460
    %v3621 = vpack.c.b16 %v3469, %v3461
    %v3622 = vpack.c.b16 %v3478, %v3470
    %v3623 = vpack.c.b16 %v3479, %v3471
    %v3624 = vpack.c.b16 %v3480, %v3472
    %v3625 = vpack.c.b16 %v3481, %v3473
    %v3626 = vpack.c.b16 %v3482, %v3474
    %v3627 = vpack.c.b16 %v3483, %v3475
    %v3628 = vpack.c.b16 %v3484, %v3476
    %v3629 = vpack.c.b16 %v3485, %v3477
    %v3630 = vpack.c.b16 %v3494, %v3486
    %v3631 = vpack.c.b16 %v3495, %v3487
    %v3632 = vpack.c.b16 %v3496, %v3488
    %v3633 = vpack.c.b16 %v3497, %v3489
    %v3634 = vpack.c.b16 %v3498, %v3490
    %v3635 = vpack.c.b16 %v3499, %v3491
    %v3636 = vpack.c.b16 %v3500, %v3492
    %v3637 = vpack.c.b16 %v3501, %v3493
    %v3638 = vpack.c.b16 %v3510, %v3502
    %v3639 = vpack.c.b16 %v3511, %v3503
    %v3640 = vpack.c.b16 %v3512, %v3504
    %v3641 = vpack.c.b16 %v3513, %v3505
    %v3642 = vpack.c.b16 %v3514, %v3506
    %v3643 = vpack.c.b16 %v3515, %v3507
    %v3644 = vpack.c.b16 %v3516, %v3508
    %v3645 = vpack.c.b16 %v3517, %v3509
    %3774 = vmatprep.subr.bf16.mxu0 %v3575
    %3775 = vmatpush1.bf16.msra.mxu0 %v3574
    %3776 = vmatprep.subr.bf16.mxu0 %v3567
    %3777 = vmatpush1.bf16.msra.mxu0 %v3566
    %3778 = vmatprep.subr.bf16.mxu0 %v3559
    %3779 = vmatpush1.bf16.msra.mxu0 %v3558
    %3780 = vmatprep.subr.bf16.mxu0 %v3551
    %3781 = vmatpush1.bf16.msra.mxu0 %v3550
    %3782 = vmatprep.subr.bf16.mxu0 %v3543
    %3783 = vmatpush1.bf16.msra.mxu0 %v3542
    %3784 = vmatprep.subr.bf16.mxu0 %v3535
    %3785 = vmatpush1.bf16.msra.mxu0 %v3534
    %3786 = vmatprep.subr.bf16.mxu0 %v3527
    %3787 = vmatpush1.bf16.msra.mxu0 %v3526
    %3788 = vmatprep.subr.bf16.mxu0 %v3519
    %3789 = vmatpush1.bf16.msra.mxu0 %v3518
    %3790 = vmatprep.subr.bf16.mxu0 %v3639
    %3791 = vmatpush2.bf16.msra.mxu0 %v3638
    %3792 = vmatprep.subr.bf16.mxu0 %v3631
    %3793 = vmatpush2.bf16.msra.mxu0 %v3630
    %3794 = vmatprep.subr.bf16.mxu0 %v3623
    %3795 = vmatpush2.bf16.msra.mxu0 %v3622
    %3796 = vmatprep.subr.bf16.mxu0 %v3615
    %3797 = vmatpush2.bf16.msra.mxu0 %v3614
    %3798 = vmatprep.subr.bf16.mxu0 %v3607
    %3799 = vmatpush2.bf16.msra.mxu0 %v3606
    %3800 = vmatprep.subr.bf16.mxu0 %v3599
    %3801 = vmatpush2.bf16.msra.mxu0 %v3598
    %3802 = vmatprep.subr.bf16.mxu0 %v3591
    %3803 = vmatpush2.bf16.msra.mxu0 %v3590
    %3804 = vmatprep.subr.bf16.mxu0 %v3583
    %3805 = vmatpush2.bf16.msra.mxu0 %v3582
    %3806 = vmatprep.mubr.bf16.mxu0 %v3005
    %3807 = vmatmul.mubr.bf16.gmra.mxu0 %v3004
    %v3808 = vpop.f32.mrf.mxu0
    %v3809 = vadd.f32 0.0, %v3808
    %v3810 = vpop.f32.mrf.mxu0
    %v3811 = vadd.f32 0.0, %v3810
    %v3812 = vpop.f32.mrf.mxu0
    %v3813 = vpop.f32.mrf.mxu0
    %3814 = vdwg.mxu0
    %3815 = vmatprep.subr.bf16.mxu0 %v3577
    %3816 = vmatpush1.bf16.msra.mxu0 %v3576
    %3817 = vmatprep.subr.bf16.mxu0 %v3569
    %3818 = vmatpush1.bf16.msra.mxu0 %v3568
    %3819 = vmatprep.subr.bf16.mxu0 %v3561
    %3820 = vmatpush1.bf16.msra.mxu0 %v3560
    %3821 = vmatprep.subr.bf16.mxu0 %v3553
    %3822 = vmatpush1.bf16.msra.mxu0 %v3552
    %3823 = vmatprep.subr.bf16.mxu0 %v3545
    %3824 = vmatpush1.bf16.msra.mxu0 %v3544
    %3825 = vmatprep.subr.bf16.mxu0 %v3537
    %3826 = vmatpush1.bf16.msra.mxu0 %v3536
    %3827 = vmatprep.subr.bf16.mxu0 %v3529
    %3828 = vmatpush1.bf16.msra.mxu0 %v3528
    %3829 = vmatprep.subr.bf16.mxu0 %v3521
    %3830 = vmatpush1.bf16.msra.mxu0 %v3520
    %3831 = vmatprep.subr.bf16.mxu0 %v3641
    %3832 = vmatpush2.bf16.msra.mxu0 %v3640
    %3833 = vmatprep.subr.bf16.mxu0 %v3633
    %3834 = vmatpush2.bf16.msra.mxu0 %v3632
    %3835 = vmatprep.subr.bf16.mxu0 %v3625
    %3836 = vmatpush2.bf16.msra.mxu0 %v3624
    %3837 = vmatprep.subr.bf16.mxu0 %v3617
    %3838 = vmatpush2.bf16.msra.mxu0 %v3616
    %3839 = vmatprep.subr.bf16.mxu0 %v3609
    %3840 = vmatpush2.bf16.msra.mxu0 %v3608
    %3841 = vmatprep.subr.bf16.mxu0 %v3601
    %3842 = vmatpush2.bf16.msra.mxu0 %v3600
    %3843 = vmatprep.subr.bf16.mxu0 %v3593
    %3844 = vmatpush2.bf16.msra.mxu0 %v3592
    %3845 = vmatprep.subr.bf16.mxu0 %v3585
    %3846 = vmatpush2.bf16.msra.mxu0 %v3584
    %3847 = vmatprep.mubr.bf16.mxu0 %v3005
    %3848 = vmatmul.mubr.bf16.gmra.mxu0 %v3004
    %v3849 = vpop.f32.mrf.mxu0
    %v3850 = vadd.f32 0.0, %v3849
    %v3851 = vpop.f32.mrf.mxu0
    %v3852 = vadd.f32 0.0, %v3851
    %v3853 = vpop.f32.mrf.mxu0
    %v3854 = vpop.f32.mrf.mxu0
    %3855 = vdwg.mxu0
    %3856 = vmatprep.subr.bf16.mxu0 %v3579
    %3857 = vmatpush1.bf16.msra.mxu0 %v3578
    %3858 = vmatprep.subr.bf16.mxu0 %v3571
    %3859 = vmatpush1.bf16.msra.mxu0 %v3570
    %3860 = vmatprep.subr.bf16.mxu0 %v3563
    %3861 = vmatpush1.bf16.msra.mxu0 %v3562
    %3862 = vmatprep.subr.bf16.mxu0 %v3555
    %3863 = vmatpush1.bf16.msra.mxu0 %v3554
    %3864 = vmatprep.subr.bf16.mxu0 %v3547
    %3865 = vmatpush1.bf16.msra.mxu0 %v3546
    %3866 = vmatprep.subr.bf16.mxu0 %v3539
    %3867 = vmatpush1.bf16.msra.mxu0 %v3538
    %3868 = vmatprep.subr.bf16.mxu0 %v3531
    %3869 = vmatpush1.bf16.msra.mxu0 %v3530
    %3870 = vmatprep.subr.bf16.mxu0 %v3523
    %3871 = vmatpush1.bf16.msra.mxu0 %v3522
    %3872 = vmatprep.subr.bf16.mxu0 %v3643
    %3873 = vmatpush2.bf16.msra.mxu0 %v3642
    %3874 = vmatprep.subr.bf16.mxu0 %v3635
    %3875 = vmatpush2.bf16.msra.mxu0 %v3634
    %3876 = vmatprep.subr.bf16.mxu0 %v3627
    %3877 = vmatpush2.bf16.msra.mxu0 %v3626
    %3878 = vmatprep.subr.bf16.mxu0 %v3619
    %3879 = vmatpush2.bf16.msra.mxu0 %v3618
    %3880 = vmatprep.subr.bf16.mxu0 %v3611
    %3881 = vmatpush2.bf16.msra.mxu0 %v3610
    %3882 = vmatprep.subr.bf16.mxu0 %v3603
    %3883 = vmatpush2.bf16.msra.mxu0 %v3602
    %3884 = vmatprep.subr.bf16.mxu0 %v3595
    %3885 = vmatpush2.bf16.msra.mxu0 %v3594
    %3886 = vmatprep.subr.bf16.mxu0 %v3587
    %3887 = vmatpush2.bf16.msra.mxu0 %v3586
    %3888 = vmatprep.mubr.bf16.mxu0 %v3005
    %3889 = vmatmul.mubr.bf16.gmra.mxu0 %v3004
    %v3890 = vpop.f32.mrf.mxu0
    %v3891 = vadd.f32 0.0, %v3890
    %v3892 = vpop.f32.mrf.mxu0
    %v3893 = vadd.f32 0.0, %v3892
    %v3894 = vpop.f32.mrf.mxu0
    %v3895 = vpop.f32.mrf.mxu0
    %3896 = vdwg.mxu0
    %3897 = vmatprep.subr.bf16.mxu0 %v3581
    %3898 = vmatpush1.bf16.msra.mxu0 %v3580
    %3899 = vmatprep.subr.bf16.mxu0 %v3573
    %3900 = vmatpush1.bf16.msra.mxu0 %v3572
    %3901 = vmatprep.subr.bf16.mxu0 %v3565
    %3902 = vmatpush1.bf16.msra.mxu0 %v3564
    %3903 = vmatprep.subr.bf16.mxu0 %v3557
    %3904 = vmatpush1.bf16.msra.mxu0 %v3556
    %3905 = vmatprep.subr.bf16.mxu0 %v3549
    %3906 = vmatpush1.bf16.msra.mxu0 %v3548
    %3907 = vmatprep.subr.bf16.mxu0 %v3541
    %3908 = vmatpush1.bf16.msra.mxu0 %v3540
    %3909 = vmatprep.subr.bf16.mxu0 %v3533
    %3910 = vmatpush1.bf16.msra.mxu0 %v3532
    %3911 = vmatprep.subr.bf16.mxu0 %v3525
    %3912 = vmatpush1.bf16.msra.mxu0 %v3524
    %3913 = vmatprep.subr.bf16.mxu0 %v3645
    %3914 = vmatpush2.bf16.msra.mxu0 %v3644
    %3915 = vmatprep.subr.bf16.mxu0 %v3637
    %3916 = vmatpush2.bf16.msra.mxu0 %v3636
    %3917 = vmatprep.subr.bf16.mxu0 %v3629
    %3918 = vmatpush2.bf16.msra.mxu0 %v3628
    %3919 = vmatprep.subr.bf16.mxu0 %v3621
    %3920 = vmatpush2.bf16.msra.mxu0 %v3620
    %3921 = vmatprep.subr.bf16.mxu0 %v3613
    %3922 = vmatpush2.bf16.msra.mxu0 %v3612
    %3923 = vmatprep.subr.bf16.mxu0 %v3605
    %3924 = vmatpush2.bf16.msra.mxu0 %v3604
    %3925 = vmatprep.subr.bf16.mxu0 %v3597
    %3926 = vmatpush2.bf16.msra.mxu0 %v3596
    %3927 = vmatprep.subr.bf16.mxu0 %v3589
    %3928 = vmatpush2.bf16.msra.mxu0 %v3588
    %3929 = vmatprep.mubr.bf16.mxu0 %v3005
    %3930 = vmatmul.mubr.bf16.gmra.mxu0 %v3004
    %v3931 = vpop.f32.mrf.mxu0
    %v3932 = vadd.f32 0.0, %v3931
    %v3933 = vpop.f32.mrf.mxu0
    %v3934 = vadd.f32 0.0, %v3933
    %v3935 = vpop.f32.mrf.mxu0
    %v3936 = vpop.f32.mrf.mxu0
    %3937 = vdwg.mxu0
    %s3938 = scalar_lea.vmem [#allocation2], 192
    %v3939 = vld [vmem:[%s3938] sm:$0xff]
    %v3940 = vld [vmem:[%s3938 + $0x8] sm:$0xff]
    %v3941 = vld [vmem:[%s3938 + $0x10] sm:$0xff]
    %v3942 = vld [vmem:[%s3938 + $0x18] sm:$0xff]
    %s3943 = scalar_lea.vmem [#allocation2], 256
    %v3944 = vld [vmem:[%s3943 + $0x20] sm:$0xff]
    %v3945 = vld [vmem:[%s3943 + $0x28] sm:$0xff]
    %v3946 = vld [vmem:[%s3943 + $0x30] sm:$0xff]
    %v3947 = vld [vmem:[%s3943 + $0x38] sm:$0xff]
    %v3948 = vadd.f32 %v3809, %v3939
    %v3949 = vadd.f32 %v3811, %v3940
    %v3950 = vadd.f32 %v3850, %v3941
    %v3951 = vadd.f32 %v3852, %v3942
    %v3952 = vadd.f32 %v3891, %v3944
    %v3953 = vadd.f32 %v3893, %v3945
    %v3954 = vadd.f32 %v3932, %v3946
    %v3955 = vadd.f32 %v3934, %v3947
    %v3956 = vxor.u32 %v3948, 2147483648
    %v3957 = vmul.f32 %v3956, 1.442695
    %v3958 = vpow.pop %v3957
    %v3959 = vadd.f32 %v3958, 1.0
    %v3960 = vrcp.pop %v3959
    %v3961 = vmul.f32 1.0, %v3960
    %v3962 = vxor.u32 %v3949, 2147483648
    %v3963 = vmul.f32 %v3962, 1.442695
    %v3964 = vpow.pop %v3963
    %v3965 = vadd.f32 %v3964, 1.0
    %v3966 = vrcp.pop %v3965
    %v3967 = vmul.f32 1.0, %v3966
    %v3968 = vtanh.pop %v3950
    %v3969 = vxor.u32 %v3951, 2147483648
    %v3970 = vmul.f32 %v3969, 1.442695
    %v3971 = vpow.pop %v3970
    %v3972 = vadd.f32 %v3971, 1.0
    %v3973 = vrcp.pop %v3972
    %v3974 = vmul.f32 1.0, %v3973
    %v3975 = vmul.f32 %v3967, %v2956
    %v3976 = vmul.f32 %v3961, %v3968
    %v3977 = vadd.f32 %v3975, %v3976
    %v3978 = vtanh.pop %v3977
    %v3979 = vmul.f32 %v3974, %v3978
    %v3980 = vxor.u32 %v3952, 2147483648
    %v3981 = vmul.f32 %v3980, 1.442695
    %v3982 = vpow.pop %v3981
    %v3983 = vadd.f32 %v3982, 1.0
    %v3984 = vrcp.pop %v3983
    %v3985 = vmul.f32 1.0, %v3984
    %v3986 = vxor.u32 %v3953, 2147483648
    %v3987 = vmul.f32 %v3986, 1.442695
    %v3988 = vpow.pop %v3987
    %v3989 = vadd.f32 %v3988, 1.0
    %v3990 = vrcp.pop %v3989
    %v3991 = vmul.f32 1.0, %v3990
    %v3992 = vtanh.pop %v3954
    %v3993 = vxor.u32 %v3955, 2147483648
    %v3994 = vmul.f32 %v3993, 1.442695
    %v3995 = vpow.pop %v3994
    %v3996 = vadd.f32 %v3995, 1.0
    %v3997 = vrcp.pop %v3996
    %v3998 = vmul.f32 1.0, %v3997
    %v3999 = vmul.f32 %v3991, %v2991
    %v4000 = vmul.f32 %v3985, %v3992
    %v4001 = vadd.f32 %v3999, %v4000
    %v4002 = vtanh.pop %v4001
    %v4003 = vmul.f32 %v3998, %v4002
    %s4004 = scalar_lea.vmem %s1, 32
    %v4005 = vld [vmem:[%s4004] sm:$0xff]
    %4007 = vset.pattern.permute.xlu0 0
    %4008 = vperm.xlu0 %4007, %v4005
    %v4009 = vpop.permute.xlu0 %4008
    %v4011 = vmul.f32 %v4003, %v4009
    %v4012 = vmul.f32 %v4001, %v4009
    %v4013 = vmax.f32 %v3979, 0.0
    %v4014 = vmul.f32 %v4013, %v939
    %4015 = vadd.xlane.f32.xlu0 %v4014
    %v4016 = vpop.xlane.xlu0 %4015
    %s4017 = scalar_lea.vmem [#allocation4], 24
    %4018 = vst.msk [vmem:[%s4017] sm:$0xff] %vm944, %v4016
    %v4019 = vmax.f32 %v4011, 0.0
    %v4020 = vmul.f32 %v4019, %v951
    %4021 = vadd.xlane.f32.xlu0 %v4020
    %v4022 = vpop.xlane.xlu0 %4021
    %s4023 = scalar_lea.vmem [#allocation5], 32
    %4024 = vst.msk [vmem:[%s4023] sm:$0xff] %vm944, %v4022
    %v4025 = vpack.c.bf16 %v3979, %v3979
    %v4026 = vpack.c.bf16 %v4011, %v4011
    %v4027 = vld [vmem:[#allocation3] sm:$0xff]
    %v4028 = vld [vmem:[#allocation3 + $0x8] sm:$0xff]
    %v4029 = vld [vmem:[#allocation3 + $0x10] sm:$0xff]
    %v4030 = vld [vmem:[#allocation3 + $0x18] sm:$0xff]
    %v4031 = vld [vmem:[#allocation3 + $0x20] sm:$0xff]
    %v4032 = vld [vmem:[#allocation3 + $0x28] sm:$0xff]
    %v4033 = vld [vmem:[#allocation3 + $0x30] sm:$0xff]
    %v4034 = vld [vmem:[#allocation3 + $0x38] sm:$0xff]
    %v4035 = vld [vmem:[#allocation3 + $0x40] sm:$0xff]
    %v4036 = vld [vmem:[#allocation3 + $0x48] sm:$0xff]
    %v4037 = vld [vmem:[#allocation3 + $0x50] sm:$0xff]
    %v4038 = vld [vmem:[#allocation3 + $0x58] sm:$0xff]
    %v4039 = vld [vmem:[#allocation3 + $0x60] sm:$0xff]
    %v4040 = vld [vmem:[#allocation3 + $0x68] sm:$0xff]
    %v4041 = vld [vmem:[#allocation3 + $0x70] sm:$0xff]
    %v4042 = vld [vmem:[#allocation3 + $0x78] sm:$0xff]
    %v4043 = vld [vmem:[#allocation3 + $0x80] sm:$0xff]
    %v4044 = vld [vmem:[#allocation3 + $0x88] sm:$0xff]
    %v4045 = vld [vmem:[#allocation3 + $0x90] sm:$0xff]
    %v4046 = vld [vmem:[#allocation3 + $0x98] sm:$0xff]
    %v4047 = vld [vmem:[#allocation3 + $0xa0] sm:$0xff]
    %v4048 = vld [vmem:[#allocation3 + $0xa8] sm:$0xff]
    %v4049 = vld [vmem:[#allocation3 + $0xb0] sm:$0xff]
    %v4050 = vld [vmem:[#allocation3 + $0xb8] sm:$0xff]
    %v4051 = vld [vmem:[#allocation3 + $0xc0] sm:$0xff]
    %v4052 = vld [vmem:[#allocation3 + $0xc8] sm:$0xff]
    %v4053 = vld [vmem:[#allocation3 + $0xd0] sm:$0xff]
    %v4054 = vld [vmem:[#allocation3 + $0xd8] sm:$0xff]
    %v4055 = vld [vmem:[#allocation3 + $0xe0] sm:$0xff]
    %v4056 = vld [vmem:[#allocation3 + $0xe8] sm:$0xff]
    %v4057 = vld [vmem:[#allocation3 + $0xf0] sm:$0xff]
    %v4058 = vld [vmem:[#allocation3 + $0xf8] sm:$0xff]
    %v4059 = vld [vmem:[#allocation3 + $0x100] sm:$0xff]
    %v4060 = vld [vmem:[#allocation3 + $0x108] sm:$0xff]
    %v4061 = vld [vmem:[#allocation3 + $0x110] sm:$0xff]
    %v4062 = vld [vmem:[#allocation3 + $0x118] sm:$0xff]
    %v4063 = vld [vmem:[#allocation3 + $0x120] sm:$0xff]
    %v4064 = vld [vmem:[#allocation3 + $0x128] sm:$0xff]
    %v4065 = vld [vmem:[#allocation3 + $0x130] sm:$0xff]
    %v4066 = vld [vmem:[#allocation3 + $0x138] sm:$0xff]
    %v4067 = vld [vmem:[#allocation3 + $0x140] sm:$0xff]
    %v4068 = vld [vmem:[#allocation3 + $0x148] sm:$0xff]
    %v4069 = vld [vmem:[#allocation3 + $0x150] sm:$0xff]
    %v4070 = vld [vmem:[#allocation3 + $0x158] sm:$0xff]
    %v4071 = vld [vmem:[#allocation3 + $0x160] sm:$0xff]
    %v4072 = vld [vmem:[#allocation3 + $0x168] sm:$0xff]
    %v4073 = vld [vmem:[#allocation3 + $0x170] sm:$0xff]
    %v4074 = vld [vmem:[#allocation3 + $0x178] sm:$0xff]
    %v4075 = vld [vmem:[#allocation3 + $0x180] sm:$0xff]
    %v4076 = vld [vmem:[#allocation3 + $0x188] sm:$0xff]
    %v4077 = vld [vmem:[#allocation3 + $0x190] sm:$0xff]
    %v4078 = vld [vmem:[#allocation3 + $0x198] sm:$0xff]
    %v4079 = vld [vmem:[#allocation3 + $0x1a0] sm:$0xff]
    %v4080 = vld [vmem:[#allocation3 + $0x1a8] sm:$0xff]
    %v4081 = vld [vmem:[#allocation3 + $0x1b0] sm:$0xff]
    %v4082 = vld [vmem:[#allocation3 + $0x1b8] sm:$0xff]
    %v4083 = vld [vmem:[#allocation3 + $0x1c0] sm:$0xff]
    %v4084 = vld [vmem:[#allocation3 + $0x1c8] sm:$0xff]
    %v4085 = vld [vmem:[#allocation3 + $0x1d0] sm:$0xff]
    %v4086 = vld [vmem:[#allocation3 + $0x1d8] sm:$0xff]
    %v4087 = vld [vmem:[#allocation3 + $0x1e0] sm:$0xff]
    %v4088 = vld [vmem:[#allocation3 + $0x1e8] sm:$0xff]
    %v4089 = vld [vmem:[#allocation3 + $0x1f0] sm:$0xff]
    %v4090 = vld [vmem:[#allocation3 + $0x1f8] sm:$0xff]
    %v4091 = vld [vmem:[#allocation3 + $0x200] sm:$0xff]
    %v4092 = vld [vmem:[#allocation3 + $0x208] sm:$0xff]
    %v4093 = vld [vmem:[#allocation3 + $0x210] sm:$0xff]
    %v4094 = vld [vmem:[#allocation3 + $0x218] sm:$0xff]
    %v4095 = vld [vmem:[#allocation3 + $0x220] sm:$0xff]
    %v4096 = vld [vmem:[#allocation3 + $0x228] sm:$0xff]
    %v4097 = vld [vmem:[#allocation3 + $0x230] sm:$0xff]
    %v4098 = vld [vmem:[#allocation3 + $0x238] sm:$0xff]
    %v4099 = vld [vmem:[#allocation3 + $0x240] sm:$0xff]
    %v4100 = vld [vmem:[#allocation3 + $0x248] sm:$0xff]
    %v4101 = vld [vmem:[#allocation3 + $0x250] sm:$0xff]
    %v4102 = vld [vmem:[#allocation3 + $0x258] sm:$0xff]
    %v4103 = vld [vmem:[#allocation3 + $0x260] sm:$0xff]
    %v4104 = vld [vmem:[#allocation3 + $0x268] sm:$0xff]
    %v4105 = vld [vmem:[#allocation3 + $0x270] sm:$0xff]
    %v4106 = vld [vmem:[#allocation3 + $0x278] sm:$0xff]
    %v4107 = vld [vmem:[#allocation3 + $0x280] sm:$0xff]
    %v4108 = vld [vmem:[#allocation3 + $0x288] sm:$0xff]
    %v4109 = vld [vmem:[#allocation3 + $0x290] sm:$0xff]
    %v4110 = vld [vmem:[#allocation3 + $0x298] sm:$0xff]
    %v4111 = vld [vmem:[#allocation3 + $0x2a0] sm:$0xff]
    %v4112 = vld [vmem:[#allocation3 + $0x2a8] sm:$0xff]
    %v4113 = vld [vmem:[#allocation3 + $0x2b0] sm:$0xff]
    %v4114 = vld [vmem:[#allocation3 + $0x2b8] sm:$0xff]
    %v4115 = vld [vmem:[#allocation3 + $0x2c0] sm:$0xff]
    %v4116 = vld [vmem:[#allocation3 + $0x2c8] sm:$0xff]
    %v4117 = vld [vmem:[#allocation3 + $0x2d0] sm:$0xff]
    %v4118 = vld [vmem:[#allocation3 + $0x2d8] sm:$0xff]
    %v4119 = vld [vmem:[#allocation3 + $0x2e0] sm:$0xff]
    %v4120 = vld [vmem:[#allocation3 + $0x2e8] sm:$0xff]
    %v4121 = vld [vmem:[#allocation3 + $0x2f0] sm:$0xff]
    %v4122 = vld [vmem:[#allocation3 + $0x2f8] sm:$0xff]
    %v4123 = vld [vmem:[#allocation3 + $0x300] sm:$0xff]
    %v4124 = vld [vmem:[#allocation3 + $0x308] sm:$0xff]
    %v4125 = vld [vmem:[#allocation3 + $0x310] sm:$0xff]
    %v4126 = vld [vmem:[#allocation3 + $0x318] sm:$0xff]
    %v4127 = vld [vmem:[#allocation3 + $0x320] sm:$0xff]
    %v4128 = vld [vmem:[#allocation3 + $0x328] sm:$0xff]
    %v4129 = vld [vmem:[#allocation3 + $0x330] sm:$0xff]
    %v4130 = vld [vmem:[#allocation3 + $0x338] sm:$0xff]
    %v4131 = vld [vmem:[#allocation3 + $0x340] sm:$0xff]
    %v4132 = vld [vmem:[#allocation3 + $0x348] sm:$0xff]
    %v4133 = vld [vmem:[#allocation3 + $0x350] sm:$0xff]
    %v4134 = vld [vmem:[#allocation3 + $0x358] sm:$0xff]
    %v4135 = vld [vmem:[#allocation3 + $0x360] sm:$0xff]
    %v4136 = vld [vmem:[#allocation3 + $0x368] sm:$0xff]
    %v4137 = vld [vmem:[#allocation3 + $0x370] sm:$0xff]
    %v4138 = vld [vmem:[#allocation3 + $0x378] sm:$0xff]
    %v4139 = vld [vmem:[#allocation3 + $0x380] sm:$0xff]
    %v4140 = vld [vmem:[#allocation3 + $0x388] sm:$0xff]
    %v4141 = vld [vmem:[#allocation3 + $0x390] sm:$0xff]
    %v4142 = vld [vmem:[#allocation3 + $0x398] sm:$0xff]
    %v4143 = vld [vmem:[#allocation3 + $0x3a0] sm:$0xff]
    %v4144 = vld [vmem:[#allocation3 + $0x3a8] sm:$0xff]
    %v4145 = vld [vmem:[#allocation3 + $0x3b0] sm:$0xff]
    %v4146 = vld [vmem:[#allocation3 + $0x3b8] sm:$0xff]
    %v4147 = vld [vmem:[#allocation3 + $0x3c0] sm:$0xff]
    %v4148 = vld [vmem:[#allocation3 + $0x3c8] sm:$0xff]
    %v4149 = vld [vmem:[#allocation3 + $0x3d0] sm:$0xff]
    %v4150 = vld [vmem:[#allocation3 + $0x3d8] sm:$0xff]
    %v4151 = vld [vmem:[#allocation3 + $0x3e0] sm:$0xff]
    %v4152 = vld [vmem:[#allocation3 + $0x3e8] sm:$0xff]
    %v4153 = vld [vmem:[#allocation3 + $0x3f0] sm:$0xff]
    %v4154 = vld [vmem:[#allocation3 + $0x3f8] sm:$0xff]
    %v4283 = vunpack.c.l.b16 %v4027
    %v4284 = vunpack.c.h.b16 %v4027
    %v4285 = vunpack.c.l.b16 %v4028
    %v4286 = vunpack.c.h.b16 %v4028
    %v4287 = vunpack.c.l.b16 %v4029
    %v4288 = vunpack.c.h.b16 %v4029
    %v4289 = vunpack.c.l.b16 %v4030
    %v4290 = vunpack.c.h.b16 %v4030
    %v4291 = vunpack.c.l.b16 %v4031
    %v4292 = vunpack.c.h.b16 %v4031
    %v4293 = vunpack.c.l.b16 %v4032
    %v4294 = vunpack.c.h.b16 %v4032
    %v4295 = vunpack.c.l.b16 %v4033
    %v4296 = vunpack.c.h.b16 %v4033
    %v4297 = vunpack.c.l.b16 %v4034
    %v4298 = vunpack.c.h.b16 %v4034
    %v4299 = vunpack.c.l.b16 %v4035
    %v4300 = vunpack.c.h.b16 %v4035
    %v4301 = vunpack.c.l.b16 %v4036
    %v4302 = vunpack.c.h.b16 %v4036
    %v4303 = vunpack.c.l.b16 %v4037
    %v4304 = vunpack.c.h.b16 %v4037
    %v4305 = vunpack.c.l.b16 %v4038
    %v4306 = vunpack.c.h.b16 %v4038
    %v4307 = vunpack.c.l.b16 %v4039
    %v4308 = vunpack.c.h.b16 %v4039
    %v4309 = vunpack.c.l.b16 %v4040
    %v4310 = vunpack.c.h.b16 %v4040
    %v4311 = vunpack.c.l.b16 %v4041
    %v4312 = vunpack.c.h.b16 %v4041
    %v4313 = vunpack.c.l.b16 %v4042
    %v4314 = vunpack.c.h.b16 %v4042
    %v4315 = vunpack.c.l.b16 %v4043
    %v4316 = vunpack.c.h.b16 %v4043
    %v4317 = vunpack.c.l.b16 %v4044
    %v4318 = vunpack.c.h.b16 %v4044
    %v4319 = vunpack.c.l.b16 %v4045
    %v4320 = vunpack.c.h.b16 %v4045
    %v4321 = vunpack.c.l.b16 %v4046
    %v4322 = vunpack.c.h.b16 %v4046
    %v4323 = vunpack.c.l.b16 %v4047
    %v4324 = vunpack.c.h.b16 %v4047
    %v4325 = vunpack.c.l.b16 %v4048
    %v4326 = vunpack.c.h.b16 %v4048
    %v4327 = vunpack.c.l.b16 %v4049
    %v4328 = vunpack.c.h.b16 %v4049
    %v4329 = vunpack.c.l.b16 %v4050
    %v4330 = vunpack.c.h.b16 %v4050
    %v4331 = vunpack.c.l.b16 %v4051
    %v4332 = vunpack.c.h.b16 %v4051
    %v4333 = vunpack.c.l.b16 %v4052
    %v4334 = vunpack.c.h.b16 %v4052
    %v4335 = vunpack.c.l.b16 %v4053
    %v4336 = vunpack.c.h.b16 %v4053
    %v4337 = vunpack.c.l.b16 %v4054
    %v4338 = vunpack.c.h.b16 %v4054
    %v4339 = vunpack.c.l.b16 %v4055
    %v4340 = vunpack.c.h.b16 %v4055
    %v4341 = vunpack.c.l.b16 %v4056
    %v4342 = vunpack.c.h.b16 %v4056
    %v4343 = vunpack.c.l.b16 %v4057
    %v4344 = vunpack.c.h.b16 %v4057
    %v4345 = vunpack.c.l.b16 %v4058
    %v4346 = vunpack.c.h.b16 %v4058
    %v4347 = vunpack.c.l.b16 %v4059
    %v4348 = vunpack.c.h.b16 %v4059
    %v4349 = vunpack.c.l.b16 %v4060
    %v4350 = vunpack.c.h.b16 %v4060
    %v4351 = vunpack.c.l.b16 %v4061
    %v4352 = vunpack.c.h.b16 %v4061
    %v4353 = vunpack.c.l.b16 %v4062
    %v4354 = vunpack.c.h.b16 %v4062
    %v4355 = vunpack.c.l.b16 %v4063
    %v4356 = vunpack.c.h.b16 %v4063
    %v4357 = vunpack.c.l.b16 %v4064
    %v4358 = vunpack.c.h.b16 %v4064
    %v4359 = vunpack.c.l.b16 %v4065
    %v4360 = vunpack.c.h.b16 %v4065
    %v4361 = vunpack.c.l.b16 %v4066
    %v4362 = vunpack.c.h.b16 %v4066
    %v4363 = vunpack.c.l.b16 %v4067
    %v4364 = vunpack.c.h.b16 %v4067
    %v4365 = vunpack.c.l.b16 %v4068
    %v4366 = vunpack.c.h.b16 %v4068
    %v4367 = vunpack.c.l.b16 %v4069
    %v4368 = vunpack.c.h.b16 %v4069
    %v4369 = vunpack.c.l.b16 %v4070
    %v4370 = vunpack.c.h.b16 %v4070
    %v4371 = vunpack.c.l.b16 %v4071
    %v4372 = vunpack.c.h.b16 %v4071
    %v4373 = vunpack.c.l.b16 %v4072
    %v4374 = vunpack.c.h.b16 %v4072
    %v4375 = vunpack.c.l.b16 %v4073
    %v4376 = vunpack.c.h.b16 %v4073
    %v4377 = vunpack.c.l.b16 %v4074
    %v4378 = vunpack.c.h.b16 %v4074
    %v4379 = vunpack.c.l.b16 %v4075
    %v4380 = vunpack.c.h.b16 %v4075
    %v4381 = vunpack.c.l.b16 %v4076
    %v4382 = vunpack.c.h.b16 %v4076
    %v4383 = vunpack.c.l.b16 %v4077
    %v4384 = vunpack.c.h.b16 %v4077
    %v4385 = vunpack.c.l.b16 %v4078
    %v4386 = vunpack.c.h.b16 %v4078
    %v4387 = vunpack.c.l.b16 %v4079
    %v4388 = vunpack.c.h.b16 %v4079
    %v4389 = vunpack.c.l.b16 %v4080
    %v4390 = vunpack.c.h.b16 %v4080
    %v4391 = vunpack.c.l.b16 %v4081
    %v4392 = vunpack.c.h.b16 %v4081
    %v4393 = vunpack.c.l.b16 %v4082
    %v4394 = vunpack.c.h.b16 %v4082
    %v4395 = vunpack.c.l.b16 %v4083
    %v4396 = vunpack.c.h.b16 %v4083
    %v4397 = vunpack.c.l.b16 %v4084
    %v4398 = vunpack.c.h.b16 %v4084
    %v4399 = vunpack.c.l.b16 %v4085
    %v4400 = vunpack.c.h.b16 %v4085
    %v4401 = vunpack.c.l.b16 %v4086
    %v4402 = vunpack.c.h.b16 %v4086
    %v4403 = vunpack.c.l.b16 %v4087
    %v4404 = vunpack.c.h.b16 %v4087
    %v4405 = vunpack.c.l.b16 %v4088
    %v4406 = vunpack.c.h.b16 %v4088
    %v4407 = vunpack.c.l.b16 %v4089
    %v4408 = vunpack.c.h.b16 %v4089
    %v4409 = vunpack.c.l.b16 %v4090
    %v4410 = vunpack.c.h.b16 %v4090
    %v4411 = vunpack.c.l.b16 %v4091
    %v4412 = vunpack.c.h.b16 %v4091
    %v4413 = vunpack.c.l.b16 %v4092
    %v4414 = vunpack.c.h.b16 %v4092
    %v4415 = vunpack.c.l.b16 %v4093
    %v4416 = vunpack.c.h.b16 %v4093
    %v4417 = vunpack.c.l.b16 %v4094
    %v4418 = vunpack.c.h.b16 %v4094
    %v4419 = vunpack.c.l.b16 %v4095
    %v4420 = vunpack.c.h.b16 %v4095
    %v4421 = vunpack.c.l.b16 %v4096
    %v4422 = vunpack.c.h.b16 %v4096
    %v4423 = vunpack.c.l.b16 %v4097
    %v4424 = vunpack.c.h.b16 %v4097
    %v4425 = vunpack.c.l.b16 %v4098
    %v4426 = vunpack.c.h.b16 %v4098
    %v4427 = vunpack.c.l.b16 %v4099
    %v4428 = vunpack.c.h.b16 %v4099
    %v4429 = vunpack.c.l.b16 %v4100
    %v4430 = vunpack.c.h.b16 %v4100
    %v4431 = vunpack.c.l.b16 %v4101
    %v4432 = vunpack.c.h.b16 %v4101
    %v4433 = vunpack.c.l.b16 %v4102
    %v4434 = vunpack.c.h.b16 %v4102
    %v4435 = vunpack.c.l.b16 %v4103
    %v4436 = vunpack.c.h.b16 %v4103
    %v4437 = vunpack.c.l.b16 %v4104
    %v4438 = vunpack.c.h.b16 %v4104
    %v4439 = vunpack.c.l.b16 %v4105
    %v4440 = vunpack.c.h.b16 %v4105
    %v4441 = vunpack.c.l.b16 %v4106
    %v4442 = vunpack.c.h.b16 %v4106
    %v4443 = vunpack.c.l.b16 %v4107
    %v4444 = vunpack.c.h.b16 %v4107
    %v4445 = vunpack.c.l.b16 %v4108
    %v4446 = vunpack.c.h.b16 %v4108
    %v4447 = vunpack.c.l.b16 %v4109
    %v4448 = vunpack.c.h.b16 %v4109
    %v4449 = vunpack.c.l.b16 %v4110
    %v4450 = vunpack.c.h.b16 %v4110
    %v4451 = vunpack.c.l.b16 %v4111
    %v4452 = vunpack.c.h.b16 %v4111
    %v4453 = vunpack.c.l.b16 %v4112
    %v4454 = vunpack.c.h.b16 %v4112
    %v4455 = vunpack.c.l.b16 %v4113
    %v4456 = vunpack.c.h.b16 %v4113
    %v4457 = vunpack.c.l.b16 %v4114
    %v4458 = vunpack.c.h.b16 %v4114
    %v4459 = vunpack.c.l.b16 %v4115
    %v4460 = vunpack.c.h.b16 %v4115
    %v4461 = vunpack.c.l.b16 %v4116
    %v4462 = vunpack.c.h.b16 %v4116
    %v4463 = vunpack.c.l.b16 %v4117
    %v4464 = vunpack.c.h.b16 %v4117
    %v4465 = vunpack.c.l.b16 %v4118
    %v4466 = vunpack.c.h.b16 %v4118
    %v4467 = vunpack.c.l.b16 %v4119
    %v4468 = vunpack.c.h.b16 %v4119
    %v4469 = vunpack.c.l.b16 %v4120
    %v4470 = vunpack.c.h.b16 %v4120
    %v4471 = vunpack.c.l.b16 %v4121
    %v4472 = vunpack.c.h.b16 %v4121
    %v4473 = vunpack.c.l.b16 %v4122
    %v4474 = vunpack.c.h.b16 %v4122
    %v4475 = vunpack.c.l.b16 %v4123
    %v4476 = vunpack.c.h.b16 %v4123
    %v4477 = vunpack.c.l.b16 %v4124
    %v4478 = vunpack.c.h.b16 %v4124
    %v4479 = vunpack.c.l.b16 %v4125
    %v4480 = vunpack.c.h.b16 %v4125
    %v4481 = vunpack.c.l.b16 %v4126
    %v4482 = vunpack.c.h.b16 %v4126
    %v4483 = vunpack.c.l.b16 %v4127
    %v4484 = vunpack.c.h.b16 %v4127
    %v4485 = vunpack.c.l.b16 %v4128
    %v4486 = vunpack.c.h.b16 %v4128
    %v4487 = vunpack.c.l.b16 %v4129
    %v4488 = vunpack.c.h.b16 %v4129
    %v4489 = vunpack.c.l.b16 %v4130
    %v4490 = vunpack.c.h.b16 %v4130
    %v4491 = vunpack.c.l.b16 %v4131
    %v4492 = vunpack.c.h.b16 %v4131
    %v4493 = vunpack.c.l.b16 %v4132
    %v4494 = vunpack.c.h.b16 %v4132
    %v4495 = vunpack.c.l.b16 %v4133
    %v4496 = vunpack.c.h.b16 %v4133
    %v4497 = vunpack.c.l.b16 %v4134
    %v4498 = vunpack.c.h.b16 %v4134
    %v4499 = vunpack.c.l.b16 %v4135
    %v4500 = vunpack.c.h.b16 %v4135
    %v4501 = vunpack.c.l.b16 %v4136
    %v4502 = vunpack.c.h.b16 %v4136
    %v4503 = vunpack.c.l.b16 %v4137
    %v4504 = vunpack.c.h.b16 %v4137
    %v4505 = vunpack.c.l.b16 %v4138
    %v4506 = vunpack.c.h.b16 %v4138
    %v4507 = vunpack.c.l.b16 %v4139
    %v4508 = vunpack.c.h.b16 %v4139
    %v4509 = vunpack.c.l.b16 %v4140
    %v4510 = vunpack.c.h.b16 %v4140
    %v4511 = vunpack.c.l.b16 %v4141
    %v4512 = vunpack.c.h.b16 %v4141
    %v4513 = vunpack.c.l.b16 %v4142
    %v4514 = vunpack.c.h.b16 %v4142
    %v4515 = vunpack.c.l.b16 %v4143
    %v4516 = vunpack.c.h.b16 %v4143
    %v4517 = vunpack.c.l.b16 %v4144
    %v4518 = vunpack.c.h.b16 %v4144
    %v4519 = vunpack.c.l.b16 %v4145
    %v4520 = vunpack.c.h.b16 %v4145
    %v4521 = vunpack.c.l.b16 %v4146
    %v4522 = vunpack.c.h.b16 %v4146
    %v4523 = vunpack.c.l.b16 %v4147
    %v4524 = vunpack.c.h.b16 %v4147
    %v4525 = vunpack.c.l.b16 %v4148
    %v4526 = vunpack.c.h.b16 %v4148
    %v4527 = vunpack.c.l.b16 %v4149
    %v4528 = vunpack.c.h.b16 %v4149
    %v4529 = vunpack.c.l.b16 %v4150
    %v4530 = vunpack.c.h.b16 %v4150
    %v4531 = vunpack.c.l.b16 %v4151
    %v4532 = vunpack.c.h.b16 %v4151
    %v4533 = vunpack.c.l.b16 %v4152
    %v4534 = vunpack.c.h.b16 %v4152
    %v4535 = vunpack.c.l.b16 %v4153
    %v4536 = vunpack.c.h.b16 %v4153
    %v4537 = vunpack.c.l.b16 %v4154
    %v4538 = vunpack.c.h.b16 %v4154
    %v4539 = vpack.c.b16 %v4291, %v4283
    %v4540 = vpack.c.b16 %v4292, %v4284
    %v4541 = vpack.c.b16 %v4293, %v4285
    %v4542 = vpack.c.b16 %v4294, %v4286
    %v4543 = vpack.c.b16 %v4295, %v4287
    %v4544 = vpack.c.b16 %v4296, %v4288
    %v4545 = vpack.c.b16 %v4297, %v4289
    %v4546 = vpack.c.b16 %v4298, %v4290
    %v4547 = vpack.c.b16 %v4307, %v4299
    %v4548 = vpack.c.b16 %v4308, %v4300
    %v4549 = vpack.c.b16 %v4309, %v4301
    %v4550 = vpack.c.b16 %v4310, %v4302
    %v4551 = vpack.c.b16 %v4311, %v4303
    %v4552 = vpack.c.b16 %v4312, %v4304
    %v4553 = vpack.c.b16 %v4313, %v4305
    %v4554 = vpack.c.b16 %v4314, %v4306
    %v4555 = vpack.c.b16 %v4323, %v4315
    %v4556 = vpack.c.b16 %v4324, %v4316
    %v4557 = vpack.c.b16 %v4325, %v4317
    %v4558 = vpack.c.b16 %v4326, %v4318
    %v4559 = vpack.c.b16 %v4327, %v4319
    %v4560 = vpack.c.b16 %v4328, %v4320
    %v4561 = vpack.c.b16 %v4329, %v4321
    %v4562 = vpack.c.b16 %v4330, %v4322
    %v4563 = vpack.c.b16 %v4339, %v4331
    %v4564 = vpack.c.b16 %v4340, %v4332
    %v4565 = vpack.c.b16 %v4341, %v4333
    %v4566 = vpack.c.b16 %v4342, %v4334
    %v4567 = vpack.c.b16 %v4343, %v4335
    %v4568 = vpack.c.b16 %v4344, %v4336
    %v4569 = vpack.c.b16 %v4345, %v4337
    %v4570 = vpack.c.b16 %v4346, %v4338
    %v4571 = vpack.c.b16 %v4355, %v4347
    %v4572 = vpack.c.b16 %v4356, %v4348
    %v4573 = vpack.c.b16 %v4357, %v4349
    %v4574 = vpack.c.b16 %v4358, %v4350
    %v4575 = vpack.c.b16 %v4359, %v4351
    %v4576 = vpack.c.b16 %v4360, %v4352
    %v4577 = vpack.c.b16 %v4361, %v4353
    %v4578 = vpack.c.b16 %v4362, %v4354
    %v4579 = vpack.c.b16 %v4371, %v4363
    %v4580 = vpack.c.b16 %v4372, %v4364
    %v4581 = vpack.c.b16 %v4373, %v4365
    %v4582 = vpack.c.b16 %v4374, %v4366
    %v4583 = vpack.c.b16 %v4375, %v4367
    %v4584 = vpack.c.b16 %v4376, %v4368
    %v4585 = vpack.c.b16 %v4377, %v4369
    %v4586 = vpack.c.b16 %v4378, %v4370
    %v4587 = vpack.c.b16 %v4387, %v4379
    %v4588 = vpack.c.b16 %v4388, %v4380
    %v4589 = vpack.c.b16 %v4389, %v4381
    %v4590 = vpack.c.b16 %v4390, %v4382
    %v4591 = vpack.c.b16 %v4391, %v4383
    %v4592 = vpack.c.b16 %v4392, %v4384
    %v4593 = vpack.c.b16 %v4393, %v4385
    %v4594 = vpack.c.b16 %v4394, %v4386
    %v4595 = vpack.c.b16 %v4403, %v4395
    %v4596 = vpack.c.b16 %v4404, %v4396
    %v4597 = vpack.c.b16 %v4405, %v4397
    %v4598 = vpack.c.b16 %v4406, %v4398
    %v4599 = vpack.c.b16 %v4407, %v4399
    %v4600 = vpack.c.b16 %v4408, %v4400
    %v4601 = vpack.c.b16 %v4409, %v4401
    %v4602 = vpack.c.b16 %v4410, %v4402
    %v4603 = vpack.c.b16 %v4419, %v4411
    %v4604 = vpack.c.b16 %v4420, %v4412
    %v4605 = vpack.c.b16 %v4421, %v4413
    %v4606 = vpack.c.b16 %v4422, %v4414
    %v4607 = vpack.c.b16 %v4423, %v4415
    %v4608 = vpack.c.b16 %v4424, %v4416
    %v4609 = vpack.c.b16 %v4425, %v4417
    %v4610 = vpack.c.b16 %v4426, %v4418
    %v4611 = vpack.c.b16 %v4435, %v4427
    %v4612 = vpack.c.b16 %v4436, %v4428
    %v4613 = vpack.c.b16 %v4437, %v4429
    %v4614 = vpack.c.b16 %v4438, %v4430
    %v4615 = vpack.c.b16 %v4439, %v4431
    %v4616 = vpack.c.b16 %v4440, %v4432
    %v4617 = vpack.c.b16 %v4441, %v4433
    %v4618 = vpack.c.b16 %v4442, %v4434
    %v4619 = vpack.c.b16 %v4451, %v4443
    %v4620 = vpack.c.b16 %v4452, %v4444
    %v4621 = vpack.c.b16 %v4453, %v4445
    %v4622 = vpack.c.b16 %v4454, %v4446
    %v4623 = vpack.c.b16 %v4455, %v4447
    %v4624 = vpack.c.b16 %v4456, %v4448
    %v4625 = vpack.c.b16 %v4457, %v4449
    %v4626 = vpack.c.b16 %v4458, %v4450
    %v4627 = vpack.c.b16 %v4467, %v4459
    %v4628 = vpack.c.b16 %v4468, %v4460
    %v4629 = vpack.c.b16 %v4469, %v4461
    %v4630 = vpack.c.b16 %v4470, %v4462
    %v4631 = vpack.c.b16 %v4471, %v4463
    %v4632 = vpack.c.b16 %v4472, %v4464
    %v4633 = vpack.c.b16 %v4473, %v4465
    %v4634 = vpack.c.b16 %v4474, %v4466
    %v4635 = vpack.c.b16 %v4483, %v4475
    %v4636 = vpack.c.b16 %v4484, %v4476
    %v4637 = vpack.c.b16 %v4485, %v4477
    %v4638 = vpack.c.b16 %v4486, %v4478
    %v4639 = vpack.c.b16 %v4487, %v4479
    %v4640 = vpack.c.b16 %v4488, %v4480
    %v4641 = vpack.c.b16 %v4489, %v4481
    %v4642 = vpack.c.b16 %v4490, %v4482
    %v4643 = vpack.c.b16 %v4499, %v4491
    %v4644 = vpack.c.b16 %v4500, %v4492
    %v4645 = vpack.c.b16 %v4501, %v4493
    %v4646 = vpack.c.b16 %v4502, %v4494
    %v4647 = vpack.c.b16 %v4503, %v4495
    %v4648 = vpack.c.b16 %v4504, %v4496
    %v4649 = vpack.c.b16 %v4505, %v4497
    %v4650 = vpack.c.b16 %v4506, %v4498
    %v4651 = vpack.c.b16 %v4515, %v4507
    %v4652 = vpack.c.b16 %v4516, %v4508
    %v4653 = vpack.c.b16 %v4517, %v4509
    %v4654 = vpack.c.b16 %v4518, %v4510
    %v4655 = vpack.c.b16 %v4519, %v4511
    %v4656 = vpack.c.b16 %v4520, %v4512
    %v4657 = vpack.c.b16 %v4521, %v4513
    %v4658 = vpack.c.b16 %v4522, %v4514
    %v4659 = vpack.c.b16 %v4531, %v4523
    %v4660 = vpack.c.b16 %v4532, %v4524
    %v4661 = vpack.c.b16 %v4533, %v4525
    %v4662 = vpack.c.b16 %v4534, %v4526
    %v4663 = vpack.c.b16 %v4535, %v4527
    %v4664 = vpack.c.b16 %v4536, %v4528
    %v4665 = vpack.c.b16 %v4537, %v4529
    %v4666 = vpack.c.b16 %v4538, %v4530
    %4795 = vmatprep.subr.bf16.mxu0 %v4596
    %4796 = vmatpush1.bf16.msra.mxu0 %v4595
    %4797 = vmatprep.subr.bf16.mxu0 %v4588
    %4798 = vmatpush1.bf16.msra.mxu0 %v4587
    %4799 = vmatprep.subr.bf16.mxu0 %v4580
    %4800 = vmatpush1.bf16.msra.mxu0 %v4579
    %4801 = vmatprep.subr.bf16.mxu0 %v4572
    %4802 = vmatpush1.bf16.msra.mxu0 %v4571
    %4803 = vmatprep.subr.bf16.mxu0 %v4564
    %4804 = vmatpush1.bf16.msra.mxu0 %v4563
    %4805 = vmatprep.subr.bf16.mxu0 %v4556
    %4806 = vmatpush1.bf16.msra.mxu0 %v4555
    %4807 = vmatprep.subr.bf16.mxu0 %v4548
    %4808 = vmatpush1.bf16.msra.mxu0 %v4547
    %4809 = vmatprep.subr.bf16.mxu0 %v4540
    %4810 = vmatpush1.bf16.msra.mxu0 %v4539
    %4811 = vmatprep.subr.bf16.mxu0 %v4660
    %4812 = vmatpush2.bf16.msra.mxu0 %v4659
    %4813 = vmatprep.subr.bf16.mxu0 %v4652
    %4814 = vmatpush2.bf16.msra.mxu0 %v4651
    %4815 = vmatprep.subr.bf16.mxu0 %v4644
    %4816 = vmatpush2.bf16.msra.mxu0 %v4643
    %4817 = vmatprep.subr.bf16.mxu0 %v4636
    %4818 = vmatpush2.bf16.msra.mxu0 %v4635
    %4819 = vmatprep.subr.bf16.mxu0 %v4628
    %4820 = vmatpush2.bf16.msra.mxu0 %v4627
    %4821 = vmatprep.subr.bf16.mxu0 %v4620
    %4822 = vmatpush2.bf16.msra.mxu0 %v4619
    %4823 = vmatprep.subr.bf16.mxu0 %v4612
    %4824 = vmatpush2.bf16.msra.mxu0 %v4611
    %4825 = vmatprep.subr.bf16.mxu0 %v4604
    %4826 = vmatpush2.bf16.msra.mxu0 %v4603
    %4827 = vmatprep.mubr.bf16.mxu0 %v4026
    %4828 = vmatmul.mubr.bf16.gmra.mxu0 %v4025
    %v4829 = vpop.f32.mrf.mxu0
    %v4830 = vadd.f32 0.0, %v4829
    %v4831 = vpop.f32.mrf.mxu0
    %v4832 = vadd.f32 0.0, %v4831
    %v4833 = vpop.f32.mrf.mxu0
    %v4834 = vpop.f32.mrf.mxu0
    %4835 = vdwg.mxu0
    %4836 = vmatprep.subr.bf16.mxu0 %v4598
    %4837 = vmatpush1.bf16.msra.mxu0 %v4597
    %4838 = vmatprep.subr.bf16.mxu0 %v4590
    %4839 = vmatpush1.bf16.msra.mxu0 %v4589
    %4840 = vmatprep.subr.bf16.mxu0 %v4582
    %4841 = vmatpush1.bf16.msra.mxu0 %v4581
    %4842 = vmatprep.subr.bf16.mxu0 %v4574
    %4843 = vmatpush1.bf16.msra.mxu0 %v4573
    %4844 = vmatprep.subr.bf16.mxu0 %v4566
    %4845 = vmatpush1.bf16.msra.mxu0 %v4565
    %4846 = vmatprep.subr.bf16.mxu0 %v4558
    %4847 = vmatpush1.bf16.msra.mxu0 %v4557
    %4848 = vmatprep.subr.bf16.mxu0 %v4550
    %4849 = vmatpush1.bf16.msra.mxu0 %v4549
    %4850 = vmatprep.subr.bf16.mxu0 %v4542
    %4851 = vmatpush1.bf16.msra.mxu0 %v4541
    %4852 = vmatprep.subr.bf16.mxu0 %v4662
    %4853 = vmatpush2.bf16.msra.mxu0 %v4661
    %4854 = vmatprep.subr.bf16.mxu0 %v4654
    %4855 = vmatpush2.bf16.msra.mxu0 %v4653
    %4856 = vmatprep.subr.bf16.mxu0 %v4646
    %4857 = vmatpush2.bf16.msra.mxu0 %v4645
    %4858 = vmatprep.subr.bf16.mxu0 %v4638
    %4859 = vmatpush2.bf16.msra.mxu0 %v4637
    %4860 = vmatprep.subr.bf16.mxu0 %v4630
    %4861 = vmatpush2.bf16.msra.mxu0 %v4629
    %4862 = vmatprep.subr.bf16.mxu0 %v4622
    %4863 = vmatpush2.bf16.msra.mxu0 %v4621
    %4864 = vmatprep.subr.bf16.mxu0 %v4614
    %4865 = vmatpush2.bf16.msra.mxu0 %v4613
    %4866 = vmatprep.subr.bf16.mxu0 %v4606
    %4867 = vmatpush2.bf16.msra.mxu0 %v4605
    %4868 = vmatprep.mubr.bf16.mxu0 %v4026
    %4869 = vmatmul.mubr.bf16.gmra.mxu0 %v4025
    %v4870 = vpop.f32.mrf.mxu0
    %v4871 = vadd.f32 0.0, %v4870
    %v4872 = vpop.f32.mrf.mxu0
    %v4873 = vadd.f32 0.0, %v4872
    %v4874 = vpop.f32.mrf.mxu0
    %v4875 = vpop.f32.mrf.mxu0
    %4876 = vdwg.mxu0
    %4877 = vmatprep.subr.bf16.mxu0 %v4600
    %4878 = vmatpush1.bf16.msra.mxu0 %v4599
    %4879 = vmatprep.subr.bf16.mxu0 %v4592
    %4880 = vmatpush1.bf16.msra.mxu0 %v4591
    %4881 = vmatprep.subr.bf16.mxu0 %v4584
    %4882 = vmatpush1.bf16.msra.mxu0 %v4583
    %4883 = vmatprep.subr.bf16.mxu0 %v4576
    %4884 = vmatpush1.bf16.msra.mxu0 %v4575
    %4885 = vmatprep.subr.bf16.mxu0 %v4568
    %4886 = vmatpush1.bf16.msra.mxu0 %v4567
    %4887 = vmatprep.subr.bf16.mxu0 %v4560
    %4888 = vmatpush1.bf16.msra.mxu0 %v4559
    %4889 = vmatprep.subr.bf16.mxu0 %v4552
    %4890 = vmatpush1.bf16.msra.mxu0 %v4551
    %4891 = vmatprep.subr.bf16.mxu0 %v4544
    %4892 = vmatpush1.bf16.msra.mxu0 %v4543
    %4893 = vmatprep.subr.bf16.mxu0 %v4664
    %4894 = vmatpush2.bf16.msra.mxu0 %v4663
    %4895 = vmatprep.subr.bf16.mxu0 %v4656
    %4896 = vmatpush2.bf16.msra.mxu0 %v4655
    %4897 = vmatprep.subr.bf16.mxu0 %v4648
    %4898 = vmatpush2.bf16.msra.mxu0 %v4647
    %4899 = vmatprep.subr.bf16.mxu0 %v4640
    %4900 = vmatpush2.bf16.msra.mxu0 %v4639
    %4901 = vmatprep.subr.bf16.mxu0 %v4632
    %4902 = vmatpush2.bf16.msra.mxu0 %v4631
    %4903 = vmatprep.subr.bf16.mxu0 %v4624
    %4904 = vmatpush2.bf16.msra.mxu0 %v4623
    %4905 = vmatprep.subr.bf16.mxu0 %v4616
    %4906 = vmatpush2.bf16.msra.mxu0 %v4615
    %4907 = vmatprep.subr.bf16.mxu0 %v4608
    %4908 = vmatpush2.bf16.msra.mxu0 %v4607
    %4909 = vmatprep.mubr.bf16.mxu0 %v4026
    %4910 = vmatmul.mubr.bf16.gmra.mxu0 %v4025
    %v4911 = vpop.f32.mrf.mxu0
    %v4912 = vadd.f32 0.0, %v4911
    %v4913 = vpop.f32.mrf.mxu0
    %v4914 = vadd.f32 0.0, %v4913
    %v4915 = vpop.f32.mrf.mxu0
    %v4916 = vpop.f32.mrf.mxu0
    %4917 = vdwg.mxu0
    %4918 = vmatprep.subr.bf16.mxu0 %v4602
    %4919 = vmatpush1.bf16.msra.mxu0 %v4601
    %4920 = vmatprep.subr.bf16.mxu0 %v4594
    %4921 = vmatpush1.bf16.msra.mxu0 %v4593
    %4922 = vmatprep.subr.bf16.mxu0 %v4586
    %4923 = vmatpush1.bf16.msra.mxu0 %v4585
    %4924 = vmatprep.subr.bf16.mxu0 %v4578
    %4925 = vmatpush1.bf16.msra.mxu0 %v4577
    %4926 = vmatprep.subr.bf16.mxu0 %v4570
    %4927 = vmatpush1.bf16.msra.mxu0 %v4569
    %4928 = vmatprep.subr.bf16.mxu0 %v4562
    %4929 = vmatpush1.bf16.msra.mxu0 %v4561
    %4930 = vmatprep.subr.bf16.mxu0 %v4554
    %4931 = vmatpush1.bf16.msra.mxu0 %v4553
    %4932 = vmatprep.subr.bf16.mxu0 %v4546
    %4933 = vmatpush1.bf16.msra.mxu0 %v4545
    %4934 = vmatprep.subr.bf16.mxu0 %v4666
    %4935 = vmatpush2.bf16.msra.mxu0 %v4665
    %4936 = vmatprep.subr.bf16.mxu0 %v4658
    %4937 = vmatpush2.bf16.msra.mxu0 %v4657
    %4938 = vmatprep.subr.bf16.mxu0 %v4650
    %4939 = vmatpush2.bf16.msra.mxu0 %v4649
    %4940 = vmatprep.subr.bf16.mxu0 %v4642
    %4941 = vmatpush2.bf16.msra.mxu0 %v4641
    %4942 = vmatprep.subr.bf16.mxu0 %v4634
    %4943 = vmatpush2.bf16.msra.mxu0 %v4633
    %4944 = vmatprep.subr.bf16.mxu0 %v4626
    %4945 = vmatpush2.bf16.msra.mxu0 %v4625
    %4946 = vmatprep.subr.bf16.mxu0 %v4618
    %4947 = vmatpush2.bf16.msra.mxu0 %v4617
    %4948 = vmatprep.subr.bf16.mxu0 %v4610
    %4949 = vmatpush2.bf16.msra.mxu0 %v4609
    %4950 = vmatprep.mubr.bf16.mxu0 %v4026
    %4951 = vmatmul.mubr.bf16.gmra.mxu0 %v4025
    %v4952 = vpop.f32.mrf.mxu0
    %v4953 = vadd.f32 0.0, %v4952
    %v4954 = vpop.f32.mrf.mxu0
    %v4955 = vadd.f32 0.0, %v4954
    %v4956 = vpop.f32.mrf.mxu0
    %v4957 = vpop.f32.mrf.mxu0
    %4958 = vdwg.mxu0
    %v4959 = vld [vmem:[%s3943] sm:$0xff]
    %v4960 = vld [vmem:[%s3943 + $0x8] sm:$0xff]
    %v4961 = vld [vmem:[%s3943 + $0x10] sm:$0xff]
    %v4962 = vld [vmem:[%s3943 + $0x18] sm:$0xff]
    %v4963 = vld [vmem:[%s3938 + $0x20] sm:$0xff]
    %v4964 = vld [vmem:[%s3938 + $0x28] sm:$0xff]
    %v4965 = vld [vmem:[%s3938 + $0x30] sm:$0xff]
    %v4966 = vld [vmem:[%s3938 + $0x38] sm:$0xff]
    %v4967 = vadd.f32 %v4830, %v4959
    %v4968 = vadd.f32 %v4832, %v4960
    %v4969 = vadd.f32 %v4871, %v4961
    %v4970 = vadd.f32 %v4873, %v4962
    %v4971 = vadd.f32 %v4912, %v4963
    %v4972 = vadd.f32 %v4914, %v4964
    %v4973 = vadd.f32 %v4953, %v4965
    %v4974 = vadd.f32 %v4955, %v4966
    %v4975 = vxor.u32 %v4967, 2147483648
    %v4976 = vmul.f32 %v4975, 1.442695
    %v4977 = vpow.pop %v4976
    %v4978 = vadd.f32 %v4977, 1.0
    %v4979 = vrcp.pop %v4978
    %v4980 = vmul.f32 1.0, %v4979
    %v4981 = vxor.u32 %v4968, 2147483648
    %v4982 = vmul.f32 %v4981, 1.442695
    %v4983 = vpow.pop %v4982
    %v4984 = vadd.f32 %v4983, 1.0
    %v4985 = vrcp.pop %v4984
    %v4986 = vmul.f32 1.0, %v4985
    %v4987 = vtanh.pop %v4969
    %v4988 = vxor.u32 %v4970, 2147483648
    %v4989 = vmul.f32 %v4988, 1.442695
    %v4990 = vpow.pop %v4989
    %v4991 = vadd.f32 %v4990, 1.0
    %v4992 = vrcp.pop %v4991
    %v4993 = vmul.f32 1.0, %v4992
    %v4994 = vmul.f32 %v4986, %v3977
    %v4995 = vmul.f32 %v4980, %v4987
    %v4996 = vadd.f32 %v4994, %v4995
    %v4997 = vtanh.pop %v4996
    %v4998 = vmul.f32 %v4993, %v4997
    %v4999 = vxor.u32 %v4971, 2147483648
    %v5000 = vmul.f32 %v4999, 1.442695
    %v5001 = vpow.pop %v5000
    %v5002 = vadd.f32 %v5001, 1.0
    %v5003 = vrcp.pop %v5002
    %v5004 = vmul.f32 1.0, %v5003
    %v5005 = vxor.u32 %v4972, 2147483648
    %v5006 = vmul.f32 %v5005, 1.442695
    %v5007 = vpow.pop %v5006
    %v5008 = vadd.f32 %v5007, 1.0
    %v5009 = vrcp.pop %v5008
    %v5010 = vmul.f32 1.0, %v5009
    %v5011 = vtanh.pop %v4973
    %v5012 = vxor.u32 %v4974, 2147483648
    %v5013 = vmul.f32 %v5012, 1.442695
    %v5014 = vpow.pop %v5013
    %v5015 = vadd.f32 %v5014, 1.0
    %v5016 = vrcp.pop %v5015
    %v5017 = vmul.f32 1.0, %v5016
    %v5018 = vmul.f32 %v5010, %v4012
    %v5019 = vmul.f32 %v5004, %v5011
    %v5020 = vadd.f32 %v5018, %v5019
    %v5021 = vtanh.pop %v5020
    %v5022 = vmul.f32 %v5017, %v5021
    %s5023 = scalar_lea.vmem %s1, 24
    %v5024 = vld [vmem:[%s5023] sm:$0xff]
    %5026 = vset.pattern.permute.xlu0 0
    %5027 = vperm.xlu0 %5026, %v5024
    %v5028 = vpop.permute.xlu0 %5027
    %v5030 = vmul.f32 %v5022, %v5028
    %v5031 = vmul.f32 %v5020, %v5028
    %v5032 = vmax.f32 %v4998, 0.0
    %v5033 = vmul.f32 %v5032, %v939
    %5034 = vadd.xlane.f32.xlu0 %v5033
    %v5035 = vpop.xlane.xlu0 %5034
    %s5036 = scalar_lea.vmem [#allocation4], 32
    %5037 = vst.msk [vmem:[%s5036] sm:$0xff] %vm944, %v5035
    %v5038 = vmax.f32 %v5030, 0.0
    %v5039 = vmul.f32 %v5038, %v951
    %5040 = vadd.xlane.f32.xlu0 %v5039
    %v5041 = vpop.xlane.xlu0 %5040
    %s5042 = scalar_lea.vmem [#allocation5], 24
    %5043 = vst.msk [vmem:[%s5042] sm:$0xff] %vm944, %v5041
    %v5044 = vpack.c.bf16 %v4998, %v4998
    %v5045 = vpack.c.bf16 %v5030, %v5030
    %v5046 = vld [vmem:[#allocation3] sm:$0xff]
    %v5047 = vld [vmem:[#allocation3 + $0x8] sm:$0xff]
    %v5048 = vld [vmem:[#allocation3 + $0x10] sm:$0xff]
    %v5049 = vld [vmem:[#allocation3 + $0x18] sm:$0xff]
    %v5050 = vld [vmem:[#allocation3 + $0x20] sm:$0xff]
    %v5051 = vld [vmem:[#allocation3 + $0x28] sm:$0xff]
    %v5052 = vld [vmem:[#allocation3 + $0x30] sm:$0xff]
    %v5053 = vld [vmem:[#allocation3 + $0x38] sm:$0xff]
    %v5054 = vld [vmem:[#allocation3 + $0x40] sm:$0xff]
    %v5055 = vld [vmem:[#allocation3 + $0x48] sm:$0xff]
    %v5056 = vld [vmem:[#allocation3 + $0x50] sm:$0xff]
    %v5057 = vld [vmem:[#allocation3 + $0x58] sm:$0xff]
    %v5058 = vld [vmem:[#allocation3 + $0x60] sm:$0xff]
    %v5059 = vld [vmem:[#allocation3 + $0x68] sm:$0xff]
    %v5060 = vld [vmem:[#allocation3 + $0x70] sm:$0xff]
    %v5061 = vld [vmem:[#allocation3 + $0x78] sm:$0xff]
    %v5062 = vld [vmem:[#allocation3 + $0x80] sm:$0xff]
    %v5063 = vld [vmem:[#allocation3 + $0x88] sm:$0xff]
    %v5064 = vld [vmem:[#allocation3 + $0x90] sm:$0xff]
    %v5065 = vld [vmem:[#allocation3 + $0x98] sm:$0xff]
    %v5066 = vld [vmem:[#allocation3 + $0xa0] sm:$0xff]
    %v5067 = vld [vmem:[#allocation3 + $0xa8] sm:$0xff]
    %v5068 = vld [vmem:[#allocation3 + $0xb0] sm:$0xff]
    %v5069 = vld [vmem:[#allocation3 + $0xb8] sm:$0xff]
    %v5070 = vld [vmem:[#allocation3 + $0xc0] sm:$0xff]
    %v5071 = vld [vmem:[#allocation3 + $0xc8] sm:$0xff]
    %v5072 = vld [vmem:[#allocation3 + $0xd0] sm:$0xff]
    %v5073 = vld [vmem:[#allocation3 + $0xd8] sm:$0xff]
    %v5074 = vld [vmem:[#allocation3 + $0xe0] sm:$0xff]
    %v5075 = vld [vmem:[#allocation3 + $0xe8] sm:$0xff]
    %v5076 = vld [vmem:[#allocation3 + $0xf0] sm:$0xff]
    %v5077 = vld [vmem:[#allocation3 + $0xf8] sm:$0xff]
    %v5078 = vld [vmem:[#allocation3 + $0x100] sm:$0xff]
    %v5079 = vld [vmem:[#allocation3 + $0x108] sm:$0xff]
    %v5080 = vld [vmem:[#allocation3 + $0x110] sm:$0xff]
    %v5081 = vld [vmem:[#allocation3 + $0x118] sm:$0xff]
    %v5082 = vld [vmem:[#allocation3 + $0x120] sm:$0xff]
    %v5083 = vld [vmem:[#allocation3 + $0x128] sm:$0xff]
    %v5084 = vld [vmem:[#allocation3 + $0x130] sm:$0xff]
    %v5085 = vld [vmem:[#allocation3 + $0x138] sm:$0xff]
    %v5086 = vld [vmem:[#allocation3 + $0x140] sm:$0xff]
    %v5087 = vld [vmem:[#allocation3 + $0x148] sm:$0xff]
    %v5088 = vld [vmem:[#allocation3 + $0x150] sm:$0xff]
    %v5089 = vld [vmem:[#allocation3 + $0x158] sm:$0xff]
    %v5090 = vld [vmem:[#allocation3 + $0x160] sm:$0xff]
    %v5091 = vld [vmem:[#allocation3 + $0x168] sm:$0xff]
    %v5092 = vld [vmem:[#allocation3 + $0x170] sm:$0xff]
    %v5093 = vld [vmem:[#allocation3 + $0x178] sm:$0xff]
    %v5094 = vld [vmem:[#allocation3 + $0x180] sm:$0xff]
    %v5095 = vld [vmem:[#allocation3 + $0x188] sm:$0xff]
    %v5096 = vld [vmem:[#allocation3 + $0x190] sm:$0xff]
    %v5097 = vld [vmem:[#allocation3 + $0x198] sm:$0xff]
    %v5098 = vld [vmem:[#allocation3 + $0x1a0] sm:$0xff]
    %v5099 = vld [vmem:[#allocation3 + $0x1a8] sm:$0xff]
    %v5100 = vld [vmem:[#allocation3 + $0x1b0] sm:$0xff]
    %v5101 = vld [vmem:[#allocation3 + $0x1b8] sm:$0xff]
    %v5102 = vld [vmem:[#allocation3 + $0x1c0] sm:$0xff]
    %v5103 = vld [vmem:[#allocation3 + $0x1c8] sm:$0xff]
    %v5104 = vld [vmem:[#allocation3 + $0x1d0] sm:$0xff]
    %v5105 = vld [vmem:[#allocation3 + $0x1d8] sm:$0xff]
    %v5106 = vld [vmem:[#allocation3 + $0x1e0] sm:$0xff]
    %v5107 = vld [vmem:[#allocation3 + $0x1e8] sm:$0xff]
    %v5108 = vld [vmem:[#allocation3 + $0x1f0] sm:$0xff]
    %v5109 = vld [vmem:[#allocation3 + $0x1f8] sm:$0xff]
    %v5110 = vld [vmem:[#allocation3 + $0x200] sm:$0xff]
    %v5111 = vld [vmem:[#allocation3 + $0x208] sm:$0xff]
    %v5112 = vld [vmem:[#allocation3 + $0x210] sm:$0xff]
    %v5113 = vld [vmem:[#allocation3 + $0x218] sm:$0xff]
    %v5114 = vld [vmem:[#allocation3 + $0x220] sm:$0xff]
    %v5115 = vld [vmem:[#allocation3 + $0x228] sm:$0xff]
    %v5116 = vld [vmem:[#allocation3 + $0x230] sm:$0xff]
    %v5117 = vld [vmem:[#allocation3 + $0x238] sm:$0xff]
    %v5118 = vld [vmem:[#allocation3 + $0x240] sm:$0xff]
    %v5119 = vld [vmem:[#allocation3 + $0x248] sm:$0xff]
    %v5120 = vld [vmem:[#allocation3 + $0x250] sm:$0xff]
    %v5121 = vld [vmem:[#allocation3 + $0x258] sm:$0xff]
    %v5122 = vld [vmem:[#allocation3 + $0x260] sm:$0xff]
    %v5123 = vld [vmem:[#allocation3 + $0x268] sm:$0xff]
    %v5124 = vld [vmem:[#allocation3 + $0x270] sm:$0xff]
    %v5125 = vld [vmem:[#allocation3 + $0x278] sm:$0xff]
    %v5126 = vld [vmem:[#allocation3 + $0x280] sm:$0xff]
    %v5127 = vld [vmem:[#allocation3 + $0x288] sm:$0xff]
    %v5128 = vld [vmem:[#allocation3 + $0x290] sm:$0xff]
    %v5129 = vld [vmem:[#allocation3 + $0x298] sm:$0xff]
    %v5130 = vld [vmem:[#allocation3 + $0x2a0] sm:$0xff]
    %v5131 = vld [vmem:[#allocation3 + $0x2a8] sm:$0xff]
    %v5132 = vld [vmem:[#allocation3 + $0x2b0] sm:$0xff]
    %v5133 = vld [vmem:[#allocation3 + $0x2b8] sm:$0xff]
    %v5134 = vld [vmem:[#allocation3 + $0x2c0] sm:$0xff]
    %v5135 = vld [vmem:[#allocation3 + $0x2c8] sm:$0xff]
    %v5136 = vld [vmem:[#allocation3 + $0x2d0] sm:$0xff]
    %v5137 = vld [vmem:[#allocation3 + $0x2d8] sm:$0xff]
    %v5138 = vld [vmem:[#allocation3 + $0x2e0] sm:$0xff]
    %v5139 = vld [vmem:[#allocation3 + $0x2e8] sm:$0xff]
    %v5140 = vld [vmem:[#allocation3 + $0x2f0] sm:$0xff]
    %v5141 = vld [vmem:[#allocation3 + $0x2f8] sm:$0xff]
    %v5142 = vld [vmem:[#allocation3 + $0x300] sm:$0xff]
    %v5143 = vld [vmem:[#allocation3 + $0x308] sm:$0xff]
    %v5144 = vld [vmem:[#allocation3 + $0x310] sm:$0xff]
    %v5145 = vld [vmem:[#allocation3 + $0x318] sm:$0xff]
    %v5146 = vld [vmem:[#allocation3 + $0x320] sm:$0xff]
    %v5147 = vld [vmem:[#allocation3 + $0x328] sm:$0xff]
    %v5148 = vld [vmem:[#allocation3 + $0x330] sm:$0xff]
    %v5149 = vld [vmem:[#allocation3 + $0x338] sm:$0xff]
    %v5150 = vld [vmem:[#allocation3 + $0x340] sm:$0xff]
    %v5151 = vld [vmem:[#allocation3 + $0x348] sm:$0xff]
    %v5152 = vld [vmem:[#allocation3 + $0x350] sm:$0xff]
    %v5153 = vld [vmem:[#allocation3 + $0x358] sm:$0xff]
    %v5154 = vld [vmem:[#allocation3 + $0x360] sm:$0xff]
    %v5155 = vld [vmem:[#allocation3 + $0x368] sm:$0xff]
    %v5156 = vld [vmem:[#allocation3 + $0x370] sm:$0xff]
    %v5157 = vld [vmem:[#allocation3 + $0x378] sm:$0xff]
    %v5158 = vld [vmem:[#allocation3 + $0x380] sm:$0xff]
    %v5159 = vld [vmem:[#allocation3 + $0x388] sm:$0xff]
    %v5160 = vld [vmem:[#allocation3 + $0x390] sm:$0xff]
    %v5161 = vld [vmem:[#allocation3 + $0x398] sm:$0xff]
    %v5162 = vld [vmem:[#allocation3 + $0x3a0] sm:$0xff]
    %v5163 = vld [vmem:[#allocation3 + $0x3a8] sm:$0xff]
    %v5164 = vld [vmem:[#allocation3 + $0x3b0] sm:$0xff]
    %v5165 = vld [vmem:[#allocation3 + $0x3b8] sm:$0xff]
    %v5166 = vld [vmem:[#allocation3 + $0x3c0] sm:$0xff]
    %v5167 = vld [vmem:[#allocation3 + $0x3c8] sm:$0xff]
    %v5168 = vld [vmem:[#allocation3 + $0x3d0] sm:$0xff]
    %v5169 = vld [vmem:[#allocation3 + $0x3d8] sm:$0xff]
    %v5170 = vld [vmem:[#allocation3 + $0x3e0] sm:$0xff]
    %v5171 = vld [vmem:[#allocation3 + $0x3e8] sm:$0xff]
    %v5172 = vld [vmem:[#allocation3 + $0x3f0] sm:$0xff]
    %v5173 = vld [vmem:[#allocation3 + $0x3f8] sm:$0xff]
    %v5302 = vunpack.c.l.b16 %v5046
    %v5303 = vunpack.c.h.b16 %v5046
    %v5304 = vunpack.c.l.b16 %v5047
    %v5305 = vunpack.c.h.b16 %v5047
    %v5306 = vunpack.c.l.b16 %v5048
    %v5307 = vunpack.c.h.b16 %v5048
    %v5308 = vunpack.c.l.b16 %v5049
    %v5309 = vunpack.c.h.b16 %v5049
    %v5310 = vunpack.c.l.b16 %v5050
    %v5311 = vunpack.c.h.b16 %v5050
    %v5312 = vunpack.c.l.b16 %v5051
    %v5313 = vunpack.c.h.b16 %v5051
    %v5314 = vunpack.c.l.b16 %v5052
    %v5315 = vunpack.c.h.b16 %v5052
    %v5316 = vunpack.c.l.b16 %v5053
    %v5317 = vunpack.c.h.b16 %v5053
    %v5318 = vunpack.c.l.b16 %v5054
    %v5319 = vunpack.c.h.b16 %v5054
    %v5320 = vunpack.c.l.b16 %v5055
    %v5321 = vunpack.c.h.b16 %v5055
    %v5322 = vunpack.c.l.b16 %v5056
    %v5323 = vunpack.c.h.b16 %v5056
    %v5324 = vunpack.c.l.b16 %v5057
    %v5325 = vunpack.c.h.b16 %v5057
    %v5326 = vunpack.c.l.b16 %v5058
    %v5327 = vunpack.c.h.b16 %v5058
    %v5328 = vunpack.c.l.b16 %v5059
    %v5329 = vunpack.c.h.b16 %v5059
    %v5330 = vunpack.c.l.b16 %v5060
    %v5331 = vunpack.c.h.b16 %v5060
    %v5332 = vunpack.c.l.b16 %v5061
    %v5333 = vunpack.c.h.b16 %v5061
    %v5334 = vunpack.c.l.b16 %v5062
    %v5335 = vunpack.c.h.b16 %v5062
    %v5336 = vunpack.c.l.b16 %v5063
    %v5337 = vunpack.c.h.b16 %v5063
    %v5338 = vunpack.c.l.b16 %v5064
    %v5339 = vunpack.c.h.b16 %v5064
    %v5340 = vunpack.c.l.b16 %v5065
    %v5341 = vunpack.c.h.b16 %v5065
    %v5342 = vunpack.c.l.b16 %v5066
    %v5343 = vunpack.c.h.b16 %v5066
    %v5344 = vunpack.c.l.b16 %v5067
    %v5345 = vunpack.c.h.b16 %v5067
    %v5346 = vunpack.c.l.b16 %v5068
    %v5347 = vunpack.c.h.b16 %v5068
    %v5348 = vunpack.c.l.b16 %v5069
    %v5349 = vunpack.c.h.b16 %v5069
    %v5350 = vunpack.c.l.b16 %v5070
    %v5351 = vunpack.c.h.b16 %v5070
    %v5352 = vunpack.c.l.b16 %v5071
    %v5353 = vunpack.c.h.b16 %v5071
    %v5354 = vunpack.c.l.b16 %v5072
    %v5355 = vunpack.c.h.b16 %v5072
    %v5356 = vunpack.c.l.b16 %v5073
    %v5357 = vunpack.c.h.b16 %v5073
    %v5358 = vunpack.c.l.b16 %v5074
    %v5359 = vunpack.c.h.b16 %v5074
    %v5360 = vunpack.c.l.b16 %v5075
    %v5361 = vunpack.c.h.b16 %v5075
    %v5362 = vunpack.c.l.b16 %v5076
    %v5363 = vunpack.c.h.b16 %v5076
    %v5364 = vunpack.c.l.b16 %v5077
    %v5365 = vunpack.c.h.b16 %v5077
    %v5366 = vunpack.c.l.b16 %v5078
    %v5367 = vunpack.c.h.b16 %v5078
    %v5368 = vunpack.c.l.b16 %v5079
    %v5369 = vunpack.c.h.b16 %v5079
    %v5370 = vunpack.c.l.b16 %v5080
    %v5371 = vunpack.c.h.b16 %v5080
    %v5372 = vunpack.c.l.b16 %v5081
    %v5373 = vunpack.c.h.b16 %v5081
    %v5374 = vunpack.c.l.b16 %v5082
    %v5375 = vunpack.c.h.b16 %v5082
    %v5376 = vunpack.c.l.b16 %v5083
    %v5377 = vunpack.c.h.b16 %v5083
    %v5378 = vunpack.c.l.b16 %v5084
    %v5379 = vunpack.c.h.b16 %v5084
    %v5380 = vunpack.c.l.b16 %v5085
    %v5381 = vunpack.c.h.b16 %v5085
    %v5382 = vunpack.c.l.b16 %v5086
    %v5383 = vunpack.c.h.b16 %v5086
    %v5384 = vunpack.c.l.b16 %v5087
    %v5385 = vunpack.c.h.b16 %v5087
    %v5386 = vunpack.c.l.b16 %v5088
    %v5387 = vunpack.c.h.b16 %v5088
    %v5388 = vunpack.c.l.b16 %v5089
    %v5389 = vunpack.c.h.b16 %v5089
    %v5390 = vunpack.c.l.b16 %v5090
    %v5391 = vunpack.c.h.b16 %v5090
    %v5392 = vunpack.c.l.b16 %v5091
    %v5393 = vunpack.c.h.b16 %v5091
    %v5394 = vunpack.c.l.b16 %v5092
    %v5395 = vunpack.c.h.b16 %v5092
    %v5396 = vunpack.c.l.b16 %v5093
    %v5397 = vunpack.c.h.b16 %v5093
    %v5398 = vunpack.c.l.b16 %v5094
    %v5399 = vunpack.c.h.b16 %v5094
    %v5400 = vunpack.c.l.b16 %v5095
    %v5401 = vunpack.c.h.b16 %v5095
    %v5402 = vunpack.c.l.b16 %v5096
    %v5403 = vunpack.c.h.b16 %v5096
    %v5404 = vunpack.c.l.b16 %v5097
    %v5405 = vunpack.c.h.b16 %v5097
    %v5406 = vunpack.c.l.b16 %v5098
    %v5407 = vunpack.c.h.b16 %v5098
    %v5408 = vunpack.c.l.b16 %v5099
    %v5409 = vunpack.c.h.b16 %v5099
    %v5410 = vunpack.c.l.b16 %v5100
    %v5411 = vunpack.c.h.b16 %v5100
    %v5412 = vunpack.c.l.b16 %v5101
    %v5413 = vunpack.c.h.b16 %v5101
    %v5414 = vunpack.c.l.b16 %v5102
    %v5415 = vunpack.c.h.b16 %v5102
    %v5416 = vunpack.c.l.b16 %v5103
    %v5417 = vunpack.c.h.b16 %v5103
    %v5418 = vunpack.c.l.b16 %v5104
    %v5419 = vunpack.c.h.b16 %v5104
    %v5420 = vunpack.c.l.b16 %v5105
    %v5421 = vunpack.c.h.b16 %v5105
    %v5422 = vunpack.c.l.b16 %v5106
    %v5423 = vunpack.c.h.b16 %v5106
    %v5424 = vunpack.c.l.b16 %v5107
    %v5425 = vunpack.c.h.b16 %v5107
    %v5426 = vunpack.c.l.b16 %v5108
    %v5427 = vunpack.c.h.b16 %v5108
    %v5428 = vunpack.c.l.b16 %v5109
    %v5429 = vunpack.c.h.b16 %v5109
    %v5430 = vunpack.c.l.b16 %v5110
    %v5431 = vunpack.c.h.b16 %v5110
    %v5432 = vunpack.c.l.b16 %v5111
    %v5433 = vunpack.c.h.b16 %v5111
    %v5434 = vunpack.c.l.b16 %v5112
    %v5435 = vunpack.c.h.b16 %v5112
    %v5436 = vunpack.c.l.b16 %v5113
    %v5437 = vunpack.c.h.b16 %v5113
    %v5438 = vunpack.c.l.b16 %v5114
    %v5439 = vunpack.c.h.b16 %v5114
    %v5440 = vunpack.c.l.b16 %v5115
    %v5441 = vunpack.c.h.b16 %v5115
    %v5442 = vunpack.c.l.b16 %v5116
    %v5443 = vunpack.c.h.b16 %v5116
    %v5444 = vunpack.c.l.b16 %v5117
    %v5445 = vunpack.c.h.b16 %v5117
    %v5446 = vunpack.c.l.b16 %v5118
    %v5447 = vunpack.c.h.b16 %v5118
    %v5448 = vunpack.c.l.b16 %v5119
    %v5449 = vunpack.c.h.b16 %v5119
    %v5450 = vunpack.c.l.b16 %v5120
    %v5451 = vunpack.c.h.b16 %v5120
    %v5452 = vunpack.c.l.b16 %v5121
    %v5453 = vunpack.c.h.b16 %v5121
    %v5454 = vunpack.c.l.b16 %v5122
    %v5455 = vunpack.c.h.b16 %v5122
    %v5456 = vunpack.c.l.b16 %v5123
    %v5457 = vunpack.c.h.b16 %v5123
    %v5458 = vunpack.c.l.b16 %v5124
    %v5459 = vunpack.c.h.b16 %v5124
    %v5460 = vunpack.c.l.b16 %v5125
    %v5461 = vunpack.c.h.b16 %v5125
    %v5462 = vunpack.c.l.b16 %v5126
    %v5463 = vunpack.c.h.b16 %v5126
    %v5464 = vunpack.c.l.b16 %v5127
    %v5465 = vunpack.c.h.b16 %v5127
    %v5466 = vunpack.c.l.b16 %v5128
    %v5467 = vunpack.c.h.b16 %v5128
    %v5468 = vunpack.c.l.b16 %v5129
    %v5469 = vunpack.c.h.b16 %v5129
    %v5470 = vunpack.c.l.b16 %v5130
    %v5471 = vunpack.c.h.b16 %v5130
    %v5472 = vunpack.c.l.b16 %v5131
    %v5473 = vunpack.c.h.b16 %v5131
    %v5474 = vunpack.c.l.b16 %v5132
    %v5475 = vunpack.c.h.b16 %v5132
    %v5476 = vunpack.c.l.b16 %v5133
    %v5477 = vunpack.c.h.b16 %v5133
    %v5478 = vunpack.c.l.b16 %v5134
    %v5479 = vunpack.c.h.b16 %v5134
    %v5480 = vunpack.c.l.b16 %v5135
    %v5481 = vunpack.c.h.b16 %v5135
    %v5482 = vunpack.c.l.b16 %v5136
    %v5483 = vunpack.c.h.b16 %v5136
    %v5484 = vunpack.c.l.b16 %v5137
    %v5485 = vunpack.c.h.b16 %v5137
    %v5486 = vunpack.c.l.b16 %v5138
    %v5487 = vunpack.c.h.b16 %v5138
    %v5488 = vunpack.c.l.b16 %v5139
    %v5489 = vunpack.c.h.b16 %v5139
    %v5490 = vunpack.c.l.b16 %v5140
    %v5491 = vunpack.c.h.b16 %v5140
    %v5492 = vunpack.c.l.b16 %v5141
    %v5493 = vunpack.c.h.b16 %v5141
    %v5494 = vunpack.c.l.b16 %v5142
    %v5495 = vunpack.c.h.b16 %v5142
    %v5496 = vunpack.c.l.b16 %v5143
    %v5497 = vunpack.c.h.b16 %v5143
    %v5498 = vunpack.c.l.b16 %v5144
    %v5499 = vunpack.c.h.b16 %v5144
    %v5500 = vunpack.c.l.b16 %v5145
    %v5501 = vunpack.c.h.b16 %v5145
    %v5502 = vunpack.c.l.b16 %v5146
    %v5503 = vunpack.c.h.b16 %v5146
    %v5504 = vunpack.c.l.b16 %v5147
    %v5505 = vunpack.c.h.b16 %v5147
    %v5506 = vunpack.c.l.b16 %v5148
    %v5507 = vunpack.c.h.b16 %v5148
    %v5508 = vunpack.c.l.b16 %v5149
    %v5509 = vunpack.c.h.b16 %v5149
    %v5510 = vunpack.c.l.b16 %v5150
    %v5511 = vunpack.c.h.b16 %v5150
    %v5512 = vunpack.c.l.b16 %v5151
    %v5513 = vunpack.c.h.b16 %v5151
    %v5514 = vunpack.c.l.b16 %v5152
    %v5515 = vunpack.c.h.b16 %v5152
    %v5516 = vunpack.c.l.b16 %v5153
    %v5517 = vunpack.c.h.b16 %v5153
    %v5518 = vunpack.c.l.b16 %v5154
    %v5519 = vunpack.c.h.b16 %v5154
    %v5520 = vunpack.c.l.b16 %v5155
    %v5521 = vunpack.c.h.b16 %v5155
    %v5522 = vunpack.c.l.b16 %v5156
    %v5523 = vunpack.c.h.b16 %v5156
    %v5524 = vunpack.c.l.b16 %v5157
    %v5525 = vunpack.c.h.b16 %v5157
    %v5526 = vunpack.c.l.b16 %v5158
    %v5527 = vunpack.c.h.b16 %v5158
    %v5528 = vunpack.c.l.b16 %v5159
    %v5529 = vunpack.c.h.b16 %v5159
    %v5530 = vunpack.c.l.b16 %v5160
    %v5531 = vunpack.c.h.b16 %v5160
    %v5532 = vunpack.c.l.b16 %v5161
    %v5533 = vunpack.c.h.b16 %v5161
    %v5534 = vunpack.c.l.b16 %v5162
    %v5535 = vunpack.c.h.b16 %v5162
    %v5536 = vunpack.c.l.b16 %v5163
    %v5537 = vunpack.c.h.b16 %v5163
    %v5538 = vunpack.c.l.b16 %v5164
    %v5539 = vunpack.c.h.b16 %v5164
    %v5540 = vunpack.c.l.b16 %v5165
    %v5541 = vunpack.c.h.b16 %v5165
    %v5542 = vunpack.c.l.b16 %v5166
    %v5543 = vunpack.c.h.b16 %v5166
    %v5544 = vunpack.c.l.b16 %v5167
    %v5545 = vunpack.c.h.b16 %v5167
    %v5546 = vunpack.c.l.b16 %v5168
    %v5547 = vunpack.c.h.b16 %v5168
    %v5548 = vunpack.c.l.b16 %v5169
    %v5549 = vunpack.c.h.b16 %v5169
    %v5550 = vunpack.c.l.b16 %v5170
    %v5551 = vunpack.c.h.b16 %v5170
    %v5552 = vunpack.c.l.b16 %v5171
    %v5553 = vunpack.c.h.b16 %v5171
    %v5554 = vunpack.c.l.b16 %v5172
    %v5555 = vunpack.c.h.b16 %v5172
    %v5556 = vunpack.c.l.b16 %v5173
    %v5557 = vunpack.c.h.b16 %v5173
    %v5558 = vpack.c.b16 %v5310, %v5302
    %v5559 = vpack.c.b16 %v5311, %v5303
    %v5560 = vpack.c.b16 %v5312, %v5304
    %v5561 = vpack.c.b16 %v5313, %v5305
    %v5562 = vpack.c.b16 %v5314, %v5306
    %v5563 = vpack.c.b16 %v5315, %v5307
    %v5564 = vpack.c.b16 %v5316, %v5308
    %v5565 = vpack.c.b16 %v5317, %v5309
    %v5566 = vpack.c.b16 %v5326, %v5318
    %v5567 = vpack.c.b16 %v5327, %v5319
    %v5568 = vpack.c.b16 %v5328, %v5320
    %v5569 = vpack.c.b16 %v5329, %v5321
    %v5570 = vpack.c.b16 %v5330, %v5322
    %v5571 = vpack.c.b16 %v5331, %v5323
    %v5572 = vpack.c.b16 %v5332, %v5324
    %v5573 = vpack.c.b16 %v5333, %v5325
    %v5574 = vpack.c.b16 %v5342, %v5334
    %v5575 = vpack.c.b16 %v5343, %v5335
    %v5576 = vpack.c.b16 %v5344, %v5336
    %v5577 = vpack.c.b16 %v5345, %v5337
    %v5578 = vpack.c.b16 %v5346, %v5338
    %v5579 = vpack.c.b16 %v5347, %v5339
    %v5580 = vpack.c.b16 %v5348, %v5340
    %v5581 = vpack.c.b16 %v5349, %v5341
    %v5582 = vpack.c.b16 %v5358, %v5350
    %v5583 = vpack.c.b16 %v5359, %v5351
    %v5584 = vpack.c.b16 %v5360, %v5352
    %v5585 = vpack.c.b16 %v5361, %v5353
    %v5586 = vpack.c.b16 %v5362, %v5354
    %v5587 = vpack.c.b16 %v5363, %v5355
    %v5588 = vpack.c.b16 %v5364, %v5356
    %v5589 = vpack.c.b16 %v5365, %v5357
    %v5590 = vpack.c.b16 %v5374, %v5366
    %v5591 = vpack.c.b16 %v5375, %v5367
    %v5592 = vpack.c.b16 %v5376, %v5368
    %v5593 = vpack.c.b16 %v5377, %v5369
    %v5594 = vpack.c.b16 %v5378, %v5370
    %v5595 = vpack.c.b16 %v5379, %v5371
    %v5596 = vpack.c.b16 %v5380, %v5372
    %v5597 = vpack.c.b16 %v5381, %v5373
    %v5598 = vpack.c.b16 %v5390, %v5382
    %v5599 = vpack.c.b16 %v5391, %v5383
    %v5600 = vpack.c.b16 %v5392, %v5384
    %v5601 = vpack.c.b16 %v5393, %v5385
    %v5602 = vpack.c.b16 %v5394, %v5386
    %v5603 = vpack.c.b16 %v5395, %v5387
    %v5604 = vpack.c.b16 %v5396, %v5388
    %v5605 = vpack.c.b16 %v5397, %v5389
    %v5606 = vpack.c.b16 %v5406, %v5398
    %v5607 = vpack.c.b16 %v5407, %v5399
    %v5608 = vpack.c.b16 %v5408, %v5400
    %v5609 = vpack.c.b16 %v5409, %v5401
    %v5610 = vpack.c.b16 %v5410, %v5402
    %v5611 = vpack.c.b16 %v5411, %v5403
    %v5612 = vpack.c.b16 %v5412, %v5404
    %v5613 = vpack.c.b16 %v5413, %v5405
    %v5614 = vpack.c.b16 %v5422, %v5414
    %v5615 = vpack.c.b16 %v5423, %v5415
    %v5616 = vpack.c.b16 %v5424, %v5416
    %v5617 = vpack.c.b16 %v5425, %v5417
    %v5618 = vpack.c.b16 %v5426, %v5418
    %v5619 = vpack.c.b16 %v5427, %v5419
    %v5620 = vpack.c.b16 %v5428, %v5420
    %v5621 = vpack.c.b16 %v5429, %v5421
    %v5622 = vpack.c.b16 %v5438, %v5430
    %v5623 = vpack.c.b16 %v5439, %v5431
    %v5624 = vpack.c.b16 %v5440, %v5432
    %v5625 = vpack.c.b16 %v5441, %v5433
    %v5626 = vpack.c.b16 %v5442, %v5434
    %v5627 = vpack.c.b16 %v5443, %v5435
    %v5628 = vpack.c.b16 %v5444, %v5436
    %v5629 = vpack.c.b16 %v5445, %v5437
    %v5630 = vpack.c.b16 %v5454, %v5446
    %v5631 = vpack.c.b16 %v5455, %v5447
    %v5632 = vpack.c.b16 %v5456, %v5448
    %v5633 = vpack.c.b16 %v5457, %v5449
    %v5634 = vpack.c.b16 %v5458, %v5450
    %v5635 = vpack.c.b16 %v5459, %v5451
    %v5636 = vpack.c.b16 %v5460, %v5452
    %v5637 = vpack.c.b16 %v5461, %v5453
    %v5638 = vpack.c.b16 %v5470, %v5462
    %v5639 = vpack.c.b16 %v5471, %v5463
    %v5640 = vpack.c.b16 %v5472, %v5464
    %v5641 = vpack.c.b16 %v5473, %v5465
    %v5642 = vpack.c.b16 %v5474, %v5466
    %v5643 = vpack.c.b16 %v5475, %v5467
    %v5644 = vpack.c.b16 %v5476, %v5468
    %v5645 = vpack.c.b16 %v5477, %v5469
    %v5646 = vpack.c.b16 %v5486, %v5478
    %v5647 = vpack.c.b16 %v5487, %v5479
    %v5648 = vpack.c.b16 %v5488, %v5480
    %v5649 = vpack.c.b16 %v5489, %v5481
    %v5650 = vpack.c.b16 %v5490, %v5482
    %v5651 = vpack.c.b16 %v5491, %v5483
    %v5652 = vpack.c.b16 %v5492, %v5484
    %v5653 = vpack.c.b16 %v5493, %v5485
    %v5654 = vpack.c.b16 %v5502, %v5494
    %v5655 = vpack.c.b16 %v5503, %v5495
    %v5656 = vpack.c.b16 %v5504, %v5496
    %v5657 = vpack.c.b16 %v5505, %v5497
    %v5658 = vpack.c.b16 %v5506, %v5498
    %v5659 = vpack.c.b16 %v5507, %v5499
    %v5660 = vpack.c.b16 %v5508, %v5500
    %v5661 = vpack.c.b16 %v5509, %v5501
    %v5662 = vpack.c.b16 %v5518, %v5510
    %v5663 = vpack.c.b16 %v5519, %v5511
    %v5664 = vpack.c.b16 %v5520, %v5512
    %v5665 = vpack.c.b16 %v5521, %v5513
    %v5666 = vpack.c.b16 %v5522, %v5514
    %v5667 = vpack.c.b16 %v5523, %v5515
    %v5668 = vpack.c.b16 %v5524, %v5516
    %v5669 = vpack.c.b16 %v5525, %v5517
    %v5670 = vpack.c.b16 %v5534, %v5526
    %v5671 = vpack.c.b16 %v5535, %v5527
    %v5672 = vpack.c.b16 %v5536, %v5528
    %v5673 = vpack.c.b16 %v5537, %v5529
    %v5674 = vpack.c.b16 %v5538, %v5530
    %v5675 = vpack.c.b16 %v5539, %v5531
    %v5676 = vpack.c.b16 %v5540, %v5532
    %v5677 = vpack.c.b16 %v5541, %v5533
    %v5678 = vpack.c.b16 %v5550, %v5542
    %v5679 = vpack.c.b16 %v5551, %v5543
    %v5680 = vpack.c.b16 %v5552, %v5544
    %v5681 = vpack.c.b16 %v5553, %v5545
    %v5682 = vpack.c.b16 %v5554, %v5546
    %v5683 = vpack.c.b16 %v5555, %v5547
    %v5684 = vpack.c.b16 %v5556, %v5548
    %v5685 = vpack.c.b16 %v5557, %v5549
    %5814 = vmatprep.subr.bf16.mxu0 %v5615
    %5815 = vmatpush1.bf16.msra.mxu0 %v5614
    %5816 = vmatprep.subr.bf16.mxu0 %v5607
    %5817 = vmatpush1.bf16.msra.mxu0 %v5606
    %5818 = vmatprep.subr.bf16.mxu0 %v5599
    %5819 = vmatpush1.bf16.msra.mxu0 %v5598
    %5820 = vmatprep.subr.bf16.mxu0 %v5591
    %5821 = vmatpush1.bf16.msra.mxu0 %v5590
    %5822 = vmatprep.subr.bf16.mxu0 %v5583
    %5823 = vmatpush1.bf16.msra.mxu0 %v5582
    %5824 = vmatprep.subr.bf16.mxu0 %v5575
    %5825 = vmatpush1.bf16.msra.mxu0 %v5574
    %5826 = vmatprep.subr.bf16.mxu0 %v5567
    %5827 = vmatpush1.bf16.msra.mxu0 %v5566
    %5828 = vmatprep.subr.bf16.mxu0 %v5559
    %5829 = vmatpush1.bf16.msra.mxu0 %v5558
    %5830 = vmatprep.subr.bf16.mxu0 %v5679
    %5831 = vmatpush2.bf16.msra.mxu0 %v5678
    %5832 = vmatprep.subr.bf16.mxu0 %v5671
    %5833 = vmatpush2.bf16.msra.mxu0 %v5670
    %5834 = vmatprep.subr.bf16.mxu0 %v5663
    %5835 = vmatpush2.bf16.msra.mxu0 %v5662
    %5836 = vmatprep.subr.bf16.mxu0 %v5655
    %5837 = vmatpush2.bf16.msra.mxu0 %v5654
    %5838 = vmatprep.subr.bf16.mxu0 %v5647
    %5839 = vmatpush2.bf16.msra.mxu0 %v5646
    %5840 = vmatprep.subr.bf16.mxu0 %v5639
    %5841 = vmatpush2.bf16.msra.mxu0 %v5638
    %5842 = vmatprep.subr.bf16.mxu0 %v5631
    %5843 = vmatpush2.bf16.msra.mxu0 %v5630
    %5844 = vmatprep.subr.bf16.mxu0 %v5623
    %5845 = vmatpush2.bf16.msra.mxu0 %v5622
    %5846 = vmatprep.mubr.bf16.mxu0 %v5045
    %5847 = vmatmul.mubr.bf16.gmra.mxu0 %v5044
    %v5848 = vpop.f32.mrf.mxu0
    %v5849 = vadd.f32 0.0, %v5848
    %v5850 = vpop.f32.mrf.mxu0
    %v5851 = vadd.f32 0.0, %v5850
    %v5852 = vpop.f32.mrf.mxu0
    %v5853 = vpop.f32.mrf.mxu0
    %5854 = vdwg.mxu0
    %5855 = vmatprep.subr.bf16.mxu0 %v5617
    %5856 = vmatpush1.bf16.msra.mxu0 %v5616
    %5857 = vmatprep.subr.bf16.mxu0 %v5609
    %5858 = vmatpush1.bf16.msra.mxu0 %v5608
    %5859 = vmatprep.subr.bf16.mxu0 %v5601
    %5860 = vmatpush1.bf16.msra.mxu0 %v5600
    %5861 = vmatprep.subr.bf16.mxu0 %v5593
    %5862 = vmatpush1.bf16.msra.mxu0 %v5592
    %5863 = vmatprep.subr.bf16.mxu0 %v5585
    %5864 = vmatpush1.bf16.msra.mxu0 %v5584
    %5865 = vmatprep.subr.bf16.mxu0 %v5577
    %5866 = vmatpush1.bf16.msra.mxu0 %v5576
    %5867 = vmatprep.subr.bf16.mxu0 %v5569
    %5868 = vmatpush1.bf16.msra.mxu0 %v5568
    %5869 = vmatprep.subr.bf16.mxu0 %v5561
    %5870 = vmatpush1.bf16.msra.mxu0 %v5560
    %5871 = vmatprep.subr.bf16.mxu0 %v5681
    %5872 = vmatpush2.bf16.msra.mxu0 %v5680
    %5873 = vmatprep.subr.bf16.mxu0 %v5673
    %5874 = vmatpush2.bf16.msra.mxu0 %v5672
    %5875 = vmatprep.subr.bf16.mxu0 %v5665
    %5876 = vmatpush2.bf16.msra.mxu0 %v5664
    %5877 = vmatprep.subr.bf16.mxu0 %v5657
    %5878 = vmatpush2.bf16.msra.mxu0 %v5656
    %5879 = vmatprep.subr.bf16.mxu0 %v5649
    %5880 = vmatpush2.bf16.msra.mxu0 %v5648
    %5881 = vmatprep.subr.bf16.mxu0 %v5641
    %5882 = vmatpush2.bf16.msra.mxu0 %v5640
    %5883 = vmatprep.subr.bf16.mxu0 %v5633
    %5884 = vmatpush2.bf16.msra.mxu0 %v5632
    %5885 = vmatprep.subr.bf16.mxu0 %v5625
    %5886 = vmatpush2.bf16.msra.mxu0 %v5624
    %5887 = vmatprep.mubr.bf16.mxu0 %v5045
    %5888 = vmatmul.mubr.bf16.gmra.mxu0 %v5044
    %v5889 = vpop.f32.mrf.mxu0
    %v5890 = vadd.f32 0.0, %v5889
    %v5891 = vpop.f32.mrf.mxu0
    %v5892 = vadd.f32 0.0, %v5891
    %v5893 = vpop.f32.mrf.mxu0
    %v5894 = vpop.f32.mrf.mxu0
    %5895 = vdwg.mxu0
    %5896 = vmatprep.subr.bf16.mxu0 %v5619
    %5897 = vmatpush1.bf16.msra.mxu0 %v5618
    %5898 = vmatprep.subr.bf16.mxu0 %v5611
    %5899 = vmatpush1.bf16.msra.mxu0 %v5610
    %5900 = vmatprep.subr.bf16.mxu0 %v5603
    %5901 = vmatpush1.bf16.msra.mxu0 %v5602
    %5902 = vmatprep.subr.bf16.mxu0 %v5595
    %5903 = vmatpush1.bf16.msra.mxu0 %v5594
    %5904 = vmatprep.subr.bf16.mxu0 %v5587
    %5905 = vmatpush1.bf16.msra.mxu0 %v5586
    %5906 = vmatprep.subr.bf16.mxu0 %v5579
    %5907 = vmatpush1.bf16.msra.mxu0 %v5578
    %5908 = vmatprep.subr.bf16.mxu0 %v5571
    %5909 = vmatpush1.bf16.msra.mxu0 %v5570
    %5910 = vmatprep.subr.bf16.mxu0 %v5563
    %5911 = vmatpush1.bf16.msra.mxu0 %v5562
    %5912 = vmatprep.subr.bf16.mxu0 %v5683
    %5913 = vmatpush2.bf16.msra.mxu0 %v5682
    %5914 = vmatprep.subr.bf16.mxu0 %v5675
    %5915 = vmatpush2.bf16.msra.mxu0 %v5674
    %5916 = vmatprep.subr.bf16.mxu0 %v5667
    %5917 = vmatpush2.bf16.msra.mxu0 %v5666
    %5918 = vmatprep.subr.bf16.mxu0 %v5659
    %5919 = vmatpush2.bf16.msra.mxu0 %v5658
    %5920 = vmatprep.subr.bf16.mxu0 %v5651
    %5921 = vmatpush2.bf16.msra.mxu0 %v5650
    %5922 = vmatprep.subr.bf16.mxu0 %v5643
    %5923 = vmatpush2.bf16.msra.mxu0 %v5642
    %5924 = vmatprep.subr.bf16.mxu0 %v5635
    %5925 = vmatpush2.bf16.msra.mxu0 %v5634
    %5926 = vmatprep.subr.bf16.mxu0 %v5627
    %5927 = vmatpush2.bf16.msra.mxu0 %v5626
    %5928 = vmatprep.mubr.bf16.mxu0 %v5045
    %5929 = vmatmul.mubr.bf16.gmra.mxu0 %v5044
    %v5930 = vpop.f32.mrf.mxu0
    %v5931 = vadd.f32 0.0, %v5930
    %v5932 = vpop.f32.mrf.mxu0
    %v5933 = vadd.f32 0.0, %v5932
    %v5934 = vpop.f32.mrf.mxu0
    %v5935 = vpop.f32.mrf.mxu0
    %5936 = vdwg.mxu0
    %5937 = vmatprep.subr.bf16.mxu0 %v5621
    %5938 = vmatpush1.bf16.msra.mxu0 %v5620
    %5939 = vmatprep.subr.bf16.mxu0 %v5613
    %5940 = vmatpush1.bf16.msra.mxu0 %v5612
    %5941 = vmatprep.subr.bf16.mxu0 %v5605
    %5942 = vmatpush1.bf16.msra.mxu0 %v5604
    %5943 = vmatprep.subr.bf16.mxu0 %v5597
    %5944 = vmatpush1.bf16.msra.mxu0 %v5596
    %5945 = vmatprep.subr.bf16.mxu0 %v5589
    %5946 = vmatpush1.bf16.msra.mxu0 %v5588
    %5947 = vmatprep.subr.bf16.mxu0 %v5581
    %5948 = vmatpush1.bf16.msra.mxu0 %v5580
    %5949 = vmatprep.subr.bf16.mxu0 %v5573
    %5950 = vmatpush1.bf16.msra.mxu0 %v5572
    %5951 = vmatprep.subr.bf16.mxu0 %v5565
    %5952 = vmatpush1.bf16.msra.mxu0 %v5564
    %5953 = vmatprep.subr.bf16.mxu0 %v5685
    %5954 = vmatpush2.bf16.msra.mxu0 %v5684
    %5955 = vmatprep.subr.bf16.mxu0 %v5677
    %5956 = vmatpush2.bf16.msra.mxu0 %v5676
    %5957 = vmatprep.subr.bf16.mxu0 %v5669
    %5958 = vmatpush2.bf16.msra.mxu0 %v5668
    %5959 = vmatprep.subr.bf16.mxu0 %v5661
    %5960 = vmatpush2.bf16.msra.mxu0 %v5660
    %5961 = vmatprep.subr.bf16.mxu0 %v5653
    %5962 = vmatpush2.bf16.msra.mxu0 %v5652
    %5963 = vmatprep.subr.bf16.mxu0 %v5645
    %5964 = vmatpush2.bf16.msra.mxu0 %v5644
    %5965 = vmatprep.subr.bf16.mxu0 %v5637
    %5966 = vmatpush2.bf16.msra.mxu0 %v5636
    %5967 = vmatprep.subr.bf16.mxu0 %v5629
    %5968 = vmatpush2.bf16.msra.mxu0 %v5628
    %5969 = vmatprep.mubr.bf16.mxu0 %v5045
    %5970 = vmatmul.mubr.bf16.gmra.mxu0 %v5044
    %v5971 = vpop.f32.mrf.mxu0
    %v5972 = vadd.f32 0.0, %v5971
    %v5973 = vpop.f32.mrf.mxu0
    %v5974 = vadd.f32 0.0, %v5973
    %v5975 = vpop.f32.mrf.mxu0
    %v5976 = vpop.f32.mrf.mxu0
    %5977 = vdwg.mxu0
    %v5978 = vld [vmem:[%s2922] sm:$0xff]
    %v5979 = vld [vmem:[%s2922 + $0x8] sm:$0xff]
    %v5980 = vld [vmem:[%s2922 + $0x10] sm:$0xff]
    %v5981 = vld [vmem:[%s2922 + $0x18] sm:$0xff]
    %v5982 = vld [vmem:[%s2917 + $0x20] sm:$0xff]
    %v5983 = vld [vmem:[%s2917 + $0x28] sm:$0xff]
    %v5984 = vld [vmem:[%s2917 + $0x30] sm:$0xff]
    %v5985 = vld [vmem:[%s2917 + $0x38] sm:$0xff]
    %v5986 = vadd.f32 %v5849, %v5978
    %v5987 = vadd.f32 %v5851, %v5979
    %v5988 = vadd.f32 %v5890, %v5980
    %v5989 = vadd.f32 %v5892, %v5981
    %v5990 = vadd.f32 %v5931, %v5982
    %v5991 = vadd.f32 %v5933, %v5983
    %v5992 = vadd.f32 %v5972, %v5984
    %v5993 = vadd.f32 %v5974, %v5985
    %v5994 = vxor.u32 %v5986, 2147483648
    %v5995 = vmul.f32 %v5994, 1.442695
    %v5996 = vpow.pop %v5995
    %v5997 = vadd.f32 %v5996, 1.0
    %v5998 = vrcp.pop %v5997
    %v5999 = vmul.f32 1.0, %v5998
    %v6000 = vxor.u32 %v5987, 2147483648
    %v6001 = vmul.f32 %v6000, 1.442695
    %v6002 = vpow.pop %v6001
    %v6003 = vadd.f32 %v6002, 1.0
    %v6004 = vrcp.pop %v6003
    %v6005 = vmul.f32 1.0, %v6004
    %v6006 = vtanh.pop %v5988
    %v6007 = vxor.u32 %v5989, 2147483648
    %v6008 = vmul.f32 %v6007, 1.442695
    %v6009 = vpow.pop %v6008
    %v6010 = vadd.f32 %v6009, 1.0
    %v6011 = vrcp.pop %v6010
    %v6012 = vmul.f32 1.0, %v6011
    %v6013 = vmul.f32 %v6005, %v4996
    %v6014 = vmul.f32 %v5999, %v6006
    %v6015 = vadd.f32 %v6013, %v6014
    %v6016 = vtanh.pop %v6015
    %v6017 = vmul.f32 %v6012, %v6016
    %v6018 = vxor.u32 %v5990, 2147483648
    %v6019 = vmul.f32 %v6018, 1.442695
    %v6020 = vpow.pop %v6019
    %v6021 = vadd.f32 %v6020, 1.0
    %v6022 = vrcp.pop %v6021
    %v6023 = vmul.f32 1.0, %v6022
    %v6024 = vxor.u32 %v5991, 2147483648
    %v6025 = vmul.f32 %v6024, 1.442695
    %v6026 = vpow.pop %v6025
    %v6027 = vadd.f32 %v6026, 1.0
    %v6028 = vrcp.pop %v6027
    %v6029 = vmul.f32 1.0, %v6028
    %v6030 = vtanh.pop %v5992
    %v6031 = vxor.u32 %v5993, 2147483648
    %v6032 = vmul.f32 %v6031, 1.442695
    %v6033 = vpow.pop %v6032
    %v6034 = vadd.f32 %v6033, 1.0
    %v6035 = vrcp.pop %v6034
    %v6036 = vmul.f32 1.0, %v6035
    %v6037 = vmul.f32 %v6029, %v5031
    %v6038 = vmul.f32 %v6023, %v6030
    %v6039 = vadd.f32 %v6037, %v6038
    %v6040 = vtanh.pop %v6039
    %v6041 = vmul.f32 %v6036, %v6040
    %s6042 = scalar_lea.vmem %s1, 16
    %v6043 = vld [vmem:[%s6042] sm:$0xff]
    %6045 = vset.pattern.permute.xlu0 0
    %6046 = vperm.xlu0 %6045, %v6043
    %v6047 = vpop.permute.xlu0 %6046
    %v6049 = vmul.f32 %v6041, %v6047
    %v6050 = vmul.f32 %v6039, %v6047
    %v6051 = vmax.f32 %v6017, 0.0
    %v6052 = vmul.f32 %v6051, %v939
    %6053 = vadd.xlane.f32.xlu0 %v6052
    %v6054 = vpop.xlane.xlu0 %6053
    %s6055 = scalar_lea.vmem [#allocation4], 40
    %6056 = vst.msk [vmem:[%s6055] sm:$0xff] %vm944, %v6054
    %v6057 = vmax.f32 %v6049, 0.0
    %v6058 = vmul.f32 %v6057, %v951
    %6059 = vadd.xlane.f32.xlu0 %v6058
    %v6060 = vpop.xlane.xlu0 %6059
    %s6061 = scalar_lea.vmem [#allocation5], 16
    %6062 = vst.msk [vmem:[%s6061] sm:$0xff] %vm944, %v6060
    %v6063 = vpack.c.bf16 %v6017, %v6017
    %v6064 = vpack.c.bf16 %v6049, %v6049
    %v6065 = vld [vmem:[#allocation3] sm:$0xff]
    %v6066 = vld [vmem:[#allocation3 + $0x8] sm:$0xff]
    %v6067 = vld [vmem:[#allocation3 + $0x10] sm:$0xff]
    %v6068 = vld [vmem:[#allocation3 + $0x18] sm:$0xff]
    %v6069 = vld [vmem:[#allocation3 + $0x20] sm:$0xff]
    %v6070 = vld [vmem:[#allocation3 + $0x28] sm:$0xff]
    %v6071 = vld [vmem:[#allocation3 + $0x30] sm:$0xff]
    %v6072 = vld [vmem:[#allocation3 + $0x38] sm:$0xff]
    %v6073 = vld [vmem:[#allocation3 + $0x40] sm:$0xff]
    %v6074 = vld [vmem:[#allocation3 + $0x48] sm:$0xff]
    %v6075 = vld [vmem:[#allocation3 + $0x50] sm:$0xff]
    %v6076 = vld [vmem:[#allocation3 + $0x58] sm:$0xff]
    %v6077 = vld [vmem:[#allocation3 + $0x60] sm:$0xff]
    %v6078 = vld [vmem:[#allocation3 + $0x68] sm:$0xff]
    %v6079 = vld [vmem:[#allocation3 + $0x70] sm:$0xff]
    %v6080 = vld [vmem:[#allocation3 + $0x78] sm:$0xff]
    %v6081 = vld [vmem:[#allocation3 + $0x80] sm:$0xff]
    %v6082 = vld [vmem:[#allocation3 + $0x88] sm:$0xff]
    %v6083 = vld [vmem:[#allocation3 + $0x90] sm:$0xff]
    %v6084 = vld [vmem:[#allocation3 + $0x98] sm:$0xff]
    %v6085 = vld [vmem:[#allocation3 + $0xa0] sm:$0xff]
    %v6086 = vld [vmem:[#allocation3 + $0xa8] sm:$0xff]
    %v6087 = vld [vmem:[#allocation3 + $0xb0] sm:$0xff]
    %v6088 = vld [vmem:[#allocation3 + $0xb8] sm:$0xff]
    %v6089 = vld [vmem:[#allocation3 + $0xc0] sm:$0xff]
    %v6090 = vld [vmem:[#allocation3 + $0xc8] sm:$0xff]
    %v6091 = vld [vmem:[#allocation3 + $0xd0] sm:$0xff]
    %v6092 = vld [vmem:[#allocation3 + $0xd8] sm:$0xff]
    %v6093 = vld [vmem:[#allocation3 + $0xe0] sm:$0xff]
    %v6094 = vld [vmem:[#allocation3 + $0xe8] sm:$0xff]
    %v6095 = vld [vmem:[#allocation3 + $0xf0] sm:$0xff]
    %v6096 = vld [vmem:[#allocation3 + $0xf8] sm:$0xff]
    %v6097 = vld [vmem:[#allocation3 + $0x100] sm:$0xff]
    %v6098 = vld [vmem:[#allocation3 + $0x108] sm:$0xff]
    %v6099 = vld [vmem:[#allocation3 + $0x110] sm:$0xff]
    %v6100 = vld [vmem:[#allocation3 + $0x118] sm:$0xff]
    %v6101 = vld [vmem:[#allocation3 + $0x120] sm:$0xff]
    %v6102 = vld [vmem:[#allocation3 + $0x128] sm:$0xff]
    %v6103 = vld [vmem:[#allocation3 + $0x130] sm:$0xff]
    %v6104 = vld [vmem:[#allocation3 + $0x138] sm:$0xff]
    %v6105 = vld [vmem:[#allocation3 + $0x140] sm:$0xff]
    %v6106 = vld [vmem:[#allocation3 + $0x148] sm:$0xff]
    %v6107 = vld [vmem:[#allocation3 + $0x150] sm:$0xff]
    %v6108 = vld [vmem:[#allocation3 + $0x158] sm:$0xff]
    %v6109 = vld [vmem:[#allocation3 + $0x160] sm:$0xff]
    %v6110 = vld [vmem:[#allocation3 + $0x168] sm:$0xff]
    %v6111 = vld [vmem:[#allocation3 + $0x170] sm:$0xff]
    %v6112 = vld [vmem:[#allocation3 + $0x178] sm:$0xff]
    %v6113 = vld [vmem:[#allocation3 + $0x180] sm:$0xff]
    %v6114 = vld [vmem:[#allocation3 + $0x188] sm:$0xff]
    %v6115 = vld [vmem:[#allocation3 + $0x190] sm:$0xff]
    %v6116 = vld [vmem:[#allocation3 + $0x198] sm:$0xff]
    %v6117 = vld [vmem:[#allocation3 + $0x1a0] sm:$0xff]
    %v6118 = vld [vmem:[#allocation3 + $0x1a8] sm:$0xff]
    %v6119 = vld [vmem:[#allocation3 + $0x1b0] sm:$0xff]
    %v6120 = vld [vmem:[#allocation3 + $0x1b8] sm:$0xff]
    %v6121 = vld [vmem:[#allocation3 + $0x1c0] sm:$0xff]
    %v6122 = vld [vmem:[#allocation3 + $0x1c8] sm:$0xff]
    %v6123 = vld [vmem:[#allocation3 + $0x1d0] sm:$0xff]
    %v6124 = vld [vmem:[#allocation3 + $0x1d8] sm:$0xff]
    %v6125 = vld [vmem:[#allocation3 + $0x1e0] sm:$0xff]
    %v6126 = vld [vmem:[#allocation3 + $0x1e8] sm:$0xff]
    %v6127 = vld [vmem:[#allocation3 + $0x1f0] sm:$0xff]
    %v6128 = vld [vmem:[#allocation3 + $0x1f8] sm:$0xff]
    %v6129 = vld [vmem:[#allocation3 + $0x200] sm:$0xff]
    %v6130 = vld [vmem:[#allocation3 + $0x208] sm:$0xff]
    %v6131 = vld [vmem:[#allocation3 + $0x210] sm:$0xff]
    %v6132 = vld [vmem:[#allocation3 + $0x218] sm:$0xff]
    %v6133 = vld [vmem:[#allocation3 + $0x220] sm:$0xff]
    %v6134 = vld [vmem:[#allocation3 + $0x228] sm:$0xff]
    %v6135 = vld [vmem:[#allocation3 + $0x230] sm:$0xff]
    %v6136 = vld [vmem:[#allocation3 + $0x238] sm:$0xff]
    %v6137 = vld [vmem:[#allocation3 + $0x240] sm:$0xff]
    %v6138 = vld [vmem:[#allocation3 + $0x248] sm:$0xff]
    %v6139 = vld [vmem:[#allocation3 + $0x250] sm:$0xff]
    %v6140 = vld [vmem:[#allocation3 + $0x258] sm:$0xff]
    %v6141 = vld [vmem:[#allocation3 + $0x260] sm:$0xff]
    %v6142 = vld [vmem:[#allocation3 + $0x268] sm:$0xff]
    %v6143 = vld [vmem:[#allocation3 + $0x270] sm:$0xff]
    %v6144 = vld [vmem:[#allocation3 + $0x278] sm:$0xff]
    %v6145 = vld [vmem:[#allocation3 + $0x280] sm:$0xff]
    %v6146 = vld [vmem:[#allocation3 + $0x288] sm:$0xff]
    %v6147 = vld [vmem:[#allocation3 + $0x290] sm:$0xff]
    %v6148 = vld [vmem:[#allocation3 + $0x298] sm:$0xff]
    %v6149 = vld [vmem:[#allocation3 + $0x2a0] sm:$0xff]
    %v6150 = vld [vmem:[#allocation3 + $0x2a8] sm:$0xff]
    %v6151 = vld [vmem:[#allocation3 + $0x2b0] sm:$0xff]
    %v6152 = vld [vmem:[#allocation3 + $0x2b8] sm:$0xff]
    %v6153 = vld [vmem:[#allocation3 + $0x2c0] sm:$0xff]
    %v6154 = vld [vmem:[#allocation3 + $0x2c8] sm:$0xff]
    %v6155 = vld [vmem:[#allocation3 + $0x2d0] sm:$0xff]
    %v6156 = vld [vmem:[#allocation3 + $0x2d8] sm:$0xff]
    %v6157 = vld [vmem:[#allocation3 + $0x2e0] sm:$0xff]
    %v6158 = vld [vmem:[#allocation3 + $0x2e8] sm:$0xff]
    %v6159 = vld [vmem:[#allocation3 + $0x2f0] sm:$0xff]
    %v6160 = vld [vmem:[#allocation3 + $0x2f8] sm:$0xff]
    %v6161 = vld [vmem:[#allocation3 + $0x300] sm:$0xff]
    %v6162 = vld [vmem:[#allocation3 + $0x308] sm:$0xff]
    %v6163 = vld [vmem:[#allocation3 + $0x310] sm:$0xff]
    %v6164 = vld [vmem:[#allocation3 + $0x318] sm:$0xff]
    %v6165 = vld [vmem:[#allocation3 + $0x320] sm:$0xff]
    %v6166 = vld [vmem:[#allocation3 + $0x328] sm:$0xff]
    %v6167 = vld [vmem:[#allocation3 + $0x330] sm:$0xff]
    %v6168 = vld [vmem:[#allocation3 + $0x338] sm:$0xff]
    %v6169 = vld [vmem:[#allocation3 + $0x340] sm:$0xff]
    %v6170 = vld [vmem:[#allocation3 + $0x348] sm:$0xff]
    %v6171 = vld [vmem:[#allocation3 + $0x350] sm:$0xff]
    %v6172 = vld [vmem:[#allocation3 + $0x358] sm:$0xff]
    %v6173 = vld [vmem:[#allocation3 + $0x360] sm:$0xff]
    %v6174 = vld [vmem:[#allocation3 + $0x368] sm:$0xff]
    %v6175 = vld [vmem:[#allocation3 + $0x370] sm:$0xff]
    %v6176 = vld [vmem:[#allocation3 + $0x378] sm:$0xff]
    %v6177 = vld [vmem:[#allocation3 + $0x380] sm:$0xff]
    %v6178 = vld [vmem:[#allocation3 + $0x388] sm:$0xff]
    %v6179 = vld [vmem:[#allocation3 + $0x390] sm:$0xff]
    %v6180 = vld [vmem:[#allocation3 + $0x398] sm:$0xff]
    %v6181 = vld [vmem:[#allocation3 + $0x3a0] sm:$0xff]
    %v6182 = vld [vmem:[#allocation3 + $0x3a8] sm:$0xff]
    %v6183 = vld [vmem:[#allocation3 + $0x3b0] sm:$0xff]
    %v6184 = vld [vmem:[#allocation3 + $0x3b8] sm:$0xff]
    %v6185 = vld [vmem:[#allocation3 + $0x3c0] sm:$0xff]
    %v6186 = vld [vmem:[#allocation3 + $0x3c8] sm:$0xff]
    %v6187 = vld [vmem:[#allocation3 + $0x3d0] sm:$0xff]
    %v6188 = vld [vmem:[#allocation3 + $0x3d8] sm:$0xff]
    %v6189 = vld [vmem:[#allocation3 + $0x3e0] sm:$0xff]
    %v6190 = vld [vmem:[#allocation3 + $0x3e8] sm:$0xff]
    %v6191 = vld [vmem:[#allocation3 + $0x3f0] sm:$0xff]
    %v6192 = vld [vmem:[#allocation3 + $0x3f8] sm:$0xff]
    %v6321 = vunpack.c.l.b16 %v6065
    %v6322 = vunpack.c.h.b16 %v6065
    %v6323 = vunpack.c.l.b16 %v6066
    %v6324 = vunpack.c.h.b16 %v6066
    %v6325 = vunpack.c.l.b16 %v6067
    %v6326 = vunpack.c.h.b16 %v6067
    %v6327 = vunpack.c.l.b16 %v6068
    %v6328 = vunpack.c.h.b16 %v6068
    %v6329 = vunpack.c.l.b16 %v6069
    %v6330 = vunpack.c.h.b16 %v6069
    %v6331 = vunpack.c.l.b16 %v6070
    %v6332 = vunpack.c.h.b16 %v6070
    %v6333 = vunpack.c.l.b16 %v6071
    %v6334 = vunpack.c.h.b16 %v6071
    %v6335 = vunpack.c.l.b16 %v6072
    %v6336 = vunpack.c.h.b16 %v6072
    %v6337 = vunpack.c.l.b16 %v6073
    %v6338 = vunpack.c.h.b16 %v6073
    %v6339 = vunpack.c.l.b16 %v6074
    %v6340 = vunpack.c.h.b16 %v6074
    %v6341 = vunpack.c.l.b16 %v6075
    %v6342 = vunpack.c.h.b16 %v6075
    %v6343 = vunpack.c.l.b16 %v6076
    %v6344 = vunpack.c.h.b16 %v6076
    %v6345 = vunpack.c.l.b16 %v6077
    %v6346 = vunpack.c.h.b16 %v6077
    %v6347 = vunpack.c.l.b16 %v6078
    %v6348 = vunpack.c.h.b16 %v6078
    %v6349 = vunpack.c.l.b16 %v6079
    %v6350 = vunpack.c.h.b16 %v6079
    %v6351 = vunpack.c.l.b16 %v6080
    %v6352 = vunpack.c.h.b16 %v6080
    %v6353 = vunpack.c.l.b16 %v6081
    %v6354 = vunpack.c.h.b16 %v6081
    %v6355 = vunpack.c.l.b16 %v6082
    %v6356 = vunpack.c.h.b16 %v6082
    %v6357 = vunpack.c.l.b16 %v6083
    %v6358 = vunpack.c.h.b16 %v6083
    %v6359 = vunpack.c.l.b16 %v6084
    %v6360 = vunpack.c.h.b16 %v6084
    %v6361 = vunpack.c.l.b16 %v6085
    %v6362 = vunpack.c.h.b16 %v6085
    %v6363 = vunpack.c.l.b16 %v6086
    %v6364 = vunpack.c.h.b16 %v6086
    %v6365 = vunpack.c.l.b16 %v6087
    %v6366 = vunpack.c.h.b16 %v6087
    %v6367 = vunpack.c.l.b16 %v6088
    %v6368 = vunpack.c.h.b16 %v6088
    %v6369 = vunpack.c.l.b16 %v6089
    %v6370 = vunpack.c.h.b16 %v6089
    %v6371 = vunpack.c.l.b16 %v6090
    %v6372 = vunpack.c.h.b16 %v6090
    %v6373 = vunpack.c.l.b16 %v6091
    %v6374 = vunpack.c.h.b16 %v6091
    %v6375 = vunpack.c.l.b16 %v6092
    %v6376 = vunpack.c.h.b16 %v6092
    %v6377 = vunpack.c.l.b16 %v6093
    %v6378 = vunpack.c.h.b16 %v6093
    %v6379 = vunpack.c.l.b16 %v6094
    %v6380 = vunpack.c.h.b16 %v6094
    %v6381 = vunpack.c.l.b16 %v6095
    %v6382 = vunpack.c.h.b16 %v6095
    %v6383 = vunpack.c.l.b16 %v6096
    %v6384 = vunpack.c.h.b16 %v6096
    %v6385 = vunpack.c.l.b16 %v6097
    %v6386 = vunpack.c.h.b16 %v6097
    %v6387 = vunpack.c.l.b16 %v6098
    %v6388 = vunpack.c.h.b16 %v6098
    %v6389 = vunpack.c.l.b16 %v6099
    %v6390 = vunpack.c.h.b16 %v6099
    %v6391 = vunpack.c.l.b16 %v6100
    %v6392 = vunpack.c.h.b16 %v6100
    %v6393 = vunpack.c.l.b16 %v6101
    %v6394 = vunpack.c.h.b16 %v6101
    %v6395 = vunpack.c.l.b16 %v6102
    %v6396 = vunpack.c.h.b16 %v6102
    %v6397 = vunpack.c.l.b16 %v6103
    %v6398 = vunpack.c.h.b16 %v6103
    %v6399 = vunpack.c.l.b16 %v6104
    %v6400 = vunpack.c.h.b16 %v6104
    %v6401 = vunpack.c.l.b16 %v6105
    %v6402 = vunpack.c.h.b16 %v6105
    %v6403 = vunpack.c.l.b16 %v6106
    %v6404 = vunpack.c.h.b16 %v6106
    %v6405 = vunpack.c.l.b16 %v6107
    %v6406 = vunpack.c.h.b16 %v6107
    %v6407 = vunpack.c.l.b16 %v6108
    %v6408 = vunpack.c.h.b16 %v6108
    %v6409 = vunpack.c.l.b16 %v6109
    %v6410 = vunpack.c.h.b16 %v6109
    %v6411 = vunpack.c.l.b16 %v6110
    %v6412 = vunpack.c.h.b16 %v6110
    %v6413 = vunpack.c.l.b16 %v6111
    %v6414 = vunpack.c.h.b16 %v6111
    %v6415 = vunpack.c.l.b16 %v6112
    %v6416 = vunpack.c.h.b16 %v6112
    %v6417 = vunpack.c.l.b16 %v6113
    %v6418 = vunpack.c.h.b16 %v6113
    %v6419 = vunpack.c.l.b16 %v6114
    %v6420 = vunpack.c.h.b16 %v6114
    %v6421 = vunpack.c.l.b16 %v6115
    %v6422 = vunpack.c.h.b16 %v6115
    %v6423 = vunpack.c.l.b16 %v6116
    %v6424 = vunpack.c.h.b16 %v6116
    %v6425 = vunpack.c.l.b16 %v6117
    %v6426 = vunpack.c.h.b16 %v6117
    %v6427 = vunpack.c.l.b16 %v6118
    %v6428 = vunpack.c.h.b16 %v6118
    %v6429 = vunpack.c.l.b16 %v6119
    %v6430 = vunpack.c.h.b16 %v6119
    %v6431 = vunpack.c.l.b16 %v6120
    %v6432 = vunpack.c.h.b16 %v6120
    %v6433 = vunpack.c.l.b16 %v6121
    %v6434 = vunpack.c.h.b16 %v6121
    %v6435 = vunpack.c.l.b16 %v6122
    %v6436 = vunpack.c.h.b16 %v6122
    %v6437 = vunpack.c.l.b16 %v6123
    %v6438 = vunpack.c.h.b16 %v6123
    %v6439 = vunpack.c.l.b16 %v6124
    %v6440 = vunpack.c.h.b16 %v6124
    %v6441 = vunpack.c.l.b16 %v6125
    %v6442 = vunpack.c.h.b16 %v6125
    %v6443 = vunpack.c.l.b16 %v6126
    %v6444 = vunpack.c.h.b16 %v6126
    %v6445 = vunpack.c.l.b16 %v6127
    %v6446 = vunpack.c.h.b16 %v6127
    %v6447 = vunpack.c.l.b16 %v6128
    %v6448 = vunpack.c.h.b16 %v6128
    %v6449 = vunpack.c.l.b16 %v6129
    %v6450 = vunpack.c.h.b16 %v6129
    %v6451 = vunpack.c.l.b16 %v6130
    %v6452 = vunpack.c.h.b16 %v6130
    %v6453 = vunpack.c.l.b16 %v6131
    %v6454 = vunpack.c.h.b16 %v6131
    %v6455 = vunpack.c.l.b16 %v6132
    %v6456 = vunpack.c.h.b16 %v6132
    %v6457 = vunpack.c.l.b16 %v6133
    %v6458 = vunpack.c.h.b16 %v6133
    %v6459 = vunpack.c.l.b16 %v6134
    %v6460 = vunpack.c.h.b16 %v6134
    %v6461 = vunpack.c.l.b16 %v6135
    %v6462 = vunpack.c.h.b16 %v6135
    %v6463 = vunpack.c.l.b16 %v6136
    %v6464 = vunpack.c.h.b16 %v6136
    %v6465 = vunpack.c.l.b16 %v6137
    %v6466 = vunpack.c.h.b16 %v6137
    %v6467 = vunpack.c.l.b16 %v6138
    %v6468 = vunpack.c.h.b16 %v6138
    %v6469 = vunpack.c.l.b16 %v6139
    %v6470 = vunpack.c.h.b16 %v6139
    %v6471 = vunpack.c.l.b16 %v6140
    %v6472 = vunpack.c.h.b16 %v6140
    %v6473 = vunpack.c.l.b16 %v6141
    %v6474 = vunpack.c.h.b16 %v6141
    %v6475 = vunpack.c.l.b16 %v6142
    %v6476 = vunpack.c.h.b16 %v6142
    %v6477 = vunpack.c.l.b16 %v6143
    %v6478 = vunpack.c.h.b16 %v6143
    %v6479 = vunpack.c.l.b16 %v6144
    %v6480 = vunpack.c.h.b16 %v6144
    %v6481 = vunpack.c.l.b16 %v6145
    %v6482 = vunpack.c.h.b16 %v6145
    %v6483 = vunpack.c.l.b16 %v6146
    %v6484 = vunpack.c.h.b16 %v6146
    %v6485 = vunpack.c.l.b16 %v6147
    %v6486 = vunpack.c.h.b16 %v6147
    %v6487 = vunpack.c.l.b16 %v6148
    %v6488 = vunpack.c.h.b16 %v6148
    %v6489 = vunpack.c.l.b16 %v6149
    %v6490 = vunpack.c.h.b16 %v6149
    %v6491 = vunpack.c.l.b16 %v6150
    %v6492 = vunpack.c.h.b16 %v6150
    %v6493 = vunpack.c.l.b16 %v6151
    %v6494 = vunpack.c.h.b16 %v6151
    %v6495 = vunpack.c.l.b16 %v6152
    %v6496 = vunpack.c.h.b16 %v6152
    %v6497 = vunpack.c.l.b16 %v6153
    %v6498 = vunpack.c.h.b16 %v6153
    %v6499 = vunpack.c.l.b16 %v6154
    %v6500 = vunpack.c.h.b16 %v6154
    %v6501 = vunpack.c.l.b16 %v6155
    %v6502 = vunpack.c.h.b16 %v6155
    %v6503 = vunpack.c.l.b16 %v6156
    %v6504 = vunpack.c.h.b16 %v6156
    %v6505 = vunpack.c.l.b16 %v6157
    %v6506 = vunpack.c.h.b16 %v6157
    %v6507 = vunpack.c.l.b16 %v6158
    %v6508 = vunpack.c.h.b16 %v6158
    %v6509 = vunpack.c.l.b16 %v6159
    %v6510 = vunpack.c.h.b16 %v6159
    %v6511 = vunpack.c.l.b16 %v6160
    %v6512 = vunpack.c.h.b16 %v6160
    %v6513 = vunpack.c.l.b16 %v6161
    %v6514 = vunpack.c.h.b16 %v6161
    %v6515 = vunpack.c.l.b16 %v6162
    %v6516 = vunpack.c.h.b16 %v6162
    %v6517 = vunpack.c.l.b16 %v6163
    %v6518 = vunpack.c.h.b16 %v6163
    %v6519 = vunpack.c.l.b16 %v6164
    %v6520 = vunpack.c.h.b16 %v6164
    %v6521 = vunpack.c.l.b16 %v6165
    %v6522 = vunpack.c.h.b16 %v6165
    %v6523 = vunpack.c.l.b16 %v6166
    %v6524 = vunpack.c.h.b16 %v6166
    %v6525 = vunpack.c.l.b16 %v6167
    %v6526 = vunpack.c.h.b16 %v6167
    %v6527 = vunpack.c.l.b16 %v6168
    %v6528 = vunpack.c.h.b16 %v6168
    %v6529 = vunpack.c.l.b16 %v6169
    %v6530 = vunpack.c.h.b16 %v6169
    %v6531 = vunpack.c.l.b16 %v6170
    %v6532 = vunpack.c.h.b16 %v6170
    %v6533 = vunpack.c.l.b16 %v6171
    %v6534 = vunpack.c.h.b16 %v6171
    %v6535 = vunpack.c.l.b16 %v6172
    %v6536 = vunpack.c.h.b16 %v6172
    %v6537 = vunpack.c.l.b16 %v6173
    %v6538 = vunpack.c.h.b16 %v6173
    %v6539 = vunpack.c.l.b16 %v6174
    %v6540 = vunpack.c.h.b16 %v6174
    %v6541 = vunpack.c.l.b16 %v6175
    %v6542 = vunpack.c.h.b16 %v6175
    %v6543 = vunpack.c.l.b16 %v6176
    %v6544 = vunpack.c.h.b16 %v6176
    %v6545 = vunpack.c.l.b16 %v6177
    %v6546 = vunpack.c.h.b16 %v6177
    %v6547 = vunpack.c.l.b16 %v6178
    %v6548 = vunpack.c.h.b16 %v6178
    %v6549 = vunpack.c.l.b16 %v6179
    %v6550 = vunpack.c.h.b16 %v6179
    %v6551 = vunpack.c.l.b16 %v6180
    %v6552 = vunpack.c.h.b16 %v6180
    %v6553 = vunpack.c.l.b16 %v6181
    %v6554 = vunpack.c.h.b16 %v6181
    %v6555 = vunpack.c.l.b16 %v6182
    %v6556 = vunpack.c.h.b16 %v6182
    %v6557 = vunpack.c.l.b16 %v6183
    %v6558 = vunpack.c.h.b16 %v6183
    %v6559 = vunpack.c.l.b16 %v6184
    %v6560 = vunpack.c.h.b16 %v6184
    %v6561 = vunpack.c.l.b16 %v6185
    %v6562 = vunpack.c.h.b16 %v6185
    %v6563 = vunpack.c.l.b16 %v6186
    %v6564 = vunpack.c.h.b16 %v6186
    %v6565 = vunpack.c.l.b16 %v6187
    %v6566 = vunpack.c.h.b16 %v6187
    %v6567 = vunpack.c.l.b16 %v6188
    %v6568 = vunpack.c.h.b16 %v6188
    %v6569 = vunpack.c.l.b16 %v6189
    %v6570 = vunpack.c.h.b16 %v6189
    %v6571 = vunpack.c.l.b16 %v6190
    %v6572 = vunpack.c.h.b16 %v6190
    %v6573 = vunpack.c.l.b16 %v6191
    %v6574 = vunpack.c.h.b16 %v6191
    %v6575 = vunpack.c.l.b16 %v6192
    %v6576 = vunpack.c.h.b16 %v6192
    %v6577 = vpack.c.b16 %v6329, %v6321
    %v6578 = vpack.c.b16 %v6330, %v6322
    %v6579 = vpack.c.b16 %v6331, %v6323
    %v6580 = vpack.c.b16 %v6332, %v6324
    %v6581 = vpack.c.b16 %v6333, %v6325
    %v6582 = vpack.c.b16 %v6334, %v6326
    %v6583 = vpack.c.b16 %v6335, %v6327
    %v6584 = vpack.c.b16 %v6336, %v6328
    %v6585 = vpack.c.b16 %v6345, %v6337
    %v6586 = vpack.c.b16 %v6346, %v6338
    %v6587 = vpack.c.b16 %v6347, %v6339
    %v6588 = vpack.c.b16 %v6348, %v6340
    %v6589 = vpack.c.b16 %v6349, %v6341
    %v6590 = vpack.c.b16 %v6350, %v6342
    %v6591 = vpack.c.b16 %v6351, %v6343
    %v6592 = vpack.c.b16 %v6352, %v6344
    %v6593 = vpack.c.b16 %v6361, %v6353
    %v6594 = vpack.c.b16 %v6362, %v6354
    %v6595 = vpack.c.b16 %v6363, %v6355
    %v6596 = vpack.c.b16 %v6364, %v6356
    %v6597 = vpack.c.b16 %v6365, %v6357
    %v6598 = vpack.c.b16 %v6366, %v6358
    %v6599 = vpack.c.b16 %v6367, %v6359
    %v6600 = vpack.c.b16 %v6368, %v6360
    %v6601 = vpack.c.b16 %v6377, %v6369
    %v6602 = vpack.c.b16 %v6378, %v6370
    %v6603 = vpack.c.b16 %v6379, %v6371
    %v6604 = vpack.c.b16 %v6380, %v6372
    %v6605 = vpack.c.b16 %v6381, %v6373
    %v6606 = vpack.c.b16 %v6382, %v6374
    %v6607 = vpack.c.b16 %v6383, %v6375
    %v6608 = vpack.c.b16 %v6384, %v6376
    %v6609 = vpack.c.b16 %v6393, %v6385
    %v6610 = vpack.c.b16 %v6394, %v6386
    %v6611 = vpack.c.b16 %v6395, %v6387
    %v6612 = vpack.c.b16 %v6396, %v6388
    %v6613 = vpack.c.b16 %v6397, %v6389
    %v6614 = vpack.c.b16 %v6398, %v6390
    %v6615 = vpack.c.b16 %v6399, %v6391
    %v6616 = vpack.c.b16 %v6400, %v6392
    %v6617 = vpack.c.b16 %v6409, %v6401
    %v6618 = vpack.c.b16 %v6410, %v6402
    %v6619 = vpack.c.b16 %v6411, %v6403
    %v6620 = vpack.c.b16 %v6412, %v6404
    %v6621 = vpack.c.b16 %v6413, %v6405
    %v6622 = vpack.c.b16 %v6414, %v6406
    %v6623 = vpack.c.b16 %v6415, %v6407
    %v6624 = vpack.c.b16 %v6416, %v6408
    %v6625 = vpack.c.b16 %v6425, %v6417
    %v6626 = vpack.c.b16 %v6426, %v6418
    %v6627 = vpack.c.b16 %v6427, %v6419
    %v6628 = vpack.c.b16 %v6428, %v6420
    %v6629 = vpack.c.b16 %v6429, %v6421
    %v6630 = vpack.c.b16 %v6430, %v6422
    %v6631 = vpack.c.b16 %v6431, %v6423
    %v6632 = vpack.c.b16 %v6432, %v6424
    %v6633 = vpack.c.b16 %v6441, %v6433
    %v6634 = vpack.c.b16 %v6442, %v6434
    %v6635 = vpack.c.b16 %v6443, %v6435
    %v6636 = vpack.c.b16 %v6444, %v6436
    %v6637 = vpack.c.b16 %v6445, %v6437
    %v6638 = vpack.c.b16 %v6446, %v6438
    %v6639 = vpack.c.b16 %v6447, %v6439
    %v6640 = vpack.c.b16 %v6448, %v6440
    %v6641 = vpack.c.b16 %v6457, %v6449
    %v6642 = vpack.c.b16 %v6458, %v6450
    %v6643 = vpack.c.b16 %v6459, %v6451
    %v6644 = vpack.c.b16 %v6460, %v6452
    %v6645 = vpack.c.b16 %v6461, %v6453
    %v6646 = vpack.c.b16 %v6462, %v6454
    %v6647 = vpack.c.b16 %v6463, %v6455
    %v6648 = vpack.c.b16 %v6464, %v6456
    %v6649 = vpack.c.b16 %v6473, %v6465
    %v6650 = vpack.c.b16 %v6474, %v6466
    %v6651 = vpack.c.b16 %v6475, %v6467
    %v6652 = vpack.c.b16 %v6476, %v6468
    %v6653 = vpack.c.b16 %v6477, %v6469
    %v6654 = vpack.c.b16 %v6478, %v6470
    %v6655 = vpack.c.b16 %v6479, %v6471
    %v6656 = vpack.c.b16 %v6480, %v6472
    %v6657 = vpack.c.b16 %v6489, %v6481
    %v6658 = vpack.c.b16 %v6490, %v6482
    %v6659 = vpack.c.b16 %v6491, %v6483
    %v6660 = vpack.c.b16 %v6492, %v6484
    %v6661 = vpack.c.b16 %v6493, %v6485
    %v6662 = vpack.c.b16 %v6494, %v6486
    %v6663 = vpack.c.b16 %v6495, %v6487
    %v6664 = vpack.c.b16 %v6496, %v6488
    %v6665 = vpack.c.b16 %v6505, %v6497
    %v6666 = vpack.c.b16 %v6506, %v6498
    %v6667 = vpack.c.b16 %v6507, %v6499
    %v6668 = vpack.c.b16 %v6508, %v6500
    %v6669 = vpack.c.b16 %v6509, %v6501
    %v6670 = vpack.c.b16 %v6510, %v6502
    %v6671 = vpack.c.b16 %v6511, %v6503
    %v6672 = vpack.c.b16 %v6512, %v6504
    %v6673 = vpack.c.b16 %v6521, %v6513
    %v6674 = vpack.c.b16 %v6522, %v6514
    %v6675 = vpack.c.b16 %v6523, %v6515
    %v6676 = vpack.c.b16 %v6524, %v6516
    %v6677 = vpack.c.b16 %v6525, %v6517
    %v6678 = vpack.c.b16 %v6526, %v6518
    %v6679 = vpack.c.b16 %v6527, %v6519
    %v6680 = vpack.c.b16 %v6528, %v6520
    %v6681 = vpack.c.b16 %v6537, %v6529
    %v6682 = vpack.c.b16 %v6538, %v6530
    %v6683 = vpack.c.b16 %v6539, %v6531
    %v6684 = vpack.c.b16 %v6540, %v6532
    %v6685 = vpack.c.b16 %v6541, %v6533
    %v6686 = vpack.c.b16 %v6542, %v6534
    %v6687 = vpack.c.b16 %v6543, %v6535
    %v6688 = vpack.c.b16 %v6544, %v6536
    %v6689 = vpack.c.b16 %v6553, %v6545
    %v6690 = vpack.c.b16 %v6554, %v6546
    %v6691 = vpack.c.b16 %v6555, %v6547
    %v6692 = vpack.c.b16 %v6556, %v6548
    %v6693 = vpack.c.b16 %v6557, %v6549
    %v6694 = vpack.c.b16 %v6558, %v6550
    %v6695 = vpack.c.b16 %v6559, %v6551
    %v6696 = vpack.c.b16 %v6560, %v6552
    %v6697 = vpack.c.b16 %v6569, %v6561
    %v6698 = vpack.c.b16 %v6570, %v6562
    %v6699 = vpack.c.b16 %v6571, %v6563
    %v6700 = vpack.c.b16 %v6572, %v6564
    %v6701 = vpack.c.b16 %v6573, %v6565
    %v6702 = vpack.c.b16 %v6574, %v6566
    %v6703 = vpack.c.b16 %v6575, %v6567
    %v6704 = vpack.c.b16 %v6576, %v6568
    %6833 = vmatprep.subr.bf16.mxu0 %v6634
    %6834 = vmatpush1.bf16.msra.mxu0 %v6633
    %6835 = vmatprep.subr.bf16.mxu0 %v6626
    %6836 = vmatpush1.bf16.msra.mxu0 %v6625
    %6837 = vmatprep.subr.bf16.mxu0 %v6618
    %6838 = vmatpush1.bf16.msra.mxu0 %v6617
    %6839 = vmatprep.subr.bf16.mxu0 %v6610
    %6840 = vmatpush1.bf16.msra.mxu0 %v6609
    %6841 = vmatprep.subr.bf16.mxu0 %v6602
    %6842 = vmatpush1.bf16.msra.mxu0 %v6601
    %6843 = vmatprep.subr.bf16.mxu0 %v6594
    %6844 = vmatpush1.bf16.msra.mxu0 %v6593
    %6845 = vmatprep.subr.bf16.mxu0 %v6586
    %6846 = vmatpush1.bf16.msra.mxu0 %v6585
    %6847 = vmatprep.subr.bf16.mxu0 %v6578
    %6848 = vmatpush1.bf16.msra.mxu0 %v6577
    %6849 = vmatprep.subr.bf16.mxu0 %v6698
    %6850 = vmatpush2.bf16.msra.mxu0 %v6697
    %6851 = vmatprep.subr.bf16.mxu0 %v6690
    %6852 = vmatpush2.bf16.msra.mxu0 %v6689
    %6853 = vmatprep.subr.bf16.mxu0 %v6682
    %6854 = vmatpush2.bf16.msra.mxu0 %v6681
    %6855 = vmatprep.subr.bf16.mxu0 %v6674
    %6856 = vmatpush2.bf16.msra.mxu0 %v6673
    %6857 = vmatprep.subr.bf16.mxu0 %v6666
    %6858 = vmatpush2.bf16.msra.mxu0 %v6665
    %6859 = vmatprep.subr.bf16.mxu0 %v6658
    %6860 = vmatpush2.bf16.msra.mxu0 %v6657
    %6861 = vmatprep.subr.bf16.mxu0 %v6650
    %6862 = vmatpush2.bf16.msra.mxu0 %v6649
    %6863 = vmatprep.subr.bf16.mxu0 %v6642
    %6864 = vmatpush2.bf16.msra.mxu0 %v6641
    %6865 = vmatprep.mubr.bf16.mxu0 %v6064
    %6866 = vmatmul.mubr.bf16.gmra.mxu0 %v6063
    %v6867 = vpop.f32.mrf.mxu0
    %v6868 = vadd.f32 0.0, %v6867
    %v6869 = vpop.f32.mrf.mxu0
    %v6870 = vadd.f32 0.0, %v6869
    %v6871 = vpop.f32.mrf.mxu0
    %v6872 = vpop.f32.mrf.mxu0
    %6873 = vdwg.mxu0
    %6874 = vmatprep.subr.bf16.mxu0 %v6636
    %6875 = vmatpush1.bf16.msra.mxu0 %v6635
    %6876 = vmatprep.subr.bf16.mxu0 %v6628
    %6877 = vmatpush1.bf16.msra.mxu0 %v6627
    %6878 = vmatprep.subr.bf16.mxu0 %v6620
    %6879 = vmatpush1.bf16.msra.mxu0 %v6619
    %6880 = vmatprep.subr.bf16.mxu0 %v6612
    %6881 = vmatpush1.bf16.msra.mxu0 %v6611
    %6882 = vmatprep.subr.bf16.mxu0 %v6604
    %6883 = vmatpush1.bf16.msra.mxu0 %v6603
    %6884 = vmatprep.subr.bf16.mxu0 %v6596
    %6885 = vmatpush1.bf16.msra.mxu0 %v6595
    %6886 = vmatprep.subr.bf16.mxu0 %v6588
    %6887 = vmatpush1.bf16.msra.mxu0 %v6587
    %6888 = vmatprep.subr.bf16.mxu0 %v6580
    %6889 = vmatpush1.bf16.msra.mxu0 %v6579
    %6890 = vmatprep.subr.bf16.mxu0 %v6700
    %6891 = vmatpush2.bf16.msra.mxu0 %v6699
    %6892 = vmatprep.subr.bf16.mxu0 %v6692
    %6893 = vmatpush2.bf16.msra.mxu0 %v6691
    %6894 = vmatprep.subr.bf16.mxu0 %v6684
    %6895 = vmatpush2.bf16.msra.mxu0 %v6683
    %6896 = vmatprep.subr.bf16.mxu0 %v6676
    %6897 = vmatpush2.bf16.msra.mxu0 %v6675
    %6898 = vmatprep.subr.bf16.mxu0 %v6668
    %6899 = vmatpush2.bf16.msra.mxu0 %v6667
    %6900 = vmatprep.subr.bf16.mxu0 %v6660
    %6901 = vmatpush2.bf16.msra.mxu0 %v6659
    %6902 = vmatprep.subr.bf16.mxu0 %v6652
    %6903 = vmatpush2.bf16.msra.mxu0 %v6651
    %6904 = vmatprep.subr.bf16.mxu0 %v6644
    %6905 = vmatpush2.bf16.msra.mxu0 %v6643
    %6906 = vmatprep.mubr.bf16.mxu0 %v6064
    %6907 = vmatmul.mubr.bf16.gmra.mxu0 %v6063
    %v6908 = vpop.f32.mrf.mxu0
    %v6909 = vadd.f32 0.0, %v6908
    %v6910 = vpop.f32.mrf.mxu0
    %v6911 = vadd.f32 0.0, %v6910
    %v6912 = vpop.f32.mrf.mxu0
    %v6913 = vpop.f32.mrf.mxu0
    %6914 = vdwg.mxu0
    %6915 = vmatprep.subr.bf16.mxu0 %v6638
    %6916 = vmatpush1.bf16.msra.mxu0 %v6637
    %6917 = vmatprep.subr.bf16.mxu0 %v6630
    %6918 = vmatpush1.bf16.msra.mxu0 %v6629
    %6919 = vmatprep.subr.bf16.mxu0 %v6622
    %6920 = vmatpush1.bf16.msra.mxu0 %v6621
    %6921 = vmatprep.subr.bf16.mxu0 %v6614
    %6922 = vmatpush1.bf16.msra.mxu0 %v6613
    %6923 = vmatprep.subr.bf16.mxu0 %v6606
    %6924 = vmatpush1.bf16.msra.mxu0 %v6605
    %6925 = vmatprep.subr.bf16.mxu0 %v6598
    %6926 = vmatpush1.bf16.msra.mxu0 %v6597
    %6927 = vmatprep.subr.bf16.mxu0 %v6590
    %6928 = vmatpush1.bf16.msra.mxu0 %v6589
    %6929 = vmatprep.subr.bf16.mxu0 %v6582
    %6930 = vmatpush1.bf16.msra.mxu0 %v6581
    %6931 = vmatprep.subr.bf16.mxu0 %v6702
    %6932 = vmatpush2.bf16.msra.mxu0 %v6701
    %6933 = vmatprep.subr.bf16.mxu0 %v6694
    %6934 = vmatpush2.bf16.msra.mxu0 %v6693
    %6935 = vmatprep.subr.bf16.mxu0 %v6686
    %6936 = vmatpush2.bf16.msra.mxu0 %v6685
    %6937 = vmatprep.subr.bf16.mxu0 %v6678
    %6938 = vmatpush2.bf16.msra.mxu0 %v6677
    %6939 = vmatprep.subr.bf16.mxu0 %v6670
    %6940 = vmatpush2.bf16.msra.mxu0 %v6669
    %6941 = vmatprep.subr.bf16.mxu0 %v6662
    %6942 = vmatpush2.bf16.msra.mxu0 %v6661
    %6943 = vmatprep.subr.bf16.mxu0 %v6654
    %6944 = vmatpush2.bf16.msra.mxu0 %v6653
    %6945 = vmatprep.subr.bf16.mxu0 %v6646
    %6946 = vmatpush2.bf16.msra.mxu0 %v6645
    %6947 = vmatprep.mubr.bf16.mxu0 %v6064
    %6948 = vmatmul.mubr.bf16.gmra.mxu0 %v6063
    %v6949 = vpop.f32.mrf.mxu0
    %v6950 = vadd.f32 0.0, %v6949
    %v6951 = vpop.f32.mrf.mxu0
    %v6952 = vadd.f32 0.0, %v6951
    %v6953 = vpop.f32.mrf.mxu0
    %v6954 = vpop.f32.mrf.mxu0
    %6955 = vdwg.mxu0
    %6956 = vmatprep.subr.bf16.mxu0 %v6640
    %6957 = vmatpush1.bf16.msra.mxu0 %v6639
    %6958 = vmatprep.subr.bf16.mxu0 %v6632
    %6959 = vmatpush1.bf16.msra.mxu0 %v6631
    %6960 = vmatprep.subr.bf16.mxu0 %v6624
    %6961 = vmatpush1.bf16.msra.mxu0 %v6623
    %6962 = vmatprep.subr.bf16.mxu0 %v6616
    %6963 = vmatpush1.bf16.msra.mxu0 %v6615
    %6964 = vmatprep.subr.bf16.mxu0 %v6608
    %6965 = vmatpush1.bf16.msra.mxu0 %v6607
    %6966 = vmatprep.subr.bf16.mxu0 %v6600
    %6967 = vmatpush1.bf16.msra.mxu0 %v6599
    %6968 = vmatprep.subr.bf16.mxu0 %v6592
    %6969 = vmatpush1.bf16.msra.mxu0 %v6591
    %6970 = vmatprep.subr.bf16.mxu0 %v6584
    %6971 = vmatpush1.bf16.msra.mxu0 %v6583
    %6972 = vmatprep.subr.bf16.mxu0 %v6704
    %6973 = vmatpush2.bf16.msra.mxu0 %v6703
    %6974 = vmatprep.subr.bf16.mxu0 %v6696
    %6975 = vmatpush2.bf16.msra.mxu0 %v6695
    %6976 = vmatprep.subr.bf16.mxu0 %v6688
    %6977 = vmatpush2.bf16.msra.mxu0 %v6687
    %6978 = vmatprep.subr.bf16.mxu0 %v6680
    %6979 = vmatpush2.bf16.msra.mxu0 %v6679
    %6980 = vmatprep.subr.bf16.mxu0 %v6672
    %6981 = vmatpush2.bf16.msra.mxu0 %v6671
    %6982 = vmatprep.subr.bf16.mxu0 %v6664
    %6983 = vmatpush2.bf16.msra.mxu0 %v6663
    %6984 = vmatprep.subr.bf16.mxu0 %v6656
    %6985 = vmatpush2.bf16.msra.mxu0 %v6655
    %6986 = vmatprep.subr.bf16.mxu0 %v6648
    %6987 = vmatpush2.bf16.msra.mxu0 %v6647
    %6988 = vmatprep.mubr.bf16.mxu0 %v6064
    %6989 = vmatmul.mubr.bf16.gmra.mxu0 %v6063
    %v6990 = vpop.f32.mrf.mxu0
    %v6991 = vadd.f32 0.0, %v6990
    %v6992 = vpop.f32.mrf.mxu0
    %v6993 = vadd.f32 0.0, %v6992
    %v6994 = vpop.f32.mrf.mxu0
    %v6995 = vpop.f32.mrf.mxu0
    %6996 = vdwg.mxu0
    %v6997 = vld [vmem:[%s1901] sm:$0xff]
    %v6998 = vld [vmem:[%s1901 + $0x8] sm:$0xff]
    %v6999 = vld [vmem:[%s1901 + $0x10] sm:$0xff]
    %v7000 = vld [vmem:[%s1901 + $0x18] sm:$0xff]
    %v7001 = vld [vmem:[%s1896 + $0x20] sm:$0xff]
    %v7002 = vld [vmem:[%s1896 + $0x28] sm:$0xff]
    %v7003 = vld [vmem:[%s1896 + $0x30] sm:$0xff]
    %v7004 = vld [vmem:[%s1896 + $0x38] sm:$0xff]
    %v7005 = vadd.f32 %v6868, %v6997
    %v7006 = vadd.f32 %v6870, %v6998
    %v7007 = vadd.f32 %v6909, %v6999
    %v7008 = vadd.f32 %v6911, %v7000
    %v7009 = vadd.f32 %v6950, %v7001
    %v7010 = vadd.f32 %v6952, %v7002
    %v7011 = vadd.f32 %v6991, %v7003
    %v7012 = vadd.f32 %v6993, %v7004
    %v7013 = vxor.u32 %v7005, 2147483648
    %v7014 = vmul.f32 %v7013, 1.442695
    %v7015 = vpow.pop %v7014
    %v7016 = vadd.f32 %v7015, 1.0
    %v7017 = vrcp.pop %v7016
    %v7018 = vmul.f32 1.0, %v7017
    %v7019 = vxor.u32 %v7006, 2147483648
    %v7020 = vmul.f32 %v7019, 1.442695
    %v7021 = vpow.pop %v7020
    %v7022 = vadd.f32 %v7021, 1.0
    %v7023 = vrcp.pop %v7022
    %v7024 = vmul.f32 1.0, %v7023
    %v7025 = vtanh.pop %v7007
    %v7026 = vxor.u32 %v7008, 2147483648
    %v7027 = vmul.f32 %v7026, 1.442695
    %v7028 = vpow.pop %v7027
    %v7029 = vadd.f32 %v7028, 1.0
    %v7030 = vrcp.pop %v7029
    %v7031 = vmul.f32 1.0, %v7030
    %v7032 = vmul.f32 %v7024, %v6015
    %v7033 = vmul.f32 %v7018, %v7025
    %v7034 = vadd.f32 %v7032, %v7033
    %v7035 = vtanh.pop %v7034
    %v7036 = vmul.f32 %v7031, %v7035
    %v7037 = vxor.u32 %v7009, 2147483648
    %v7038 = vmul.f32 %v7037, 1.442695
    %v7039 = vpow.pop %v7038
    %v7040 = vadd.f32 %v7039, 1.0
    %v7041 = vrcp.pop %v7040
    %v7042 = vmul.f32 1.0, %v7041
    %v7043 = vxor.u32 %v7010, 2147483648
    %v7044 = vmul.f32 %v7043, 1.442695
    %v7045 = vpow.pop %v7044
    %v7046 = vadd.f32 %v7045, 1.0
    %v7047 = vrcp.pop %v7046
    %v7048 = vmul.f32 1.0, %v7047
    %v7049 = vtanh.pop %v7011
    %v7050 = vxor.u32 %v7012, 2147483648
    %v7051 = vmul.f32 %v7050, 1.442695
    %v7052 = vpow.pop %v7051
    %v7053 = vadd.f32 %v7052, 1.0
    %v7054 = vrcp.pop %v7053
    %v7055 = vmul.f32 1.0, %v7054
    %v7056 = vmul.f32 %v7048, %v6050
    %v7057 = vmul.f32 %v7042, %v7049
    %v7058 = vadd.f32 %v7056, %v7057
    %v7059 = vtanh.pop %v7058
    %v7060 = vmul.f32 %v7055, %v7059
    %s7061 = scalar_lea.vmem %s1, 8
    %v7062 = vld [vmem:[%s7061] sm:$0xff]
    %7064 = vset.pattern.permute.xlu0 0
    %7065 = vperm.xlu0 %7064, %v7062
    %v7066 = vpop.permute.xlu0 %7065
    %v7068 = vmul.f32 %v7060, %v7066
    %v7069 = vmul.f32 %v7058, %v7066
    %v7070 = vmax.f32 %v7036, 0.0
    %v7071 = vmul.f32 %v7070, %v939
    %7072 = vadd.xlane.f32.xlu0 %v7071
    %v7073 = vpop.xlane.xlu0 %7072
    %s7074 = scalar_lea.vmem [#allocation4], 48
    %7075 = vst.msk [vmem:[%s7074] sm:$0xff] %vm944, %v7073
    %v7076 = vmax.f32 %v7068, 0.0
    %v7077 = vmul.f32 %v7076, %v951
    %7078 = vadd.xlane.f32.xlu0 %v7077
    %v7079 = vpop.xlane.xlu0 %7078
    %s7080 = scalar_lea.vmem [#allocation5], 8
    %7081 = vst.msk [vmem:[%s7080] sm:$0xff] %vm944, %v7079
    %v7082 = vpack.c.bf16 %v7036, %v7036
    %v7083 = vpack.c.bf16 %v7068, %v7068
    %v7084 = vld [vmem:[#allocation3] sm:$0xff]
    %v7085 = vld [vmem:[#allocation3 + $0x8] sm:$0xff]
    %v7086 = vld [vmem:[#allocation3 + $0x10] sm:$0xff]
    %v7087 = vld [vmem:[#allocation3 + $0x18] sm:$0xff]
    %v7088 = vld [vmem:[#allocation3 + $0x20] sm:$0xff]
    %v7089 = vld [vmem:[#allocation3 + $0x28] sm:$0xff]
    %v7090 = vld [vmem:[#allocation3 + $0x30] sm:$0xff]
    %v7091 = vld [vmem:[#allocation3 + $0x38] sm:$0xff]
    %v7092 = vld [vmem:[#allocation3 + $0x40] sm:$0xff]
    %v7093 = vld [vmem:[#allocation3 + $0x48] sm:$0xff]
    %v7094 = vld [vmem:[#allocation3 + $0x50] sm:$0xff]
    %v7095 = vld [vmem:[#allocation3 + $0x58] sm:$0xff]
    %v7096 = vld [vmem:[#allocation3 + $0x60] sm:$0xff]
    %v7097 = vld [vmem:[#allocation3 + $0x68] sm:$0xff]
    %v7098 = vld [vmem:[#allocation3 + $0x70] sm:$0xff]
    %v7099 = vld [vmem:[#allocation3 + $0x78] sm:$0xff]
    %v7100 = vld [vmem:[#allocation3 + $0x80] sm:$0xff]
    %v7101 = vld [vmem:[#allocation3 + $0x88] sm:$0xff]
    %v7102 = vld [vmem:[#allocation3 + $0x90] sm:$0xff]
    %v7103 = vld [vmem:[#allocation3 + $0x98] sm:$0xff]
    %v7104 = vld [vmem:[#allocation3 + $0xa0] sm:$0xff]
    %v7105 = vld [vmem:[#allocation3 + $0xa8] sm:$0xff]
    %v7106 = vld [vmem:[#allocation3 + $0xb0] sm:$0xff]
    %v7107 = vld [vmem:[#allocation3 + $0xb8] sm:$0xff]
    %v7108 = vld [vmem:[#allocation3 + $0xc0] sm:$0xff]
    %v7109 = vld [vmem:[#allocation3 + $0xc8] sm:$0xff]
    %v7110 = vld [vmem:[#allocation3 + $0xd0] sm:$0xff]
    %v7111 = vld [vmem:[#allocation3 + $0xd8] sm:$0xff]
    %v7112 = vld [vmem:[#allocation3 + $0xe0] sm:$0xff]
    %v7113 = vld [vmem:[#allocation3 + $0xe8] sm:$0xff]
    %v7114 = vld [vmem:[#allocation3 + $0xf0] sm:$0xff]
    %v7115 = vld [vmem:[#allocation3 + $0xf8] sm:$0xff]
    %v7116 = vld [vmem:[#allocation3 + $0x100] sm:$0xff]
    %v7117 = vld [vmem:[#allocation3 + $0x108] sm:$0xff]
    %v7118 = vld [vmem:[#allocation3 + $0x110] sm:$0xff]
    %v7119 = vld [vmem:[#allocation3 + $0x118] sm:$0xff]
    %v7120 = vld [vmem:[#allocation3 + $0x120] sm:$0xff]
    %v7121 = vld [vmem:[#allocation3 + $0x128] sm:$0xff]
    %v7122 = vld [vmem:[#allocation3 + $0x130] sm:$0xff]
    %v7123 = vld [vmem:[#allocation3 + $0x138] sm:$0xff]
    %v7124 = vld [vmem:[#allocation3 + $0x140] sm:$0xff]
    %v7125 = vld [vmem:[#allocation3 + $0x148] sm:$0xff]
    %v7126 = vld [vmem:[#allocation3 + $0x150] sm:$0xff]
    %v7127 = vld [vmem:[#allocation3 + $0x158] sm:$0xff]
    %v7128 = vld [vmem:[#allocation3 + $0x160] sm:$0xff]
    %v7129 = vld [vmem:[#allocation3 + $0x168] sm:$0xff]
    %v7130 = vld [vmem:[#allocation3 + $0x170] sm:$0xff]
    %v7131 = vld [vmem:[#allocation3 + $0x178] sm:$0xff]
    %v7132 = vld [vmem:[#allocation3 + $0x180] sm:$0xff]
    %v7133 = vld [vmem:[#allocation3 + $0x188] sm:$0xff]
    %v7134 = vld [vmem:[#allocation3 + $0x190] sm:$0xff]
    %v7135 = vld [vmem:[#allocation3 + $0x198] sm:$0xff]
    %v7136 = vld [vmem:[#allocation3 + $0x1a0] sm:$0xff]
    %v7137 = vld [vmem:[#allocation3 + $0x1a8] sm:$0xff]
    %v7138 = vld [vmem:[#allocation3 + $0x1b0] sm:$0xff]
    %v7139 = vld [vmem:[#allocation3 + $0x1b8] sm:$0xff]
    %v7140 = vld [vmem:[#allocation3 + $0x1c0] sm:$0xff]
    %v7141 = vld [vmem:[#allocation3 + $0x1c8] sm:$0xff]
    %v7142 = vld [vmem:[#allocation3 + $0x1d0] sm:$0xff]
    %v7143 = vld [vmem:[#allocation3 + $0x1d8] sm:$0xff]
    %v7144 = vld [vmem:[#allocation3 + $0x1e0] sm:$0xff]
    %v7145 = vld [vmem:[#allocation3 + $0x1e8] sm:$0xff]
    %v7146 = vld [vmem:[#allocation3 + $0x1f0] sm:$0xff]
    %v7147 = vld [vmem:[#allocation3 + $0x1f8] sm:$0xff]
    %v7148 = vld [vmem:[#allocation3 + $0x200] sm:$0xff]
    %v7149 = vld [vmem:[#allocation3 + $0x208] sm:$0xff]
    %v7150 = vld [vmem:[#allocation3 + $0x210] sm:$0xff]
    %v7151 = vld [vmem:[#allocation3 + $0x218] sm:$0xff]
    %v7152 = vld [vmem:[#allocation3 + $0x220] sm:$0xff]
    %v7153 = vld [vmem:[#allocation3 + $0x228] sm:$0xff]
    %v7154 = vld [vmem:[#allocation3 + $0x230] sm:$0xff]
    %v7155 = vld [vmem:[#allocation3 + $0x238] sm:$0xff]
    %v7156 = vld [vmem:[#allocation3 + $0x240] sm:$0xff]
    %v7157 = vld [vmem:[#allocation3 + $0x248] sm:$0xff]
    %v7158 = vld [vmem:[#allocation3 + $0x250] sm:$0xff]
    %v7159 = vld [vmem:[#allocation3 + $0x258] sm:$0xff]
    %v7160 = vld [vmem:[#allocation3 + $0x260] sm:$0xff]
    %v7161 = vld [vmem:[#allocation3 + $0x268] sm:$0xff]
    %v7162 = vld [vmem:[#allocation3 + $0x270] sm:$0xff]
    %v7163 = vld [vmem:[#allocation3 + $0x278] sm:$0xff]
    %v7164 = vld [vmem:[#allocation3 + $0x280] sm:$0xff]
    %v7165 = vld [vmem:[#allocation3 + $0x288] sm:$0xff]
    %v7166 = vld [vmem:[#allocation3 + $0x290] sm:$0xff]
    %v7167 = vld [vmem:[#allocation3 + $0x298] sm:$0xff]
    %v7168 = vld [vmem:[#allocation3 + $0x2a0] sm:$0xff]
    %v7169 = vld [vmem:[#allocation3 + $0x2a8] sm:$0xff]
    %v7170 = vld [vmem:[#allocation3 + $0x2b0] sm:$0xff]
    %v7171 = vld [vmem:[#allocation3 + $0x2b8] sm:$0xff]
    %v7172 = vld [vmem:[#allocation3 + $0x2c0] sm:$0xff]
    %v7173 = vld [vmem:[#allocation3 + $0x2c8] sm:$0xff]
    %v7174 = vld [vmem:[#allocation3 + $0x2d0] sm:$0xff]
    %v7175 = vld [vmem:[#allocation3 + $0x2d8] sm:$0xff]
    %v7176 = vld [vmem:[#allocation3 + $0x2e0] sm:$0xff]
    %v7177 = vld [vmem:[#allocation3 + $0x2e8] sm:$0xff]
    %v7178 = vld [vmem:[#allocation3 + $0x2f0] sm:$0xff]
    %v7179 = vld [vmem:[#allocation3 + $0x2f8] sm:$0xff]
    %v7180 = vld [vmem:[#allocation3 + $0x300] sm:$0xff]
    %v7181 = vld [vmem:[#allocation3 + $0x308] sm:$0xff]
    %v7182 = vld [vmem:[#allocation3 + $0x310] sm:$0xff]
    %v7183 = vld [vmem:[#allocation3 + $0x318] sm:$0xff]
    %v7184 = vld [vmem:[#allocation3 + $0x320] sm:$0xff]
    %v7185 = vld [vmem:[#allocation3 + $0x328] sm:$0xff]
    %v7186 = vld [vmem:[#allocation3 + $0x330] sm:$0xff]
    %v7187 = vld [vmem:[#allocation3 + $0x338] sm:$0xff]
    %v7188 = vld [vmem:[#allocation3 + $0x340] sm:$0xff]
    %v7189 = vld [vmem:[#allocation3 + $0x348] sm:$0xff]
    %v7190 = vld [vmem:[#allocation3 + $0x350] sm:$0xff]
    %v7191 = vld [vmem:[#allocation3 + $0x358] sm:$0xff]
    %v7192 = vld [vmem:[#allocation3 + $0x360] sm:$0xff]
    %v7193 = vld [vmem:[#allocation3 + $0x368] sm:$0xff]
    %v7194 = vld [vmem:[#allocation3 + $0x370] sm:$0xff]
    %v7195 = vld [vmem:[#allocation3 + $0x378] sm:$0xff]
    %v7196 = vld [vmem:[#allocation3 + $0x380] sm:$0xff]
    %v7197 = vld [vmem:[#allocation3 + $0x388] sm:$0xff]
    %v7198 = vld [vmem:[#allocation3 + $0x390] sm:$0xff]
    %v7199 = vld [vmem:[#allocation3 + $0x398] sm:$0xff]
    %v7200 = vld [vmem:[#allocation3 + $0x3a0] sm:$0xff]
    %v7201 = vld [vmem:[#allocation3 + $0x3a8] sm:$0xff]
    %v7202 = vld [vmem:[#allocation3 + $0x3b0] sm:$0xff]
    %v7203 = vld [vmem:[#allocation3 + $0x3b8] sm:$0xff]
    %v7204 = vld [vmem:[#allocation3 + $0x3c0] sm:$0xff]
    %v7205 = vld [vmem:[#allocation3 + $0x3c8] sm:$0xff]
    %v7206 = vld [vmem:[#allocation3 + $0x3d0] sm:$0xff]
    %v7207 = vld [vmem:[#allocation3 + $0x3d8] sm:$0xff]
    %v7208 = vld [vmem:[#allocation3 + $0x3e0] sm:$0xff]
    %v7209 = vld [vmem:[#allocation3 + $0x3e8] sm:$0xff]
    %v7210 = vld [vmem:[#allocation3 + $0x3f0] sm:$0xff]
    %v7211 = vld [vmem:[#allocation3 + $0x3f8] sm:$0xff]
    %v7340 = vunpack.c.l.b16 %v7084
    %v7341 = vunpack.c.h.b16 %v7084
    %v7342 = vunpack.c.l.b16 %v7085
    %v7343 = vunpack.c.h.b16 %v7085
    %v7344 = vunpack.c.l.b16 %v7086
    %v7345 = vunpack.c.h.b16 %v7086
    %v7346 = vunpack.c.l.b16 %v7087
    %v7347 = vunpack.c.h.b16 %v7087
    %v7348 = vunpack.c.l.b16 %v7088
    %v7349 = vunpack.c.h.b16 %v7088
    %v7350 = vunpack.c.l.b16 %v7089
    %v7351 = vunpack.c.h.b16 %v7089
    %v7352 = vunpack.c.l.b16 %v7090
    %v7353 = vunpack.c.h.b16 %v7090
    %v7354 = vunpack.c.l.b16 %v7091
    %v7355 = vunpack.c.h.b16 %v7091
    %v7356 = vunpack.c.l.b16 %v7092
    %v7357 = vunpack.c.h.b16 %v7092
    %v7358 = vunpack.c.l.b16 %v7093
    %v7359 = vunpack.c.h.b16 %v7093
    %v7360 = vunpack.c.l.b16 %v7094
    %v7361 = vunpack.c.h.b16 %v7094
    %v7362 = vunpack.c.l.b16 %v7095
    %v7363 = vunpack.c.h.b16 %v7095
    %v7364 = vunpack.c.l.b16 %v7096
    %v7365 = vunpack.c.h.b16 %v7096
    %v7366 = vunpack.c.l.b16 %v7097
    %v7367 = vunpack.c.h.b16 %v7097
    %v7368 = vunpack.c.l.b16 %v7098
    %v7369 = vunpack.c.h.b16 %v7098
    %v7370 = vunpack.c.l.b16 %v7099
    %v7371 = vunpack.c.h.b16 %v7099
    %v7372 = vunpack.c.l.b16 %v7100
    %v7373 = vunpack.c.h.b16 %v7100
    %v7374 = vunpack.c.l.b16 %v7101
    %v7375 = vunpack.c.h.b16 %v7101
    %v7376 = vunpack.c.l.b16 %v7102
    %v7377 = vunpack.c.h.b16 %v7102
    %v7378 = vunpack.c.l.b16 %v7103
    %v7379 = vunpack.c.h.b16 %v7103
    %v7380 = vunpack.c.l.b16 %v7104
    %v7381 = vunpack.c.h.b16 %v7104
    %v7382 = vunpack.c.l.b16 %v7105
    %v7383 = vunpack.c.h.b16 %v7105
    %v7384 = vunpack.c.l.b16 %v7106
    %v7385 = vunpack.c.h.b16 %v7106
    %v7386 = vunpack.c.l.b16 %v7107
    %v7387 = vunpack.c.h.b16 %v7107
    %v7388 = vunpack.c.l.b16 %v7108
    %v7389 = vunpack.c.h.b16 %v7108
    %v7390 = vunpack.c.l.b16 %v7109
    %v7391 = vunpack.c.h.b16 %v7109
    %v7392 = vunpack.c.l.b16 %v7110
    %v7393 = vunpack.c.h.b16 %v7110
    %v7394 = vunpack.c.l.b16 %v7111
    %v7395 = vunpack.c.h.b16 %v7111
    %v7396 = vunpack.c.l.b16 %v7112
    %v7397 = vunpack.c.h.b16 %v7112
    %v7398 = vunpack.c.l.b16 %v7113
    %v7399 = vunpack.c.h.b16 %v7113
    %v7400 = vunpack.c.l.b16 %v7114
    %v7401 = vunpack.c.h.b16 %v7114
    %v7402 = vunpack.c.l.b16 %v7115
    %v7403 = vunpack.c.h.b16 %v7115
    %v7404 = vunpack.c.l.b16 %v7116
    %v7405 = vunpack.c.h.b16 %v7116
    %v7406 = vunpack.c.l.b16 %v7117
    %v7407 = vunpack.c.h.b16 %v7117
    %v7408 = vunpack.c.l.b16 %v7118
    %v7409 = vunpack.c.h.b16 %v7118
    %v7410 = vunpack.c.l.b16 %v7119
    %v7411 = vunpack.c.h.b16 %v7119
    %v7412 = vunpack.c.l.b16 %v7120
    %v7413 = vunpack.c.h.b16 %v7120
    %v7414 = vunpack.c.l.b16 %v7121
    %v7415 = vunpack.c.h.b16 %v7121
    %v7416 = vunpack.c.l.b16 %v7122
    %v7417 = vunpack.c.h.b16 %v7122
    %v7418 = vunpack.c.l.b16 %v7123
    %v7419 = vunpack.c.h.b16 %v7123
    %v7420 = vunpack.c.l.b16 %v7124
    %v7421 = vunpack.c.h.b16 %v7124
    %v7422 = vunpack.c.l.b16 %v7125
    %v7423 = vunpack.c.h.b16 %v7125
    %v7424 = vunpack.c.l.b16 %v7126
    %v7425 = vunpack.c.h.b16 %v7126
    %v7426 = vunpack.c.l.b16 %v7127
    %v7427 = vunpack.c.h.b16 %v7127
    %v7428 = vunpack.c.l.b16 %v7128
    %v7429 = vunpack.c.h.b16 %v7128
    %v7430 = vunpack.c.l.b16 %v7129
    %v7431 = vunpack.c.h.b16 %v7129
    %v7432 = vunpack.c.l.b16 %v7130
    %v7433 = vunpack.c.h.b16 %v7130
    %v7434 = vunpack.c.l.b16 %v7131
    %v7435 = vunpack.c.h.b16 %v7131
    %v7436 = vunpack.c.l.b16 %v7132
    %v7437 = vunpack.c.h.b16 %v7132
    %v7438 = vunpack.c.l.b16 %v7133
    %v7439 = vunpack.c.h.b16 %v7133
    %v7440 = vunpack.c.l.b16 %v7134
    %v7441 = vunpack.c.h.b16 %v7134
    %v7442 = vunpack.c.l.b16 %v7135
    %v7443 = vunpack.c.h.b16 %v7135
    %v7444 = vunpack.c.l.b16 %v7136
    %v7445 = vunpack.c.h.b16 %v7136
    %v7446 = vunpack.c.l.b16 %v7137
    %v7447 = vunpack.c.h.b16 %v7137
    %v7448 = vunpack.c.l.b16 %v7138
    %v7449 = vunpack.c.h.b16 %v7138
    %v7450 = vunpack.c.l.b16 %v7139
    %v7451 = vunpack.c.h.b16 %v7139
    %v7452 = vunpack.c.l.b16 %v7140
    %v7453 = vunpack.c.h.b16 %v7140
    %v7454 = vunpack.c.l.b16 %v7141
    %v7455 = vunpack.c.h.b16 %v7141
    %v7456 = vunpack.c.l.b16 %v7142
    %v7457 = vunpack.c.h.b16 %v7142
    %v7458 = vunpack.c.l.b16 %v7143
    %v7459 = vunpack.c.h.b16 %v7143
    %v7460 = vunpack.c.l.b16 %v7144
    %v7461 = vunpack.c.h.b16 %v7144
    %v7462 = vunpack.c.l.b16 %v7145
    %v7463 = vunpack.c.h.b16 %v7145
    %v7464 = vunpack.c.l.b16 %v7146
    %v7465 = vunpack.c.h.b16 %v7146
    %v7466 = vunpack.c.l.b16 %v7147
    %v7467 = vunpack.c.h.b16 %v7147
    %v7468 = vunpack.c.l.b16 %v7148
    %v7469 = vunpack.c.h.b16 %v7148
    %v7470 = vunpack.c.l.b16 %v7149
    %v7471 = vunpack.c.h.b16 %v7149
    %v7472 = vunpack.c.l.b16 %v7150
    %v7473 = vunpack.c.h.b16 %v7150
    %v7474 = vunpack.c.l.b16 %v7151
    %v7475 = vunpack.c.h.b16 %v7151
    %v7476 = vunpack.c.l.b16 %v7152
    %v7477 = vunpack.c.h.b16 %v7152
    %v7478 = vunpack.c.l.b16 %v7153
    %v7479 = vunpack.c.h.b16 %v7153
    %v7480 = vunpack.c.l.b16 %v7154
    %v7481 = vunpack.c.h.b16 %v7154
    %v7482 = vunpack.c.l.b16 %v7155
    %v7483 = vunpack.c.h.b16 %v7155
    %v7484 = vunpack.c.l.b16 %v7156
    %v7485 = vunpack.c.h.b16 %v7156
    %v7486 = vunpack.c.l.b16 %v7157
    %v7487 = vunpack.c.h.b16 %v7157
    %v7488 = vunpack.c.l.b16 %v7158
    %v7489 = vunpack.c.h.b16 %v7158
    %v7490 = vunpack.c.l.b16 %v7159
    %v7491 = vunpack.c.h.b16 %v7159
    %v7492 = vunpack.c.l.b16 %v7160
    %v7493 = vunpack.c.h.b16 %v7160
    %v7494 = vunpack.c.l.b16 %v7161
    %v7495 = vunpack.c.h.b16 %v7161
    %v7496 = vunpack.c.l.b16 %v7162
    %v7497 = vunpack.c.h.b16 %v7162
    %v7498 = vunpack.c.l.b16 %v7163
    %v7499 = vunpack.c.h.b16 %v7163
    %v7500 = vunpack.c.l.b16 %v7164
    %v7501 = vunpack.c.h.b16 %v7164
    %v7502 = vunpack.c.l.b16 %v7165
    %v7503 = vunpack.c.h.b16 %v7165
    %v7504 = vunpack.c.l.b16 %v7166
    %v7505 = vunpack.c.h.b16 %v7166
    %v7506 = vunpack.c.l.b16 %v7167
    %v7507 = vunpack.c.h.b16 %v7167
    %v7508 = vunpack.c.l.b16 %v7168
    %v7509 = vunpack.c.h.b16 %v7168
    %v7510 = vunpack.c.l.b16 %v7169
    %v7511 = vunpack.c.h.b16 %v7169
    %v7512 = vunpack.c.l.b16 %v7170
    %v7513 = vunpack.c.h.b16 %v7170
    %v7514 = vunpack.c.l.b16 %v7171
    %v7515 = vunpack.c.h.b16 %v7171
    %v7516 = vunpack.c.l.b16 %v7172
    %v7517 = vunpack.c.h.b16 %v7172
    %v7518 = vunpack.c.l.b16 %v7173
    %v7519 = vunpack.c.h.b16 %v7173
    %v7520 = vunpack.c.l.b16 %v7174
    %v7521 = vunpack.c.h.b16 %v7174
    %v7522 = vunpack.c.l.b16 %v7175
    %v7523 = vunpack.c.h.b16 %v7175
    %v7524 = vunpack.c.l.b16 %v7176
    %v7525 = vunpack.c.h.b16 %v7176
    %v7526 = vunpack.c.l.b16 %v7177
    %v7527 = vunpack.c.h.b16 %v7177
    %v7528 = vunpack.c.l.b16 %v7178
    %v7529 = vunpack.c.h.b16 %v7178
    %v7530 = vunpack.c.l.b16 %v7179
    %v7531 = vunpack.c.h.b16 %v7179
    %v7532 = vunpack.c.l.b16 %v7180
    %v7533 = vunpack.c.h.b16 %v7180
    %v7534 = vunpack.c.l.b16 %v7181
    %v7535 = vunpack.c.h.b16 %v7181
    %v7536 = vunpack.c.l.b16 %v7182
    %v7537 = vunpack.c.h.b16 %v7182
    %v7538 = vunpack.c.l.b16 %v7183
    %v7539 = vunpack.c.h.b16 %v7183
    %v7540 = vunpack.c.l.b16 %v7184
    %v7541 = vunpack.c.h.b16 %v7184
    %v7542 = vunpack.c.l.b16 %v7185
    %v7543 = vunpack.c.h.b16 %v7185
    %v7544 = vunpack.c.l.b16 %v7186
    %v7545 = vunpack.c.h.b16 %v7186
    %v7546 = vunpack.c.l.b16 %v7187
    %v7547 = vunpack.c.h.b16 %v7187
    %v7548 = vunpack.c.l.b16 %v7188
    %v7549 = vunpack.c.h.b16 %v7188
    %v7550 = vunpack.c.l.b16 %v7189
    %v7551 = vunpack.c.h.b16 %v7189
    %v7552 = vunpack.c.l.b16 %v7190
    %v7553 = vunpack.c.h.b16 %v7190
    %v7554 = vunpack.c.l.b16 %v7191
    %v7555 = vunpack.c.h.b16 %v7191
    %v7556 = vunpack.c.l.b16 %v7192
    %v7557 = vunpack.c.h.b16 %v7192
    %v7558 = vunpack.c.l.b16 %v7193
    %v7559 = vunpack.c.h.b16 %v7193
    %v7560 = vunpack.c.l.b16 %v7194
    %v7561 = vunpack.c.h.b16 %v7194
    %v7562 = vunpack.c.l.b16 %v7195
    %v7563 = vunpack.c.h.b16 %v7195
    %v7564 = vunpack.c.l.b16 %v7196
    %v7565 = vunpack.c.h.b16 %v7196
    %v7566 = vunpack.c.l.b16 %v7197
    %v7567 = vunpack.c.h.b16 %v7197
    %v7568 = vunpack.c.l.b16 %v7198
    %v7569 = vunpack.c.h.b16 %v7198
    %v7570 = vunpack.c.l.b16 %v7199
    %v7571 = vunpack.c.h.b16 %v7199
    %v7572 = vunpack.c.l.b16 %v7200
    %v7573 = vunpack.c.h.b16 %v7200
    %v7574 = vunpack.c.l.b16 %v7201
    %v7575 = vunpack.c.h.b16 %v7201
    %v7576 = vunpack.c.l.b16 %v7202
    %v7577 = vunpack.c.h.b16 %v7202
    %v7578 = vunpack.c.l.b16 %v7203
    %v7579 = vunpack.c.h.b16 %v7203
    %v7580 = vunpack.c.l.b16 %v7204
    %v7581 = vunpack.c.h.b16 %v7204
    %v7582 = vunpack.c.l.b16 %v7205
    %v7583 = vunpack.c.h.b16 %v7205
    %v7584 = vunpack.c.l.b16 %v7206
    %v7585 = vunpack.c.h.b16 %v7206
    %v7586 = vunpack.c.l.b16 %v7207
    %v7587 = vunpack.c.h.b16 %v7207
    %v7588 = vunpack.c.l.b16 %v7208
    %v7589 = vunpack.c.h.b16 %v7208
    %v7590 = vunpack.c.l.b16 %v7209
    %v7591 = vunpack.c.h.b16 %v7209
    %v7592 = vunpack.c.l.b16 %v7210
    %v7593 = vunpack.c.h.b16 %v7210
    %v7594 = vunpack.c.l.b16 %v7211
    %v7595 = vunpack.c.h.b16 %v7211
    %v7596 = vpack.c.b16 %v7348, %v7340
    %v7597 = vpack.c.b16 %v7349, %v7341
    %v7598 = vpack.c.b16 %v7350, %v7342
    %v7599 = vpack.c.b16 %v7351, %v7343
    %v7600 = vpack.c.b16 %v7352, %v7344
    %v7601 = vpack.c.b16 %v7353, %v7345
    %v7602 = vpack.c.b16 %v7354, %v7346
    %v7603 = vpack.c.b16 %v7355, %v7347
    %v7604 = vpack.c.b16 %v7364, %v7356
    %v7605 = vpack.c.b16 %v7365, %v7357
    %v7606 = vpack.c.b16 %v7366, %v7358
    %v7607 = vpack.c.b16 %v7367, %v7359
    %v7608 = vpack.c.b16 %v7368, %v7360
    %v7609 = vpack.c.b16 %v7369, %v7361
    %v7610 = vpack.c.b16 %v7370, %v7362
    %v7611 = vpack.c.b16 %v7371, %v7363
    %v7612 = vpack.c.b16 %v7380, %v7372
    %v7613 = vpack.c.b16 %v7381, %v7373
    %v7614 = vpack.c.b16 %v7382, %v7374
    %v7615 = vpack.c.b16 %v7383, %v7375
    %v7616 = vpack.c.b16 %v7384, %v7376
    %v7617 = vpack.c.b16 %v7385, %v7377
    %v7618 = vpack.c.b16 %v7386, %v7378
    %v7619 = vpack.c.b16 %v7387, %v7379
    %v7620 = vpack.c.b16 %v7396, %v7388
    %v7621 = vpack.c.b16 %v7397, %v7389
    %v7622 = vpack.c.b16 %v7398, %v7390
    %v7623 = vpack.c.b16 %v7399, %v7391
    %v7624 = vpack.c.b16 %v7400, %v7392
    %v7625 = vpack.c.b16 %v7401, %v7393
    %v7626 = vpack.c.b16 %v7402, %v7394
    %v7627 = vpack.c.b16 %v7403, %v7395
    %v7628 = vpack.c.b16 %v7412, %v7404
    %v7629 = vpack.c.b16 %v7413, %v7405
    %v7630 = vpack.c.b16 %v7414, %v7406
    %v7631 = vpack.c.b16 %v7415, %v7407
    %v7632 = vpack.c.b16 %v7416, %v7408
    %v7633 = vpack.c.b16 %v7417, %v7409
    %v7634 = vpack.c.b16 %v7418, %v7410
    %v7635 = vpack.c.b16 %v7419, %v7411
    %v7636 = vpack.c.b16 %v7428, %v7420
    %v7637 = vpack.c.b16 %v7429, %v7421
    %v7638 = vpack.c.b16 %v7430, %v7422
    %v7639 = vpack.c.b16 %v7431, %v7423
    %v7640 = vpack.c.b16 %v7432, %v7424
    %v7641 = vpack.c.b16 %v7433, %v7425
    %v7642 = vpack.c.b16 %v7434, %v7426
    %v7643 = vpack.c.b16 %v7435, %v7427
    %v7644 = vpack.c.b16 %v7444, %v7436
    %v7645 = vpack.c.b16 %v7445, %v7437
    %v7646 = vpack.c.b16 %v7446, %v7438
    %v7647 = vpack.c.b16 %v7447, %v7439
    %v7648 = vpack.c.b16 %v7448, %v7440
    %v7649 = vpack.c.b16 %v7449, %v7441
    %v7650 = vpack.c.b16 %v7450, %v7442
    %v7651 = vpack.c.b16 %v7451, %v7443
    %v7652 = vpack.c.b16 %v7460, %v7452
    %v7653 = vpack.c.b16 %v7461, %v7453
    %v7654 = vpack.c.b16 %v7462, %v7454
    %v7655 = vpack.c.b16 %v7463, %v7455
    %v7656 = vpack.c.b16 %v7464, %v7456
    %v7657 = vpack.c.b16 %v7465, %v7457
    %v7658 = vpack.c.b16 %v7466, %v7458
    %v7659 = vpack.c.b16 %v7467, %v7459
    %v7660 = vpack.c.b16 %v7476, %v7468
    %v7661 = vpack.c.b16 %v7477, %v7469
    %v7662 = vpack.c.b16 %v7478, %v7470
    %v7663 = vpack.c.b16 %v7479, %v7471
    %v7664 = vpack.c.b16 %v7480, %v7472
    %v7665 = vpack.c.b16 %v7481, %v7473
    %v7666 = vpack.c.b16 %v7482, %v7474
    %v7667 = vpack.c.b16 %v7483, %v7475
    %v7668 = vpack.c.b16 %v7492, %v7484
    %v7669 = vpack.c.b16 %v7493, %v7485
    %v7670 = vpack.c.b16 %v7494, %v7486
    %v7671 = vpack.c.b16 %v7495, %v7487
    %v7672 = vpack.c.b16 %v7496, %v7488
    %v7673 = vpack.c.b16 %v7497, %v7489
    %v7674 = vpack.c.b16 %v7498, %v7490
    %v7675 = vpack.c.b16 %v7499, %v7491
    %v7676 = vpack.c.b16 %v7508, %v7500
    %v7677 = vpack.c.b16 %v7509, %v7501
    %v7678 = vpack.c.b16 %v7510, %v7502
    %v7679 = vpack.c.b16 %v7511, %v7503
    %v7680 = vpack.c.b16 %v7512, %v7504
    %v7681 = vpack.c.b16 %v7513, %v7505
    %v7682 = vpack.c.b16 %v7514, %v7506
    %v7683 = vpack.c.b16 %v7515, %v7507
    %v7684 = vpack.c.b16 %v7524, %v7516
    %v7685 = vpack.c.b16 %v7525, %v7517
    %v7686 = vpack.c.b16 %v7526, %v7518
    %v7687 = vpack.c.b16 %v7527, %v7519
    %v7688 = vpack.c.b16 %v7528, %v7520
    %v7689 = vpack.c.b16 %v7529, %v7521
    %v7690 = vpack.c.b16 %v7530, %v7522
    %v7691 = vpack.c.b16 %v7531, %v7523
    %v7692 = vpack.c.b16 %v7540, %v7532
    %v7693 = vpack.c.b16 %v7541, %v7533
    %v7694 = vpack.c.b16 %v7542, %v7534
    %v7695 = vpack.c.b16 %v7543, %v7535
    %v7696 = vpack.c.b16 %v7544, %v7536
    %v7697 = vpack.c.b16 %v7545, %v7537
    %v7698 = vpack.c.b16 %v7546, %v7538
    %v7699 = vpack.c.b16 %v7547, %v7539
    %v7700 = vpack.c.b16 %v7556, %v7548
    %v7701 = vpack.c.b16 %v7557, %v7549
    %v7702 = vpack.c.b16 %v7558, %v7550
    %v7703 = vpack.c.b16 %v7559, %v7551
    %v7704 = vpack.c.b16 %v7560, %v7552
    %v7705 = vpack.c.b16 %v7561, %v7553
    %v7706 = vpack.c.b16 %v7562, %v7554
    %v7707 = vpack.c.b16 %v7563, %v7555
    %v7708 = vpack.c.b16 %v7572, %v7564
    %v7709 = vpack.c.b16 %v7573, %v7565
    %v7710 = vpack.c.b16 %v7574, %v7566
    %v7711 = vpack.c.b16 %v7575, %v7567
    %v7712 = vpack.c.b16 %v7576, %v7568
    %v7713 = vpack.c.b16 %v7577, %v7569
    %v7714 = vpack.c.b16 %v7578, %v7570
    %v7715 = vpack.c.b16 %v7579, %v7571
    %v7716 = vpack.c.b16 %v7588, %v7580
    %v7717 = vpack.c.b16 %v7589, %v7581
    %v7718 = vpack.c.b16 %v7590, %v7582
    %v7719 = vpack.c.b16 %v7591, %v7583
    %v7720 = vpack.c.b16 %v7592, %v7584
    %v7721 = vpack.c.b16 %v7593, %v7585
    %v7722 = vpack.c.b16 %v7594, %v7586
    %v7723 = vpack.c.b16 %v7595, %v7587
    %7852 = vmatprep.subr.bf16.mxu0 %v7653
    %7853 = vmatpush1.bf16.msra.mxu0 %v7652
    %7854 = vmatprep.subr.bf16.mxu0 %v7645
    %7855 = vmatpush1.bf16.msra.mxu0 %v7644
    %7856 = vmatprep.subr.bf16.mxu0 %v7637
    %7857 = vmatpush1.bf16.msra.mxu0 %v7636
    %7858 = vmatprep.subr.bf16.mxu0 %v7629
    %7859 = vmatpush1.bf16.msra.mxu0 %v7628
    %7860 = vmatprep.subr.bf16.mxu0 %v7621
    %7861 = vmatpush1.bf16.msra.mxu0 %v7620
    %7862 = vmatprep.subr.bf16.mxu0 %v7613
    %7863 = vmatpush1.bf16.msra.mxu0 %v7612
    %7864 = vmatprep.subr.bf16.mxu0 %v7605
    %7865 = vmatpush1.bf16.msra.mxu0 %v7604
    %7866 = vmatprep.subr.bf16.mxu0 %v7597
    %7867 = vmatpush1.bf16.msra.mxu0 %v7596
    %7868 = vmatprep.subr.bf16.mxu0 %v7717
    %7869 = vmatpush2.bf16.msra.mxu0 %v7716
    %7870 = vmatprep.subr.bf16.mxu0 %v7709
    %7871 = vmatpush2.bf16.msra.mxu0 %v7708
    %7872 = vmatprep.subr.bf16.mxu0 %v7701
    %7873 = vmatpush2.bf16.msra.mxu0 %v7700
    %7874 = vmatprep.subr.bf16.mxu0 %v7693
    %7875 = vmatpush2.bf16.msra.mxu0 %v7692
    %7876 = vmatprep.subr.bf16.mxu0 %v7685
    %7877 = vmatpush2.bf16.msra.mxu0 %v7684
    %7878 = vmatprep.subr.bf16.mxu0 %v7677
    %7879 = vmatpush2.bf16.msra.mxu0 %v7676
    %7880 = vmatprep.subr.bf16.mxu0 %v7669
    %7881 = vmatpush2.bf16.msra.mxu0 %v7668
    %7882 = vmatprep.subr.bf16.mxu0 %v7661
    %7883 = vmatpush2.bf16.msra.mxu0 %v7660
    %7884 = vmatprep.mubr.bf16.mxu0 %v7083
    %7885 = vmatmul.mubr.bf16.gmra.mxu0 %v7082
    %v7886 = vpop.f32.mrf.mxu0
    %v7887 = vadd.f32 0.0, %v7886
    %v7888 = vpop.f32.mrf.mxu0
    %v7889 = vadd.f32 0.0, %v7888
    %v7890 = vpop.f32.mrf.mxu0
    %v7891 = vpop.f32.mrf.mxu0
    %7892 = vdwg.mxu0
    %7893 = vmatprep.subr.bf16.mxu0 %v7655
    %7894 = vmatpush1.bf16.msra.mxu0 %v7654
    %7895 = vmatprep.subr.bf16.mxu0 %v7647
    %7896 = vmatpush1.bf16.msra.mxu0 %v7646
    %7897 = vmatprep.subr.bf16.mxu0 %v7639
    %7898 = vmatpush1.bf16.msra.mxu0 %v7638
    %7899 = vmatprep.subr.bf16.mxu0 %v7631
    %7900 = vmatpush1.bf16.msra.mxu0 %v7630
    %7901 = vmatprep.subr.bf16.mxu0 %v7623
    %7902 = vmatpush1.bf16.msra.mxu0 %v7622
    %7903 = vmatprep.subr.bf16.mxu0 %v7615
    %7904 = vmatpush1.bf16.msra.mxu0 %v7614
    %7905 = vmatprep.subr.bf16.mxu0 %v7607
    %7906 = vmatpush1.bf16.msra.mxu0 %v7606
    %7907 = vmatprep.subr.bf16.mxu0 %v7599
    %7908 = vmatpush1.bf16.msra.mxu0 %v7598
    %7909 = vmatprep.subr.bf16.mxu0 %v7719
    %7910 = vmatpush2.bf16.msra.mxu0 %v7718
    %7911 = vmatprep.subr.bf16.mxu0 %v7711
    %7912 = vmatpush2.bf16.msra.mxu0 %v7710
    %7913 = vmatprep.subr.bf16.mxu0 %v7703
    %7914 = vmatpush2.bf16.msra.mxu0 %v7702
    %7915 = vmatprep.subr.bf16.mxu0 %v7695
    %7916 = vmatpush2.bf16.msra.mxu0 %v7694
    %7917 = vmatprep.subr.bf16.mxu0 %v7687
    %7918 = vmatpush2.bf16.msra.mxu0 %v7686
    %7919 = vmatprep.subr.bf16.mxu0 %v7679
    %7920 = vmatpush2.bf16.msra.mxu0 %v7678
    %7921 = vmatprep.subr.bf16.mxu0 %v7671
    %7922 = vmatpush2.bf16.msra.mxu0 %v7670
    %7923 = vmatprep.subr.bf16.mxu0 %v7663
    %7924 = vmatpush2.bf16.msra.mxu0 %v7662
    %7925 = vmatprep.mubr.bf16.mxu0 %v7083
    %7926 = vmatmul.mubr.bf16.gmra.mxu0 %v7082
    %v7927 = vpop.f32.mrf.mxu0
    %v7928 = vadd.f32 0.0, %v7927
    %v7929 = vpop.f32.mrf.mxu0
    %v7930 = vadd.f32 0.0, %v7929
    %v7931 = vpop.f32.mrf.mxu0
    %v7932 = vpop.f32.mrf.mxu0
    %7933 = vdwg.mxu0
    %7934 = vmatprep.subr.bf16.mxu0 %v7657
    %7935 = vmatpush1.bf16.msra.mxu0 %v7656
    %7936 = vmatprep.subr.bf16.mxu0 %v7649
    %7937 = vmatpush1.bf16.msra.mxu0 %v7648
    %7938 = vmatprep.subr.bf16.mxu0 %v7641
    %7939 = vmatpush1.bf16.msra.mxu0 %v7640
    %7940 = vmatprep.subr.bf16.mxu0 %v7633
    %7941 = vmatpush1.bf16.msra.mxu0 %v7632
    %7942 = vmatprep.subr.bf16.mxu0 %v7625
    %7943 = vmatpush1.bf16.msra.mxu0 %v7624
    %7944 = vmatprep.subr.bf16.mxu0 %v7617
    %7945 = vmatpush1.bf16.msra.mxu0 %v7616
    %7946 = vmatprep.subr.bf16.mxu0 %v7609
    %7947 = vmatpush1.bf16.msra.mxu0 %v7608
    %7948 = vmatprep.subr.bf16.mxu0 %v7601
    %7949 = vmatpush1.bf16.msra.mxu0 %v7600
    %7950 = vmatprep.subr.bf16.mxu0 %v7721
    %7951 = vmatpush2.bf16.msra.mxu0 %v7720
    %7952 = vmatprep.subr.bf16.mxu0 %v7713
    %7953 = vmatpush2.bf16.msra.mxu0 %v7712
    %7954 = vmatprep.subr.bf16.mxu0 %v7705
    %7955 = vmatpush2.bf16.msra.mxu0 %v7704
    %7956 = vmatprep.subr.bf16.mxu0 %v7697
    %7957 = vmatpush2.bf16.msra.mxu0 %v7696
    %7958 = vmatprep.subr.bf16.mxu0 %v7689
    %7959 = vmatpush2.bf16.msra.mxu0 %v7688
    %7960 = vmatprep.subr.bf16.mxu0 %v7681
    %7961 = vmatpush2.bf16.msra.mxu0 %v7680
    %7962 = vmatprep.subr.bf16.mxu0 %v7673
    %7963 = vmatpush2.bf16.msra.mxu0 %v7672
    %7964 = vmatprep.subr.bf16.mxu0 %v7665
    %7965 = vmatpush2.bf16.msra.mxu0 %v7664
    %7966 = vmatprep.mubr.bf16.mxu0 %v7083
    %7967 = vmatmul.mubr.bf16.gmra.mxu0 %v7082
    %v7968 = vpop.f32.mrf.mxu0
    %v7969 = vadd.f32 0.0, %v7968
    %v7970 = vpop.f32.mrf.mxu0
    %v7971 = vadd.f32 0.0, %v7970
    %v7972 = vpop.f32.mrf.mxu0
    %v7973 = vpop.f32.mrf.mxu0
    %7974 = vdwg.mxu0
    %7975 = vmatprep.subr.bf16.mxu0 %v7659
    %7976 = vmatpush1.bf16.msra.mxu0 %v7658
    %7977 = vmatprep.subr.bf16.mxu0 %v7651
    %7978 = vmatpush1.bf16.msra.mxu0 %v7650
    %7979 = vmatprep.subr.bf16.mxu0 %v7643
    %7980 = vmatpush1.bf16.msra.mxu0 %v7642
    %7981 = vmatprep.subr.bf16.mxu0 %v7635
    %7982 = vmatpush1.bf16.msra.mxu0 %v7634
    %7983 = vmatprep.subr.bf16.mxu0 %v7627
    %7984 = vmatpush1.bf16.msra.mxu0 %v7626
    %7985 = vmatprep.subr.bf16.mxu0 %v7619
    %7986 = vmatpush1.bf16.msra.mxu0 %v7618
    %7987 = vmatprep.subr.bf16.mxu0 %v7611
    %7988 = vmatpush1.bf16.msra.mxu0 %v7610
    %7989 = vmatprep.subr.bf16.mxu0 %v7603
    %7990 = vmatpush1.bf16.msra.mxu0 %v7602
    %7991 = vmatprep.subr.bf16.mxu0 %v7723
    %7992 = vmatpush2.bf16.msra.mxu0 %v7722
    %7993 = vmatprep.subr.bf16.mxu0 %v7715
    %7994 = vmatpush2.bf16.msra.mxu0 %v7714
    %7995 = vmatprep.subr.bf16.mxu0 %v7707
    %7996 = vmatpush2.bf16.msra.mxu0 %v7706
    %7997 = vmatprep.subr.bf16.mxu0 %v7699
    %7998 = vmatpush2.bf16.msra.mxu0 %v7698
    %7999 = vmatprep.subr.bf16.mxu0 %v7691
    %8000 = vmatpush2.bf16.msra.mxu0 %v7690
    %8001 = vmatprep.subr.bf16.mxu0 %v7683
    %8002 = vmatpush2.bf16.msra.mxu0 %v7682
    %8003 = vmatprep.subr.bf16.mxu0 %v7675
    %8004 = vmatpush2.bf16.msra.mxu0 %v7674
    %8005 = vmatprep.subr.bf16.mxu0 %v7667
    %8006 = vmatpush2.bf16.msra.mxu0 %v7666
    %8007 = vmatprep.mubr.bf16.mxu0 %v7083
    %8008 = vmatmul.mubr.bf16.gmra.mxu0 %v7082
    %v8009 = vpop.f32.mrf.mxu0
    %v8010 = vadd.f32 0.0, %v8009
    %v8011 = vpop.f32.mrf.mxu0
    %v8012 = vadd.f32 0.0, %v8011
    %v8013 = vpop.f32.mrf.mxu0
    %v8014 = vpop.f32.mrf.mxu0
    %8015 = vdwg.mxu0
    %v8016 = vld [vmem:[%s872] sm:$0xff]
    %v8017 = vld [vmem:[%s872 + $0x8] sm:$0xff]
    %v8018 = vld [vmem:[%s872 + $0x10] sm:$0xff]
    %v8019 = vld [vmem:[%s872 + $0x18] sm:$0xff]
    %v8020 = vld [vmem:[#allocation2 + $0x20] sm:$0xff]
    %v8021 = vld [vmem:[#allocation2 + $0x28] sm:$0xff]
    %v8022 = vld [vmem:[#allocation2 + $0x30] sm:$0xff]
    %v8023 = vld [vmem:[#allocation2 + $0x38] sm:$0xff]
    %v8024 = vadd.f32 %v7887, %v8016
    %v8025 = vadd.f32 %v7889, %v8017
    %v8026 = vadd.f32 %v7928, %v8018
    %v8027 = vadd.f32 %v7930, %v8019
    %v8028 = vadd.f32 %v7969, %v8020
    %v8029 = vadd.f32 %v7971, %v8021
    %v8030 = vadd.f32 %v8010, %v8022
    %v8031 = vadd.f32 %v8012, %v8023
    %v8032 = vxor.u32 %v8024, 2147483648
    %v8033 = vmul.f32 %v8032, 1.442695
    %v8034 = vpow.pop %v8033
    %v8035 = vadd.f32 %v8034, 1.0
    %v8036 = vrcp.pop %v8035
    %v8037 = vmul.f32 1.0, %v8036
    %v8038 = vxor.u32 %v8025, 2147483648
    %v8039 = vmul.f32 %v8038, 1.442695
    %v8040 = vpow.pop %v8039
    %v8041 = vadd.f32 %v8040, 1.0
    %v8042 = vrcp.pop %v8041
    %v8043 = vmul.f32 1.0, %v8042
    %v8044 = vtanh.pop %v8026
    %v8045 = vxor.u32 %v8027, 2147483648
    %v8046 = vmul.f32 %v8045, 1.442695
    %v8047 = vpow.pop %v8046
    %v8048 = vadd.f32 %v8047, 1.0
    %v8049 = vrcp.pop %v8048
    %v8050 = vmul.f32 1.0, %v8049
    %v8051 = vmul.f32 %v8043, %v7034
    %v8052 = vmul.f32 %v8037, %v8044
    %v8053 = vadd.f32 %v8051, %v8052
    %v8054 = vtanh.pop %v8053
    %v8055 = vmul.f32 %v8050, %v8054
    %v8056 = vxor.u32 %v8028, 2147483648
    %v8057 = vmul.f32 %v8056, 1.442695
    %v8058 = vpow.pop %v8057
    %v8059 = vadd.f32 %v8058, 1.0
    %v8060 = vrcp.pop %v8059
    %v8061 = vmul.f32 1.0, %v8060
    %v8062 = vxor.u32 %v8029, 2147483648
    %v8063 = vmul.f32 %v8062, 1.442695
    %v8064 = vpow.pop %v8063
    %v8065 = vadd.f32 %v8064, 1.0
    %v8066 = vrcp.pop %v8065
    %v8067 = vmul.f32 1.0, %v8066
    %v8068 = vtanh.pop %v8030
    %v8069 = vxor.u32 %v8031, 2147483648
    %v8070 = vmul.f32 %v8069, 1.442695
    %v8071 = vpow.pop %v8070
    %v8072 = vadd.f32 %v8071, 1.0
    %v8073 = vrcp.pop %v8072
    %v8074 = vmul.f32 1.0, %v8073
    %v8075 = vmul.f32 %v8067, %v7069
    %v8076 = vmul.f32 %v8061, %v8068
    %v8077 = vadd.f32 %v8075, %v8076
    %v8078 = vtanh.pop %v8077
    %v8079 = vmul.f32 %v8074, %v8078
    %v8080 = vld [vmem:[%s1] sm:$0xff]
    %8082 = vset.pattern.permute.xlu0 0
    %8083 = vperm.xlu0 %8082, %v8080
    %v8084 = vpop.permute.xlu0 %8083
    %v8086 = vmul.f32 %v8079, %v8084
    %v8087 = vmax.f32 %v8055, 0.0
    %v8088 = vmul.f32 %v8087, %v939
    %8089 = vadd.xlane.f32.xlu0 %v8088
    %v8090 = vpop.xlane.xlu0 %8089
    %s8091 = scalar_lea.vmem [#allocation4], 56
    %8092 = vst.msk [vmem:[%s8091] sm:$0xff] %vm944, %v8090
    %v8093 = vmax.f32 %v8086, 0.0
    %v8094 = vmul.f32 %v8093, %v951
    %8095 = vadd.xlane.f32.xlu0 %v8094
    %v8096 = vpop.xlane.xlu0 %8095
    %8097 = vst.msk [vmem:[#allocation5] sm:$0xff] %vm944, %v8096
    %v8098 = vld [vmem:[#allocation4] sm:$0xff]
    %v8099 = vld [vmem:[#allocation4 + $0x8] sm:$0xff]
    %v8100 = vld [vmem:[#allocation4 + $0x10] sm:$0xff]
    %v8101 = vld [vmem:[#allocation4 + $0x18] sm:$0xff]
    %v8102 = vld [vmem:[#allocation4 + $0x20] sm:$0xff]
    %v8103 = vld [vmem:[#allocation4 + $0x28] sm:$0xff]
    %v8104 = vld [vmem:[#allocation4 + $0x30] sm:$0xff]
    %v8105 = vld [vmem:[#allocation4 + $0x38] sm:$0xff]
    %v8106 = vld [vmem:[%s1] sm:$0xff]
    %v8107 = vld [vmem:[%s1 + $0x8] sm:$0xff]
    %v8108 = vld [vmem:[%s1 + $0x10] sm:$0xff]
    %v8109 = vld [vmem:[%s1 + $0x18] sm:$0xff]
    %v8110 = vld [vmem:[%s1 + $0x20] sm:$0xff]
    %v8111 = vld [vmem:[%s1 + $0x28] sm:$0xff]
    %v8112 = vld [vmem:[%s1 + $0x30] sm:$0xff]
    %v8113 = vld [vmem:[%s1 + $0x38] sm:$0xff]
    %v8114 = vmul.f32 %v8098, %v8106
    %v8115 = vmul.f32 %v8099, %v8107
    %v8116 = vmul.f32 %v8100, %v8108
    %v8117 = vmul.f32 %v8101, %v8109
    %v8118 = vmul.f32 %v8102, %v8110
    %v8119 = vmul.f32 %v8103, %v8111
    %v8120 = vmul.f32 %v8104, %v8112
    %v8121 = vmul.f32 %v8105, %v8113
    %v8122 = vld [vmem:[#allocation5] sm:$0xff]
    %v8123 = vld [vmem:[#allocation5 + $0x8] sm:$0xff]
    %v8124 = vld [vmem:[#allocation5 + $0x10] sm:$0xff]
    %v8125 = vld [vmem:[#allocation5 + $0x18] sm:$0xff]
    %v8126 = vld [vmem:[#allocation5 + $0x20] sm:$0xff]
    %v8127 = vld [vmem:[#allocation5 + $0x28] sm:$0xff]
    %v8128 = vld [vmem:[#allocation5 + $0x30] sm:$0xff]
    %v8129 = vld [vmem:[#allocation5 + $0x38] sm:$0xff]
    %v8130 = vadd.f32 %v8114, %v8122
    %v8131 = vadd.f32 %v8115, %v8123
    %v8132 = vadd.f32 %v8116, %v8124
    %v8133 = vadd.f32 %v8117, %v8125
    %v8134 = vadd.f32 %v8118, %v8126
    %v8135 = vadd.f32 %v8119, %v8127
    %v8136 = vadd.f32 %v8120, %v8128
    %v8137 = vadd.f32 %v8121, %v8129
    %v8138 = vld [vmem:[#allocation7] sm:$0x1]
    %s8139 = vtos %v8138
    %v8140 = vstv %s8139
    %v8141 = vadd.f32 %v8130, %v8140
    %v8142 = vadd.f32 %v8131, %v8140
    %v8143 = vadd.f32 %v8132, %v8140
    %v8144 = vadd.f32 %v8133, %v8140
    %v8145 = vadd.f32 %v8134, %v8140
    %v8146 = vadd.f32 %v8135, %v8140
    %v8147 = vadd.f32 %v8136, %v8140
    %v8148 = vadd.f32 %v8137, %v8140
    %v8149 = vxor.u32 %v8141, 2147483648
    %v8150 = vxor.u32 %v8142, 2147483648
    %v8151 = vxor.u32 %v8143, 2147483648
    %v8152 = vxor.u32 %v8144, 2147483648
    %v8153 = vxor.u32 %v8145, 2147483648
    %v8154 = vxor.u32 %v8146, 2147483648
    %v8155 = vxor.u32 %v8147, 2147483648
    %v8156 = vxor.u32 %v8148, 2147483648
    %v8157 = vmul.f32 %v8149, 1.442695
    %v8158 = vpow.pop %v8157
    %v8159 = vmul.f32 %v8150, 1.442695
    %v8160 = vpow.pop %v8159
    %v8161 = vmul.f32 %v8151, 1.442695
    %v8162 = vpow.pop %v8161
    %v8163 = vmul.f32 %v8152, 1.442695
    %v8164 = vpow.pop %v8163
    %v8165 = vmul.f32 %v8153, 1.442695
    %v8166 = vpow.pop %v8165
    %v8167 = vmul.f32 %v8154, 1.442695
    %v8168 = vpow.pop %v8167
    %v8169 = vmul.f32 %v8155, 1.442695
    %v8170 = vpow.pop %v8169
    %v8171 = vmul.f32 %v8156, 1.442695
    %v8172 = vpow.pop %v8171
    %v8173 = vadd.f32 %v8158, 1.0
    %v8174 = vadd.f32 %v8160, 1.0
    %v8175 = vadd.f32 %v8162, 1.0
    %v8176 = vadd.f32 %v8164, 1.0
    %v8177 = vadd.f32 %v8166, 1.0
    %v8178 = vadd.f32 %v8168, 1.0
    %v8179 = vadd.f32 %v8170, 1.0
    %v8180 = vadd.f32 %v8172, 1.0
    %v8181 = vrcp.pop %v8173
    %v8182 = vmul.f32 1.0, %v8181
    %v8183 = vrcp.pop %v8174
    %v8184 = vmul.f32 1.0, %v8183
    %v8185 = vrcp.pop %v8175
    %v8186 = vmul.f32 1.0, %v8185
    %v8187 = vrcp.pop %v8176
    %v8188 = vmul.f32 1.0, %v8187
    %v8189 = vrcp.pop %v8177
    %v8190 = vmul.f32 1.0, %v8189
    %v8191 = vrcp.pop %v8178
    %v8192 = vmul.f32 1.0, %v8191
    %v8193 = vrcp.pop %v8179
    %v8194 = vmul.f32 1.0, %v8193
    %v8195 = vrcp.pop %v8180
    %v8196 = vmul.f32 1.0, %v8195
    %8197 = vst.msk [vmem:[%s7] sm:$0xff] %vm944, %v8182
    %8198 = vst.msk [vmem:[%s7 + $0x8] sm:$0xff] %vm944, %v8184
    %8199 = vst.msk [vmem:[%s7 + $0x10] sm:$0xff] %vm944, %v8186
    %8200 = vst.msk [vmem:[%s7 + $0x18] sm:$0xff] %vm944, %v8188
    %8201 = vst.msk [vmem:[%s7 + $0x20] sm:$0xff] %vm944, %v8190
    %8202 = vst.msk [vmem:[%s7 + $0x28] sm:$0xff] %vm944, %v8192
    %8203 = vst.msk [vmem:[%s7 + $0x30] sm:$0xff] %vm944, %v8194
    %8204 = vst.msk [vmem:[%s7 + $0x38] sm:$0xff] %vm944, %v8196
    // Predicated region
    $region34: #{tpu_custom_call.1} parent=1 // pred_check
      _
    $region35: #{tpu_custom_call.1} parent=1 // pred_check_branch
      %8206 = sbr.rel (0) target = $region37
    $region36: #{tpu_custom_call.1} parent=1 // pred_region
      _
    $region37: #{tpu_custom_call.1} parent=1 // pred_fallthru
      _
    // Predicated region
    $region38: #{tpu_custom_call.1} parent=1 // pred_check
      _
    $region39: #{tpu_custom_call.1} parent=1 // pred_check_branch
      %8208 = sbr.rel (0) target = $region41
    $region40: #{tpu_custom_call.1} parent=1 // pred_region
      _
    $region41: #{tpu_custom_call.1} parent=1 // pred_fallthru
      _
    %8209 = vsyncpa [#allocation9], 1
  %8210 = vsyncmov [#allocation6]
  %s8211 = vpop.sfrf %8210
  %p8212 = scmp.eq.s32.totalorder %s8211, 0
  %p8213 = pneg %p8212
  %8215 = shalt.err (%p8213)

</llo_original>
